<compile_context>
chip_gen: v7x
topology: tpu7x:2x2x1
jax: 0.10.0
libtpu: 0.0.40
codegen_flags: <defaults>
</compile_context>

<pallas_src>
import functools

import numpy as np

import jax
import jax.numpy as jnp
from jax import lax
from jax.experimental import pallas as pl
from jax.experimental.pallas import tpu as pltpu

LANE = 128


def _round_up(x, m):
    return ((x + m - 1) // m) * m


# ----------------------------------------------------------------------------
# Fused forward kernel (one grid step == one sample)
# ----------------------------------------------------------------------------
def _fused_vae_kernel(
    img_ref, eps_ref, onehot_ref,
    b1m_ref, b1b_ref, b3m_ref, b3b_ref, b4m_ref, b4b_ref,
    wmu_ref, bmu_ref, wvar_ref, bvar_ref,
    wdz_ref, wdc_ref, bd_ref,
    c4m_ref, c4b_ref, c3m_ref, c3b_ref, c1m_ref, c1b_ref,
    recon_ref, mu_ref, logvar_ref,
    *, W0, H1, H2, H3, H4, H5, H6, latent_dim):
    f32 = jnp.float32

    def band_layer(x, band_ref, bias_ref, h_out, stride, transposed, relu):
        # x: [h_in, W_in*Cin] ; band_ref: [kh, W_in*Cin, W_out*Cout] ; bias: [1, W_out*Cout]
        h_in = x.shape[0]
        kh = band_ref.shape[0]
        r = lax.broadcasted_iota(jnp.int32, (h_out, h_in), 0)
        c = lax.broadcasted_iota(jnp.int32, (h_out, h_in), 1)
        acc = None
        for t in range(kh):
            if transposed:   # ConvTranspose: input row ih scatters to output row s*ih + t
                sel = jnp.where(r == stride * c + t, 1.0, 0.0)
                term = jnp.dot(sel, jnp.dot(x, band_ref[t], preferred_element_type=f32),
                               preferred_element_type=f32)
            else:            # Conv: output row oh gathers input row s*oh + t
                sel = jnp.where(c == stride * r + t, 1.0, 0.0)
                term = jnp.dot(jnp.dot(sel, x, preferred_element_type=f32), band_ref[t],
                               preferred_element_type=f32)
            acc = term if acc is None else acc + term
        acc = acc + bias_ref[...]
        if relu:
            acc = jnp.maximum(acc, 0.0)
        return acc

    # ----------------------------- encoder -----------------------------
    x0 = img_ref[0][:, :W0]                                      # [H0, W0*1]
    a1 = band_layer(x0, b1m_ref, b1b_ref, H1, 1, False, True)    # [H1, W1*h0]
    a3 = band_layer(a1, b3m_ref, b3b_ref, H2, 2, False, True)    # [H2, W2*h1]
    a4 = band_layer(a3, b4m_ref, b4b_ref, H3, 2, False, True)    # [H3, W3*h2]

    # flatten (NCHW order folded into the FC weights at init): mu = b + sum_h a4[h] @ Wmu[h]
    hsel = lax.broadcasted_iota(jnp.int32, (1, H3), 1)
    mu = bmu_ref[...]
    log_var = bvar_ref[...]
    for h in range(H3):
        row_h = jnp.dot(jnp.where(hsel == h, 1.0, 0.0), a4,
                        preferred_element_type=f32)              # [1, W3*h2]
        mu = mu + jnp.dot(row_h, wmu_ref[h], preferred_element_type=f32)
        log_var = log_var + jnp.dot(row_h, wvar_ref[h], preferred_element_type=f32)
    mu_ref[0] = mu                                               # lane-dense [1, 128] store
    logvar_ref[0] = log_var

    # --------------------- reparameterize (fused, f32) ---------------------
    z = eps_ref[0] * jnp.exp(0.5 * log_var) + mu                 # [1, 128]
    z = z[:, :latent_dim]                                        # [1, latent]

    # --------- decoder_input: concat([z, onehot]) folded into two dots ---------
    onehot = onehot_ref[0]                                       # [1, n_cluster+1]
    rsel = lax.broadcasted_iota(jnp.int32, (H3, 1), 0)
    d0 = None
    for h in range(H3):
        row_h = (jnp.dot(z, wdz_ref[h], preferred_element_type=f32)
                 + jnp.dot(onehot, wdc_ref[h], preferred_element_type=f32)
                 + bd_ref[h])                                    # [1, W3*h2]
        term = jnp.where(rsel == h, 1.0, 0.0) * row_h            # scatter into row h
        d0 = term if d0 is None else d0 + term                   # [H3, W3*h2]

    # ----------------------------- decoder -----------------------------
    d4 = band_layer(d0, c4m_ref, c4b_ref, H4, 2, True, True)     # [H4, W4*h3]
    d3 = band_layer(d4, c3m_ref, c3b_ref, H5, 2, True, True)     # [H5, W5*h4]
    d1 = band_layer(d3, c1m_ref, c1b_ref, H6, 1, True, False)    # [H6, 128] (lanes >=W6 are 0)
    recon_ref[0] = d1


# ----------------------------------------------------------------------------
# Parameter construction (PyTorch layout) + one-time re-layout for the kernel
# ----------------------------------------------------------------------------
def init_params(key, latent_dim, total_cluster, fgx, fgy, hidden=(16, 8, 4, 8, 8)):
    scanx = fgx % 4 + 3
    scany = fgy % 4 + 3

    # per-layer floor arithmetic (safer than the float formula of the original)
    H0, W0 = fgx, fgy
    H1, W1 = H0 - scanx + 1, W0 - scany + 1
    H2, W2 = (H1 - 4) // 2 + 1, (W1 - 4) // 2 + 1
    H3, W3 = (H2 - 4) // 2 + 1, (W2 - 4) // 2 + 1
    enbedimx = int(((fgx - scanx + 1) / 2 - 1) / 2 - 1)
    enbedimy = int(((fgy - scany + 1) / 2 - 1) / 2 - 1)
    assert (H3, W3) == (enbedimx, enbedimy), "per-layer sizes disagree with the PyTorch formula"
    H4, W4 = (H3 - 1) * 2 + 4, (W3 - 1) * 2 + 4
    H5, W5 = (H4 - 1) * 2 + 4, (W4 - 1) * 2 + 4
    H6, W6 = H5 + scanx - 1, W5 + scany - 1
    node_int = H3 * W3 * hidden[2]
    zdim = latent_dim + total_cluster + 1

    keys = jax.random.split(key, 18)
    s = 0.2

    def nrm(k, shape):
        return s * jax.random.normal(k, shape, dtype=jnp.float32)

    params = {
        "conv1_w": nrm(keys[0], (hidden[0], 1, scanx, scany)),
        "conv1_b": nrm(keys[1], (hidden[0],)),
        "conv3_w": nrm(keys[2], (hidden[1], hidden[0], 4, 4)),
        "conv3_b": nrm(keys[3], (hidden[1],)),
        "conv4_w": nrm(keys[4], (hidden[2], hidden[1], 4, 4)),
        "conv4_b": nrm(keys[5], (hidden[2],)),
        "deconv4_w": nrm(keys[6], (hidden[2], hidden[3], 4, 4)),
        "deconv4_b": nrm(keys[7], (hidden[3],)),
        "deconv3_w": nrm(keys[8], (hidden[3], hidden[4], 4, 4)),
        "deconv3_b": nrm(keys[9], (hidden[4],)),
        "deconv1_w": nrm(keys[10], (hidden[4], 1, scanx, scany)),
        "deconv1_b": nrm(keys[11], (1,)),
        # torch nn.Linear layout: weight [out, in]
        "fc_mu_w": nrm(keys[12], (latent_dim, node_int)),
        "fc_mu_b": nrm(keys[13], (latent_dim,)),
        "fc_var_w": nrm(keys[14], (latent_dim, node_int)),
        "fc_var_b": nrm(keys[15], (latent_dim,)),
        "dec_in_w": nrm(keys[16], (node_int, zdim)),
        "dec_in_b": nrm(keys[17], (node_int,)),
    }
    cfg = dict(hidden=tuple(hidden), latent_dim=latent_dim, total_cluster=total_cluster,
               fgx=fgx, fgy=fgy, scanx=scanx, scany=scany, node_int=node_int,
               H0=H0, W0=W0, H1=H1, W1=W1, H2=H2, W2=W2, H3=H3, W3=W3,
               H4=H4, W4=W4, H5=H5, W5=W5, H6=H6, W6=W6)
    return params, cfg


def _conv_band(w_oikk, bias, stride, w_in, out_lane_pad=None):
    """B[t, w*Cin+cin, ow*Cout+cout] = W[cout, cin, t, w - stride*ow] (0 outside support)."""
    w = np.asarray(w_oikk, np.float32)
    b = np.asarray(bias, np.float32)
    cout, cin, kh, kw = w.shape
    ow_n = (w_in - kw) // stride + 1
    wc_out = ow_n * cout
    wc_out_p = wc_out if out_lane_pad is None else out_lane_pad
    band = np.zeros((kh, w_in * cin, wc_out_p), np.float32)
    for i in range(kh):
        for j in range(kw):
            wt = w[:, :, i, j].T                                     # [cin, cout]
            for ow in range(ow_n):
                win = stride * ow + j
                band[i, win * cin:(win + 1) * cin, ow * cout:(ow + 1) * cout] = wt
    brow = np.zeros((1, wc_out_p), np.float32)
    brow[0, :wc_out] = np.tile(b, ow_n)
    return band, brow


def _deconv_band(w_iokk, bias, stride, w_in, out_lane_pad=None):
    """C[t, iw*Cin+cin, ow*Cout+cout] = W[cin, cout, t, ow - stride*iw] (0 outside support)."""
    w = np.asarray(w_iokk, np.float32)
    b = np.asarray(bias, np.float32)
    cin, cout, kh, kw = w.shape
    ow_n = (w_in - 1) * stride + kw
    wc_out = ow_n * cout
    wc_out_p = wc_out if out_lane_pad is None else out_lane_pad
    band = np.zeros((kh, w_in * cin, wc_out_p), np.float32)
    for m in range(kh):
        for j in range(kw):
            wt = w[:, :, m, j]                                       # [cin, cout]
            for iw in range(w_in):
                ow = stride * iw + j
                band[m, iw * cin:(iw + 1) * cin, ow * cout:(ow + 1) * cout] = wt
    brow = np.zeros((1, wc_out_p), np.float32)
    brow[0, :wc_out] = np.tile(b, ow_n)
    return band, brow


def build_kernel_params(tparams, cfg):
    """One-time re-layout of the PyTorch weights into MXU-friendly band matrices."""
    hid = cfg["hidden"]
    latent = cfg["latent_dim"]
    ncl = cfg["total_cluster"] + 1
    H3, W3 = cfg["H3"], cfg["W3"]
    w3c2 = W3 * hid[2]
    node = cfg["node_int"]
    lat_pad = _round_up(latent, LANE)
    rec_pad = _round_up(cfg["W6"] * 1, LANE)
    img_lanes = _round_up(cfg["W0"] * 1, LANE)

    b1m, b1b = _conv_band(tparams["conv1_w"], tparams["conv1_b"], 1, cfg["W0"])
    b3m, b3b = _conv_band(tparams["conv3_w"], tparams["conv3_b"], 2, cfg["W1"])
    b4m, b4b = _conv_band(tparams["conv4_w"], tparams["conv4_b"], 2, cfg["W2"])
    c4m, c4b = _deconv_band(tparams["deconv4_w"], tparams["deconv4_b"], 2, cfg["W3"])
    c3m, c3b = _deconv_band(tparams["deconv3_w"], tparams["deconv3_b"], 2, cfg["W4"])
    c1m, c1b = _deconv_band(tparams["deconv1_w"], tparams["deconv1_b"], 1, cfg["W5"],
                            out_lane_pad=rec_pad)

    # flatten permutation: kernel layout (h, w, c)  <->  torch.flatten order (c, h, w)
    perm = np.empty(node, np.int64)
    for h in range(H3):
        for w in range(W3):
            for c in range(hid[2]):
                perm[h * w3c2 + w * hid[2] + c] = c * (H3 * W3) + h * W3 + w

    wmu = np.zeros((node, lat_pad), np.float32)
    wmu[:, :latent] = np.asarray(tparams["fc_mu_w"], np.float32)[:, perm].T
    bmu = np.zeros((1, lat_pad), np.float32)
    bmu[0, :latent] = np.asarray(tparams["fc_mu_b"], np.float32)
    wvar = np.zeros((node, lat_pad), np.float32)
    wvar[:, :latent] = np.asarray(tparams["fc_var_w"], np.float32)[:, perm].T
    bvar = np.zeros((1, lat_pad), np.float32)
    bvar[0, :latent] = np.asarray(tparams["fc_var_b"], np.float32)

    dec_w = np.asarray(tparams["dec_in_w"], np.float32)              # [node, latent+ncl]
    dec_b = np.asarray(tparams["dec_in_b"], np.float32)
    wdz = dec_w[perm, :latent].T                                     # [latent, node]
    wdc = dec_w[perm, latent:].T                                     # [ncl, node]
    bd = dec_b[perm][None, :]                                        # [1, node]

    # split per decoder spatial row so the kernel never re-slices unaligned lanes
    wmu3 = wmu.reshape(H3, w3c2, lat_pad)
    wvar3 = wvar.reshape(H3, w3c2, lat_pad)
    wdz3 = np.ascontiguousarray(wdz.reshape(latent, H3, w3c2).transpose(1, 0, 2))
    wdc3 = np.ascontiguousarray(wdc.reshape(ncl, H3, w3c2).transpose(1, 0, 2))
    bd3 = np.ascontiguousarray(bd.reshape(H3, w3c2)[:, None, :])

    kp = {k: jnp.asarray(v) for k, v in dict(
        b1m=b1m, b1b=b1b, b3m=b3m, b3b=b3b, b4m=b4m, b4b=b4b,
        wmu=wmu3, bmu=bmu, wvar=wvar3, bvar=bvar,
        wdz=wdz3, wdc=wdc3, bd=bd3,
        c4m=c4m, c4b=c4b, c3m=c3m, c3b=c3b, c1m=c1m, c1b=c1b).items()}

    geom = dict(W0=cfg["W0"], H1=cfg["H1"], H2=cfg["H2"], H3=H3, H4=cfg["H4"],
                H5=cfg["H5"], H6=cfg["H6"], W6=cfg["W6"], latent=latent,
                img_lanes=img_lanes, lat_pad=lat_pad, rec_pad=rec_pad)
    return kp, geom


# ----------------------------------------------------------------------------
# Public forward: one pallas_call for the whole network
# ----------------------------------------------------------------------------
def cluster_vae_forward(kparams, image_nchw, cluster_onehot, eps, *, geom):
    """Returns [reconstruction (NCHW), (image, cluster), mu, log_var]."""
    n = image_nchw.shape[0]
    assert image_nchw.shape[1] == 1
    h0 = image_nchw.shape[2]
    w0, lat = geom["W0"], geom["latent"]
    h6, w6 = geom["H6"], geom["W6"]
    img_lanes, lat_pad, rec_pad = geom["img_lanes"], geom["lat_pad"], geom["rec_pad"]

    img = image_nchw.astype(jnp.float32).reshape(n, h0, w0)
    img = jnp.pad(img, ((0, 0), (0, 0), (0, img_lanes - w0)))
    epsp = jnp.pad(eps.astype(jnp.float32), ((0, 0), (0, lat_pad - lat)))[:, None, :]
    ohp = cluster_onehot.astype(jnp.float32)[:, None, :]

    weight_order = ("b1m", "b1b", "b3m", "b3b", "b4m", "b4b",
                    "wmu", "bmu", "wvar", "bvar", "wdz", "wdc", "bd",
                    "c4m", "c4b", "c3m", "c3b", "c1m", "c1b")
    weights = [kparams[k] for k in weight_order]

    def batched_spec(arr):
        shape = tuple(arr.shape)
        zeros = (0,) * (len(shape) - 1)
        return pl.BlockSpec((1,) + shape[1:], lambda i, _z=zeros: (i,) + _z)

    def shared_spec(arr):
        shape = tuple(arr.shape)
        zeros = (0,) * len(shape)
        return pl.BlockSpec(shape, lambda i, _z=zeros: _z)

    in_specs = [batched_spec(img), batched_spec(epsp), batched_spec(ohp)]
    in_specs += [shared_spec(wt) for wt in weights]

    out_shape = (
        jax.ShapeDtypeStruct((n, h6, rec_pad), jnp.float32),
        jax.ShapeDtypeStruct((n, 1, lat_pad), jnp.float32),
        jax.ShapeDtypeStruct((n, 1, lat_pad), jnp.float32),
    )
    out_specs = (
        pl.BlockSpec((1, h6, rec_pad), lambda i: (i, 0, 0)),
        pl.BlockSpec((1, 1, lat_pad), lambda i: (i, 0, 0)),
        pl.BlockSpec((1, 1, lat_pad), lambda i: (i, 0, 0)),
    )

    # advisory cost estimate so XLA schedules the custom call sensibly
    flops = 0
    for key, h_in, h_out in (("b1m", h0, geom["H1"]), ("b3m", geom["H1"], geom["H2"]),
                             ("b4m", geom["H2"], geom["H3"]), ("c4m", geom["H3"], geom["H4"]),
                             ("c3m", geom["H4"], geom["H5"]), ("c1m", geom["H5"], geom["H6"])):
        kh, wc_in, wc_out = kparams[key].shape
        flops += 2 * kh * (h_out * h_in * wc_in + h_out * wc_in * wc_out)
    flops = n * (flops + 4 * geom["H3"] * kparams["wmu"].shape[1] * lat_pad)
    bytes_accessed = sum(int(np.prod(a.shape)) * 4 for a in (img, epsp, ohp, *weights))
    bytes_accessed += sum(int(np.prod(s.shape)) * 4 for s in out_shape)

    kernel = functools.partial(
        _fused_vae_kernel,
        W0=w0, H1=geom["H1"], H2=geom["H2"], H3=geom["H3"], H4=geom["H4"],
        H5=geom["H5"], H6=h6, latent_dim=lat)

    recon_p, mu_p, logvar_p = pl.pallas_call(
        kernel,
        grid_spec=pltpu.PrefetchScalarGridSpec(
            num_scalar_prefetch=0, grid=(n,),
            in_specs=in_specs, out_specs=out_specs),
        out_shape=out_shape,
        compiler_params=pltpu.CompilerParams(dimension_semantics=("parallel",)),
        cost_estimate=pl.CostEstimate(flops=int(flops), transcendentals=int(n * lat_pad),
                                      bytes_accessed=int(bytes_accessed)),
    )(img, epsp, ohp, *weights)

    recon = recon_p[:, :, :w6].reshape(n, 1, h6, w6)
    mu = mu_p[:, 0, :lat]
    log_var = logvar_p[:, 0, :lat]
    return [recon, (image_nchw, cluster_onehot), mu, log_var]


# ----------------------------------------------------------------------------
# Pure-JAX/XLA reference of the PyTorch forward (verification only, no Pallas)
# ----------------------------------------------------------------------------
def _im2col_ref(x_nhwc, kh, kw, stride):
    n, h, w, c = x_nhwc.shape
    oh = (h - kh) // stride + 1
    ow = (w - kw) // stride + 1
    patches = []
    for i in range(kh):
        for j in range(kw):
            patches.append(x_nhwc[:, i:i + stride * oh:stride, j:j + stride * ow:stride, :])
    cols = jnp.stack(patches, axis=3).reshape(n * oh * ow, kh * kw * c)
    return cols, oh, ow


def _conv2d_ref(x_nhwc, w_oikk, b, stride, relu):
    cout, cin, kh, kw = w_oikk.shape
    cols, oh, ow = _im2col_ref(x_nhwc, kh, kw, stride)
    wmat = jnp.transpose(w_oikk, (2, 3, 1, 0)).reshape(kh * kw * cin, cout)
    out = jnp.dot(cols, wmat, precision=lax.Precision.HIGHEST) + b
    if relu:
        out = jnp.maximum(out, 0.0)
    return out.reshape(x_nhwc.shape[0], oh, ow, cout)


def _deconv2d_ref(x_nhwc, w_iokk, b, stride, relu):
    cin, cout, kh, kw = w_iokk.shape
    n, h, w, c = x_nhwc.shape
    hd, wd = (h - 1) * stride + 1, (w - 1) * stride + 1
    xd = jnp.zeros((n, hd, wd, c), x_nhwc.dtype).at[:, ::stride, ::stride, :].set(x_nhwc)
    xp = jnp.pad(xd, ((0, 0), (kh - 1, kh - 1), (kw - 1, kw - 1), (0, 0)))
    wmat = jnp.transpose(w_iokk[:, :, ::-1, ::-1], (2, 3, 0, 1)).reshape(kh * kw * cin, cout)
    cols, oh, ow = _im2col_ref(xp, kh, kw, 1)
    out = jnp.dot(cols, wmat, precision=lax.Precision.HIGHEST) + b
    if relu:
        out = jnp.maximum(out, 0.0)
    return out.reshape(n, oh, ow, cout)


def reference_forward(tparams, cfg, image_nchw, cluster_onehot, eps):
    hid = cfg["hidden"]
    n = image_nchw.shape[0]
    x = jnp.transpose(image_nchw, (0, 2, 3, 1)).astype(jnp.float32)
    x = _conv2d_ref(x, tparams["conv1_w"], tparams["conv1_b"], 1, True)
    x = _conv2d_ref(x, tparams["conv3_w"], tparams["conv3_b"], 2, True)
    x = _conv2d_ref(x, tparams["conv4_w"], tparams["conv4_b"], 2, True)
    flat = jnp.transpose(x, (0, 3, 1, 2)).reshape(n, -1)              # torch.flatten order
    mu = flat @ tparams["fc_mu_w"].T + tparams["fc_mu_b"]
    log_var = flat @ tparams["fc_var_w"].T + tparams["fc_var_b"]
    z = eps * jnp.exp(0.5 * log_var) + mu
    zplus = jnp.concatenate([z, cluster_onehot.astype(jnp.float32)], axis=1)
    h = zplus @ tparams["dec_in_w"].T + tparams["dec_in_b"]
    h = jnp.transpose(h.reshape(n, hid[2], cfg["H3"], cfg["W3"]), (0, 2, 3, 1))
    h = _deconv2d_ref(h, tparams["deconv4_w"], tparams["deconv4_b"], 2, True)
    h = _deconv2d_ref(h, tparams["deconv3_w"], tparams["deconv3_b"], 2, True)
    h = _deconv2d_ref(h, tparams["deconv1_w"], tparams["deconv1_b"], 1, False)
    return jnp.transpose(h, (0, 3, 1, 2)), mu, log_var


# ----------------------------------------------------------------------------
if __name__ == "__main__":
    latent_dim = 6
    total_cluster = 5
    fgx = fgy = 20
    batch = 2

    key = jax.random.PRNGKey(0)
    k_param, k_img, k_cl, k_eps = jax.random.split(key, 4)

    tparams, cfg = init_params(k_param, latent_dim, total_cluster, fgx, fgy)
    kparams, geom = build_kernel_params(tparams, cfg)

    image = jax.random.normal(k_img, (batch, 1, fgx, fgy), dtype=jnp.float32)
    cluster_ids = jax.random.randint(k_cl, (batch,), 0, total_cluster + 1)
    cluster_onehot = jax.nn.one_hot(cluster_ids, total_cluster + 1, dtype=jnp.float32)
    # TODO(synk): torch.manual_seed(0)'s randn stream cannot be reproduced bitwise in JAX;
    # eps is an explicit N(0,1) sample shared by the kernel and the reference.
    eps = jax.random.normal(k_eps, (batch, latent_dim), dtype=jnp.float32)

    fwd = jax.jit(functools.partial(cluster_vae_forward, geom=geom))
    recon, inputs, mu, log_var = fwd(kparams, image, cluster_onehot, eps)
    jax.block_until_ready((recon, mu, log_var))

    assert recon.shape == (batch, 1, cfg["H6"], cfg["W6"]), recon.shape
    assert mu.shape == (batch, latent_dim) and log_var.shape == (batch, latent_dim)

    # Numerical check against the pure-JAX replica of the PyTorch forward.
    ref_recon, ref_mu, ref_lv = reference_forward(tparams, cfg, image, cluster_onehot, eps)

    def _check(name, got, want):
        want = np.asarray(want)
        scale = float(np.max(np.abs(want))) + 1e-6
        np.testing.assert_allclose(np.asarray(got), want, rtol=3e-2, atol=3e-2 * scale,
                                   err_msg=name)

    _check("mu", mu, ref_mu)
    _check("log_var", log_var, ref_lv)
    _check("recon", recon, ref_recon)

    print("KERNEL_OK")
</pallas_src>

<mosaic_0001>
module attributes {stable_mosaic.version = 11 : i64} {
  func.func @_fused_vae_kernel(%arg0: i32, %arg1: memref<1x20x128xf32, #tpu.memory_space<vmem>>, %arg2: memref<1x1x128xf32, #tpu.memory_space<vmem>>, %arg3: memref<1x1x6xf32, #tpu.memory_space<vmem>>, %arg4: memref<3x20x288xf32, #tpu.memory_space<vmem>>, %arg5: memref<1x288xf32, #tpu.memory_space<vmem>>, %arg6: memref<4x288x64xf32, #tpu.memory_space<vmem>>, %arg7: memref<1x64xf32, #tpu.memory_space<vmem>>, %arg8: memref<4x64x12xf32, #tpu.memory_space<vmem>>, %arg9: memref<1x12xf32, #tpu.memory_space<vmem>>, %arg10: memref<3x12x128xf32, #tpu.memory_space<vmem>>, %arg11: memref<1x128xf32, #tpu.memory_space<vmem>>, %arg12: memref<3x12x128xf32, #tpu.memory_space<vmem>>, %arg13: memref<1x128xf32, #tpu.memory_space<vmem>>, %arg14: memref<3x6x12xf32, #tpu.memory_space<vmem>>, %arg15: memref<3x6x12xf32, #tpu.memory_space<vmem>>, %arg16: memref<3x1x12xf32, #tpu.memory_space<vmem>>, %arg17: memref<4x12x64xf32, #tpu.memory_space<vmem>>, %arg18: memref<1x64xf32, #tpu.memory_space<vmem>>, %arg19: memref<4x64x144xf32, #tpu.memory_space<vmem>>, %arg20: memref<1x144xf32, #tpu.memory_space<vmem>>, %arg21: memref<3x144x128xf32, #tpu.memory_space<vmem>>, %arg22: memref<1x128xf32, #tpu.memory_space<vmem>>, %arg23: memref<1x20x128xf32, #tpu.memory_space<vmem>>, %arg24: memref<1x1x128xf32, #tpu.memory_space<vmem>>, %arg25: memref<1x1x128xf32, #tpu.memory_space<vmem>>) attributes {dimension_semantics = [#tpu.dimension_semantics<parallel>], iteration_bounds = array<i64: 2>, scalar_prefetch = 0 : i64, scratch_operands = 0 : i64, tpu.core_type = #tpu.core_type<tc>, window_params = [{transform_indices = @transform_0, window_bounds = array<i64: 1, 20, 128>}, {transform_indices = @transform_1, window_bounds = array<i64: 1, 1, 128>}, {transform_indices = @transform_2, window_bounds = array<i64: 1, 1, 6>}, {pipeline_mode = #tpu.pipeline_mode<synchronous>, transform_indices = @transform_3, window_bounds = array<i64: 3, 20, 288>}, {pipeline_mode = #tpu.pipeline_mode<synchronous>, transform_indices = @transform_4, window_bounds = array<i64: 1, 288>}, {pipeline_mode = #tpu.pipeline_mode<synchronous>, transform_indices = @transform_5, window_bounds = array<i64: 4, 288, 64>}, {pipeline_mode = #tpu.pipeline_mode<synchronous>, transform_indices = @transform_6, window_bounds = array<i64: 1, 64>}, {pipeline_mode = #tpu.pipeline_mode<synchronous>, transform_indices = @transform_7, window_bounds = array<i64: 4, 64, 12>}, {pipeline_mode = #tpu.pipeline_mode<synchronous>, transform_indices = @transform_8, window_bounds = array<i64: 1, 12>}, {pipeline_mode = #tpu.pipeline_mode<synchronous>, transform_indices = @transform_9, window_bounds = array<i64: 3, 12, 128>}, {pipeline_mode = #tpu.pipeline_mode<synchronous>, transform_indices = @transform_10, window_bounds = array<i64: 1, 128>}, {pipeline_mode = #tpu.pipeline_mode<synchronous>, transform_indices = @transform_11, window_bounds = array<i64: 3, 12, 128>}, {pipeline_mode = #tpu.pipeline_mode<synchronous>, transform_indices = @transform_12, window_bounds = array<i64: 1, 128>}, {pipeline_mode = #tpu.pipeline_mode<synchronous>, transform_indices = @transform_13, window_bounds = array<i64: 3, 6, 12>}, {pipeline_mode = #tpu.pipeline_mode<synchronous>, transform_indices = @transform_14, window_bounds = array<i64: 3, 6, 12>}, {pipeline_mode = #tpu.pipeline_mode<synchronous>, transform_indices = @transform_15, window_bounds = array<i64: 3, 1, 12>}, {pipeline_mode = #tpu.pipeline_mode<synchronous>, transform_indices = @transform_16, window_bounds = array<i64: 4, 12, 64>}, {pipeline_mode = #tpu.pipeline_mode<synchronous>, transform_indices = @transform_17, window_bounds = array<i64: 1, 64>}, {pipeline_mode = #tpu.pipeline_mode<synchronous>, transform_indices = @transform_18, window_bounds = array<i64: 4, 64, 144>}, {pipeline_mode = #tpu.pipeline_mode<synchronous>, transform_indices = @transform_19, window_bounds = array<i64: 1, 144>}, {pipeline_mode = #tpu.pipeline_mode<synchronous>, transform_indices = @transform_20, window_bounds = array<i64: 3, 144, 128>}, {pipeline_mode = #tpu.pipeline_mode<synchronous>, transform_indices = @transform_21, window_bounds = array<i64: 1, 128>}, {transform_indices = @transform_22, window_bounds = array<i64: 1, 20, 128>}, {transform_indices = @transform_23, window_bounds = array<i64: 1, 1, 128>}, {transform_indices = @transform_24, window_bounds = array<i64: 1, 1, 128>}]} {
    %c0 = arith.constant 0 : index
    %c0_0 = arith.constant 0 : index
    %c0_1 = arith.constant 0 : index
    %0 = vector.load %arg1[%c0, %c0_0, %c0_1] : memref<1x20x128xf32, #tpu.memory_space<vmem>>, vector<1x20x128xf32>
    %1 = vector.shape_cast %0 : vector<1x20x128xf32> to vector<20x128xf32>
    %2 = vector.extract_strided_slice %1 {offsets = [0, 0], sizes = [20, 20], strides = [1, 1]} : vector<20x128xf32> to vector<20x20xf32>
    %3 = tpu.iota {dimensions = array<i32: 0>} : vector<18x20xi32>
    %4 = tpu.iota {dimensions = array<i32: 1>} : vector<18x20xi32>
    %c1_i32 = arith.constant 1 : i32
    %5 = vector.broadcast %c1_i32 : i32 to vector<18x20xi32>
    %6 = arith.muli %5, %3 : vector<18x20xi32>
    %c0_i32 = arith.constant 0 : i32
    %7 = vector.broadcast %c0_i32 : i32 to vector<18x20xi32>
    %8 = arith.addi %6, %7 : vector<18x20xi32>
    %9 = arith.cmpi eq, %4, %8 : vector<18x20xi32>
    %cst = arith.constant 1.000000e+00 : f32
    %cst_2 = arith.constant 0.000000e+00 : f32
    %10 = vector.broadcast %cst : f32 to vector<18x20xf32>
    %11 = vector.broadcast %cst_2 : f32 to vector<18x20xf32>
    %12 = arith.select %9, %10, %11 : vector<18x20xi1>, vector<18x20xf32>
    %cst_3 = arith.constant dense<0.000000e+00> : vector<18x20xf32>
    %13 = tpu.matmul %12, %2, %cst_3 {dimension_numbers = #tpu.dot_dimension_numbers<[1], [0], [0], [1], [0, 0, 1, 1], [], []>} : vector<18x20xf32>, vector<20x20xf32>, vector<18x20xf32> -> vector<18x20xf32>
    %c0_4 = arith.constant 0 : index
    %c0_5 = arith.constant 0 : index
    %c0_6 = arith.constant 0 : index
    %14 = vector.load %arg4[%c0_4, %c0_5, %c0_6] : memref<3x20x288xf32, #tpu.memory_space<vmem>>, vector<1x20x288xf32>
    %15 = vector.shape_cast %14 : vector<1x20x288xf32> to vector<20x288xf32>
    %cst_7 = arith.constant dense<0.000000e+00> : vector<18x288xf32>
    %16 = tpu.matmul %13, %15, %cst_7 {dimension_numbers = #tpu.dot_dimension_numbers<[1], [0], [0], [1], [0, 0, 1, 1], [], []>} : vector<18x20xf32>, vector<20x288xf32>, vector<18x288xf32> -> vector<18x288xf32>
    %c1_i32_8 = arith.constant 1 : i32
    %17 = vector.broadcast %c1_i32_8 : i32 to vector<18x20xi32>
    %18 = arith.muli %17, %3 : vector<18x20xi32>
    %c1_i32_9 = arith.constant 1 : i32
    %19 = vector.broadcast %c1_i32_9 : i32 to vector<18x20xi32>
    %20 = arith.addi %18, %19 : vector<18x20xi32>
    %21 = arith.cmpi eq, %4, %20 : vector<18x20xi32>
    %cst_10 = arith.constant 1.000000e+00 : f32
    %cst_11 = arith.constant 0.000000e+00 : f32
    %22 = vector.broadcast %cst_10 : f32 to vector<18x20xf32>
    %23 = vector.broadcast %cst_11 : f32 to vector<18x20xf32>
    %24 = arith.select %21, %22, %23 : vector<18x20xi1>, vector<18x20xf32>
    %cst_12 = arith.constant dense<0.000000e+00> : vector<18x20xf32>
    %25 = tpu.matmul %24, %2, %cst_12 {dimension_numbers = #tpu.dot_dimension_numbers<[1], [0], [0], [1], [0, 0, 1, 1], [], []>} : vector<18x20xf32>, vector<20x20xf32>, vector<18x20xf32> -> vector<18x20xf32>
    %c1 = arith.constant 1 : index
    %c0_13 = arith.constant 0 : index
    %c0_14 = arith.constant 0 : index
    %26 = vector.load %arg4[%c1, %c0_13, %c0_14] : memref<3x20x288xf32, #tpu.memory_space<vmem>>, vector<1x20x288xf32>
    %27 = vector.shape_cast %26 : vector<1x20x288xf32> to vector<20x288xf32>
    %cst_15 = arith.constant dense<0.000000e+00> : vector<18x288xf32>
    %28 = tpu.matmul %25, %27, %cst_15 {dimension_numbers = #tpu.dot_dimension_numbers<[1], [0], [0], [1], [0, 0, 1, 1], [], []>} : vector<18x20xf32>, vector<20x288xf32>, vector<18x288xf32> -> vector<18x288xf32>
    %29 = arith.addf %16, %28 : vector<18x288xf32>
    %c1_i32_16 = arith.constant 1 : i32
    %30 = vector.broadcast %c1_i32_16 : i32 to vector<18x20xi32>
    %31 = arith.muli %30, %3 : vector<18x20xi32>
    %c2_i32 = arith.constant 2 : i32
    %32 = vector.broadcast %c2_i32 : i32 to vector<18x20xi32>
    %33 = arith.addi %31, %32 : vector<18x20xi32>
    %34 = arith.cmpi eq, %4, %33 : vector<18x20xi32>
    %cst_17 = arith.constant 1.000000e+00 : f32
    %cst_18 = arith.constant 0.000000e+00 : f32
    %35 = vector.broadcast %cst_17 : f32 to vector<18x20xf32>
    %36 = vector.broadcast %cst_18 : f32 to vector<18x20xf32>
    %37 = arith.select %34, %35, %36 : vector<18x20xi1>, vector<18x20xf32>
    %cst_19 = arith.constant dense<0.000000e+00> : vector<18x20xf32>
    %38 = tpu.matmul %37, %2, %cst_19 {dimension_numbers = #tpu.dot_dimension_numbers<[1], [0], [0], [1], [0, 0, 1, 1], [], []>} : vector<18x20xf32>, vector<20x20xf32>, vector<18x20xf32> -> vector<18x20xf32>
    %c2 = arith.constant 2 : index
    %c0_20 = arith.constant 0 : index
    %c0_21 = arith.constant 0 : index
    %39 = vector.load %arg4[%c2, %c0_20, %c0_21] : memref<3x20x288xf32, #tpu.memory_space<vmem>>, vector<1x20x288xf32>
    %40 = vector.shape_cast %39 : vector<1x20x288xf32> to vector<20x288xf32>
    %cst_22 = arith.constant dense<0.000000e+00> : vector<18x288xf32>
    %41 = tpu.matmul %38, %40, %cst_22 {dimension_numbers = #tpu.dot_dimension_numbers<[1], [0], [0], [1], [0, 0, 1, 1], [], []>} : vector<18x20xf32>, vector<20x288xf32>, vector<18x288xf32> -> vector<18x288xf32>
    %42 = arith.addf %29, %41 : vector<18x288xf32>
    %c0_23 = arith.constant 0 : index
    %c0_24 = arith.constant 0 : index
    %43 = vector.load %arg5[%c0_23, %c0_24] : memref<1x288xf32, #tpu.memory_space<vmem>>, vector<1x288xf32>
    %44 = vector.broadcast %43 : vector<1x288xf32> to vector<18x288xf32>
    %45 = arith.addf %42, %44 : vector<18x288xf32>
    %cst_25 = arith.constant 0.000000e+00 : f32
    %46 = vector.broadcast %cst_25 : f32 to vector<18x288xf32>
    %47 = arith.maximumf %45, %46 : vector<18x288xf32>
    %48 = tpu.iota {dimensions = array<i32: 0>} : vector<8x18xi32>
    %49 = tpu.iota {dimensions = array<i32: 1>} : vector<8x18xi32>
    %c2_i32_26 = arith.constant 2 : i32
    %50 = vector.broadcast %c2_i32_26 : i32 to vector<8x18xi32>
    %51 = arith.muli %50, %48 : vector<8x18xi32>
    %c0_i32_27 = arith.constant 0 : i32
    %52 = vector.broadcast %c0_i32_27 : i32 to vector<8x18xi32>
    %53 = arith.addi %51, %52 : vector<8x18xi32>
    %54 = arith.cmpi eq, %49, %53 : vector<8x18xi32>
    %cst_28 = arith.constant 1.000000e+00 : f32
    %cst_29 = arith.constant 0.000000e+00 : f32
    %55 = vector.broadcast %cst_28 : f32 to vector<8x18xf32>
    %56 = vector.broadcast %cst_29 : f32 to vector<8x18xf32>
    %57 = arith.select %54, %55, %56 : vector<8x18xi1>, vector<8x18xf32>
    %cst_30 = arith.constant dense<0.000000e+00> : vector<8x288xf32>
    %58 = tpu.matmul %57, %47, %cst_30 {dimension_numbers = #tpu.dot_dimension_numbers<[1], [0], [0], [1], [0, 0, 1, 1], [], []>} : vector<8x18xf32>, vector<18x288xf32>, vector<8x288xf32> -> vector<8x288xf32>
    %c0_31 = arith.constant 0 : index
    %c0_32 = arith.constant 0 : index
    %c0_33 = arith.constant 0 : index
    %59 = vector.load %arg6[%c0_31, %c0_32, %c0_33] : memref<4x288x64xf32, #tpu.memory_space<vmem>>, vector<1x288x64xf32>
    %60 = vector.shape_cast %59 : vector<1x288x64xf32> to vector<288x64xf32>
    %cst_34 = arith.constant dense<0.000000e+00> : vector<8x64xf32>
    %61 = tpu.matmul %58, %60, %cst_34 {dimension_numbers = #tpu.dot_dimension_numbers<[1], [0], [0], [1], [0, 0, 1, 1], [], []>} : vector<8x288xf32>, vector<288x64xf32>, vector<8x64xf32> -> vector<8x64xf32>
    %c2_i32_35 = arith.constant 2 : i32
    %62 = vector.broadcast %c2_i32_35 : i32 to vector<8x18xi32>
    %63 = arith.muli %62, %48 : vector<8x18xi32>
    %c1_i32_36 = arith.constant 1 : i32
    %64 = vector.broadcast %c1_i32_36 : i32 to vector<8x18xi32>
    %65 = arith.addi %63, %64 : vector<8x18xi32>
    %66 = arith.cmpi eq, %49, %65 : vector<8x18xi32>
    %cst_37 = arith.constant 1.000000e+00 : f32
    %cst_38 = arith.constant 0.000000e+00 : f32
    %67 = vector.broadcast %cst_37 : f32 to vector<8x18xf32>
    %68 = vector.broadcast %cst_38 : f32 to vector<8x18xf32>
    %69 = arith.select %66, %67, %68 : vector<8x18xi1>, vector<8x18xf32>
    %cst_39 = arith.constant dense<0.000000e+00> : vector<8x288xf32>
    %70 = tpu.matmul %69, %47, %cst_39 {dimension_numbers = #tpu.dot_dimension_numbers<[1], [0], [0], [1], [0, 0, 1, 1], [], []>} : vector<8x18xf32>, vector<18x288xf32>, vector<8x288xf32> -> vector<8x288xf32>
    %c1_40 = arith.constant 1 : index
    %c0_41 = arith.constant 0 : index
    %c0_42 = arith.constant 0 : index
    %71 = vector.load %arg6[%c1_40, %c0_41, %c0_42] : memref<4x288x64xf32, #tpu.memory_space<vmem>>, vector<1x288x64xf32>
    %72 = vector.shape_cast %71 : vector<1x288x64xf32> to vector<288x64xf32>
    %cst_43 = arith.constant dense<0.000000e+00> : vector<8x64xf32>
    %73 = tpu.matmul %70, %72, %cst_43 {dimension_numbers = #tpu.dot_dimension_numbers<[1], [0], [0], [1], [0, 0, 1, 1], [], []>} : vector<8x288xf32>, vector<288x64xf32>, vector<8x64xf32> -> vector<8x64xf32>
    %74 = arith.addf %61, %73 : vector<8x64xf32>
    %c2_i32_44 = arith.constant 2 : i32
    %75 = vector.broadcast %c2_i32_44 : i32 to vector<8x18xi32>
    %76 = arith.muli %75, %48 : vector<8x18xi32>
    %c2_i32_45 = arith.constant 2 : i32
    %77 = vector.broadcast %c2_i32_45 : i32 to vector<8x18xi32>
    %78 = arith.addi %76, %77 : vector<8x18xi32>
    %79 = arith.cmpi eq, %49, %78 : vector<8x18xi32>
    %cst_46 = arith.constant 1.000000e+00 : f32
    %cst_47 = arith.constant 0.000000e+00 : f32
    %80 = vector.broadcast %cst_46 : f32 to vector<8x18xf32>
    %81 = vector.broadcast %cst_47 : f32 to vector<8x18xf32>
    %82 = arith.select %79, %80, %81 : vector<8x18xi1>, vector<8x18xf32>
    %cst_48 = arith.constant dense<0.000000e+00> : vector<8x288xf32>
    %83 = tpu.matmul %82, %47, %cst_48 {dimension_numbers = #tpu.dot_dimension_numbers<[1], [0], [0], [1], [0, 0, 1, 1], [], []>} : vector<8x18xf32>, vector<18x288xf32>, vector<8x288xf32> -> vector<8x288xf32>
    %c2_49 = arith.constant 2 : index
    %c0_50 = arith.constant 0 : index
    %c0_51 = arith.constant 0 : index
    %84 = vector.load %arg6[%c2_49, %c0_50, %c0_51] : memref<4x288x64xf32, #tpu.memory_space<vmem>>, vector<1x288x64xf32>
    %85 = vector.shape_cast %84 : vector<1x288x64xf32> to vector<288x64xf32>
    %cst_52 = arith.constant dense<0.000000e+00> : vector<8x64xf32>
    %86 = tpu.matmul %83, %85, %cst_52 {dimension_numbers = #tpu.dot_dimension_numbers<[1], [0], [0], [1], [0, 0, 1, 1], [], []>} : vector<8x288xf32>, vector<288x64xf32>, vector<8x64xf32> -> vector<8x64xf32>
    %87 = arith.addf %74, %86 : vector<8x64xf32>
    %c2_i32_53 = arith.constant 2 : i32
    %88 = vector.broadcast %c2_i32_53 : i32 to vector<8x18xi32>
    %89 = arith.muli %88, %48 : vector<8x18xi32>
    %c3_i32 = arith.constant 3 : i32
    %90 = vector.broadcast %c3_i32 : i32 to vector<8x18xi32>
    %91 = arith.addi %89, %90 : vector<8x18xi32>
    %92 = arith.cmpi eq, %49, %91 : vector<8x18xi32>
    %cst_54 = arith.constant 1.000000e+00 : f32
    %cst_55 = arith.constant 0.000000e+00 : f32
    %93 = vector.broadcast %cst_54 : f32 to vector<8x18xf32>
    %94 = vector.broadcast %cst_55 : f32 to vector<8x18xf32>
    %95 = arith.select %92, %93, %94 : vector<8x18xi1>, vector<8x18xf32>
    %cst_56 = arith.constant dense<0.000000e+00> : vector<8x288xf32>
    %96 = tpu.matmul %95, %47, %cst_56 {dimension_numbers = #tpu.dot_dimension_numbers<[1], [0], [0], [1], [0, 0, 1, 1], [], []>} : vector<8x18xf32>, vector<18x288xf32>, vector<8x288xf32> -> vector<8x288xf32>
    %c3 = arith.constant 3 : index
    %c0_57 = arith.constant 0 : index
    %c0_58 = arith.constant 0 : index
    %97 = vector.load %arg6[%c3, %c0_57, %c0_58] : memref<4x288x64xf32, #tpu.memory_space<vmem>>, vector<1x288x64xf32>
    %98 = vector.shape_cast %97 : vector<1x288x64xf32> to vector<288x64xf32>
    %cst_59 = arith.constant dense<0.000000e+00> : vector<8x64xf32>
    %99 = tpu.matmul %96, %98, %cst_59 {dimension_numbers = #tpu.dot_dimension_numbers<[1], [0], [0], [1], [0, 0, 1, 1], [], []>} : vector<8x288xf32>, vector<288x64xf32>, vector<8x64xf32> -> vector<8x64xf32>
    %100 = arith.addf %87, %99 : vector<8x64xf32>
    %c0_60 = arith.constant 0 : index
    %c0_61 = arith.constant 0 : index
    %101 = vector.load %arg7[%c0_60, %c0_61] : memref<1x64xf32, #tpu.memory_space<vmem>>, vector<1x64xf32>
    %102 = vector.broadcast %101 : vector<1x64xf32> to vector<8x64xf32>
    %103 = arith.addf %100, %102 : vector<8x64xf32>
    %cst_62 = arith.constant 0.000000e+00 : f32
    %104 = vector.broadcast %cst_62 : f32 to vector<8x64xf32>
    %105 = arith.maximumf %103, %104 : vector<8x64xf32>
    %106 = tpu.iota {dimensions = array<i32: 0>} : vector<3x8xi32>
    %107 = tpu.iota {dimensions = array<i32: 1>} : vector<3x8xi32>
    %c2_i32_63 = arith.constant 2 : i32
    %108 = vector.broadcast %c2_i32_63 : i32 to vector<3x8xi32>
    %109 = arith.muli %108, %106 : vector<3x8xi32>
    %c0_i32_64 = arith.constant 0 : i32
    %110 = vector.broadcast %c0_i32_64 : i32 to vector<3x8xi32>
    %111 = arith.addi %109, %110 : vector<3x8xi32>
    %112 = arith.cmpi eq, %107, %111 : vector<3x8xi32>
    %cst_65 = arith.constant 1.000000e+00 : f32
    %cst_66 = arith.constant 0.000000e+00 : f32
    %113 = vector.broadcast %cst_65 : f32 to vector<3x8xf32>
    %114 = vector.broadcast %cst_66 : f32 to vector<3x8xf32>
    %115 = arith.select %112, %113, %114 : vector<3x8xi1>, vector<3x8xf32>
    %cst_67 = arith.constant dense<0.000000e+00> : vector<3x64xf32>
    %116 = tpu.matmul %115, %105, %cst_67 {dimension_numbers = #tpu.dot_dimension_numbers<[1], [0], [0], [1], [0, 0, 1, 1], [], []>} : vector<3x8xf32>, vector<8x64xf32>, vector<3x64xf32> -> vector<3x64xf32>
    %c0_68 = arith.constant 0 : index
    %c0_69 = arith.constant 0 : index
    %c0_70 = arith.constant 0 : index
    %117 = vector.load %arg8[%c0_68, %c0_69, %c0_70] : memref<4x64x12xf32, #tpu.memory_space<vmem>>, vector<1x64x12xf32>
    %118 = vector.shape_cast %117 : vector<1x64x12xf32> to vector<64x12xf32>
    %cst_71 = arith.constant dense<0.000000e+00> : vector<3x12xf32>
    %119 = tpu.matmul %116, %118, %cst_71 {dimension_numbers = #tpu.dot_dimension_numbers<[1], [0], [0], [1], [0, 0, 1, 1], [], []>} : vector<3x64xf32>, vector<64x12xf32>, vector<3x12xf32> -> vector<3x12xf32>
    %c2_i32_72 = arith.constant 2 : i32
    %120 = vector.broadcast %c2_i32_72 : i32 to vector<3x8xi32>
    %121 = arith.muli %120, %106 : vector<3x8xi32>
    %c1_i32_73 = arith.constant 1 : i32
    %122 = vector.broadcast %c1_i32_73 : i32 to vector<3x8xi32>
    %123 = arith.addi %121, %122 : vector<3x8xi32>
    %124 = arith.cmpi eq, %107, %123 : vector<3x8xi32>
    %cst_74 = arith.constant 1.000000e+00 : f32
    %cst_75 = arith.constant 0.000000e+00 : f32
    %125 = vector.broadcast %cst_74 : f32 to vector<3x8xf32>
    %126 = vector.broadcast %cst_75 : f32 to vector<3x8xf32>
    %127 = arith.select %124, %125, %126 : vector<3x8xi1>, vector<3x8xf32>
    %cst_76 = arith.constant dense<0.000000e+00> : vector<3x64xf32>
    %128 = tpu.matmul %127, %105, %cst_76 {dimension_numbers = #tpu.dot_dimension_numbers<[1], [0], [0], [1], [0, 0, 1, 1], [], []>} : vector<3x8xf32>, vector<8x64xf32>, vector<3x64xf32> -> vector<3x64xf32>
    %c1_77 = arith.constant 1 : index
    %c0_78 = arith.constant 0 : index
    %c0_79 = arith.constant 0 : index
    %129 = vector.load %arg8[%c1_77, %c0_78, %c0_79] : memref<4x64x12xf32, #tpu.memory_space<vmem>>, vector<1x64x12xf32>
    %130 = vector.shape_cast %129 : vector<1x64x12xf32> to vector<64x12xf32>
    %cst_80 = arith.constant dense<0.000000e+00> : vector<3x12xf32>
    %131 = tpu.matmul %128, %130, %cst_80 {dimension_numbers = #tpu.dot_dimension_numbers<[1], [0], [0], [1], [0, 0, 1, 1], [], []>} : vector<3x64xf32>, vector<64x12xf32>, vector<3x12xf32> -> vector<3x12xf32>
    %132 = arith.addf %119, %131 : vector<3x12xf32>
    %c2_i32_81 = arith.constant 2 : i32
    %133 = vector.broadcast %c2_i32_81 : i32 to vector<3x8xi32>
    %134 = arith.muli %133, %106 : vector<3x8xi32>
    %c2_i32_82 = arith.constant 2 : i32
    %135 = vector.broadcast %c2_i32_82 : i32 to vector<3x8xi32>
    %136 = arith.addi %134, %135 : vector<3x8xi32>
    %137 = arith.cmpi eq, %107, %136 : vector<3x8xi32>
    %cst_83 = arith.constant 1.000000e+00 : f32
    %cst_84 = arith.constant 0.000000e+00 : f32
    %138 = vector.broadcast %cst_83 : f32 to vector<3x8xf32>
    %139 = vector.broadcast %cst_84 : f32 to vector<3x8xf32>
    %140 = arith.select %137, %138, %139 : vector<3x8xi1>, vector<3x8xf32>
    %cst_85 = arith.constant dense<0.000000e+00> : vector<3x64xf32>
    %141 = tpu.matmul %140, %105, %cst_85 {dimension_numbers = #tpu.dot_dimension_numbers<[1], [0], [0], [1], [0, 0, 1, 1], [], []>} : vector<3x8xf32>, vector<8x64xf32>, vector<3x64xf32> -> vector<3x64xf32>
    %c2_86 = arith.constant 2 : index
    %c0_87 = arith.constant 0 : index
    %c0_88 = arith.constant 0 : index
    %142 = vector.load %arg8[%c2_86, %c0_87, %c0_88] : memref<4x64x12xf32, #tpu.memory_space<vmem>>, vector<1x64x12xf32>
    %143 = vector.shape_cast %142 : vector<1x64x12xf32> to vector<64x12xf32>
    %cst_89 = arith.constant dense<0.000000e+00> : vector<3x12xf32>
    %144 = tpu.matmul %141, %143, %cst_89 {dimension_numbers = #tpu.dot_dimension_numbers<[1], [0], [0], [1], [0, 0, 1, 1], [], []>} : vector<3x64xf32>, vector<64x12xf32>, vector<3x12xf32> -> vector<3x12xf32>
    %145 = arith.addf %132, %144 : vector<3x12xf32>
    %c2_i32_90 = arith.constant 2 : i32
    %146 = vector.broadcast %c2_i32_90 : i32 to vector<3x8xi32>
    %147 = arith.muli %146, %106 : vector<3x8xi32>
    %c3_i32_91 = arith.constant 3 : i32
    %148 = vector.broadcast %c3_i32_91 : i32 to vector<3x8xi32>
    %149 = arith.addi %147, %148 : vector<3x8xi32>
    %150 = arith.cmpi eq, %107, %149 : vector<3x8xi32>
    %cst_92 = arith.constant 1.000000e+00 : f32
    %cst_93 = arith.constant 0.000000e+00 : f32
    %151 = vector.broadcast %cst_92 : f32 to vector<3x8xf32>
    %152 = vector.broadcast %cst_93 : f32 to vector<3x8xf32>
    %153 = arith.select %150, %151, %152 : vector<3x8xi1>, vector<3x8xf32>
    %cst_94 = arith.constant dense<0.000000e+00> : vector<3x64xf32>
    %154 = tpu.matmul %153, %105, %cst_94 {dimension_numbers = #tpu.dot_dimension_numbers<[1], [0], [0], [1], [0, 0, 1, 1], [], []>} : vector<3x8xf32>, vector<8x64xf32>, vector<3x64xf32> -> vector<3x64xf32>
    %c3_95 = arith.constant 3 : index
    %c0_96 = arith.constant 0 : index
    %c0_97 = arith.constant 0 : index
    %155 = vector.load %arg8[%c3_95, %c0_96, %c0_97] : memref<4x64x12xf32, #tpu.memory_space<vmem>>, vector<1x64x12xf32>
    %156 = vector.shape_cast %155 : vector<1x64x12xf32> to vector<64x12xf32>
    %cst_98 = arith.constant dense<0.000000e+00> : vector<3x12xf32>
    %157 = tpu.matmul %154, %156, %cst_98 {dimension_numbers = #tpu.dot_dimension_numbers<[1], [0], [0], [1], [0, 0, 1, 1], [], []>} : vector<3x64xf32>, vector<64x12xf32>, vector<3x12xf32> -> vector<3x12xf32>
    %158 = arith.addf %145, %157 : vector<3x12xf32>
    %c0_99 = arith.constant 0 : index
    %c0_100 = arith.constant 0 : index
    %159 = vector.load %arg9[%c0_99, %c0_100] : memref<1x12xf32, #tpu.memory_space<vmem>>, vector<1x12xf32>
    %160 = vector.broadcast %159 : vector<1x12xf32> to vector<3x12xf32>
    %161 = arith.addf %158, %160 : vector<3x12xf32>
    %cst_101 = arith.constant 0.000000e+00 : f32
    %162 = vector.broadcast %cst_101 : f32 to vector<3x12xf32>
    %163 = arith.maximumf %161, %162 : vector<3x12xf32>
    %164 = tpu.iota {dimensions = array<i32: 1>} : vector<1x3xi32>
    %c0_102 = arith.constant 0 : index
    %c0_103 = arith.constant 0 : index
    %165 = vector.load %arg11[%c0_102, %c0_103] : memref<1x128xf32, #tpu.memory_space<vmem>>, vector<1x128xf32>
    %c0_104 = arith.constant 0 : index
    %c0_105 = arith.constant 0 : index
    %166 = vector.load %arg13[%c0_104, %c0_105] : memref<1x128xf32, #tpu.memory_space<vmem>>, vector<1x128xf32>
    %c0_i32_106 = arith.constant 0 : i32
    %167 = vector.broadcast %c0_i32_106 : i32 to vector<1x3xi32>
    %168 = arith.cmpi eq, %164, %167 : vector<1x3xi32>
    %cst_107 = arith.constant 1.000000e+00 : f32
    %cst_108 = arith.constant 0.000000e+00 : f32
    %169 = vector.broadcast %cst_107 : f32 to vector<1x3xf32>
    %170 = vector.broadcast %cst_108 : f32 to vector<1x3xf32>
    %171 = arith.select %168, %169, %170 : vector<1x3xi1>, vector<1x3xf32>
    %cst_109 = arith.constant dense<0.000000e+00> : vector<1x12xf32>
    %172 = tpu.matmul %171, %163, %cst_109 {dimension_numbers = #tpu.dot_dimension_numbers<[1], [0], [0], [1], [0, 0, 1, 1], [], []>} : vector<1x3xf32>, vector<3x12xf32>, vector<1x12xf32> -> vector<1x12xf32>
    %c0_110 = arith.constant 0 : index
    %c0_111 = arith.constant 0 : index
    %c0_112 = arith.constant 0 : index
    %173 = vector.load %arg10[%c0_110, %c0_111, %c0_112] : memref<3x12x128xf32, #tpu.memory_space<vmem>>, vector<1x12x128xf32>
    %174 = vector.shape_cast %173 : vector<1x12x128xf32> to vector<12x128xf32>
    %cst_113 = arith.constant dense<0.000000e+00> : vector<1x128xf32>
    %175 = tpu.matmul %172, %174, %cst_113 {dimension_numbers = #tpu.dot_dimension_numbers<[1], [0], [0], [1], [0, 0, 1, 1], [], []>} : vector<1x12xf32>, vector<12x128xf32>, vector<1x128xf32> -> vector<1x128xf32>
    %176 = arith.addf %165, %175 : vector<1x128xf32>
    %c0_114 = arith.constant 0 : index
    %c0_115 = arith.constant 0 : index
    %c0_116 = arith.constant 0 : index
    %177 = vector.load %arg12[%c0_114, %c0_115, %c0_116] : memref<3x12x128xf32, #tpu.memory_space<vmem>>, vector<1x12x128xf32>
    %178 = vector.shape_cast %177 : vector<1x12x128xf32> to vector<12x128xf32>
    %cst_117 = arith.constant dense<0.000000e+00> : vector<1x128xf32>
    %179 = tpu.matmul %172, %178, %cst_117 {dimension_numbers = #tpu.dot_dimension_numbers<[1], [0], [0], [1], [0, 0, 1, 1], [], []>} : vector<1x12xf32>, vector<12x128xf32>, vector<1x128xf32> -> vector<1x128xf32>
    %180 = arith.addf %166, %179 : vector<1x128xf32>
    %c1_i32_118 = arith.constant 1 : i32
    %181 = vector.broadcast %c1_i32_118 : i32 to vector<1x3xi32>
    %182 = arith.cmpi eq, %164, %181 : vector<1x3xi32>
    %cst_119 = arith.constant 1.000000e+00 : f32
    %cst_120 = arith.constant 0.000000e+00 : f32
    %183 = vector.broadcast %cst_119 : f32 to vector<1x3xf32>
    %184 = vector.broadcast %cst_120 : f32 to vector<1x3xf32>
    %185 = arith.select %182, %183, %184 : vector<1x3xi1>, vector<1x3xf32>
    %cst_121 = arith.constant dense<0.000000e+00> : vector<1x12xf32>
    %186 = tpu.matmul %185, %163, %cst_121 {dimension_numbers = #tpu.dot_dimension_numbers<[1], [0], [0], [1], [0, 0, 1, 1], [], []>} : vector<1x3xf32>, vector<3x12xf32>, vector<1x12xf32> -> vector<1x12xf32>
    %c1_122 = arith.constant 1 : index
    %c0_123 = arith.constant 0 : index
    %c0_124 = arith.constant 0 : index
    %187 = vector.load %arg10[%c1_122, %c0_123, %c0_124] : memref<3x12x128xf32, #tpu.memory_space<vmem>>, vector<1x12x128xf32>
    %188 = vector.shape_cast %187 : vector<1x12x128xf32> to vector<12x128xf32>
    %cst_125 = arith.constant dense<0.000000e+00> : vector<1x128xf32>
    %189 = tpu.matmul %186, %188, %cst_125 {dimension_numbers = #tpu.dot_dimension_numbers<[1], [0], [0], [1], [0, 0, 1, 1], [], []>} : vector<1x12xf32>, vector<12x128xf32>, vector<1x128xf32> -> vector<1x128xf32>
    %190 = arith.addf %176, %189 : vector<1x128xf32>
    %c1_126 = arith.constant 1 : index
    %c0_127 = arith.constant 0 : index
    %c0_128 = arith.constant 0 : index
    %191 = vector.load %arg12[%c1_126, %c0_127, %c0_128] : memref<3x12x128xf32, #tpu.memory_space<vmem>>, vector<1x12x128xf32>
    %192 = vector.shape_cast %191 : vector<1x12x128xf32> to vector<12x128xf32>
    %cst_129 = arith.constant dense<0.000000e+00> : vector<1x128xf32>
    %193 = tpu.matmul %186, %192, %cst_129 {dimension_numbers = #tpu.dot_dimension_numbers<[1], [0], [0], [1], [0, 0, 1, 1], [], []>} : vector<1x12xf32>, vector<12x128xf32>, vector<1x128xf32> -> vector<1x128xf32>
    %194 = arith.addf %180, %193 : vector<1x128xf32>
    %c2_i32_130 = arith.constant 2 : i32
    %195 = vector.broadcast %c2_i32_130 : i32 to vector<1x3xi32>
    %196 = arith.cmpi eq, %164, %195 : vector<1x3xi32>
    %cst_131 = arith.constant 1.000000e+00 : f32
    %cst_132 = arith.constant 0.000000e+00 : f32
    %197 = vector.broadcast %cst_131 : f32 to vector<1x3xf32>
    %198 = vector.broadcast %cst_132 : f32 to vector<1x3xf32>
    %199 = arith.select %196, %197, %198 : vector<1x3xi1>, vector<1x3xf32>
    %cst_133 = arith.constant dense<0.000000e+00> : vector<1x12xf32>
    %200 = tpu.matmul %199, %163, %cst_133 {dimension_numbers = #tpu.dot_dimension_numbers<[1], [0], [0], [1], [0, 0, 1, 1], [], []>} : vector<1x3xf32>, vector<3x12xf32>, vector<1x12xf32> -> vector<1x12xf32>
    %c2_134 = arith.constant 2 : index
    %c0_135 = arith.constant 0 : index
    %c0_136 = arith.constant 0 : index
    %201 = vector.load %arg10[%c2_134, %c0_135, %c0_136] : memref<3x12x128xf32, #tpu.memory_space<vmem>>, vector<1x12x128xf32>
    %202 = vector.shape_cast %201 : vector<1x12x128xf32> to vector<12x128xf32>
    %cst_137 = arith.constant dense<0.000000e+00> : vector<1x128xf32>
    %203 = tpu.matmul %200, %202, %cst_137 {dimension_numbers = #tpu.dot_dimension_numbers<[1], [0], [0], [1], [0, 0, 1, 1], [], []>} : vector<1x12xf32>, vector<12x128xf32>, vector<1x128xf32> -> vector<1x128xf32>
    %204 = arith.addf %190, %203 : vector<1x128xf32>
    %c2_138 = arith.constant 2 : index
    %c0_139 = arith.constant 0 : index
    %c0_140 = arith.constant 0 : index
    %205 = vector.load %arg12[%c2_138, %c0_139, %c0_140] : memref<3x12x128xf32, #tpu.memory_space<vmem>>, vector<1x12x128xf32>
    %206 = vector.shape_cast %205 : vector<1x12x128xf32> to vector<12x128xf32>
    %cst_141 = arith.constant dense<0.000000e+00> : vector<1x128xf32>
    %207 = tpu.matmul %200, %206, %cst_141 {dimension_numbers = #tpu.dot_dimension_numbers<[1], [0], [0], [1], [0, 0, 1, 1], [], []>} : vector<1x12xf32>, vector<12x128xf32>, vector<1x128xf32> -> vector<1x128xf32>
    %208 = arith.addf %194, %207 : vector<1x128xf32>
    %c0_142 = arith.constant 0 : index
    %c0_143 = arith.constant 0 : index
    %c0_144 = arith.constant 0 : index
    %209 = vector.load %arg24[%c0_142, %c0_143, %c0_144] : memref<1x1x128xf32, #tpu.memory_space<vmem>>, vector<1x1x128xf32>
    %210 = vector.shape_cast %209 : vector<1x1x128xf32> to vector<1x128xf32>
    %211 = vector.shape_cast %204 : vector<1x128xf32> to vector<1x1x128xf32>
    tpu.vector_store %arg24[%c0_142, %c0_143, %c0_144], %211 {strides = array<i32>} : memref<1x1x128xf32, #tpu.memory_space<vmem>>, vector<1x1x128xf32>,
    %c0_145 = arith.constant 0 : index
    %c0_146 = arith.constant 0 : index
    %c0_147 = arith.constant 0 : index
    %212 = vector.load %arg25[%c0_145, %c0_146, %c0_147] : memref<1x1x128xf32, #tpu.memory_space<vmem>>, vector<1x1x128xf32>
    %213 = vector.shape_cast %212 : vector<1x1x128xf32> to vector<1x128xf32>
    %214 = vector.shape_cast %208 : vector<1x128xf32> to vector<1x1x128xf32>
    tpu.vector_store %arg25[%c0_145, %c0_146, %c0_147], %214 {strides = array<i32>} : memref<1x1x128xf32, #tpu.memory_space<vmem>>, vector<1x1x128xf32>,
    %c0_148 = arith.constant 0 : index
    %c0_149 = arith.constant 0 : index
    %c0_150 = arith.constant 0 : index
    %215 = vector.load %arg2[%c0_148, %c0_149, %c0_150] : memref<1x1x128xf32, #tpu.memory_space<vmem>>, vector<1x1x128xf32>
    %216 = vector.shape_cast %215 : vector<1x1x128xf32> to vector<1x128xf32>
    %cst_151 = arith.constant 5.000000e-01 : f32
    %217 = vector.broadcast %cst_151 : f32 to vector<1x128xf32>
    %218 = arith.mulf %217, %208 : vector<1x128xf32>
    %219 = math.exp %218 : vector<1x128xf32>
    %220 = arith.mulf %216, %219 : vector<1x128xf32>
    %221 = arith.addf %220, %204 : vector<1x128xf32>
    %222 = vector.extract_strided_slice %221 {offsets = [0, 0], sizes = [1, 6], strides = [1, 1]} : vector<1x128xf32> to vector<1x6xf32>
    %c0_152 = arith.constant 0 : index
    %c0_153 = arith.constant 0 : index
    %c0_154 = arith.constant 0 : index
    %223 = vector.load %arg3[%c0_152, %c0_153, %c0_154] : memref<1x1x6xf32, #tpu.memory_space<vmem>>, vector<1x1x6xf32>
    %224 = vector.shape_cast %223 : vector<1x1x6xf32> to vector<1x6xf32>
    %225 = tpu.iota {dimensions = array<i32: 0>} : vector<3x1xi32>
    %c0_155 = arith.constant 0 : index
    %c0_156 = arith.constant 0 : index
    %c0_157 = arith.constant 0 : index
    %226 = vector.load %arg14[%c0_155, %c0_156, %c0_157] : memref<3x6x12xf32, #tpu.memory_space<vmem>>, vector<1x6x12xf32>
    %227 = vector.shape_cast %226 : vector<1x6x12xf32> to vector<6x12xf32>
    %cst_158 = arith.constant dense<0.000000e+00> : vector<1x12xf32>
    %228 = tpu.matmul %222, %227, %cst_158 {dimension_numbers = #tpu.dot_dimension_numbers<[1], [0], [0], [1], [0, 0, 1, 1], [], []>} : vector<1x6xf32>, vector<6x12xf32>, vector<1x12xf32> -> vector<1x12xf32>
    %c0_159 = arith.constant 0 : index
    %c0_160 = arith.constant 0 : index
    %c0_161 = arith.constant 0 : index
    %229 = vector.load %arg15[%c0_159, %c0_160, %c0_161] : memref<3x6x12xf32, #tpu.memory_space<vmem>>, vector<1x6x12xf32>
    %230 = vector.shape_cast %229 : vector<1x6x12xf32> to vector<6x12xf32>
    %cst_162 = arith.constant dense<0.000000e+00> : vector<1x12xf32>
    %231 = tpu.matmul %224, %230, %cst_162 {dimension_numbers = #tpu.dot_dimension_numbers<[1], [0], [0], [1], [0, 0, 1, 1], [], []>} : vector<1x6xf32>, vector<6x12xf32>, vector<1x12xf32> -> vector<1x12xf32>
    %232 = arith.addf %228, %231 : vector<1x12xf32>
    %c0_163 = arith.constant 0 : index
    %c0_164 = arith.constant 0 : index
    %c0_165 = arith.constant 0 : index
    %233 = vector.load %arg16[%c0_163, %c0_164, %c0_165] : memref<3x1x12xf32, #tpu.memory_space<vmem>>, vector<1x1x12xf32>
    %234 = vector.shape_cast %233 : vector<1x1x12xf32> to vector<1x12xf32>
    %235 = arith.addf %232, %234 : vector<1x12xf32>
    %c0_i32_166 = arith.constant 0 : i32
    %236 = vector.broadcast %c0_i32_166 : i32 to vector<3x1xi32>
    %237 = arith.cmpi eq, %225, %236 : vector<3x1xi32>
    %cst_167 = arith.constant 1.000000e+00 : f32
    %cst_168 = arith.constant 0.000000e+00 : f32
    %238 = vector.broadcast %cst_167 : f32 to vector<3x1xf32>
    %239 = vector.broadcast %cst_168 : f32 to vector<3x1xf32>
    %240 = arith.select %237, %238, %239 : vector<3x1xi1>, vector<3x1xf32>
    %241 = vector.broadcast %240 : vector<3x1xf32> to vector<3x12xf32>
    %242 = vector.broadcast %235 : vector<1x12xf32> to vector<3x12xf32>
    %243 = arith.mulf %241, %242 : vector<3x12xf32>
    %c1_169 = arith.constant 1 : index
    %c0_170 = arith.constant 0 : index
    %c0_171 = arith.constant 0 : index
    %244 = vector.load %arg14[%c1_169, %c0_170, %c0_171] : memref<3x6x12xf32, #tpu.memory_space<vmem>>, vector<1x6x12xf32>
    %245 = vector.shape_cast %244 : vector<1x6x12xf32> to vector<6x12xf32>
    %cst_172 = arith.constant dense<0.000000e+00> : vector<1x12xf32>
    %246 = tpu.matmul %222, %245, %cst_172 {dimension_numbers = #tpu.dot_dimension_numbers<[1], [0], [0], [1], [0, 0, 1, 1], [], []>} : vector<1x6xf32>, vector<6x12xf32>, vector<1x12xf32> -> vector<1x12xf32>
    %c1_173 = arith.constant 1 : index
    %c0_174 = arith.constant 0 : index
    %c0_175 = arith.constant 0 : index
    %247 = vector.load %arg15[%c1_173, %c0_174, %c0_175] : memref<3x6x12xf32, #tpu.memory_space<vmem>>, vector<1x6x12xf32>
    %248 = vector.shape_cast %247 : vector<1x6x12xf32> to vector<6x12xf32>
    %cst_176 = arith.constant dense<0.000000e+00> : vector<1x12xf32>
    %249 = tpu.matmul %224, %248, %cst_176 {dimension_numbers = #tpu.dot_dimension_numbers<[1], [0], [0], [1], [0, 0, 1, 1], [], []>} : vector<1x6xf32>, vector<6x12xf32>, vector<1x12xf32> -> vector<1x12xf32>
    %250 = arith.addf %246, %249 : vector<1x12xf32>
    %c1_177 = arith.constant 1 : index
    %c0_178 = arith.constant 0 : index
    %c0_179 = arith.constant 0 : index
    %251 = vector.load %arg16[%c1_177, %c0_178, %c0_179] : memref<3x1x12xf32, #tpu.memory_space<vmem>>, vector<1x1x12xf32>
    %252 = vector.shape_cast %251 : vector<1x1x12xf32> to vector<1x12xf32>
    %253 = arith.addf %250, %252 : vector<1x12xf32>
    %c1_i32_180 = arith.constant 1 : i32
    %254 = vector.broadcast %c1_i32_180 : i32 to vector<3x1xi32>
    %255 = arith.cmpi eq, %225, %254 : vector<3x1xi32>
    %cst_181 = arith.constant 1.000000e+00 : f32
    %cst_182 = arith.constant 0.000000e+00 : f32
    %256 = vector.broadcast %cst_181 : f32 to vector<3x1xf32>
    %257 = vector.broadcast %cst_182 : f32 to vector<3x1xf32>
    %258 = arith.select %255, %256, %257 : vector<3x1xi1>, vector<3x1xf32>
    %259 = vector.broadcast %258 : vector<3x1xf32> to vector<3x12xf32>
    %260 = vector.broadcast %253 : vector<1x12xf32> to vector<3x12xf32>
    %261 = arith.mulf %259, %260 : vector<3x12xf32>
    %262 = arith.addf %243, %261 : vector<3x12xf32>
    %c2_183 = arith.constant 2 : index
    %c0_184 = arith.constant 0 : index
    %c0_185 = arith.constant 0 : index
    %263 = vector.load %arg14[%c2_183, %c0_184, %c0_185] : memref<3x6x12xf32, #tpu.memory_space<vmem>>, vector<1x6x12xf32>
    %264 = vector.shape_cast %263 : vector<1x6x12xf32> to vector<6x12xf32>
    %cst_186 = arith.constant dense<0.000000e+00> : vector<1x12xf32>
    %265 = tpu.matmul %222, %264, %cst_186 {dimension_numbers = #tpu.dot_dimension_numbers<[1], [0], [0], [1], [0, 0, 1, 1], [], []>} : vector<1x6xf32>, vector<6x12xf32>, vector<1x12xf32> -> vector<1x12xf32>
    %c2_187 = arith.constant 2 : index
    %c0_188 = arith.constant 0 : index
    %c0_189 = arith.constant 0 : index
    %266 = vector.load %arg15[%c2_187, %c0_188, %c0_189] : memref<3x6x12xf32, #tpu.memory_space<vmem>>, vector<1x6x12xf32>
    %267 = vector.shape_cast %266 : vector<1x6x12xf32> to vector<6x12xf32>
    %cst_190 = arith.constant dense<0.000000e+00> : vector<1x12xf32>
    %268 = tpu.matmul %224, %267, %cst_190 {dimension_numbers = #tpu.dot_dimension_numbers<[1], [0], [0], [1], [0, 0, 1, 1], [], []>} : vector<1x6xf32>, vector<6x12xf32>, vector<1x12xf32> -> vector<1x12xf32>
    %269 = arith.addf %265, %268 : vector<1x12xf32>
    %c2_191 = arith.constant 2 : index
    %c0_192 = arith.constant 0 : index
    %c0_193 = arith.constant 0 : index
    %270 = vector.load %arg16[%c2_191, %c0_192, %c0_193] : memref<3x1x12xf32, #tpu.memory_space<vmem>>, vector<1x1x12xf32>
    %271 = vector.shape_cast %270 : vector<1x1x12xf32> to vector<1x12xf32>
    %272 = arith.addf %269, %271 : vector<1x12xf32>
    %c2_i32_194 = arith.constant 2 : i32
    %273 = vector.broadcast %c2_i32_194 : i32 to vector<3x1xi32>
    %274 = arith.cmpi eq, %225, %273 : vector<3x1xi32>
    %cst_195 = arith.constant 1.000000e+00 : f32
    %cst_196 = arith.constant 0.000000e+00 : f32
    %275 = vector.broadcast %cst_195 : f32 to vector<3x1xf32>
    %276 = vector.broadcast %cst_196 : f32 to vector<3x1xf32>
    %277 = arith.select %274, %275, %276 : vector<3x1xi1>, vector<3x1xf32>
    %278 = vector.broadcast %277 : vector<3x1xf32> to vector<3x12xf32>
    %279 = vector.broadcast %272 : vector<1x12xf32> to vector<3x12xf32>
    %280 = arith.mulf %278, %279 : vector<3x12xf32>
    %281 = arith.addf %262, %280 : vector<3x12xf32>
    %282 = tpu.iota {dimensions = array<i32: 0>} : vector<8x3xi32>
    %283 = tpu.iota {dimensions = array<i32: 1>} : vector<8x3xi32>
    %c2_i32_197 = arith.constant 2 : i32
    %284 = vector.broadcast %c2_i32_197 : i32 to vector<8x3xi32>
    %285 = arith.muli %284, %283 : vector<8x3xi32>
    %c0_i32_198 = arith.constant 0 : i32
    %286 = vector.broadcast %c0_i32_198 : i32 to vector<8x3xi32>
    %287 = arith.addi %285, %286 : vector<8x3xi32>
    %288 = arith.cmpi eq, %282, %287 : vector<8x3xi32>
    %cst_199 = arith.constant 1.000000e+00 : f32
    %cst_200 = arith.constant 0.000000e+00 : f32
    %289 = vector.broadcast %cst_199 : f32 to vector<8x3xf32>
    %290 = vector.broadcast %cst_200 : f32 to vector<8x3xf32>
    %291 = arith.select %288, %289, %290 : vector<8x3xi1>, vector<8x3xf32>
    %c0_201 = arith.constant 0 : index
    %c0_202 = arith.constant 0 : index
    %c0_203 = arith.constant 0 : index
    %292 = vector.load %arg17[%c0_201, %c0_202, %c0_203] : memref<4x12x64xf32, #tpu.memory_space<vmem>>, vector<1x12x64xf32>
    %293 = vector.shape_cast %292 : vector<1x12x64xf32> to vector<12x64xf32>
    %cst_204 = arith.constant dense<0.000000e+00> : vector<3x64xf32>
    %294 = tpu.matmul %281, %293, %cst_204 {dimension_numbers = #tpu.dot_dimension_numbers<[1], [0], [0], [1], [0, 0, 1, 1], [], []>} : vector<3x12xf32>, vector<12x64xf32>, vector<3x64xf32> -> vector<3x64xf32>
    %cst_205 = arith.constant dense<0.000000e+00> : vector<8x64xf32>
    %295 = tpu.matmul %291, %294, %cst_205 {dimension_numbers = #tpu.dot_dimension_numbers<[1], [0], [0], [1], [0, 0, 1, 1], [], []>} : vector<8x3xf32>, vector<3x64xf32>, vector<8x64xf32> -> vector<8x64xf32>
    %c2_i32_206 = arith.constant 2 : i32
    %296 = vector.broadcast %c2_i32_206 : i32 to vector<8x3xi32>
    %297 = arith.muli %296, %283 : vector<8x3xi32>
    %c1_i32_207 = arith.constant 1 : i32
    %298 = vector.broadcast %c1_i32_207 : i32 to vector<8x3xi32>
    %299 = arith.addi %297, %298 : vector<8x3xi32>
    %300 = arith.cmpi eq, %282, %299 : vector<8x3xi32>
    %cst_208 = arith.constant 1.000000e+00 : f32
    %cst_209 = arith.constant 0.000000e+00 : f32
    %301 = vector.broadcast %cst_208 : f32 to vector<8x3xf32>
    %302 = vector.broadcast %cst_209 : f32 to vector<8x3xf32>
    %303 = arith.select %300, %301, %302 : vector<8x3xi1>, vector<8x3xf32>
    %c1_210 = arith.constant 1 : index
    %c0_211 = arith.constant 0 : index
    %c0_212 = arith.constant 0 : index
    %304 = vector.load %arg17[%c1_210, %c0_211, %c0_212] : memref<4x12x64xf32, #tpu.memory_space<vmem>>, vector<1x12x64xf32>
    %305 = vector.shape_cast %304 : vector<1x12x64xf32> to vector<12x64xf32>
    %cst_213 = arith.constant dense<0.000000e+00> : vector<3x64xf32>
    %306 = tpu.matmul %281, %305, %cst_213 {dimension_numbers = #tpu.dot_dimension_numbers<[1], [0], [0], [1], [0, 0, 1, 1], [], []>} : vector<3x12xf32>, vector<12x64xf32>, vector<3x64xf32> -> vector<3x64xf32>
    %cst_214 = arith.constant dense<0.000000e+00> : vector<8x64xf32>
    %307 = tpu.matmul %303, %306, %cst_214 {dimension_numbers = #tpu.dot_dimension_numbers<[1], [0], [0], [1], [0, 0, 1, 1], [], []>} : vector<8x3xf32>, vector<3x64xf32>, vector<8x64xf32> -> vector<8x64xf32>
    %308 = arith.addf %295, %307 : vector<8x64xf32>
    %c2_i32_215 = arith.constant 2 : i32
    %309 = vector.broadcast %c2_i32_215 : i32 to vector<8x3xi32>
    %310 = arith.muli %309, %283 : vector<8x3xi32>
    %c2_i32_216 = arith.constant 2 : i32
    %311 = vector.broadcast %c2_i32_216 : i32 to vector<8x3xi32>
    %312 = arith.addi %310, %311 : vector<8x3xi32>
    %313 = arith.cmpi eq, %282, %312 : vector<8x3xi32>
    %cst_217 = arith.constant 1.000000e+00 : f32
    %cst_218 = arith.constant 0.000000e+00 : f32
    %314 = vector.broadcast %cst_217 : f32 to vector<8x3xf32>
    %315 = vector.broadcast %cst_218 : f32 to vector<8x3xf32>
    %316 = arith.select %313, %314, %315 : vector<8x3xi1>, vector<8x3xf32>
    %c2_219 = arith.constant 2 : index
    %c0_220 = arith.constant 0 : index
    %c0_221 = arith.constant 0 : index
    %317 = vector.load %arg17[%c2_219, %c0_220, %c0_221] : memref<4x12x64xf32, #tpu.memory_space<vmem>>, vector<1x12x64xf32>
    %318 = vector.shape_cast %317 : vector<1x12x64xf32> to vector<12x64xf32>
    %cst_222 = arith.constant dense<0.000000e+00> : vector<3x64xf32>
    %319 = tpu.matmul %281, %318, %cst_222 {dimension_numbers = #tpu.dot_dimension_numbers<[1], [0], [0], [1], [0, 0, 1, 1], [], []>} : vector<3x12xf32>, vector<12x64xf32>, vector<3x64xf32> -> vector<3x64xf32>
    %cst_223 = arith.constant dense<0.000000e+00> : vector<8x64xf32>
    %320 = tpu.matmul %316, %319, %cst_223 {dimension_numbers = #tpu.dot_dimension_numbers<[1], [0], [0], [1], [0, 0, 1, 1], [], []>} : vector<8x3xf32>, vector<3x64xf32>, vector<8x64xf32> -> vector<8x64xf32>
    %321 = arith.addf %308, %320 : vector<8x64xf32>
    %c2_i32_224 = arith.constant 2 : i32
    %322 = vector.broadcast %c2_i32_224 : i32 to vector<8x3xi32>
    %323 = arith.muli %322, %283 : vector<8x3xi32>
    %c3_i32_225 = arith.constant 3 : i32
    %324 = vector.broadcast %c3_i32_225 : i32 to vector<8x3xi32>
    %325 = arith.addi %323, %324 : vector<8x3xi32>
    %326 = arith.cmpi eq, %282, %325 : vector<8x3xi32>
    %cst_226 = arith.constant 1.000000e+00 : f32
    %cst_227 = arith.constant 0.000000e+00 : f32
    %327 = vector.broadcast %cst_226 : f32 to vector<8x3xf32>
    %328 = vector.broadcast %cst_227 : f32 to vector<8x3xf32>
    %329 = arith.select %326, %327, %328 : vector<8x3xi1>, vector<8x3xf32>
    %c3_228 = arith.constant 3 : index
    %c0_229 = arith.constant 0 : index
    %c0_230 = arith.constant 0 : index
    %330 = vector.load %arg17[%c3_228, %c0_229, %c0_230] : memref<4x12x64xf32, #tpu.memory_space<vmem>>, vector<1x12x64xf32>
    %331 = vector.shape_cast %330 : vector<1x12x64xf32> to vector<12x64xf32>
    %cst_231 = arith.constant dense<0.000000e+00> : vector<3x64xf32>
    %332 = tpu.matmul %281, %331, %cst_231 {dimension_numbers = #tpu.dot_dimension_numbers<[1], [0], [0], [1], [0, 0, 1, 1], [], []>} : vector<3x12xf32>, vector<12x64xf32>, vector<3x64xf32> -> vector<3x64xf32>
    %cst_232 = arith.constant dense<0.000000e+00> : vector<8x64xf32>
    %333 = tpu.matmul %329, %332, %cst_232 {dimension_numbers = #tpu.dot_dimension_numbers<[1], [0], [0], [1], [0, 0, 1, 1], [], []>} : vector<8x3xf32>, vector<3x64xf32>, vector<8x64xf32> -> vector<8x64xf32>
    %334 = arith.addf %321, %333 : vector<8x64xf32>
    %c0_233 = arith.constant 0 : index
    %c0_234 = arith.constant 0 : index
    %335 = vector.load %arg18[%c0_233, %c0_234] : memref<1x64xf32, #tpu.memory_space<vmem>>, vector<1x64xf32>
    %336 = vector.broadcast %335 : vector<1x64xf32> to vector<8x64xf32>
    %337 = arith.addf %334, %336 : vector<8x64xf32>
    %cst_235 = arith.constant 0.000000e+00 : f32
    %338 = vector.broadcast %cst_235 : f32 to vector<8x64xf32>
    %339 = arith.maximumf %337, %338 : vector<8x64xf32>
    %340 = tpu.iota {dimensions = array<i32: 0>} : vector<18x8xi32>
    %341 = tpu.iota {dimensions = array<i32: 1>} : vector<18x8xi32>
    %c2_i32_236 = arith.constant 2 : i32
    %342 = vector.broadcast %c2_i32_236 : i32 to vector<18x8xi32>
    %343 = arith.muli %342, %341 : vector<18x8xi32>
    %c0_i32_237 = arith.constant 0 : i32
    %344 = vector.broadcast %c0_i32_237 : i32 to vector<18x8xi32>
    %345 = arith.addi %343, %344 : vector<18x8xi32>
    %346 = arith.cmpi eq, %340, %345 : vector<18x8xi32>
    %cst_238 = arith.constant 1.000000e+00 : f32
    %cst_239 = arith.constant 0.000000e+00 : f32
    %347 = vector.broadcast %cst_238 : f32 to vector<18x8xf32>
    %348 = vector.broadcast %cst_239 : f32 to vector<18x8xf32>
    %349 = arith.select %346, %347, %348 : vector<18x8xi1>, vector<18x8xf32>
    %c0_240 = arith.constant 0 : index
    %c0_241 = arith.constant 0 : index
    %c0_242 = arith.constant 0 : index
    %350 = vector.load %arg19[%c0_240, %c0_241, %c0_242] : memref<4x64x144xf32, #tpu.memory_space<vmem>>, vector<1x64x144xf32>
    %351 = vector.shape_cast %350 : vector<1x64x144xf32> to vector<64x144xf32>
    %cst_243 = arith.constant dense<0.000000e+00> : vector<8x144xf32>
    %352 = tpu.matmul %339, %351, %cst_243 {dimension_numbers = #tpu.dot_dimension_numbers<[1], [0], [0], [1], [0, 0, 1, 1], [], []>} : vector<8x64xf32>, vector<64x144xf32>, vector<8x144xf32> -> vector<8x144xf32>
    %cst_244 = arith.constant dense<0.000000e+00> : vector<18x144xf32>
    %353 = tpu.matmul %349, %352, %cst_244 {dimension_numbers = #tpu.dot_dimension_numbers<[1], [0], [0], [1], [0, 0, 1, 1], [], []>} : vector<18x8xf32>, vector<8x144xf32>, vector<18x144xf32> -> vector<18x144xf32>
    %c2_i32_245 = arith.constant 2 : i32
    %354 = vector.broadcast %c2_i32_245 : i32 to vector<18x8xi32>
    %355 = arith.muli %354, %341 : vector<18x8xi32>
    %c1_i32_246 = arith.constant 1 : i32
    %356 = vector.broadcast %c1_i32_246 : i32 to vector<18x8xi32>
    %357 = arith.addi %355, %356 : vector<18x8xi32>
    %358 = arith.cmpi eq, %340, %357 : vector<18x8xi32>
    %cst_247 = arith.constant 1.000000e+00 : f32
    %cst_248 = arith.constant 0.000000e+00 : f32
    %359 = vector.broadcast %cst_247 : f32 to vector<18x8xf32>
    %360 = vector.broadcast %cst_248 : f32 to vector<18x8xf32>
    %361 = arith.select %358, %359, %360 : vector<18x8xi1>, vector<18x8xf32>
    %c1_249 = arith.constant 1 : index
    %c0_250 = arith.constant 0 : index
    %c0_251 = arith.constant 0 : index
    %362 = vector.load %arg19[%c1_249, %c0_250, %c0_251] : memref<4x64x144xf32, #tpu.memory_space<vmem>>, vector<1x64x144xf32>
    %363 = vector.shape_cast %362 : vector<1x64x144xf32> to vector<64x144xf32>
    %cst_252 = arith.constant dense<0.000000e+00> : vector<8x144xf32>
    %364 = tpu.matmul %339, %363, %cst_252 {dimension_numbers = #tpu.dot_dimension_numbers<[1], [0], [0], [1], [0, 0, 1, 1], [], []>} : vector<8x64xf32>, vector<64x144xf32>, vector<8x144xf32> -> vector<8x144xf32>
    %cst_253 = arith.constant dense<0.000000e+00> : vector<18x144xf32>
    %365 = tpu.matmul %361, %364, %cst_253 {dimension_numbers = #tpu.dot_dimension_numbers<[1], [0], [0], [1], [0, 0, 1, 1], [], []>} : vector<18x8xf32>, vector<8x144xf32>, vector<18x144xf32> -> vector<18x144xf32>
    %366 = arith.addf %353, %365 : vector<18x144xf32>
    %c2_i32_254 = arith.constant 2 : i32
    %367 = vector.broadcast %c2_i32_254 : i32 to vector<18x8xi32>
    %368 = arith.muli %367, %341 : vector<18x8xi32>
    %c2_i32_255 = arith.constant 2 : i32
    %369 = vector.broadcast %c2_i32_255 : i32 to vector<18x8xi32>
    %370 = arith.addi %368, %369 : vector<18x8xi32>
    %371 = arith.cmpi eq, %340, %370 : vector<18x8xi32>
    %cst_256 = arith.constant 1.000000e+00 : f32
    %cst_257 = arith.constant 0.000000e+00 : f32
    %372 = vector.broadcast %cst_256 : f32 to vector<18x8xf32>
    %373 = vector.broadcast %cst_257 : f32 to vector<18x8xf32>
    %374 = arith.select %371, %372, %373 : vector<18x8xi1>, vector<18x8xf32>
    %c2_258 = arith.constant 2 : index
    %c0_259 = arith.constant 0 : index
    %c0_260 = arith.constant 0 : index
    %375 = vector.load %arg19[%c2_258, %c0_259, %c0_260] : memref<4x64x144xf32, #tpu.memory_space<vmem>>, vector<1x64x144xf32>
    %376 = vector.shape_cast %375 : vector<1x64x144xf32> to vector<64x144xf32>
    %cst_261 = arith.constant dense<0.000000e+00> : vector<8x144xf32>
    %377 = tpu.matmul %339, %376, %cst_261 {dimension_numbers = #tpu.dot_dimension_numbers<[1], [0], [0], [1], [0, 0, 1, 1], [], []>} : vector<8x64xf32>, vector<64x144xf32>, vector<8x144xf32> -> vector<8x144xf32>
    %cst_262 = arith.constant dense<0.000000e+00> : vector<18x144xf32>
    %378 = tpu.matmul %374, %377, %cst_262 {dimension_numbers = #tpu.dot_dimension_numbers<[1], [0], [0], [1], [0, 0, 1, 1], [], []>} : vector<18x8xf32>, vector<8x144xf32>, vector<18x144xf32> -> vector<18x144xf32>
    %379 = arith.addf %366, %378 : vector<18x144xf32>
    %c2_i32_263 = arith.constant 2 : i32
    %380 = vector.broadcast %c2_i32_263 : i32 to vector<18x8xi32>
    %381 = arith.muli %380, %341 : vector<18x8xi32>
    %c3_i32_264 = arith.constant 3 : i32
    %382 = vector.broadcast %c3_i32_264 : i32 to vector<18x8xi32>
    %383 = arith.addi %381, %382 : vector<18x8xi32>
    %384 = arith.cmpi eq, %340, %383 : vector<18x8xi32>
    %cst_265 = arith.constant 1.000000e+00 : f32
    %cst_266 = arith.constant 0.000000e+00 : f32
    %385 = vector.broadcast %cst_265 : f32 to vector<18x8xf32>
    %386 = vector.broadcast %cst_266 : f32 to vector<18x8xf32>
    %387 = arith.select %384, %385, %386 : vector<18x8xi1>, vector<18x8xf32>
    %c3_267 = arith.constant 3 : index
    %c0_268 = arith.constant 0 : index
    %c0_269 = arith.constant 0 : index
    %388 = vector.load %arg19[%c3_267, %c0_268, %c0_269] : memref<4x64x144xf32, #tpu.memory_space<vmem>>, vector<1x64x144xf32>
    %389 = vector.shape_cast %388 : vector<1x64x144xf32> to vector<64x144xf32>
    %cst_270 = arith.constant dense<0.000000e+00> : vector<8x144xf32>
    %390 = tpu.matmul %339, %389, %cst_270 {dimension_numbers = #tpu.dot_dimension_numbers<[1], [0], [0], [1], [0, 0, 1, 1], [], []>} : vector<8x64xf32>, vector<64x144xf32>, vector<8x144xf32> -> vector<8x144xf32>
    %cst_271 = arith.constant dense<0.000000e+00> : vector<18x144xf32>
    %391 = tpu.matmul %387, %390, %cst_271 {dimension_numbers = #tpu.dot_dimension_numbers<[1], [0], [0], [1], [0, 0, 1, 1], [], []>} : vector<18x8xf32>, vector<8x144xf32>, vector<18x144xf32> -> vector<18x144xf32>
    %392 = arith.addf %379, %391 : vector<18x144xf32>
    %c0_272 = arith.constant 0 : index
    %c0_273 = arith.constant 0 : index
    %393 = vector.load %arg20[%c0_272, %c0_273] : memref<1x144xf32, #tpu.memory_space<vmem>>, vector<1x144xf32>
    %394 = vector.broadcast %393 : vector<1x144xf32> to vector<18x144xf32>
    %395 = arith.addf %392, %394 : vector<18x144xf32>
    %cst_274 = arith.constant 0.000000e+00 : f32
    %396 = vector.broadcast %cst_274 : f32 to vector<18x144xf32>
    %397 = arith.maximumf %395, %396 : vector<18x144xf32>
    %398 = tpu.iota {dimensions = array<i32: 0>} : vector<20x18xi32>
    %399 = tpu.iota {dimensions = array<i32: 1>} : vector<20x18xi32>
    %c1_i32_275 = arith.constant 1 : i32
    %400 = vector.broadcast %c1_i32_275 : i32 to vector<20x18xi32>
    %401 = arith.muli %400, %399 : vector<20x18xi32>
    %c0_i32_276 = arith.constant 0 : i32
    %402 = vector.broadcast %c0_i32_276 : i32 to vector<20x18xi32>
    %403 = arith.addi %401, %402 : vector<20x18xi32>
    %404 = arith.cmpi eq, %398, %403 : vector<20x18xi32>
    %cst_277 = arith.constant 1.000000e+00 : f32
    %cst_278 = arith.constant 0.000000e+00 : f32
    %405 = vector.broadcast %cst_277 : f32 to vector<20x18xf32>
    %406 = vector.broadcast %cst_278 : f32 to vector<20x18xf32>
    %407 = arith.select %404, %405, %406 : vector<20x18xi1>, vector<20x18xf32>
    %c0_279 = arith.constant 0 : index
    %c0_280 = arith.constant 0 : index
    %c0_281 = arith.constant 0 : index
    %408 = vector.load %arg21[%c0_279, %c0_280, %c0_281] : memref<3x144x128xf32, #tpu.memory_space<vmem>>, vector<1x144x128xf32>
    %409 = vector.shape_cast %408 : vector<1x144x128xf32> to vector<144x128xf32>
    %cst_282 = arith.constant dense<0.000000e+00> : vector<18x128xf32>
    %410 = tpu.matmul %397, %409, %cst_282 {dimension_numbers = #tpu.dot_dimension_numbers<[1], [0], [0], [1], [0, 0, 1, 1], [], []>} : vector<18x144xf32>, vector<144x128xf32>, vector<18x128xf32> -> vector<18x128xf32>
    %cst_283 = arith.constant dense<0.000000e+00> : vector<20x128xf32>
    %411 = tpu.matmul %407, %410, %cst_283 {dimension_numbers = #tpu.dot_dimension_numbers<[1], [0], [0], [1], [0, 0, 1, 1], [], []>} : vector<20x18xf32>, vector<18x128xf32>, vector<20x128xf32> -> vector<20x128xf32>
    %c1_i32_284 = arith.constant 1 : i32
    %412 = vector.broadcast %c1_i32_284 : i32 to vector<20x18xi32>
    %413 = arith.muli %412, %399 : vector<20x18xi32>
    %c1_i32_285 = arith.constant 1 : i32
    %414 = vector.broadcast %c1_i32_285 : i32 to vector<20x18xi32>
    %415 = arith.addi %413, %414 : vector<20x18xi32>
    %416 = arith.cmpi eq, %398, %415 : vector<20x18xi32>
    %cst_286 = arith.constant 1.000000e+00 : f32
    %cst_287 = arith.constant 0.000000e+00 : f32
    %417 = vector.broadcast %cst_286 : f32 to vector<20x18xf32>
    %418 = vector.broadcast %cst_287 : f32 to vector<20x18xf32>
    %419 = arith.select %416, %417, %418 : vector<20x18xi1>, vector<20x18xf32>
    %c1_288 = arith.constant 1 : index
    %c0_289 = arith.constant 0 : index
    %c0_290 = arith.constant 0 : index
    %420 = vector.load %arg21[%c1_288, %c0_289, %c0_290] : memref<3x144x128xf32, #tpu.memory_space<vmem>>, vector<1x144x128xf32>
    %421 = vector.shape_cast %420 : vector<1x144x128xf32> to vector<144x128xf32>
    %cst_291 = arith.constant dense<0.000000e+00> : vector<18x128xf32>
    %422 = tpu.matmul %397, %421, %cst_291 {dimension_numbers = #tpu.dot_dimension_numbers<[1], [0], [0], [1], [0, 0, 1, 1], [], []>} : vector<18x144xf32>, vector<144x128xf32>, vector<18x128xf32> -> vector<18x128xf32>
    %cst_292 = arith.constant dense<0.000000e+00> : vector<20x128xf32>
    %423 = tpu.matmul %419, %422, %cst_292 {dimension_numbers = #tpu.dot_dimension_numbers<[1], [0], [0], [1], [0, 0, 1, 1], [], []>} : vector<20x18xf32>, vector<18x128xf32>, vector<20x128xf32> -> vector<20x128xf32>
    %424 = arith.addf %411, %423 : vector<20x128xf32>
    %c1_i32_293 = arith.constant 1 : i32
    %425 = vector.broadcast %c1_i32_293 : i32 to vector<20x18xi32>
    %426 = arith.muli %425, %399 : vector<20x18xi32>
    %c2_i32_294 = arith.constant 2 : i32
    %427 = vector.broadcast %c2_i32_294 : i32 to vector<20x18xi32>
    %428 = arith.addi %426, %427 : vector<20x18xi32>
    %429 = arith.cmpi eq, %398, %428 : vector<20x18xi32>
    %cst_295 = arith.constant 1.000000e+00 : f32
    %cst_296 = arith.constant 0.000000e+00 : f32
    %430 = vector.broadcast %cst_295 : f32 to vector<20x18xf32>
    %431 = vector.broadcast %cst_296 : f32 to vector<20x18xf32>
    %432 = arith.select %429, %430, %431 : vector<20x18xi1>, vector<20x18xf32>
    %c2_297 = arith.constant 2 : index
    %c0_298 = arith.constant 0 : index
    %c0_299 = arith.constant 0 : index
    %433 = vector.load %arg21[%c2_297, %c0_298, %c0_299] : memref<3x144x128xf32, #tpu.memory_space<vmem>>, vector<1x144x128xf32>
    %434 = vector.shape_cast %433 : vector<1x144x128xf32> to vector<144x128xf32>
    %cst_300 = arith.constant dense<0.000000e+00> : vector<18x128xf32>
    %435 = tpu.matmul %397, %434, %cst_300 {dimension_numbers = #tpu.dot_dimension_numbers<[1], [0], [0], [1], [0, 0, 1, 1], [], []>} : vector<18x144xf32>, vector<144x128xf32>, vector<18x128xf32> -> vector<18x128xf32>
    %cst_301 = arith.constant dense<0.000000e+00> : vector<20x128xf32>
    %436 = tpu.matmul %432, %435, %cst_301 {dimension_numbers = #tpu.dot_dimension_numbers<[1], [0], [0], [1], [0, 0, 1, 1], [], []>} : vector<20x18xf32>, vector<18x128xf32>, vector<20x128xf32> -> vector<20x128xf32>
    %437 = arith.addf %424, %436 : vector<20x128xf32>
    %c0_302 = arith.constant 0 : index
    %c0_303 = arith.constant 0 : index
    %438 = vector.load %arg22[%c0_302, %c0_303] : memref<1x128xf32, #tpu.memory_space<vmem>>, vector<1x128xf32>
    %439 = vector.broadcast %438 : vector<1x128xf32> to vector<20x128xf32>
    %440 = arith.addf %437, %439 : vector<20x128xf32>
    %c0_304 = arith.constant 0 : index
    %c0_305 = arith.constant 0 : index
    %c0_306 = arith.constant 0 : index
    %441 = vector.load %arg23[%c0_304, %c0_305, %c0_306] : memref<1x20x128xf32, #tpu.memory_space<vmem>>, vector<1x20x128xf32>
    %442 = vector.shape_cast %441 : vector<1x20x128xf32> to vector<20x128xf32>
    %443 = vector.shape_cast %440 : vector<20x128xf32> to vector<1x20x128xf32>
    tpu.vector_store %arg23[%c0_304, %c0_305, %c0_306], %443 {strides = array<i32>} : memref<1x20x128xf32, #tpu.memory_space<vmem>>, vector<1x20x128xf32>,
    return
  }
  func.func @transform_0(%arg0: i32) -> (i32, i32, i32) {
    %c0_i32 = arith.constant 0 : i32
    %c0_i32_0 = arith.constant 0 : i32
    %c0_i32_1 = arith.constant 0 : i32
    return %arg0, %c0_i32, %c0_i32_0 : i32, i32, i32
  }
  func.func @transform_1(%arg0: i32) -> (i32, i32, i32) {
    %c0_i32 = arith.constant 0 : i32
    %c0_i32_0 = arith.constant 0 : i32
    %c0_i32_1 = arith.constant 0 : i32
    return %arg0, %c0_i32, %c0_i32_0 : i32, i32, i32
  }
  func.func @transform_2(%arg0: i32) -> (i32, i32, i32) {
    %c0_i32 = arith.constant 0 : i32
    %c0_i32_0 = arith.constant 0 : i32
    %c0_i32_1 = arith.constant 0 : i32
    return %arg0, %c0_i32, %c0_i32_0 : i32, i32, i32
  }
  func.func @transform_3(%arg0: i32) -> (i32, i32, i32) {
    %c0_i32 = arith.constant 0 : i32
    %c0_i32_0 = arith.constant 0 : i32
    %c0_i32_1 = arith.constant 0 : i32
    %c0_i32_2 = arith.constant 0 : i32
    return %c0_i32, %c0_i32_0, %c0_i32_1 : i32, i32, i32
  }
  func.func @transform_4(%arg0: i32) -> (i32, i32) {
    %c0_i32 = arith.constant 0 : i32
    %c0_i32_0 = arith.constant 0 : i32
    %c0_i32_1 = arith.constant 0 : i32
    return %c0_i32, %c0_i32_0 : i32, i32
  }
  func.func @transform_5(%arg0: i32) -> (i32, i32, i32) {
    %c0_i32 = arith.constant 0 : i32
    %c0_i32_0 = arith.constant 0 : i32
    %c0_i32_1 = arith.constant 0 : i32
    %c0_i32_2 = arith.constant 0 : i32
    return %c0_i32, %c0_i32_0, %c0_i32_1 : i32, i32, i32
  }
  func.func @transform_6(%arg0: i32) -> (i32, i32) {
    %c0_i32 = arith.constant 0 : i32
    %c0_i32_0 = arith.constant 0 : i32
    %c0_i32_1 = arith.constant 0 : i32
    return %c0_i32, %c0_i32_0 : i32, i32
  }
  func.func @transform_7(%arg0: i32) -> (i32, i32, i32) {
    %c0_i32 = arith.constant 0 : i32
    %c0_i32_0 = arith.constant 0 : i32
    %c0_i32_1 = arith.constant 0 : i32
    %c0_i32_2 = arith.constant 0 : i32
    return %c0_i32, %c0_i32_0, %c0_i32_1 : i32, i32, i32
  }
  func.func @transform_8(%arg0: i32) -> (i32, i32) {
    %c0_i32 = arith.constant 0 : i32
    %c0_i32_0 = arith.constant 0 : i32
    %c0_i32_1 = arith.constant 0 : i32
    return %c0_i32, %c0_i32_0 : i32, i32
  }
  func.func @transform_9(%arg0: i32) -> (i32, i32, i32) {
    %c0_i32 = arith.constant 0 : i32
    %c0_i32_0 = arith.constant 0 : i32
    %c0_i32_1 = arith.constant 0 : i32
    %c0_i32_2 = arith.constant 0 : i32
    return %c0_i32, %c0_i32_0, %c0_i32_1 : i32, i32, i32
  }
  func.func @transform_10(%arg0: i32) -> (i32, i32) {
    %c0_i32 = arith.constant 0 : i32
    %c0_i32_0 = arith.constant 0 : i32
    %c0_i32_1 = arith.constant 0 : i32
    return %c0_i32, %c0_i32_0 : i32, i32
  }
  func.func @transform_11(%arg0: i32) -> (i32, i32, i32) {
    %c0_i32 = arith.constant 0 : i32
    %c0_i32_0 = arith.constant 0 : i32
    %c0_i32_1 = arith.constant 0 : i32
    %c0_i32_2 = arith.constant 0 : i32
    return %c0_i32, %c0_i32_0, %c0_i32_1 : i32, i32, i32
  }
  func.func @transform_12(%arg0: i32) -> (i32, i32) {
    %c0_i32 = arith.constant 0 : i32
    %c0_i32_0 = arith.constant 0 : i32
    %c0_i32_1 = arith.constant 0 : i32
    return %c0_i32, %c0_i32_0 : i32, i32
  }
  func.func @transform_13(%arg0: i32) -> (i32, i32, i32) {
    %c0_i32 = arith.constant 0 : i32
    %c0_i32_0 = arith.constant 0 : i32
    %c0_i32_1 = arith.constant 0 : i32
    %c0_i32_2 = arith.constant 0 : i32
    return %c0_i32, %c0_i32_0, %c0_i32_1 : i32, i32, i32
  }
  func.func @transform_14(%arg0: i32) -> (i32, i32, i32) {
    %c0_i32 = arith.constant 0 : i32
    %c0_i32_0 = arith.constant 0 : i32
    %c0_i32_1 = arith.constant 0 : i32
    %c0_i32_2 = arith.constant 0 : i32
    return %c0_i32, %c0_i32_0, %c0_i32_1 : i32, i32, i32
  }
  func.func @transform_15(%arg0: i32) -> (i32, i32, i32) {
    %c0_i32 = arith.constant 0 : i32
    %c0_i32_0 = arith.constant 0 : i32
    %c0_i32_1 = arith.constant 0 : i32
    %c0_i32_2 = arith.constant 0 : i32
    return %c0_i32, %c0_i32_0, %c0_i32_1 : i32, i32, i32
  }
  func.func @transform_16(%arg0: i32) -> (i32, i32, i32) {
    %c0_i32 = arith.constant 0 : i32
    %c0_i32_0 = arith.constant 0 : i32
    %c0_i32_1 = arith.constant 0 : i32
    %c0_i32_2 = arith.constant 0 : i32
    return %c0_i32, %c0_i32_0, %c0_i32_1 : i32, i32, i32
  }
  func.func @transform_17(%arg0: i32) -> (i32, i32) {
    %c0_i32 = arith.constant 0 : i32
    %c0_i32_0 = arith.constant 0 : i32
    %c0_i32_1 = arith.constant 0 : i32
    return %c0_i32, %c0_i32_0 : i32, i32
  }
  func.func @transform_18(%arg0: i32) -> (i32, i32, i32) {
    %c0_i32 = arith.constant 0 : i32
    %c0_i32_0 = arith.constant 0 : i32
    %c0_i32_1 = arith.constant 0 : i32
    %c0_i32_2 = arith.constant 0 : i32
    return %c0_i32, %c0_i32_0, %c0_i32_1 : i32, i32, i32
  }
  func.func @transform_19(%arg0: i32) -> (i32, i32) {
    %c0_i32 = arith.constant 0 : i32
    %c0_i32_0 = arith.constant 0 : i32
    %c0_i32_1 = arith.constant 0 : i32
    return %c0_i32, %c0_i32_0 : i32, i32
  }
  func.func @transform_20(%arg0: i32) -> (i32, i32, i32) {
    %c0_i32 = arith.constant 0 : i32
    %c0_i32_0 = arith.constant 0 : i32
    %c0_i32_1 = arith.constant 0 : i32
    %c0_i32_2 = arith.constant 0 : i32
    return %c0_i32, %c0_i32_0, %c0_i32_1 : i32, i32, i32
  }
  func.func @transform_21(%arg0: i32) -> (i32, i32) {
    %c0_i32 = arith.constant 0 : i32
    %c0_i32_0 = arith.constant 0 : i32
    %c0_i32_1 = arith.constant 0 : i32
    return %c0_i32, %c0_i32_0 : i32, i32
  }
  func.func @transform_22(%arg0: i32) -> (i32, i32, i32) {
    %c0_i32 = arith.constant 0 : i32
    %c0_i32_0 = arith.constant 0 : i32
    %c0_i32_1 = arith.constant 0 : i32
    return %arg0, %c0_i32, %c0_i32_0 : i32, i32, i32
  }
  func.func @transform_23(%arg0: i32) -> (i32, i32, i32) {
    %c0_i32 = arith.constant 0 : i32
    %c0_i32_0 = arith.constant 0 : i32
    %c0_i32_1 = arith.constant 0 : i32
    return %arg0, %c0_i32, %c0_i32_0 : i32, i32, i32
  }
  func.func @transform_24(%arg0: i32) -> (i32, i32, i32) {
    %c0_i32 = arith.constant 0 : i32
    %c0_i32_0 = arith.constant 0 : i32
    %c0_i32_1 = arith.constant 0 : i32
    return %arg0, %c0_i32, %c0_i32_0 : i32, i32, i32
  }
}

</mosaic_0001>

<llo_original>
// kernel: cluster_vae_forward.1
$region0: #{cluster_vae_forward.1}
  #allocation0 [shape = 'u32[]', space=smem, size = 0x4, offset = 0x4, fixed_abs, tag = 'smem constant byte address 0x4 - core index']
  #allocation1 [shape = 'u32[144,128]{1,0:T(1,128)}', space=vmem, size = 0x12000, scoped, tag = 'internal scratch']
  %s0 = inlined_call_operand.vmem [shape: f32[2,20,128], index: 0, kind: input, shape index: {}]
  %s1 = inlined_call_operand.vmem [shape: f32[2,1,128], index: 1, kind: input, shape index: {}]
  %s2 = inlined_call_operand.vmem [shape: f32[2,1,6], index: 2, kind: input, shape index: {}]
  %s3 = inlined_call_operand.vmem [shape: f32[3,20,288], index: 3, kind: input, shape index: {}]
  %s4 = inlined_call_operand.vmem [shape: f32[1,288], index: 4, kind: input, shape index: {}]
  %s5 = inlined_call_operand.vmem [shape: f32[4,288,64], index: 5, kind: input, shape index: {}]
  %s6 = inlined_call_operand.vmem [shape: f32[1,64], index: 6, kind: input, shape index: {}]
  %s7 = inlined_call_operand.vmem [shape: f32[4,64,12], index: 7, kind: input, shape index: {}]
  %s8 = inlined_call_operand.vmem [shape: f32[1,12], index: 8, kind: input, shape index: {}]
  %s9 = inlined_call_operand.vmem [shape: f32[3,12,128], index: 9, kind: input, shape index: {}]
  %s10 = inlined_call_operand.vmem [shape: f32[1,128], index: 10, kind: input, shape index: {}]
  %s11 = inlined_call_operand.vmem [shape: f32[3,12,128], index: 11, kind: input, shape index: {}]
  %s12 = inlined_call_operand.vmem [shape: f32[1,128], index: 12, kind: input, shape index: {}]
  %s13 = inlined_call_operand.vmem [shape: f32[3,6,12], index: 13, kind: input, shape index: {}]
  %s14 = inlined_call_operand.vmem [shape: f32[3,6,12], index: 14, kind: input, shape index: {}]
  %s15 = inlined_call_operand.vmem [shape: f32[3,1,12], index: 15, kind: input, shape index: {}]
  %s16 = inlined_call_operand.vmem [shape: f32[4,12,64], index: 16, kind: input, shape index: {}]
  %s17 = inlined_call_operand.vmem [shape: f32[1,64], index: 17, kind: input, shape index: {}]
  %s18 = inlined_call_operand.vmem [shape: f32[4,64,144], index: 18, kind: input, shape index: {}]
  %s19 = inlined_call_operand.vmem [shape: f32[1,144], index: 19, kind: input, shape index: {}]
  %s20 = inlined_call_operand.vmem [shape: f32[3,144,128], index: 20, kind: input, shape index: {}]
  %s21 = inlined_call_operand.vmem [shape: f32[1,128], index: 21, kind: input, shape index: {}]
  %s22 = inlined_call_operand.vmem [shape: f32[2,20,128], index: 22, kind: output, shape index: {0}]
  %s23 = inlined_call_operand.hbm [shape: f32[2,1,128], index: 23, kind: output, shape index: {1}]
  %s24 = inlined_call_operand.hbm [shape: f32[2,1,128], index: 24, kind: output, shape index: {2}]
  %25 = xla_tuple %s22, %s23, %s24
  %s26 = sld [smem:[#allocation0]]
  $region137: #{cluster_vae_forward.1} parent=0
    _
  %s28 = ssub.s32 1, %s26
  %s29 = scalar_select 0, %s28, %s26
  $region1: #{cluster_vae_forward.1} parent=0
    #allocation2 [shape = 'u8[1024]{0}', space=vmem, size = 0x400, scoped, tag = 'output window, operand 1']
    #allocation3 [shape = 's32[2]{0}', space=sflag, size = 0x8, scoped, tag = 'scoped memory for cluster_vae_forward.1']
    #allocation4 [shape = 'u8[1024]{0}', space=vmem, size = 0x400, scoped, tag = 'output window, operand 2']
    #allocation5 [shape = 's32[2]{0}', space=sflag, size = 0x8, scoped, tag = 'scoped memory for cluster_vae_forward.1']
    %30 = vsyncpa [#allocation3], 0
    %s31 = scalar_lea.sflag [#allocation3], 1
    %32 = vsyncpa %s31, 0
    %33 = vsyncpa [#allocation5], 0
    %s34 = scalar_lea.sflag [#allocation5], 1
    %35 = vsyncpa %s34, 0
    loop: start=0, step=1, limit=4
    $region2: #{cluster_vae_forward.1} parent=1 // loop_pre_header
      _
    $region3: #{cluster_vae_forward.1} parent=1 // loop_header
      %s37 = sphi 0, %s41
      %p38 = scmp.ge.s32.totalorder %s37, 4
      %s47 = sphi 0, %s49
      %s50 = sphi 0, %s47
      %s51 = sphi 0, %s50
      %s67 = sphi 0, %s51
      %s73 = sphi 0, %s75
      %s76 = sphi 0, %s73
      %s77 = sphi 0, %s76
      %s93 = sphi 0, %s77
      %s99 = sphi 0, %s101
      %s102 = sphi 0, %s99
      %s103 = sphi 0, %s102
      %s119 = sphi 0, %s103
      %s123 = sphi 0, %s123
      %s125 = sphi 0, %s123
      %s126 = sphi 0, %s125
      %s140 = sphi 0, %s126
      %s144 = sphi 0, %s144
      %s146 = sphi 0, %s144
      %s147 = sphi 0, %s146
      %s161 = sphi 0, %s147
      %s165 = sphi 0, %s165
      %s167 = sphi 0, %s165
      %s168 = sphi 0, %s167
      %s182 = sphi 0, %s168
      %s186 = sphi 0, %s186
      %s188 = sphi 0, %s186
      %s189 = sphi 0, %s188
      %s203 = sphi 0, %s189
      %s207 = sphi 0, %s207
      %s209 = sphi 0, %s207
      %s210 = sphi 0, %s209
      %s224 = sphi 0, %s210
      %s228 = sphi 0, %s228
      %s230 = sphi 0, %s228
      %s231 = sphi 0, %s230
      %s245 = sphi 0, %s231
      %s249 = sphi 0, %s249
      %s251 = sphi 0, %s249
      %s252 = sphi 0, %s251
      %s266 = sphi 0, %s252
      %s270 = sphi 0, %s270
      %s272 = sphi 0, %s270
      %s273 = sphi 0, %s272
      %s287 = sphi 0, %s273
      %s291 = sphi 0, %s291
      %s293 = sphi 0, %s291
      %s294 = sphi 0, %s293
      %s308 = sphi 0, %s294
      %s312 = sphi 0, %s312
      %s314 = sphi 0, %s312
      %s315 = sphi 0, %s314
      %s329 = sphi 0, %s315
      %s333 = sphi 0, %s333
      %s335 = sphi 0, %s333
      %s336 = sphi 0, %s335
      %s350 = sphi 0, %s336
      %s354 = sphi 0, %s354
      %s356 = sphi 0, %s354
      %s357 = sphi 0, %s356
      %s371 = sphi 0, %s357
      %s375 = sphi 0, %s375
      %s377 = sphi 0, %s375
      %s378 = sphi 0, %s377
      %s392 = sphi 0, %s378
      %s396 = sphi 0, %s396
      %s398 = sphi 0, %s396
      %s399 = sphi 0, %s398
      %s413 = sphi 0, %s399
      %s417 = sphi 0, %s417
      %s419 = sphi 0, %s417
      %s420 = sphi 0, %s419
      %s434 = sphi 0, %s420
      %s438 = sphi 0, %s438
      %s440 = sphi 0, %s438
      %s441 = sphi 0, %s440
      %s455 = sphi 0, %s441
      %s459 = sphi 0, %s459
      %s461 = sphi 0, %s459
      %s462 = sphi 0, %s461
      %s476 = sphi 0, %s462
      %s480 = sphi 0, %s480
      %s482 = sphi 0, %s480
      %s483 = sphi 0, %s482
      %s497 = sphi 0, %s483
      %s501 = sphi 0, %s501
      %s503 = sphi 0, %s501
      %s504 = sphi 0, %s503
      %s518 = sphi 0, %s504
      %s524 = sphi 0, %s526
      %s527 = sphi 0, %s524
      %s528 = sphi 0, %s527
      %s544 = sphi 0, %s528
      %s550 = sphi 0, %s552
      %s553 = sphi 0, %s550
      %s554 = sphi 0, %s553
      %s570 = sphi 0, %s554
      %s576 = sphi 0, %s578
      %s579 = sphi 0, %s576
      %s580 = sphi 0, %s579
      %s596 = sphi 0, %s580
    $region4: #{cluster_vae_forward.1} parent=1 // loop_header_branch
      %40 = sbr.rel (%p38) target = $region8
    $region5: #{cluster_vae_forward.1} parent=1 // loop_body
      %s42 = ssub.s32 %s37, 1
      %s43 = ssub.s32 %s37, 2
      %s44 = sadd.s32 %s37, 1
      %s45 = ssub.s32 %s37, %s44
      %p46 = scmp.eq.s32.totalorder %s45, 0
      %s48 = sadd.s32 %s47, 1
      %s49 = scalar_select %p46, %s47, %s48
      %p52 = pneg %p46
      %p53 = scmp.eq.s32.totalorder %s37, 1
      %p54 = por %p52, %p53
      %p55 = scmp.ne.s32.totalorder %s47, %s50
      %p56 = scmp.eq.s32.totalorder %s37, 0
      %p57 = por %p55, %p56
      %p58 = scmp.ne.s32.totalorder %s47, %s50
      %p59 = scmp.eq.s32.totalorder %s42, 1
      %p60 = por %p58, %p59
      %p61 = scmp.ne.s32.totalorder %s50, %s51
      %p62 = scmp.eq.s32.totalorder %s42, 0
      %p63 = por %p61, %p62
      %p64 = scmp.ne.s32.totalorder %s50, %s51
      %p65 = scmp.eq.s32.totalorder %s43, 1
      %p66 = por %p64, %p65
      %p68 = scmp.ne.s32.totalorder %s51, %s67
      %p69 = scmp.eq.s32.totalorder %s43, 0
      %p70 = por %p68, %p69
      %s71 = ssub.s32 %s37, %s44
      %p72 = scmp.eq.s32.totalorder %s71, 0
      %s74 = sadd.s32 %s73, 1
      %s75 = scalar_select %p72, %s73, %s74
      %p78 = pneg %p72
      %p79 = scmp.eq.s32.totalorder %s37, 1
      %p80 = por %p78, %p79
      %p81 = scmp.ne.s32.totalorder %s73, %s76
      %p82 = scmp.eq.s32.totalorder %s37, 0
      %p83 = por %p81, %p82
      %p84 = scmp.ne.s32.totalorder %s73, %s76
      %p85 = scmp.eq.s32.totalorder %s42, 1
      %p86 = por %p84, %p85
      %p87 = scmp.ne.s32.totalorder %s76, %s77
      %p88 = scmp.eq.s32.totalorder %s42, 0
      %p89 = por %p87, %p88
      %p90 = scmp.ne.s32.totalorder %s76, %s77
      %p91 = scmp.eq.s32.totalorder %s43, 1
      %p92 = por %p90, %p91
      %p94 = scmp.ne.s32.totalorder %s77, %s93
      %p95 = scmp.eq.s32.totalorder %s43, 0
      %p96 = por %p94, %p95
      %s97 = ssub.s32 %s37, %s44
      %p98 = scmp.eq.s32.totalorder %s97, 0
      %s100 = sadd.s32 %s99, 1
      %s101 = scalar_select %p98, %s99, %s100
      %p104 = pneg %p98
      %p105 = scmp.eq.s32.totalorder %s37, 1
      %p106 = por %p104, %p105
      %p107 = scmp.ne.s32.totalorder %s99, %s102
      %p108 = scmp.eq.s32.totalorder %s37, 0
      %p109 = por %p107, %p108
      %p110 = scmp.ne.s32.totalorder %s99, %s102
      %p111 = scmp.eq.s32.totalorder %s42, 1
      %p112 = por %p110, %p111
      %p113 = scmp.ne.s32.totalorder %s102, %s103
      %p114 = scmp.eq.s32.totalorder %s42, 0
      %p115 = por %p113, %p114
      %p116 = scmp.ne.s32.totalorder %s102, %s103
      %p117 = scmp.eq.s32.totalorder %s43, 1
      %p118 = por %p116, %p117
      %p120 = scmp.ne.s32.totalorder %s103, %s119
      %p121 = scmp.eq.s32.totalorder %s43, 0
      %p122 = por %p120, %p121
      %s124 = sadd.s32 %s123, 1
      %p127 = scmp.eq.s32.totalorder %s37, 1
      %p128 = scmp.ne.s32.totalorder %s123, %s125
      %p129 = scmp.eq.s32.totalorder %s37, 0
      %p130 = por %p128, %p129
      %p131 = scmp.ne.s32.totalorder %s123, %s125
      %p132 = scmp.eq.s32.totalorder %s42, 1
      %p133 = por %p131, %p132
      %p134 = scmp.ne.s32.totalorder %s125, %s126
      %p135 = scmp.eq.s32.totalorder %s42, 0
      %p136 = por %p134, %p135
      %p137 = scmp.ne.s32.totalorder %s125, %s126
      %p138 = scmp.eq.s32.totalorder %s43, 1
      %p139 = por %p137, %p138
      %p141 = scmp.ne.s32.totalorder %s126, %s140
      %p142 = scmp.eq.s32.totalorder %s43, 0
      %p143 = por %p141, %p142
      %s145 = sadd.s32 %s144, 1
      %p148 = scmp.eq.s32.totalorder %s37, 1
      %p149 = scmp.ne.s32.totalorder %s144, %s146
      %p150 = scmp.eq.s32.totalorder %s37, 0
      %p151 = por %p149, %p150
      %p152 = scmp.ne.s32.totalorder %s144, %s146
      %p153 = scmp.eq.s32.totalorder %s42, 1
      %p154 = por %p152, %p153
      %p155 = scmp.ne.s32.totalorder %s146, %s147
      %p156 = scmp.eq.s32.totalorder %s42, 0
      %p157 = por %p155, %p156
      %p158 = scmp.ne.s32.totalorder %s146, %s147
      %p159 = scmp.eq.s32.totalorder %s43, 1
      %p160 = por %p158, %p159
      %p162 = scmp.ne.s32.totalorder %s147, %s161
      %p163 = scmp.eq.s32.totalorder %s43, 0
      %p164 = por %p162, %p163
      %s166 = sadd.s32 %s165, 1
      %p169 = scmp.eq.s32.totalorder %s37, 1
      %p170 = scmp.ne.s32.totalorder %s165, %s167
      %p171 = scmp.eq.s32.totalorder %s37, 0
      %p172 = por %p170, %p171
      %p173 = scmp.ne.s32.totalorder %s165, %s167
      %p174 = scmp.eq.s32.totalorder %s42, 1
      %p175 = por %p173, %p174
      %p176 = scmp.ne.s32.totalorder %s167, %s168
      %p177 = scmp.eq.s32.totalorder %s42, 0
      %p178 = por %p176, %p177
      %p179 = scmp.ne.s32.totalorder %s167, %s168
      %p180 = scmp.eq.s32.totalorder %s43, 1
      %p181 = por %p179, %p180
      %p183 = scmp.ne.s32.totalorder %s168, %s182
      %p184 = scmp.eq.s32.totalorder %s43, 0
      %p185 = por %p183, %p184
      %s187 = sadd.s32 %s186, 1
      %p190 = scmp.eq.s32.totalorder %s37, 1
      %p191 = scmp.ne.s32.totalorder %s186, %s188
      %p192 = scmp.eq.s32.totalorder %s37, 0
      %p193 = por %p191, %p192
      %p194 = scmp.ne.s32.totalorder %s186, %s188
      %p195 = scmp.eq.s32.totalorder %s42, 1
      %p196 = por %p194, %p195
      %p197 = scmp.ne.s32.totalorder %s188, %s189
      %p198 = scmp.eq.s32.totalorder %s42, 0
      %p199 = por %p197, %p198
      %p200 = scmp.ne.s32.totalorder %s188, %s189
      %p201 = scmp.eq.s32.totalorder %s43, 1
      %p202 = por %p200, %p201
      %p204 = scmp.ne.s32.totalorder %s189, %s203
      %p205 = scmp.eq.s32.totalorder %s43, 0
      %p206 = por %p204, %p205
      %s208 = sadd.s32 %s207, 1
      %p211 = scmp.eq.s32.totalorder %s37, 1
      %p212 = scmp.ne.s32.totalorder %s207, %s209
      %p213 = scmp.eq.s32.totalorder %s37, 0
      %p214 = por %p212, %p213
      %p215 = scmp.ne.s32.totalorder %s207, %s209
      %p216 = scmp.eq.s32.totalorder %s42, 1
      %p217 = por %p215, %p216
      %p218 = scmp.ne.s32.totalorder %s209, %s210
      %p219 = scmp.eq.s32.totalorder %s42, 0
      %p220 = por %p218, %p219
      %p221 = scmp.ne.s32.totalorder %s209, %s210
      %p222 = scmp.eq.s32.totalorder %s43, 1
      %p223 = por %p221, %p222
      %p225 = scmp.ne.s32.totalorder %s210, %s224
      %p226 = scmp.eq.s32.totalorder %s43, 0
      %p227 = por %p225, %p226
      %s229 = sadd.s32 %s228, 1
      %p232 = scmp.eq.s32.totalorder %s37, 1
      %p233 = scmp.ne.s32.totalorder %s228, %s230
      %p234 = scmp.eq.s32.totalorder %s37, 0
      %p235 = por %p233, %p234
      %p236 = scmp.ne.s32.totalorder %s228, %s230
      %p237 = scmp.eq.s32.totalorder %s42, 1
      %p238 = por %p236, %p237
      %p239 = scmp.ne.s32.totalorder %s230, %s231
      %p240 = scmp.eq.s32.totalorder %s42, 0
      %p241 = por %p239, %p240
      %p242 = scmp.ne.s32.totalorder %s230, %s231
      %p243 = scmp.eq.s32.totalorder %s43, 1
      %p244 = por %p242, %p243
      %p246 = scmp.ne.s32.totalorder %s231, %s245
      %p247 = scmp.eq.s32.totalorder %s43, 0
      %p248 = por %p246, %p247
      %s250 = sadd.s32 %s249, 1
      %p253 = scmp.eq.s32.totalorder %s37, 1
      %p254 = scmp.ne.s32.totalorder %s249, %s251
      %p255 = scmp.eq.s32.totalorder %s37, 0
      %p256 = por %p254, %p255
      %p257 = scmp.ne.s32.totalorder %s249, %s251
      %p258 = scmp.eq.s32.totalorder %s42, 1
      %p259 = por %p257, %p258
      %p260 = scmp.ne.s32.totalorder %s251, %s252
      %p261 = scmp.eq.s32.totalorder %s42, 0
      %p262 = por %p260, %p261
      %p263 = scmp.ne.s32.totalorder %s251, %s252
      %p264 = scmp.eq.s32.totalorder %s43, 1
      %p265 = por %p263, %p264
      %p267 = scmp.ne.s32.totalorder %s252, %s266
      %p268 = scmp.eq.s32.totalorder %s43, 0
      %p269 = por %p267, %p268
      %s271 = sadd.s32 %s270, 1
      %p274 = scmp.eq.s32.totalorder %s37, 1
      %p275 = scmp.ne.s32.totalorder %s270, %s272
      %p276 = scmp.eq.s32.totalorder %s37, 0
      %p277 = por %p275, %p276
      %p278 = scmp.ne.s32.totalorder %s270, %s272
      %p279 = scmp.eq.s32.totalorder %s42, 1
      %p280 = por %p278, %p279
      %p281 = scmp.ne.s32.totalorder %s272, %s273
      %p282 = scmp.eq.s32.totalorder %s42, 0
      %p283 = por %p281, %p282
      %p284 = scmp.ne.s32.totalorder %s272, %s273
      %p285 = scmp.eq.s32.totalorder %s43, 1
      %p286 = por %p284, %p285
      %p288 = scmp.ne.s32.totalorder %s273, %s287
      %p289 = scmp.eq.s32.totalorder %s43, 0
      %p290 = por %p288, %p289
      %s292 = sadd.s32 %s291, 1
      %p295 = scmp.eq.s32.totalorder %s37, 1
      %p296 = scmp.ne.s32.totalorder %s291, %s293
      %p297 = scmp.eq.s32.totalorder %s37, 0
      %p298 = por %p296, %p297
      %p299 = scmp.ne.s32.totalorder %s291, %s293
      %p300 = scmp.eq.s32.totalorder %s42, 1
      %p301 = por %p299, %p300
      %p302 = scmp.ne.s32.totalorder %s293, %s294
      %p303 = scmp.eq.s32.totalorder %s42, 0
      %p304 = por %p302, %p303
      %p305 = scmp.ne.s32.totalorder %s293, %s294
      %p306 = scmp.eq.s32.totalorder %s43, 1
      %p307 = por %p305, %p306
      %p309 = scmp.ne.s32.totalorder %s294, %s308
      %p310 = scmp.eq.s32.totalorder %s43, 0
      %p311 = por %p309, %p310
      %s313 = sadd.s32 %s312, 1
      %p316 = scmp.eq.s32.totalorder %s37, 1
      %p317 = scmp.ne.s32.totalorder %s312, %s314
      %p318 = scmp.eq.s32.totalorder %s37, 0
      %p319 = por %p317, %p318
      %p320 = scmp.ne.s32.totalorder %s312, %s314
      %p321 = scmp.eq.s32.totalorder %s42, 1
      %p322 = por %p320, %p321
      %p323 = scmp.ne.s32.totalorder %s314, %s315
      %p324 = scmp.eq.s32.totalorder %s42, 0
      %p325 = por %p323, %p324
      %p326 = scmp.ne.s32.totalorder %s314, %s315
      %p327 = scmp.eq.s32.totalorder %s43, 1
      %p328 = por %p326, %p327
      %p330 = scmp.ne.s32.totalorder %s315, %s329
      %p331 = scmp.eq.s32.totalorder %s43, 0
      %p332 = por %p330, %p331
      %s334 = sadd.s32 %s333, 1
      %p337 = scmp.eq.s32.totalorder %s37, 1
      %p338 = scmp.ne.s32.totalorder %s333, %s335
      %p339 = scmp.eq.s32.totalorder %s37, 0
      %p340 = por %p338, %p339
      %p341 = scmp.ne.s32.totalorder %s333, %s335
      %p342 = scmp.eq.s32.totalorder %s42, 1
      %p343 = por %p341, %p342
      %p344 = scmp.ne.s32.totalorder %s335, %s336
      %p345 = scmp.eq.s32.totalorder %s42, 0
      %p346 = por %p344, %p345
      %p347 = scmp.ne.s32.totalorder %s335, %s336
      %p348 = scmp.eq.s32.totalorder %s43, 1
      %p349 = por %p347, %p348
      %p351 = scmp.ne.s32.totalorder %s336, %s350
      %p352 = scmp.eq.s32.totalorder %s43, 0
      %p353 = por %p351, %p352
      %s355 = sadd.s32 %s354, 1
      %p358 = scmp.eq.s32.totalorder %s37, 1
      %p359 = scmp.ne.s32.totalorder %s354, %s356
      %p360 = scmp.eq.s32.totalorder %s37, 0
      %p361 = por %p359, %p360
      %p362 = scmp.ne.s32.totalorder %s354, %s356
      %p363 = scmp.eq.s32.totalorder %s42, 1
      %p364 = por %p362, %p363
      %p365 = scmp.ne.s32.totalorder %s356, %s357
      %p366 = scmp.eq.s32.totalorder %s42, 0
      %p367 = por %p365, %p366
      %p368 = scmp.ne.s32.totalorder %s356, %s357
      %p369 = scmp.eq.s32.totalorder %s43, 1
      %p370 = por %p368, %p369
      %p372 = scmp.ne.s32.totalorder %s357, %s371
      %p373 = scmp.eq.s32.totalorder %s43, 0
      %p374 = por %p372, %p373
      %s376 = sadd.s32 %s375, 1
      %p379 = scmp.eq.s32.totalorder %s37, 1
      %p380 = scmp.ne.s32.totalorder %s375, %s377
      %p381 = scmp.eq.s32.totalorder %s37, 0
      %p382 = por %p380, %p381
      %p383 = scmp.ne.s32.totalorder %s375, %s377
      %p384 = scmp.eq.s32.totalorder %s42, 1
      %p385 = por %p383, %p384
      %p386 = scmp.ne.s32.totalorder %s377, %s378
      %p387 = scmp.eq.s32.totalorder %s42, 0
      %p388 = por %p386, %p387
      %p389 = scmp.ne.s32.totalorder %s377, %s378
      %p390 = scmp.eq.s32.totalorder %s43, 1
      %p391 = por %p389, %p390
      %p393 = scmp.ne.s32.totalorder %s378, %s392
      %p394 = scmp.eq.s32.totalorder %s43, 0
      %p395 = por %p393, %p394
      %s397 = sadd.s32 %s396, 1
      %p400 = scmp.eq.s32.totalorder %s37, 1
      %p401 = scmp.ne.s32.totalorder %s396, %s398
      %p402 = scmp.eq.s32.totalorder %s37, 0
      %p403 = por %p401, %p402
      %p404 = scmp.ne.s32.totalorder %s396, %s398
      %p405 = scmp.eq.s32.totalorder %s42, 1
      %p406 = por %p404, %p405
      %p407 = scmp.ne.s32.totalorder %s398, %s399
      %p408 = scmp.eq.s32.totalorder %s42, 0
      %p409 = por %p407, %p408
      %p410 = scmp.ne.s32.totalorder %s398, %s399
      %p411 = scmp.eq.s32.totalorder %s43, 1
      %p412 = por %p410, %p411
      %p414 = scmp.ne.s32.totalorder %s399, %s413
      %p415 = scmp.eq.s32.totalorder %s43, 0
      %p416 = por %p414, %p415
      %s418 = sadd.s32 %s417, 1
      %p421 = scmp.eq.s32.totalorder %s37, 1
      %p422 = scmp.ne.s32.totalorder %s417, %s419
      %p423 = scmp.eq.s32.totalorder %s37, 0
      %p424 = por %p422, %p423
      %p425 = scmp.ne.s32.totalorder %s417, %s419
      %p426 = scmp.eq.s32.totalorder %s42, 1
      %p427 = por %p425, %p426
      %p428 = scmp.ne.s32.totalorder %s419, %s420
      %p429 = scmp.eq.s32.totalorder %s42, 0
      %p430 = por %p428, %p429
      %p431 = scmp.ne.s32.totalorder %s419, %s420
      %p432 = scmp.eq.s32.totalorder %s43, 1
      %p433 = por %p431, %p432
      %p435 = scmp.ne.s32.totalorder %s420, %s434
      %p436 = scmp.eq.s32.totalorder %s43, 0
      %p437 = por %p435, %p436
      %s439 = sadd.s32 %s438, 1
      %p442 = scmp.eq.s32.totalorder %s37, 1
      %p443 = scmp.ne.s32.totalorder %s438, %s440
      %p444 = scmp.eq.s32.totalorder %s37, 0
      %p445 = por %p443, %p444
      %p446 = scmp.ne.s32.totalorder %s438, %s440
      %p447 = scmp.eq.s32.totalorder %s42, 1
      %p448 = por %p446, %p447
      %p449 = scmp.ne.s32.totalorder %s440, %s441
      %p450 = scmp.eq.s32.totalorder %s42, 0
      %p451 = por %p449, %p450
      %p452 = scmp.ne.s32.totalorder %s440, %s441
      %p453 = scmp.eq.s32.totalorder %s43, 1
      %p454 = por %p452, %p453
      %p456 = scmp.ne.s32.totalorder %s441, %s455
      %p457 = scmp.eq.s32.totalorder %s43, 0
      %p458 = por %p456, %p457
      %s460 = sadd.s32 %s459, 1
      %p463 = scmp.eq.s32.totalorder %s37, 1
      %p464 = scmp.ne.s32.totalorder %s459, %s461
      %p465 = scmp.eq.s32.totalorder %s37, 0
      %p466 = por %p464, %p465
      %p467 = scmp.ne.s32.totalorder %s459, %s461
      %p468 = scmp.eq.s32.totalorder %s42, 1
      %p469 = por %p467, %p468
      %p470 = scmp.ne.s32.totalorder %s461, %s462
      %p471 = scmp.eq.s32.totalorder %s42, 0
      %p472 = por %p470, %p471
      %p473 = scmp.ne.s32.totalorder %s461, %s462
      %p474 = scmp.eq.s32.totalorder %s43, 1
      %p475 = por %p473, %p474
      %p477 = scmp.ne.s32.totalorder %s462, %s476
      %p478 = scmp.eq.s32.totalorder %s43, 0
      %p479 = por %p477, %p478
      %s481 = sadd.s32 %s480, 1
      %p484 = scmp.eq.s32.totalorder %s37, 1
      %p485 = scmp.ne.s32.totalorder %s480, %s482
      %p486 = scmp.eq.s32.totalorder %s37, 0
      %p487 = por %p485, %p486
      %p488 = scmp.ne.s32.totalorder %s480, %s482
      %p489 = scmp.eq.s32.totalorder %s42, 1
      %p490 = por %p488, %p489
      %p491 = scmp.ne.s32.totalorder %s482, %s483
      %p492 = scmp.eq.s32.totalorder %s42, 0
      %p493 = por %p491, %p492
      %p494 = scmp.ne.s32.totalorder %s482, %s483
      %p495 = scmp.eq.s32.totalorder %s43, 1
      %p496 = por %p494, %p495
      %p498 = scmp.ne.s32.totalorder %s483, %s497
      %p499 = scmp.eq.s32.totalorder %s43, 0
      %p500 = por %p498, %p499
      %s502 = sadd.s32 %s501, 1
      %p505 = scmp.eq.s32.totalorder %s37, 1
      %p506 = scmp.ne.s32.totalorder %s501, %s503
      %p507 = scmp.eq.s32.totalorder %s37, 0
      %p508 = por %p506, %p507
      %p509 = scmp.ne.s32.totalorder %s501, %s503
      %p510 = scmp.eq.s32.totalorder %s42, 1
      %p511 = por %p509, %p510
      %p512 = scmp.ne.s32.totalorder %s503, %s504
      %p513 = scmp.eq.s32.totalorder %s42, 0
      %p514 = por %p512, %p513
      %p515 = scmp.ne.s32.totalorder %s503, %s504
      %p516 = scmp.eq.s32.totalorder %s43, 1
      %p517 = por %p515, %p516
      %p519 = scmp.ne.s32.totalorder %s504, %s518
      %p520 = scmp.eq.s32.totalorder %s43, 0
      %p521 = por %p519, %p520
      %s522 = ssub.s32 %s37, %s44
      %p523 = scmp.eq.s32.totalorder %s522, 0
      %s525 = sadd.s32 %s524, 1
      %s526 = scalar_select %p523, %s524, %s525
      %p529 = pneg %p523
      %p530 = scmp.eq.s32.totalorder %s37, 1
      %p531 = por %p529, %p530
      %p532 = scmp.ne.s32.totalorder %s524, %s527
      %p533 = scmp.eq.s32.totalorder %s37, 0
      %p534 = por %p532, %p533
      %p535 = scmp.ne.s32.totalorder %s524, %s527
      %p536 = scmp.eq.s32.totalorder %s42, 1
      %p537 = por %p535, %p536
      %p538 = scmp.ne.s32.totalorder %s527, %s528
      %p539 = scmp.eq.s32.totalorder %s42, 0
      %p540 = por %p538, %p539
      %p541 = scmp.ne.s32.totalorder %s527, %s528
      %p542 = scmp.eq.s32.totalorder %s43, 1
      %p543 = por %p541, %p542
      %p545 = scmp.ne.s32.totalorder %s528, %s544
      %p546 = scmp.eq.s32.totalorder %s43, 0
      %p547 = por %p545, %p546
      %s548 = ssub.s32 %s37, %s44
      %p549 = scmp.eq.s32.totalorder %s548, 0
      %s551 = sadd.s32 %s550, 1
      %s552 = scalar_select %p549, %s550, %s551
      %p555 = pneg %p549
      %p556 = scmp.eq.s32.totalorder %s37, 1
      %p557 = por %p555, %p556
      %p558 = scmp.ne.s32.totalorder %s550, %s553
      %p559 = scmp.eq.s32.totalorder %s37, 0
      %p560 = por %p558, %p559
      %p561 = scmp.ne.s32.totalorder %s550, %s553
      %p562 = scmp.eq.s32.totalorder %s42, 1
      %p563 = por %p561, %p562
      %p564 = scmp.ne.s32.totalorder %s553, %s554
      %p565 = scmp.eq.s32.totalorder %s42, 0
      %p566 = por %p564, %p565
      %p567 = scmp.ne.s32.totalorder %s553, %s554
      %p568 = scmp.eq.s32.totalorder %s43, 1
      %p569 = por %p567, %p568
      %p571 = scmp.ne.s32.totalorder %s554, %s570
      %p572 = scmp.eq.s32.totalorder %s43, 0
      %p573 = por %p571, %p572
      %s574 = ssub.s32 %s37, %s44
      %p575 = scmp.eq.s32.totalorder %s574, 0
      %s577 = sadd.s32 %s576, 1
      %s578 = scalar_select %p575, %s576, %s577
      %p581 = pneg %p575
      %p582 = scmp.eq.s32.totalorder %s37, 1
      %p583 = por %p581, %p582
      %p584 = scmp.ne.s32.totalorder %s576, %s579
      %p585 = scmp.eq.s32.totalorder %s37, 0
      %p586 = por %p584, %p585
      %p587 = scmp.ne.s32.totalorder %s576, %s579
      %p588 = scmp.eq.s32.totalorder %s42, 1
      %p589 = por %p587, %p588
      %p590 = scmp.ne.s32.totalorder %s579, %s580
      %p591 = scmp.eq.s32.totalorder %s42, 0
      %p592 = por %p590, %p591
      %p593 = scmp.ne.s32.totalorder %s579, %s580
      %p594 = scmp.eq.s32.totalorder %s43, 1
      %p595 = por %p593, %p594
      %p597 = scmp.ne.s32.totalorder %s580, %s596
      %p598 = scmp.eq.s32.totalorder %s43, 0
      %p599 = por %p597, %p598
      %p600 = scmp.le.s32.totalorder 1, %s37
      %p601 = scmp.lt.s32.totalorder %s37, 3
      %p602 = pnand %p600, %p601
      %p603 = pneg %p602
      // Predicated region
      $region9: #{cluster_vae_forward.1} parent=5 // pred_check
        _
      $region10: #{cluster_vae_forward.1} parent=5 // pred_check_branch
        %605 = sbr.rel (%p602) target = $region12
      $region11: #{cluster_vae_forward.1} parent=5 // pred_region
        %s606 = ssub.s32 %s37, 1
        // Predicated region
        $region13: #{cluster_vae_forward.1} parent=11 // pred_check
          %p607 = pneg %p136
        $region14: #{cluster_vae_forward.1} parent=11 // pred_check_branch
          %609 = sbr.rel (%p607) target = $region16
        $region15: #{cluster_vae_forward.1} parent=11 // pred_region
          _
        $region16: #{cluster_vae_forward.1} parent=11 // pred_fallthru
          _
        // Predicated region
        $region17: #{cluster_vae_forward.1} parent=11 // pred_check
          %p610 = pneg %p157
        $region18: #{cluster_vae_forward.1} parent=11 // pred_check_branch
          %612 = sbr.rel (%p610) target = $region20
        $region19: #{cluster_vae_forward.1} parent=11 // pred_region
          _
        $region20: #{cluster_vae_forward.1} parent=11 // pred_fallthru
          _
        // Predicated region
        $region21: #{cluster_vae_forward.1} parent=11 // pred_check
          %p613 = pneg %p178
        $region22: #{cluster_vae_forward.1} parent=11 // pred_check_branch
          %615 = sbr.rel (%p613) target = $region24
        $region23: #{cluster_vae_forward.1} parent=11 // pred_region
          _
        $region24: #{cluster_vae_forward.1} parent=11 // pred_fallthru
          _
        // Predicated region
        $region25: #{cluster_vae_forward.1} parent=11 // pred_check
          %p616 = pneg %p199
        $region26: #{cluster_vae_forward.1} parent=11 // pred_check_branch
          %618 = sbr.rel (%p616) target = $region28
        $region27: #{cluster_vae_forward.1} parent=11 // pred_region
          _
        $region28: #{cluster_vae_forward.1} parent=11 // pred_fallthru
          _
        // Predicated region
        $region29: #{cluster_vae_forward.1} parent=11 // pred_check
          %p619 = pneg %p220
        $region30: #{cluster_vae_forward.1} parent=11 // pred_check_branch
          %621 = sbr.rel (%p619) target = $region32
        $region31: #{cluster_vae_forward.1} parent=11 // pred_region
          _
        $region32: #{cluster_vae_forward.1} parent=11 // pred_fallthru
          _
        // Predicated region
        $region33: #{cluster_vae_forward.1} parent=11 // pred_check
          %p622 = pneg %p241
        $region34: #{cluster_vae_forward.1} parent=11 // pred_check_branch
          %624 = sbr.rel (%p622) target = $region36
        $region35: #{cluster_vae_forward.1} parent=11 // pred_region
          _
        $region36: #{cluster_vae_forward.1} parent=11 // pred_fallthru
          _
        // Predicated region
        $region37: #{cluster_vae_forward.1} parent=11 // pred_check
          %p625 = pneg %p262
        $region38: #{cluster_vae_forward.1} parent=11 // pred_check_branch
          %627 = sbr.rel (%p625) target = $region40
        $region39: #{cluster_vae_forward.1} parent=11 // pred_region
          _
        $region40: #{cluster_vae_forward.1} parent=11 // pred_fallthru
          _
        // Predicated region
        $region41: #{cluster_vae_forward.1} parent=11 // pred_check
          %p628 = pneg %p283
        $region42: #{cluster_vae_forward.1} parent=11 // pred_check_branch
          %630 = sbr.rel (%p628) target = $region44
        $region43: #{cluster_vae_forward.1} parent=11 // pred_region
          _
        $region44: #{cluster_vae_forward.1} parent=11 // pred_fallthru
          _
        // Predicated region
        $region45: #{cluster_vae_forward.1} parent=11 // pred_check
          %p631 = pneg %p304
        $region46: #{cluster_vae_forward.1} parent=11 // pred_check_branch
          %633 = sbr.rel (%p631) target = $region48
        $region47: #{cluster_vae_forward.1} parent=11 // pred_region
          _
        $region48: #{cluster_vae_forward.1} parent=11 // pred_fallthru
          _
        // Predicated region
        $region49: #{cluster_vae_forward.1} parent=11 // pred_check
          %p634 = pneg %p325
        $region50: #{cluster_vae_forward.1} parent=11 // pred_check_branch
          %636 = sbr.rel (%p634) target = $region52
        $region51: #{cluster_vae_forward.1} parent=11 // pred_region
          _
        $region52: #{cluster_vae_forward.1} parent=11 // pred_fallthru
          _
        // Predicated region
        $region53: #{cluster_vae_forward.1} parent=11 // pred_check
          %p637 = pneg %p346
        $region54: #{cluster_vae_forward.1} parent=11 // pred_check_branch
          %639 = sbr.rel (%p637) target = $region56
        $region55: #{cluster_vae_forward.1} parent=11 // pred_region
          _
        $region56: #{cluster_vae_forward.1} parent=11 // pred_fallthru
          _
        // Predicated region
        $region57: #{cluster_vae_forward.1} parent=11 // pred_check
          %p640 = pneg %p367
        $region58: #{cluster_vae_forward.1} parent=11 // pred_check_branch
          %642 = sbr.rel (%p640) target = $region60
        $region59: #{cluster_vae_forward.1} parent=11 // pred_region
          _
        $region60: #{cluster_vae_forward.1} parent=11 // pred_fallthru
          _
        // Predicated region
        $region61: #{cluster_vae_forward.1} parent=11 // pred_check
          %p643 = pneg %p388
        $region62: #{cluster_vae_forward.1} parent=11 // pred_check_branch
          %645 = sbr.rel (%p643) target = $region64
        $region63: #{cluster_vae_forward.1} parent=11 // pred_region
          _
        $region64: #{cluster_vae_forward.1} parent=11 // pred_fallthru
          _
        // Predicated region
        $region65: #{cluster_vae_forward.1} parent=11 // pred_check
          %p646 = pneg %p409
        $region66: #{cluster_vae_forward.1} parent=11 // pred_check_branch
          %648 = sbr.rel (%p646) target = $region68
        $region67: #{cluster_vae_forward.1} parent=11 // pred_region
          _
        $region68: #{cluster_vae_forward.1} parent=11 // pred_fallthru
          _
        // Predicated region
        $region69: #{cluster_vae_forward.1} parent=11 // pred_check
          %p649 = pneg %p430
        $region70: #{cluster_vae_forward.1} parent=11 // pred_check_branch
          %651 = sbr.rel (%p649) target = $region72
        $region71: #{cluster_vae_forward.1} parent=11 // pred_region
          _
        $region72: #{cluster_vae_forward.1} parent=11 // pred_fallthru
          _
        // Predicated region
        $region73: #{cluster_vae_forward.1} parent=11 // pred_check
          %p652 = pneg %p451
        $region74: #{cluster_vae_forward.1} parent=11 // pred_check_branch
          %654 = sbr.rel (%p652) target = $region76
        $region75: #{cluster_vae_forward.1} parent=11 // pred_region
          _
        $region76: #{cluster_vae_forward.1} parent=11 // pred_fallthru
          _
        // Predicated region
        $region77: #{cluster_vae_forward.1} parent=11 // pred_check
          %p655 = pneg %p472
        $region78: #{cluster_vae_forward.1} parent=11 // pred_check_branch
          %657 = sbr.rel (%p655) target = $region80
        $region79: #{cluster_vae_forward.1} parent=11 // pred_region
          _
        $region80: #{cluster_vae_forward.1} parent=11 // pred_fallthru
          _
        // Predicated region
        $region81: #{cluster_vae_forward.1} parent=11 // pred_check
          %p658 = pneg %p493
        $region82: #{cluster_vae_forward.1} parent=11 // pred_check_branch
          %660 = sbr.rel (%p658) target = $region84
        $region83: #{cluster_vae_forward.1} parent=11 // pred_region
          _
        $region84: #{cluster_vae_forward.1} parent=11 // pred_fallthru
          _
        // Predicated region
        $region85: #{cluster_vae_forward.1} parent=11 // pred_check
          %p661 = pneg %p514
        $region86: #{cluster_vae_forward.1} parent=11 // pred_check_branch
          %663 = sbr.rel (%p661) target = $region88
        $region87: #{cluster_vae_forward.1} parent=11 // pred_region
          _
        $region88: #{cluster_vae_forward.1} parent=11 // pred_fallthru
          _
      $region12: #{cluster_vae_forward.1} parent=5 // pred_fallthru
        _
      %p664 = scmp.lt.s32.totalorder %s37, 2
      // Predicated region
      $region89: #{cluster_vae_forward.1} parent=5 // pred_check
        %p665 = pneg %p664
      $region90: #{cluster_vae_forward.1} parent=5 // pred_check_branch
        %667 = sbr.rel (%p665) target = $region92
      $region91: #{cluster_vae_forward.1} parent=5 // pred_region
        // Predicated region
        $region93: #{cluster_vae_forward.1} parent=91 // pred_check
          %p668 = pneg %p57
        $region94: #{cluster_vae_forward.1} parent=91 // pred_check_branch
          %670 = sbr.rel (%p668) target = $region96
        $region95: #{cluster_vae_forward.1} parent=91 // pred_region
          %p671 = scmp.lt.s32.totalorder %s37, 1
          %s672 = scalar_select %p671, %s37, 1
          %s673 = smul.addr %s672, 3
          %s674 = smul.addr %s673, 8
          %s675 = scalar_lea.vmem %s0, %s674
        $region96: #{cluster_vae_forward.1} parent=91 // pred_fallthru
          _
        // Predicated region
        $region97: #{cluster_vae_forward.1} parent=91 // pred_check
          %p676 = pneg %p83
        $region98: #{cluster_vae_forward.1} parent=91 // pred_check_branch
          %678 = sbr.rel (%p676) target = $region100
        $region99: #{cluster_vae_forward.1} parent=91 // pred_region
          %p679 = scmp.lt.s32.totalorder %s37, 1
          %s680 = scalar_select %p679, %s37, 1
          %s681 = scalar_lea.vmem %s1, %s680
        $region100: #{cluster_vae_forward.1} parent=91 // pred_fallthru
          _
        // Predicated region
        $region101: #{cluster_vae_forward.1} parent=91 // pred_check
          %p682 = pneg %p109
        $region102: #{cluster_vae_forward.1} parent=91 // pred_check_branch
          %684 = sbr.rel (%p682) target = $region104
        $region103: #{cluster_vae_forward.1} parent=91 // pred_region
          %p685 = scmp.lt.s32.totalorder %s37, 1
          %s686 = scalar_select %p685, %s37, 1
          %s687 = scalar_lea.vmem %s2, %s686
        $region104: #{cluster_vae_forward.1} parent=91 // pred_fallthru
          _
      $region92: #{cluster_vae_forward.1} parent=5 // pred_fallthru
        _
      %p688 = scmp.le.s32.totalorder 1, %s37
      %p689 = scmp.lt.s32.totalorder %s37, 3
      %p690 = pnand %p688, %p689
      %p691 = pneg %p690
      // Predicated region
      $region105: #{cluster_vae_forward.1} parent=5 // pred_check
        _
      $region106: #{cluster_vae_forward.1} parent=5 // pred_check_branch
        %693 = sbr.rel (%p690) target = $region108
      $region107: #{cluster_vae_forward.1} parent=5 // pred_region
        %s694 = ssub.s32 %s37, 1
        %p695 = scmp.lt.s32.totalorder %s42, 1
        %s696 = scalar_select %p695, %s42, 1
        %s697 = smul.addr %s696, 3
        %s698 = smul.addr %s697, 8
        %s699 = scalar_lea.vmem %s0, %s698
        %p700 = pneg %p63
        %p701 = pneg %p60
        %p702 = scmp.lt.s32.totalorder %s42, 1
        %s703 = scalar_select %p702, %s42, 1
        %s704 = scalar_lea.vmem %s1, %s703
        %p705 = pneg %p89
        %p706 = pneg %p86
        %p707 = scmp.lt.s32.totalorder %s42, 1
        %s708 = scalar_select %p707, %s42, 1
        %s709 = scalar_lea.vmem %s2, %s708
        %p710 = pneg %p115
        %p711 = pneg %p112
        %p712 = pneg %p136
        %p713 = pneg %p133
        %p714 = pneg %p157
        %p715 = pneg %p154
        %p716 = pneg %p178
        %p717 = pneg %p175
        %p718 = pneg %p199
        %p719 = pneg %p196
        %p720 = pneg %p220
        %p721 = pneg %p217
        %p722 = pneg %p241
        %p723 = pneg %p238
        %p724 = pneg %p262
        %p725 = pneg %p259
        %p726 = pneg %p283
        %p727 = pneg %p280
        %p728 = pneg %p304
        %p729 = pneg %p301
        %p730 = pneg %p325
        %p731 = pneg %p322
        %p732 = pneg %p346
        %p733 = pneg %p343
        %p734 = pneg %p367
        %p735 = pneg %p364
        %p736 = pneg %p388
        %p737 = pneg %p385
        %p738 = pneg %p409
        %p739 = pneg %p406
        %p740 = pneg %p430
        %p741 = pneg %p427
        %p742 = pneg %p451
        %p743 = pneg %p448
        %p744 = pneg %p472
        %p745 = pneg %p469
        %p746 = pneg %p493
        %p747 = pneg %p490
        %p748 = pneg %p514
        %p749 = pneg %p511
        %p750 = pneg %p540
        %p751 = pneg %p537
        %p752 = scmp.lt.s32.totalorder %s42, 1
        %s753 = scalar_select %p752, %s42, 1
        %s754 = smul.addr %s753, 3
        %s755 = smul.addr %s754, 8
        %s756 = scalar_lea.vmem %s22, %s755
        %p757 = pneg %p566
        %p758 = pneg %p563
        %s759 = sand.u32 %s553, 1
        %s760 = scalar_lea.sflag [#allocation3], %s759
        %s761 = sand.u32 %s553, 1
        %s762 = scalar_lea.vmem [#allocation2], %s761
        %p763 = pneg %p592
        %p764 = pneg %p589
        %s765 = sand.u32 %s579, 1
        %s766 = scalar_lea.sflag [#allocation5], %s765
        %s767 = sand.u32 %s579, 1
        %s768 = scalar_lea.vmem [#allocation4], %s767
        %p769 = scmp.lt.s32.totalorder %s42, 1
        %s770 = scalar_select %p769, %s42, 1
        %s771 = smul.addr %s770, 3
        %s772 = smul.addr %s771, 8
        %s773 = scalar_lea.vmem %s0, %s772
        %p774 = scmp.lt.s32.totalorder %s42, 1
        %s775 = scalar_select %p774, %s42, 1
        %s776 = scalar_lea.vmem %s1, %s775
        %p777 = scmp.lt.s32.totalorder %s42, 1
        %s778 = scalar_select %p777, %s42, 1
        %s779 = scalar_lea.vmem %s2, %s778
        %p780 = scmp.lt.s32.totalorder %s42, 1
        %s781 = scalar_select %p780, %s42, 1
        %s782 = smul.addr %s781, 3
        %s783 = smul.addr %s782, 8
        %s784 = scalar_lea.vmem %s22, %s783
        %v785 = vld [vmem:[%s773] sm:$0xff]
        %v786 = vld [vmem:[%s773 + $0x8] sm:$0xff]
        %v787 = vld [vmem:[%s773 + $0x10] sm:$0xf]
        %v788 = vlaneseq
        %v789 = vshrl.u32 %v788, 7
        %v790 = vadd.s32 %v789, 8
        %v791 = vadd.s32 %v789, 16
        %v792 = vlaneseq
        %v793 = vand.u32 %v792, 127
        %vm794 = vcmp.eq.s32.totalorder %v793, %v789
        %vm795 = vcmp.eq.s32.totalorder %v793, %v790
        %vm796 = vcmp.eq.s32.totalorder %v793, %v791
        %v797 = vsel %vm794, 1.0, 0.0
        %v798 = vsel %vm795, 1.0, 0.0
        %v799 = vsel %vm796, 1.0, 0.0
        %vm800 = vcmask 162816
        %v802 = vsel %vm800, %v797, 0
        %v805 = vsel %vm800, %v798, 0
        %v808 = vsel %vm800, %v799, 0
        %vm810 = vcmask 1043456
        %v812 = vsel %vm810, %v787, 0
        %814 = vmatprep.subr.mxu0 0.0
        %815 = vmatpush1.msra.mxu0 %v785
        %816 = vmatprep.subr.mxu0 0.0
        %817 = vmatpush1.msra.mxu0 %v786
        %818 = vmatprep.subr.mxu0 0.0
        %819 = vmatpush1.msra.mxu0 %v812
        %820 = vmatprep.subr.mxu0 0.0
        %821 = vmatpush1.msra.mxu0 0.0
        %822 = vmatprep.subr.mxu0 0.0
        %823 = vmatpush1.msra.mxu0 0.0
        %824 = vmatprep.subr.mxu0 0.0
        %825 = vmatpush1.msra.mxu0 0.0
        %826 = vmatprep.subr.mxu0 0.0
        %827 = vmatpush1.msra.mxu0 0.0
        %828 = vmatprep.subr.mxu0 0.0
        %829 = vmatpush1.msra.mxu0 0.0
        %830 = vmatprep.subr.mxu0 0.0
        %831 = vmatpush1.msra.mxu0 0.0
        %832 = vmatprep.subr.mxu0 0.0
        %833 = vmatpush1.msra.mxu0 0.0
        %834 = vmatprep.subr.mxu0 0.0
        %835 = vmatpush1.msra.mxu0 0.0
        %836 = vmatprep.subr.mxu0 0.0
        %837 = vmatpush1.msra.mxu0 0.0
        %838 = vmatprep.subr.mxu0 0.0
        %839 = vmatpush1.msra.mxu0 0.0
        %840 = vmatprep.subr.mxu0 0.0
        %841 = vmatpush1.msra.mxu0 0.0
        %842 = vmatprep.subr.mxu0 0.0
        %843 = vmatpush1.msra.mxu0 0.0
        %844 = vmatprep.subr.mxu0 0.0
        %845 = vmatpush1.msra.mxu0 0.0
        %846 = vmatprep.subr.mxu0 0.0
        %847 = vmatpush1.msra.mxu0 0.0
        %848 = vmatprep.subr.mxu0 0.0
        %849 = vmatpush1.msra.mxu0 0.0
        %850 = vmatprep.subr.mxu0 0.0
        %851 = vmatpush1.msra.mxu0 0.0
        %852 = vmatprep.subr.mxu0 0.0
        %853 = vmatpush1.msra.mxu0 0.0
        %854 = vmatprep.subr.mxu0 0.0
        %855 = vmatpush1.msra.mxu0 0.0
        %856 = vmatprep.subr.mxu0 0.0
        %857 = vmatpush1.msra.mxu0 0.0
        %858 = vmatprep.subr.mxu0 0.0
        %859 = vmatpush1.msra.mxu0 0.0
        %860 = vmatprep.subr.mxu0 0.0
        %861 = vmatpush1.msra.mxu0 0.0
        %862 = vmatprep.subr.mxu0 0.0
        %863 = vmatpush1.msra.mxu0 0.0
        %864 = vmatprep.subr.mxu0 0.0
        %865 = vmatpush1.msra.mxu0 0.0
        %866 = vmatprep.subr.mxu0 0.0
        %867 = vmatpush1.msra.mxu0 0.0
        %868 = vmatprep.subr.mxu0 0.0
        %869 = vmatpush1.msra.mxu0 0.0
        %870 = vmatprep.subr.mxu0 0.0
        %871 = vmatpush1.msra.mxu0 0.0
        %872 = vmatprep.subr.mxu0 0.0
        %873 = vmatpush1.msra.mxu0 0.0
        %874 = vmatprep.subr.mxu0 0.0
        %875 = vmatpush1.msra.mxu0 0.0
        %876 = vmatprep.subr.mxu0 0.0
        %877 = vmatpush1.msra.mxu0 0.0
        %878 = vmatprep.mubr.f32.mxu0 0.0
        %879 = vmatmul.mubr.f32.gmra.mrb[0].mxu0 %v802
        %v880 = vpop.f32.mrb[0].mxu0
        %v881 = vadd.f32 0.0, %v880
        %v882 = vpop.f32.mrb[0].mxu0
        %883 = vmatprep.mubr.f32.mxu0 0.0
        %884 = vmatmul.mubr.f32.gmra.mrb[0].mxu0 %v805
        %v885 = vpop.f32.mrb[0].mxu0
        %v886 = vadd.f32 0.0, %v885
        %v887 = vpop.f32.mrb[0].mxu0
        %888 = vmatprep.mubr.f32.mxu0 0.0
        %889 = vmatmul.mubr.f32.gmra.mrb[0].mxu0 %v808
        %v890 = vpop.f32.mrb[0].mxu0
        %v891 = vadd.f32 0.0, %v890
        %v892 = vpop.f32.mrb[0].mxu0
        %893 = vdwg.mxu0
        %v894 = vld [vmem:[%s3] sm:$0xff]
        %v895 = vld [vmem:[%s3 + $0x8] sm:$0xff]
        %v896 = vld [vmem:[%s3 + $0x10] sm:$0xff]
        %v897 = vld [vmem:[%s3 + $0x18] sm:$0xff]
        %v898 = vld [vmem:[%s3 + $0x20] sm:$0xff]
        %v899 = vld [vmem:[%s3 + $0x28] sm:$0xff]
        %v900 = vld [vmem:[%s3 + $0x30] sm:$0xf]
        %v901 = vld [vmem:[%s3 + $0x38] sm:$0xf]
        %v902 = vld [vmem:[%s3 + $0x40] sm:$0xf]
        %v903 = vadd.s32 %v789, 1
        %v904 = vadd.s32 %v790, 1
        %v905 = vadd.s32 %v791, 1
        %vm906 = vcmp.eq.s32.totalorder %v793, %v903
        %vm907 = vcmp.eq.s32.totalorder %v793, %v904
        %vm908 = vcmp.eq.s32.totalorder %v793, %v905
        %v909 = vsel %vm906, 1.0, 0.0
        %v910 = vsel %vm907, 1.0, 0.0
        %v911 = vsel %vm908, 1.0, 0.0
        %v913 = vsel %vm800, %v909, 0
        %v916 = vsel %vm800, %v910, 0
        %v919 = vsel %vm800, %v911, 0
        %921 = vmatprep.subr.mxu0 0.0
        %922 = vmatpush1.msra.mxu0 %v785
        %923 = vmatprep.subr.mxu0 0.0
        %924 = vmatpush1.msra.mxu0 %v786
        %925 = vmatprep.subr.mxu0 0.0
        %926 = vmatpush1.msra.mxu0 %v812
        %927 = vmatprep.subr.mxu0 0.0
        %928 = vmatpush1.msra.mxu0 0.0
        %929 = vmatprep.subr.mxu0 0.0
        %930 = vmatpush1.msra.mxu0 0.0
        %931 = vmatprep.subr.mxu0 0.0
        %932 = vmatpush1.msra.mxu0 0.0
        %933 = vmatprep.subr.mxu0 0.0
        %934 = vmatpush1.msra.mxu0 0.0
        %935 = vmatprep.subr.mxu0 0.0
        %936 = vmatpush1.msra.mxu0 0.0
        %937 = vmatprep.subr.mxu0 0.0
        %938 = vmatpush1.msra.mxu0 0.0
        %939 = vmatprep.subr.mxu0 0.0
        %940 = vmatpush1.msra.mxu0 0.0
        %941 = vmatprep.subr.mxu0 0.0
        %942 = vmatpush1.msra.mxu0 0.0
        %943 = vmatprep.subr.mxu0 0.0
        %944 = vmatpush1.msra.mxu0 0.0
        %945 = vmatprep.subr.mxu0 0.0
        %946 = vmatpush1.msra.mxu0 0.0
        %947 = vmatprep.subr.mxu0 0.0
        %948 = vmatpush1.msra.mxu0 0.0
        %949 = vmatprep.subr.mxu0 0.0
        %950 = vmatpush1.msra.mxu0 0.0
        %951 = vmatprep.subr.mxu0 0.0
        %952 = vmatpush1.msra.mxu0 0.0
        %953 = vmatprep.subr.mxu0 0.0
        %954 = vmatpush1.msra.mxu0 0.0
        %955 = vmatprep.subr.mxu0 0.0
        %956 = vmatpush1.msra.mxu0 0.0
        %957 = vmatprep.subr.mxu0 0.0
        %958 = vmatpush1.msra.mxu0 0.0
        %959 = vmatprep.subr.mxu0 0.0
        %960 = vmatpush1.msra.mxu0 0.0
        %961 = vmatprep.subr.mxu0 0.0
        %962 = vmatpush1.msra.mxu0 0.0
        %963 = vmatprep.subr.mxu0 0.0
        %964 = vmatpush1.msra.mxu0 0.0
        %965 = vmatprep.subr.mxu0 0.0
        %966 = vmatpush1.msra.mxu0 0.0
        %967 = vmatprep.subr.mxu0 0.0
        %968 = vmatpush1.msra.mxu0 0.0
        %969 = vmatprep.subr.mxu0 0.0
        %970 = vmatpush1.msra.mxu0 0.0
        %971 = vmatprep.subr.mxu0 0.0
        %972 = vmatpush1.msra.mxu0 0.0
        %973 = vmatprep.subr.mxu0 0.0
        %974 = vmatpush1.msra.mxu0 0.0
        %975 = vmatprep.subr.mxu0 0.0
        %976 = vmatpush1.msra.mxu0 0.0
        %977 = vmatprep.subr.mxu0 0.0
        %978 = vmatpush1.msra.mxu0 0.0
        %979 = vmatprep.subr.mxu0 0.0
        %980 = vmatpush1.msra.mxu0 0.0
        %981 = vmatprep.subr.mxu0 0.0
        %982 = vmatpush1.msra.mxu0 0.0
        %983 = vmatprep.subr.mxu0 0.0
        %984 = vmatpush1.msra.mxu0 0.0
        %985 = vmatprep.mubr.f32.mxu0 0.0
        %986 = vmatmul.mubr.f32.gmra.mrb[0].mxu0 %v913
        %v987 = vpop.f32.mrb[0].mxu0
        %v988 = vadd.f32 0.0, %v987
        %v989 = vpop.f32.mrb[0].mxu0
        %990 = vmatprep.mubr.f32.mxu0 0.0
        %991 = vmatmul.mubr.f32.gmra.mrb[0].mxu0 %v916
        %v992 = vpop.f32.mrb[0].mxu0
        %v993 = vadd.f32 0.0, %v992
        %v994 = vpop.f32.mrb[0].mxu0
        %995 = vmatprep.mubr.f32.mxu0 0.0
        %996 = vmatmul.mubr.f32.gmra.mrb[0].mxu0 %v919
        %v997 = vpop.f32.mrb[0].mxu0
        %v998 = vadd.f32 0.0, %v997
        %v999 = vpop.f32.mrb[0].mxu0
        %1000 = vdwg.mxu0
        %s1001 = scalar_lea.vmem %s3, 72
        %v1002 = vld [vmem:[%s1001] sm:$0xff]
        %v1003 = vld [vmem:[%s1001 + $0x8] sm:$0xff]
        %v1004 = vld [vmem:[%s1001 + $0x10] sm:$0xff]
        %v1005 = vld [vmem:[%s1001 + $0x18] sm:$0xff]
        %v1006 = vld [vmem:[%s1001 + $0x20] sm:$0xff]
        %v1007 = vld [vmem:[%s1001 + $0x28] sm:$0xff]
        %v1008 = vld [vmem:[%s1001 + $0x30] sm:$0xf]
        %v1009 = vld [vmem:[%s1001 + $0x38] sm:$0xf]
        %v1010 = vld [vmem:[%s1001 + $0x40] sm:$0xf]
        %v1012 = vsel %vm800, %v988, 0
        %v1015 = vsel %vm800, %v993, 0
        %v1018 = vsel %vm800, %v998, 0
        %v1021 = vsel %vm810, %v1008, 0
        %v1024 = vsel %vm810, %v1009, 0
        %v1027 = vsel %vm810, %v1010, 0
        %1029 = vmatprep.subr.mxu0 %v1003
        %1030 = vmatpush1.msra.mxu0 %v1002
        %1031 = vmatprep.subr.mxu0 %v1006
        %1032 = vmatpush1.msra.mxu0 %v1005
        %1033 = vmatprep.subr.mxu0 %v1024
        %1034 = vmatpush1.msra.mxu0 %v1021
        %1035 = vmatprep.subr.mxu0 0.0
        %1036 = vmatpush1.msra.mxu0 0.0
        %1037 = vmatprep.subr.mxu0 0.0
        %1038 = vmatpush1.msra.mxu0 0.0
        %1039 = vmatprep.subr.mxu0 0.0
        %1040 = vmatpush1.msra.mxu0 0.0
        %1041 = vmatprep.subr.mxu0 0.0
        %1042 = vmatpush1.msra.mxu0 0.0
        %1043 = vmatprep.subr.mxu0 0.0
        %1044 = vmatpush1.msra.mxu0 0.0
        %1045 = vmatprep.subr.mxu0 0.0
        %1046 = vmatpush1.msra.mxu0 0.0
        %1047 = vmatprep.subr.mxu0 0.0
        %1048 = vmatpush1.msra.mxu0 0.0
        %1049 = vmatprep.subr.mxu0 0.0
        %1050 = vmatpush1.msra.mxu0 0.0
        %1051 = vmatprep.subr.mxu0 0.0
        %1052 = vmatpush1.msra.mxu0 0.0
        %1053 = vmatprep.subr.mxu0 0.0
        %1054 = vmatpush1.msra.mxu0 0.0
        %1055 = vmatprep.subr.mxu0 0.0
        %1056 = vmatpush1.msra.mxu0 0.0
        %1057 = vmatprep.subr.mxu0 0.0
        %1058 = vmatpush1.msra.mxu0 0.0
        %1059 = vmatprep.subr.mxu0 0.0
        %1060 = vmatpush1.msra.mxu0 0.0
        %1061 = vmatprep.subr.mxu0 0.0
        %1062 = vmatpush1.msra.mxu0 0.0
        %1063 = vmatprep.subr.mxu0 0.0
        %1064 = vmatpush1.msra.mxu0 0.0
        %1065 = vmatprep.subr.mxu0 0.0
        %1066 = vmatpush1.msra.mxu0 0.0
        %1067 = vmatprep.subr.mxu0 0.0
        %1068 = vmatpush1.msra.mxu0 0.0
        %1069 = vmatprep.subr.mxu0 0.0
        %1070 = vmatpush1.msra.mxu0 0.0
        %1071 = vmatprep.subr.mxu0 0.0
        %1072 = vmatpush1.msra.mxu0 0.0
        %1073 = vmatprep.subr.mxu0 0.0
        %1074 = vmatpush1.msra.mxu0 0.0
        %1075 = vmatprep.subr.mxu0 0.0
        %1076 = vmatpush1.msra.mxu0 0.0
        %1077 = vmatprep.subr.mxu0 0.0
        %1078 = vmatpush1.msra.mxu0 0.0
        %1079 = vmatprep.subr.mxu0 0.0
        %1080 = vmatpush1.msra.mxu0 0.0
        %1081 = vmatprep.subr.mxu0 0.0
        %1082 = vmatpush1.msra.mxu0 0.0
        %1083 = vmatprep.subr.mxu0 0.0
        %1084 = vmatpush1.msra.mxu0 0.0
        %1085 = vmatprep.subr.mxu0 0.0
        %1086 = vmatpush1.msra.mxu0 0.0
        %1087 = vmatprep.subr.mxu0 0.0
        %1088 = vmatpush1.msra.mxu0 0.0
        %1089 = vmatprep.subr.mxu0 0.0
        %1090 = vmatpush1.msra.mxu0 0.0
        %1091 = vmatprep.subr.mxu0 0.0
        %1092 = vmatpush1.msra.mxu0 0.0
        %1093 = vmatprep.mubr.f32.mxu0 0.0
        %1094 = vmatmul.mubr.f32.gmra.mrb[0].mxu0 %v1012
        %v1095 = vpop.f32.mrb[0].mxu0
        %v1096 = vadd.f32 0.0, %v1095
        %v1097 = vpop.f32.mrb[0].mxu0
        %v1098 = vadd.f32 0.0, %v1097
        %1099 = vmatprep.mubr.f32.mxu0 0.0
        %1100 = vmatmul.mubr.f32.gmra.mrb[0].mxu0 %v1015
        %v1101 = vpop.f32.mrb[0].mxu0
        %v1102 = vadd.f32 0.0, %v1101
        %v1103 = vpop.f32.mrb[0].mxu0
        %v1104 = vadd.f32 0.0, %v1103
        %1105 = vmatprep.mubr.f32.mxu0 0.0
        %1106 = vmatmul.mubr.f32.gmra.mrb[0].mxu0 %v1018
        %v1107 = vpop.f32.mrb[0].mxu0
        %v1108 = vadd.f32 0.0, %v1107
        %v1109 = vpop.f32.mrb[0].mxu0
        %v1110 = vadd.f32 0.0, %v1109
        %1111 = vdwg.mxu0
        %1112 = vmatprep.subr.mxu0 0.0
        %1113 = vmatpush1.msra.mxu0 %v1004
        %1114 = vmatprep.subr.mxu0 0.0
        %1115 = vmatpush1.msra.mxu0 %v1007
        %1116 = vmatprep.subr.mxu0 0.0
        %1117 = vmatpush1.msra.mxu0 %v1027
        %1118 = vmatprep.subr.mxu0 0.0
        %1119 = vmatpush1.msra.mxu0 0.0
        %1120 = vmatprep.subr.mxu0 0.0
        %1121 = vmatpush1.msra.mxu0 0.0
        %1122 = vmatprep.subr.mxu0 0.0
        %1123 = vmatpush1.msra.mxu0 0.0
        %1124 = vmatprep.subr.mxu0 0.0
        %1125 = vmatpush1.msra.mxu0 0.0
        %1126 = vmatprep.subr.mxu0 0.0
        %1127 = vmatpush1.msra.mxu0 0.0
        %1128 = vmatprep.subr.mxu0 0.0
        %1129 = vmatpush1.msra.mxu0 0.0
        %1130 = vmatprep.subr.mxu0 0.0
        %1131 = vmatpush1.msra.mxu0 0.0
        %1132 = vmatprep.subr.mxu0 0.0
        %1133 = vmatpush1.msra.mxu0 0.0
        %1134 = vmatprep.subr.mxu0 0.0
        %1135 = vmatpush1.msra.mxu0 0.0
        %1136 = vmatprep.subr.mxu0 0.0
        %1137 = vmatpush1.msra.mxu0 0.0
        %1138 = vmatprep.subr.mxu0 0.0
        %1139 = vmatpush1.msra.mxu0 0.0
        %1140 = vmatprep.subr.mxu0 0.0
        %1141 = vmatpush1.msra.mxu0 0.0
        %1142 = vmatprep.subr.mxu0 0.0
        %1143 = vmatpush1.msra.mxu0 0.0
        %1144 = vmatprep.subr.mxu0 0.0
        %1145 = vmatpush1.msra.mxu0 0.0
        %1146 = vmatprep.subr.mxu0 0.0
        %1147 = vmatpush1.msra.mxu0 0.0
        %1148 = vmatprep.subr.mxu0 0.0
        %1149 = vmatpush1.msra.mxu0 0.0
        %1150 = vmatprep.subr.mxu0 0.0
        %1151 = vmatpush1.msra.mxu0 0.0
        %1152 = vmatprep.subr.mxu0 0.0
        %1153 = vmatpush1.msra.mxu0 0.0
        %1154 = vmatprep.subr.mxu0 0.0
        %1155 = vmatpush1.msra.mxu0 0.0
        %1156 = vmatprep.subr.mxu0 0.0
        %1157 = vmatpush1.msra.mxu0 0.0
        %1158 = vmatprep.subr.mxu0 0.0
        %1159 = vmatpush1.msra.mxu0 0.0
        %1160 = vmatprep.subr.mxu0 0.0
        %1161 = vmatpush1.msra.mxu0 0.0
        %1162 = vmatprep.subr.mxu0 0.0
        %1163 = vmatpush1.msra.mxu0 0.0
        %1164 = vmatprep.subr.mxu0 0.0
        %1165 = vmatpush1.msra.mxu0 0.0
        %1166 = vmatprep.subr.mxu0 0.0
        %1167 = vmatpush1.msra.mxu0 0.0
        %1168 = vmatprep.subr.mxu0 0.0
        %1169 = vmatpush1.msra.mxu0 0.0
        %1170 = vmatprep.subr.mxu0 0.0
        %1171 = vmatpush1.msra.mxu0 0.0
        %1172 = vmatprep.subr.mxu0 0.0
        %1173 = vmatpush1.msra.mxu0 0.0
        %1174 = vmatprep.subr.mxu0 0.0
        %1175 = vmatpush1.msra.mxu0 0.0
        %1176 = vmatprep.mubr.f32.mxu0 0.0
        %1177 = vmatmul.mubr.f32.gmra.mrb[0].mxu0 %v1012
        %v1178 = vpop.f32.mrb[0].mxu0
        %v1179 = vadd.f32 0.0, %v1178
        %v1180 = vpop.f32.mrb[0].mxu0
        %1181 = vmatprep.mubr.f32.mxu0 0.0
        %1182 = vmatmul.mubr.f32.gmra.mrb[0].mxu0 %v1015
        %v1183 = vpop.f32.mrb[0].mxu0
        %v1184 = vadd.f32 0.0, %v1183
        %v1185 = vpop.f32.mrb[0].mxu0
        %1186 = vmatprep.mubr.f32.mxu0 0.0
        %1187 = vmatmul.mubr.f32.gmra.mrb[0].mxu0 %v1018
        %v1188 = vpop.f32.mrb[0].mxu0
        %v1189 = vadd.f32 0.0, %v1188
        %v1190 = vpop.f32.mrb[0].mxu0
        %1191 = vdwg.mxu0
        %v1193 = vsel %vm800, %v881, 0
        %v1196 = vsel %vm800, %v886, 0
        %v1199 = vsel %vm800, %v891, 0
        %v1202 = vsel %vm810, %v900, 0
        %v1205 = vsel %vm810, %v901, 0
        %v1208 = vsel %vm810, %v902, 0
        %1210 = vmatprep.subr.mxu0 %v895
        %1211 = vmatpush1.msra.mxu0 %v894
        %1212 = vmatprep.subr.mxu0 %v898
        %1213 = vmatpush1.msra.mxu0 %v897
        %1214 = vmatprep.subr.mxu0 %v1205
        %1215 = vmatpush1.msra.mxu0 %v1202
        %1216 = vmatprep.subr.mxu0 0.0
        %1217 = vmatpush1.msra.mxu0 0.0
        %1218 = vmatprep.subr.mxu0 0.0
        %1219 = vmatpush1.msra.mxu0 0.0
        %1220 = vmatprep.subr.mxu0 0.0
        %1221 = vmatpush1.msra.mxu0 0.0
        %1222 = vmatprep.subr.mxu0 0.0
        %1223 = vmatpush1.msra.mxu0 0.0
        %1224 = vmatprep.subr.mxu0 0.0
        %1225 = vmatpush1.msra.mxu0 0.0
        %1226 = vmatprep.subr.mxu0 0.0
        %1227 = vmatpush1.msra.mxu0 0.0
        %1228 = vmatprep.subr.mxu0 0.0
        %1229 = vmatpush1.msra.mxu0 0.0
        %1230 = vmatprep.subr.mxu0 0.0
        %1231 = vmatpush1.msra.mxu0 0.0
        %1232 = vmatprep.subr.mxu0 0.0
        %1233 = vmatpush1.msra.mxu0 0.0
        %1234 = vmatprep.subr.mxu0 0.0
        %1235 = vmatpush1.msra.mxu0 0.0
        %1236 = vmatprep.subr.mxu0 0.0
        %1237 = vmatpush1.msra.mxu0 0.0
        %1238 = vmatprep.subr.mxu0 0.0
        %1239 = vmatpush1.msra.mxu0 0.0
        %1240 = vmatprep.subr.mxu0 0.0
        %1241 = vmatpush1.msra.mxu0 0.0
        %1242 = vmatprep.subr.mxu0 0.0
        %1243 = vmatpush1.msra.mxu0 0.0
        %1244 = vmatprep.subr.mxu0 0.0
        %1245 = vmatpush1.msra.mxu0 0.0
        %1246 = vmatprep.subr.mxu0 0.0
        %1247 = vmatpush1.msra.mxu0 0.0
        %1248 = vmatprep.subr.mxu0 0.0
        %1249 = vmatpush1.msra.mxu0 0.0
        %1250 = vmatprep.subr.mxu0 0.0
        %1251 = vmatpush1.msra.mxu0 0.0
        %1252 = vmatprep.subr.mxu0 0.0
        %1253 = vmatpush1.msra.mxu0 0.0
        %1254 = vmatprep.subr.mxu0 0.0
        %1255 = vmatpush1.msra.mxu0 0.0
        %1256 = vmatprep.subr.mxu0 0.0
        %1257 = vmatpush1.msra.mxu0 0.0
        %1258 = vmatprep.subr.mxu0 0.0
        %1259 = vmatpush1.msra.mxu0 0.0
        %1260 = vmatprep.subr.mxu0 0.0
        %1261 = vmatpush1.msra.mxu0 0.0
        %1262 = vmatprep.subr.mxu0 0.0
        %1263 = vmatpush1.msra.mxu0 0.0
        %1264 = vmatprep.subr.mxu0 0.0
        %1265 = vmatpush1.msra.mxu0 0.0
        %1266 = vmatprep.subr.mxu0 0.0
        %1267 = vmatpush1.msra.mxu0 0.0
        %1268 = vmatprep.subr.mxu0 0.0
        %1269 = vmatpush1.msra.mxu0 0.0
        %1270 = vmatprep.subr.mxu0 0.0
        %1271 = vmatpush1.msra.mxu0 0.0
        %1272 = vmatprep.subr.mxu0 0.0
        %1273 = vmatpush1.msra.mxu0 0.0
        %1274 = vmatprep.mubr.f32.mxu0 0.0
        %1275 = vmatmul.mubr.f32.gmra.mrb[0].mxu0 %v1193
        %v1276 = vpop.f32.mrb[0].mxu0
        %v1277 = vadd.f32 %v1096, %v1276
        %v1278 = vpop.f32.mrb[0].mxu0
        %v1279 = vadd.f32 %v1098, %v1278
        %1280 = vmatprep.mubr.f32.mxu0 0.0
        %1281 = vmatmul.mubr.f32.gmra.mrb[0].mxu0 %v1196
        %v1282 = vpop.f32.mrb[0].mxu0
        %v1283 = vadd.f32 %v1102, %v1282
        %v1284 = vpop.f32.mrb[0].mxu0
        %v1285 = vadd.f32 %v1104, %v1284
        %1286 = vmatprep.mubr.f32.mxu0 0.0
        %1287 = vmatmul.mubr.f32.gmra.mrb[0].mxu0 %v1199
        %v1288 = vpop.f32.mrb[0].mxu0
        %v1289 = vadd.f32 %v1108, %v1288
        %v1290 = vpop.f32.mrb[0].mxu0
        %v1291 = vadd.f32 %v1110, %v1290
        %1292 = vdwg.mxu0
        %1293 = vmatprep.subr.mxu0 0.0
        %1294 = vmatpush1.msra.mxu0 %v896
        %1295 = vmatprep.subr.mxu0 0.0
        %1296 = vmatpush1.msra.mxu0 %v899
        %1297 = vmatprep.subr.mxu0 0.0
        %1298 = vmatpush1.msra.mxu0 %v1208
        %1299 = vmatprep.subr.mxu0 0.0
        %1300 = vmatpush1.msra.mxu0 0.0
        %1301 = vmatprep.subr.mxu0 0.0
        %1302 = vmatpush1.msra.mxu0 0.0
        %1303 = vmatprep.subr.mxu0 0.0
        %1304 = vmatpush1.msra.mxu0 0.0
        %1305 = vmatprep.subr.mxu0 0.0
        %1306 = vmatpush1.msra.mxu0 0.0
        %1307 = vmatprep.subr.mxu0 0.0
        %1308 = vmatpush1.msra.mxu0 0.0
        %1309 = vmatprep.subr.mxu0 0.0
        %1310 = vmatpush1.msra.mxu0 0.0
        %1311 = vmatprep.subr.mxu0 0.0
        %1312 = vmatpush1.msra.mxu0 0.0
        %1313 = vmatprep.subr.mxu0 0.0
        %1314 = vmatpush1.msra.mxu0 0.0
        %1315 = vmatprep.subr.mxu0 0.0
        %1316 = vmatpush1.msra.mxu0 0.0
        %1317 = vmatprep.subr.mxu0 0.0
        %1318 = vmatpush1.msra.mxu0 0.0
        %1319 = vmatprep.subr.mxu0 0.0
        %1320 = vmatpush1.msra.mxu0 0.0
        %1321 = vmatprep.subr.mxu0 0.0
        %1322 = vmatpush1.msra.mxu0 0.0
        %1323 = vmatprep.subr.mxu0 0.0
        %1324 = vmatpush1.msra.mxu0 0.0
        %1325 = vmatprep.subr.mxu0 0.0
        %1326 = vmatpush1.msra.mxu0 0.0
        %1327 = vmatprep.subr.mxu0 0.0
        %1328 = vmatpush1.msra.mxu0 0.0
        %1329 = vmatprep.subr.mxu0 0.0
        %1330 = vmatpush1.msra.mxu0 0.0
        %1331 = vmatprep.subr.mxu0 0.0
        %1332 = vmatpush1.msra.mxu0 0.0
        %1333 = vmatprep.subr.mxu0 0.0
        %1334 = vmatpush1.msra.mxu0 0.0
        %1335 = vmatprep.subr.mxu0 0.0
        %1336 = vmatpush1.msra.mxu0 0.0
        %1337 = vmatprep.subr.mxu0 0.0
        %1338 = vmatpush1.msra.mxu0 0.0
        %1339 = vmatprep.subr.mxu0 0.0
        %1340 = vmatpush1.msra.mxu0 0.0
        %1341 = vmatprep.subr.mxu0 0.0
        %1342 = vmatpush1.msra.mxu0 0.0
        %1343 = vmatprep.subr.mxu0 0.0
        %1344 = vmatpush1.msra.mxu0 0.0
        %1345 = vmatprep.subr.mxu0 0.0
        %1346 = vmatpush1.msra.mxu0 0.0
        %1347 = vmatprep.subr.mxu0 0.0
        %1348 = vmatpush1.msra.mxu0 0.0
        %1349 = vmatprep.subr.mxu0 0.0
        %1350 = vmatpush1.msra.mxu0 0.0
        %1351 = vmatprep.subr.mxu0 0.0
        %1352 = vmatpush1.msra.mxu0 0.0
        %1353 = vmatprep.subr.mxu0 0.0
        %1354 = vmatpush1.msra.mxu0 0.0
        %1355 = vmatprep.subr.mxu0 0.0
        %1356 = vmatpush1.msra.mxu0 0.0
        %1357 = vmatprep.mubr.f32.mxu0 0.0
        %1358 = vmatmul.mubr.f32.gmra.mrb[0].mxu0 %v1193
        %v1359 = vpop.f32.mrb[0].mxu0
        %v1360 = vadd.f32 %v1179, %v1359
        %v1361 = vpop.f32.mrb[0].mxu0
        %1362 = vmatprep.mubr.f32.mxu0 0.0
        %1363 = vmatmul.mubr.f32.gmra.mrb[0].mxu0 %v1196
        %v1364 = vpop.f32.mrb[0].mxu0
        %v1365 = vadd.f32 %v1184, %v1364
        %v1366 = vpop.f32.mrb[0].mxu0
        %1367 = vmatprep.mubr.f32.mxu0 0.0
        %1368 = vmatmul.mubr.f32.gmra.mrb[0].mxu0 %v1199
        %v1369 = vpop.f32.mrb[0].mxu0
        %v1370 = vadd.f32 %v1189, %v1369
        %v1371 = vpop.f32.mrb[0].mxu0
        %1372 = vdwg.mxu0
        %v1373 = vadd.s32 %v789, 2
        %v1374 = vadd.s32 %v790, 2
        %v1375 = vadd.s32 %v791, 2
        %vm1376 = vcmp.eq.s32.totalorder %v793, %v1373
        %vm1377 = vcmp.eq.s32.totalorder %v793, %v1374
        %vm1378 = vcmp.eq.s32.totalorder %v793, %v1375
        %v1379 = vsel %vm1376, 1.0, 0.0
        %v1380 = vsel %vm1377, 1.0, 0.0
        %v1381 = vsel %vm1378, 1.0, 0.0
        %v1383 = vsel %vm800, %v1379, 0
        %v1386 = vsel %vm800, %v1380, 0
        %v1389 = vsel %vm800, %v1381, 0
        %1391 = vmatprep.subr.mxu0 0.0
        %1392 = vmatpush1.msra.mxu0 %v785
        %1393 = vmatprep.subr.mxu0 0.0
        %1394 = vmatpush1.msra.mxu0 %v786
        %1395 = vmatprep.subr.mxu0 0.0
        %1396 = vmatpush1.msra.mxu0 %v812
        %1397 = vmatprep.subr.mxu0 0.0
        %1398 = vmatpush1.msra.mxu0 0.0
        %1399 = vmatprep.subr.mxu0 0.0
        %1400 = vmatpush1.msra.mxu0 0.0
        %1401 = vmatprep.subr.mxu0 0.0
        %1402 = vmatpush1.msra.mxu0 0.0
        %1403 = vmatprep.subr.mxu0 0.0
        %1404 = vmatpush1.msra.mxu0 0.0
        %1405 = vmatprep.subr.mxu0 0.0
        %1406 = vmatpush1.msra.mxu0 0.0
        %1407 = vmatprep.subr.mxu0 0.0
        %1408 = vmatpush1.msra.mxu0 0.0
        %1409 = vmatprep.subr.mxu0 0.0
        %1410 = vmatpush1.msra.mxu0 0.0
        %1411 = vmatprep.subr.mxu0 0.0
        %1412 = vmatpush1.msra.mxu0 0.0
        %1413 = vmatprep.subr.mxu0 0.0
        %1414 = vmatpush1.msra.mxu0 0.0
        %1415 = vmatprep.subr.mxu0 0.0
        %1416 = vmatpush1.msra.mxu0 0.0
        %1417 = vmatprep.subr.mxu0 0.0
        %1418 = vmatpush1.msra.mxu0 0.0
        %1419 = vmatprep.subr.mxu0 0.0
        %1420 = vmatpush1.msra.mxu0 0.0
        %1421 = vmatprep.subr.mxu0 0.0
        %1422 = vmatpush1.msra.mxu0 0.0
        %1423 = vmatprep.subr.mxu0 0.0
        %1424 = vmatpush1.msra.mxu0 0.0
        %1425 = vmatprep.subr.mxu0 0.0
        %1426 = vmatpush1.msra.mxu0 0.0
        %1427 = vmatprep.subr.mxu0 0.0
        %1428 = vmatpush1.msra.mxu0 0.0
        %1429 = vmatprep.subr.mxu0 0.0
        %1430 = vmatpush1.msra.mxu0 0.0
        %1431 = vmatprep.subr.mxu0 0.0
        %1432 = vmatpush1.msra.mxu0 0.0
        %1433 = vmatprep.subr.mxu0 0.0
        %1434 = vmatpush1.msra.mxu0 0.0
        %1435 = vmatprep.subr.mxu0 0.0
        %1436 = vmatpush1.msra.mxu0 0.0
        %1437 = vmatprep.subr.mxu0 0.0
        %1438 = vmatpush1.msra.mxu0 0.0
        %1439 = vmatprep.subr.mxu0 0.0
        %1440 = vmatpush1.msra.mxu0 0.0
        %1441 = vmatprep.subr.mxu0 0.0
        %1442 = vmatpush1.msra.mxu0 0.0
        %1443 = vmatprep.subr.mxu0 0.0
        %1444 = vmatpush1.msra.mxu0 0.0
        %1445 = vmatprep.subr.mxu0 0.0
        %1446 = vmatpush1.msra.mxu0 0.0
        %1447 = vmatprep.subr.mxu0 0.0
        %1448 = vmatpush1.msra.mxu0 0.0
        %1449 = vmatprep.subr.mxu0 0.0
        %1450 = vmatpush1.msra.mxu0 0.0
        %1451 = vmatprep.subr.mxu0 0.0
        %1452 = vmatpush1.msra.mxu0 0.0
        %1453 = vmatprep.subr.mxu0 0.0
        %1454 = vmatpush1.msra.mxu0 0.0
        %1455 = vmatprep.mubr.f32.mxu0 0.0
        %1456 = vmatmul.mubr.f32.gmra.mrb[0].mxu0 %v1383
        %v1457 = vpop.f32.mrb[0].mxu0
        %v1458 = vadd.f32 0.0, %v1457
        %v1459 = vpop.f32.mrb[0].mxu0
        %1460 = vmatprep.mubr.f32.mxu0 0.0
        %1461 = vmatmul.mubr.f32.gmra.mrb[0].mxu0 %v1386
        %v1462 = vpop.f32.mrb[0].mxu0
        %v1463 = vadd.f32 0.0, %v1462
        %v1464 = vpop.f32.mrb[0].mxu0
        %1465 = vmatprep.mubr.f32.mxu0 0.0
        %1466 = vmatmul.mubr.f32.gmra.mrb[0].mxu0 %v1389
        %v1467 = vpop.f32.mrb[0].mxu0
        %v1468 = vadd.f32 0.0, %v1467
        %v1469 = vpop.f32.mrb[0].mxu0
        %1470 = vdwg.mxu0
        %s1471 = scalar_lea.vmem %s3, 144
        %v1472 = vld [vmem:[%s1471] sm:$0xff]
        %v1473 = vld [vmem:[%s1471 + $0x8] sm:$0xff]
        %v1474 = vld [vmem:[%s1471 + $0x10] sm:$0xff]
        %v1475 = vld [vmem:[%s1471 + $0x18] sm:$0xff]
        %v1476 = vld [vmem:[%s1471 + $0x20] sm:$0xff]
        %v1477 = vld [vmem:[%s1471 + $0x28] sm:$0xff]
        %v1478 = vld [vmem:[%s1471 + $0x30] sm:$0xf]
        %v1479 = vld [vmem:[%s1471 + $0x38] sm:$0xf]
        %v1480 = vld [vmem:[%s1471 + $0x40] sm:$0xf]
        %v1482 = vsel %vm800, %v1458, 0
        %v1485 = vsel %vm800, %v1463, 0
        %v1488 = vsel %vm800, %v1468, 0
        %v1491 = vsel %vm810, %v1478, 0
        %v1494 = vsel %vm810, %v1479, 0
        %v1497 = vsel %vm810, %v1480, 0
        %1499 = vmatprep.subr.mxu0 %v1473
        %1500 = vmatpush1.msra.mxu0 %v1472
        %1501 = vmatprep.subr.mxu0 %v1476
        %1502 = vmatpush1.msra.mxu0 %v1475
        %1503 = vmatprep.subr.mxu0 %v1494
        %1504 = vmatpush1.msra.mxu0 %v1491
        %1505 = vmatprep.subr.mxu0 0.0
        %1506 = vmatpush1.msra.mxu0 0.0
        %1507 = vmatprep.subr.mxu0 0.0
        %1508 = vmatpush1.msra.mxu0 0.0
        %1509 = vmatprep.subr.mxu0 0.0
        %1510 = vmatpush1.msra.mxu0 0.0
        %1511 = vmatprep.subr.mxu0 0.0
        %1512 = vmatpush1.msra.mxu0 0.0
        %1513 = vmatprep.subr.mxu0 0.0
        %1514 = vmatpush1.msra.mxu0 0.0
        %1515 = vmatprep.subr.mxu0 0.0
        %1516 = vmatpush1.msra.mxu0 0.0
        %1517 = vmatprep.subr.mxu0 0.0
        %1518 = vmatpush1.msra.mxu0 0.0
        %1519 = vmatprep.subr.mxu0 0.0
        %1520 = vmatpush1.msra.mxu0 0.0
        %1521 = vmatprep.subr.mxu0 0.0
        %1522 = vmatpush1.msra.mxu0 0.0
        %1523 = vmatprep.subr.mxu0 0.0
        %1524 = vmatpush1.msra.mxu0 0.0
        %1525 = vmatprep.subr.mxu0 0.0
        %1526 = vmatpush1.msra.mxu0 0.0
        %1527 = vmatprep.subr.mxu0 0.0
        %1528 = vmatpush1.msra.mxu0 0.0
        %1529 = vmatprep.subr.mxu0 0.0
        %1530 = vmatpush1.msra.mxu0 0.0
        %1531 = vmatprep.subr.mxu0 0.0
        %1532 = vmatpush1.msra.mxu0 0.0
        %1533 = vmatprep.subr.mxu0 0.0
        %1534 = vmatpush1.msra.mxu0 0.0
        %1535 = vmatprep.subr.mxu0 0.0
        %1536 = vmatpush1.msra.mxu0 0.0
        %1537 = vmatprep.subr.mxu0 0.0
        %1538 = vmatpush1.msra.mxu0 0.0
        %1539 = vmatprep.subr.mxu0 0.0
        %1540 = vmatpush1.msra.mxu0 0.0
        %1541 = vmatprep.subr.mxu0 0.0
        %1542 = vmatpush1.msra.mxu0 0.0
        %1543 = vmatprep.subr.mxu0 0.0
        %1544 = vmatpush1.msra.mxu0 0.0
        %1545 = vmatprep.subr.mxu0 0.0
        %1546 = vmatpush1.msra.mxu0 0.0
        %1547 = vmatprep.subr.mxu0 0.0
        %1548 = vmatpush1.msra.mxu0 0.0
        %1549 = vmatprep.subr.mxu0 0.0
        %1550 = vmatpush1.msra.mxu0 0.0
        %1551 = vmatprep.subr.mxu0 0.0
        %1552 = vmatpush1.msra.mxu0 0.0
        %1553 = vmatprep.subr.mxu0 0.0
        %1554 = vmatpush1.msra.mxu0 0.0
        %1555 = vmatprep.subr.mxu0 0.0
        %1556 = vmatpush1.msra.mxu0 0.0
        %1557 = vmatprep.subr.mxu0 0.0
        %1558 = vmatpush1.msra.mxu0 0.0
        %1559 = vmatprep.subr.mxu0 0.0
        %1560 = vmatpush1.msra.mxu0 0.0
        %1561 = vmatprep.subr.mxu0 0.0
        %1562 = vmatpush1.msra.mxu0 0.0
        %1563 = vmatprep.mubr.f32.mxu0 0.0
        %1564 = vmatmul.mubr.f32.gmra.mrb[0].mxu0 %v1482
        %v1565 = vpop.f32.mrb[0].mxu0
        %v1566 = vadd.f32 0.0, %v1565
        %v1567 = vpop.f32.mrb[0].mxu0
        %v1568 = vadd.f32 0.0, %v1567
        %1569 = vmatprep.mubr.f32.mxu0 0.0
        %1570 = vmatmul.mubr.f32.gmra.mrb[0].mxu0 %v1485
        %v1571 = vpop.f32.mrb[0].mxu0
        %v1572 = vadd.f32 0.0, %v1571
        %v1573 = vpop.f32.mrb[0].mxu0
        %v1574 = vadd.f32 0.0, %v1573
        %1575 = vmatprep.mubr.f32.mxu0 0.0
        %1576 = vmatmul.mubr.f32.gmra.mrb[0].mxu0 %v1488
        %v1577 = vpop.f32.mrb[0].mxu0
        %v1578 = vadd.f32 0.0, %v1577
        %v1579 = vpop.f32.mrb[0].mxu0
        %v1580 = vadd.f32 0.0, %v1579
        %1581 = vdwg.mxu0
        %1582 = vmatprep.subr.mxu0 0.0
        %1583 = vmatpush1.msra.mxu0 %v1474
        %1584 = vmatprep.subr.mxu0 0.0
        %1585 = vmatpush1.msra.mxu0 %v1477
        %1586 = vmatprep.subr.mxu0 0.0
        %1587 = vmatpush1.msra.mxu0 %v1497
        %1588 = vmatprep.subr.mxu0 0.0
        %1589 = vmatpush1.msra.mxu0 0.0
        %1590 = vmatprep.subr.mxu0 0.0
        %1591 = vmatpush1.msra.mxu0 0.0
        %1592 = vmatprep.subr.mxu0 0.0
        %1593 = vmatpush1.msra.mxu0 0.0
        %1594 = vmatprep.subr.mxu0 0.0
        %1595 = vmatpush1.msra.mxu0 0.0
        %1596 = vmatprep.subr.mxu0 0.0
        %1597 = vmatpush1.msra.mxu0 0.0
        %1598 = vmatprep.subr.mxu0 0.0
        %1599 = vmatpush1.msra.mxu0 0.0
        %1600 = vmatprep.subr.mxu0 0.0
        %1601 = vmatpush1.msra.mxu0 0.0
        %1602 = vmatprep.subr.mxu0 0.0
        %1603 = vmatpush1.msra.mxu0 0.0
        %1604 = vmatprep.subr.mxu0 0.0
        %1605 = vmatpush1.msra.mxu0 0.0
        %1606 = vmatprep.subr.mxu0 0.0
        %1607 = vmatpush1.msra.mxu0 0.0
        %1608 = vmatprep.subr.mxu0 0.0
        %1609 = vmatpush1.msra.mxu0 0.0
        %1610 = vmatprep.subr.mxu0 0.0
        %1611 = vmatpush1.msra.mxu0 0.0
        %1612 = vmatprep.subr.mxu0 0.0
        %1613 = vmatpush1.msra.mxu0 0.0
        %1614 = vmatprep.subr.mxu0 0.0
        %1615 = vmatpush1.msra.mxu0 0.0
        %1616 = vmatprep.subr.mxu0 0.0
        %1617 = vmatpush1.msra.mxu0 0.0
        %1618 = vmatprep.subr.mxu0 0.0
        %1619 = vmatpush1.msra.mxu0 0.0
        %1620 = vmatprep.subr.mxu0 0.0
        %1621 = vmatpush1.msra.mxu0 0.0
        %1622 = vmatprep.subr.mxu0 0.0
        %1623 = vmatpush1.msra.mxu0 0.0
        %1624 = vmatprep.subr.mxu0 0.0
        %1625 = vmatpush1.msra.mxu0 0.0
        %1626 = vmatprep.subr.mxu0 0.0
        %1627 = vmatpush1.msra.mxu0 0.0
        %1628 = vmatprep.subr.mxu0 0.0
        %1629 = vmatpush1.msra.mxu0 0.0
        %1630 = vmatprep.subr.mxu0 0.0
        %1631 = vmatpush1.msra.mxu0 0.0
        %1632 = vmatprep.subr.mxu0 0.0
        %1633 = vmatpush1.msra.mxu0 0.0
        %1634 = vmatprep.subr.mxu0 0.0
        %1635 = vmatpush1.msra.mxu0 0.0
        %1636 = vmatprep.subr.mxu0 0.0
        %1637 = vmatpush1.msra.mxu0 0.0
        %1638 = vmatprep.subr.mxu0 0.0
        %1639 = vmatpush1.msra.mxu0 0.0
        %1640 = vmatprep.subr.mxu0 0.0
        %1641 = vmatpush1.msra.mxu0 0.0
        %1642 = vmatprep.subr.mxu0 0.0
        %1643 = vmatpush1.msra.mxu0 0.0
        %1644 = vmatprep.subr.mxu0 0.0
        %1645 = vmatpush1.msra.mxu0 0.0
        %1646 = vmatprep.mubr.f32.mxu0 0.0
        %1647 = vmatmul.mubr.f32.gmra.mrb[0].mxu0 %v1482
        %v1648 = vpop.f32.mrb[0].mxu0
        %v1649 = vadd.f32 0.0, %v1648
        %v1650 = vpop.f32.mrb[0].mxu0
        %1651 = vmatprep.mubr.f32.mxu0 0.0
        %1652 = vmatmul.mubr.f32.gmra.mrb[0].mxu0 %v1485
        %v1653 = vpop.f32.mrb[0].mxu0
        %v1654 = vadd.f32 0.0, %v1653
        %v1655 = vpop.f32.mrb[0].mxu0
        %1656 = vmatprep.mubr.f32.mxu0 0.0
        %1657 = vmatmul.mubr.f32.gmra.mrb[0].mxu0 %v1488
        %v1658 = vpop.f32.mrb[0].mxu0
        %v1659 = vadd.f32 0.0, %v1658
        %v1660 = vpop.f32.mrb[0].mxu0
        %1661 = vdwg.mxu0
        %v1662 = vadd.f32 %v1277, %v1566
        %v1663 = vadd.f32 %v1279, %v1568
        %v1664 = vadd.f32 %v1360, %v1649
        %v1665 = vadd.f32 %v1283, %v1572
        %v1666 = vadd.f32 %v1285, %v1574
        %v1667 = vadd.f32 %v1365, %v1654
        %v1668 = vadd.f32 %v1289, %v1578
        %v1669 = vadd.f32 %v1291, %v1580
        %v1670 = vadd.f32 %v1370, %v1659
        %v1671 = vld [vmem:[%s4] sm:$0x7]
        %v1673 = vlaneseq
        %v1674 = vshrl.u32 %v1673, 7
        %v1675 = vsub.s32 0, %v1674
        %v1676 = vrot.slane %v1671, %v1675
        %v1677 = vlaneseq
        %v1678 = vshrl.u32 %v1677, 7
        %v1679 = vsub.s32 1, %v1678
        %v1680 = vrot.slane %v1671, %v1679
        %v1681 = vlaneseq
        %v1682 = vshrl.u32 %v1681, 7
        %v1683 = vsub.s32 2, %v1682
        %v1684 = vrot.slane %v1671, %v1683
        %v1688 = vadd.f32 %v1662, %v1676
        %v1689 = vadd.f32 %v1663, %v1680
        %v1690 = vadd.f32 %v1664, %v1684
        %v1691 = vadd.f32 %v1665, %v1676
        %v1692 = vadd.f32 %v1666, %v1680
        %v1693 = vadd.f32 %v1667, %v1684
        %v1694 = vadd.f32 %v1668, %v1676
        %v1695 = vadd.f32 %v1669, %v1680
        %v1696 = vadd.f32 %v1670, %v1684
        %v1697 = vmax.f32 %v1688, 0.0
        %v1698 = vmax.f32 %v1689, 0.0
        %v1699 = vmax.f32 %v1690, 0.0
        %v1700 = vmax.f32 %v1691, 0.0
        %v1701 = vmax.f32 %v1692, 0.0
        %v1702 = vmax.f32 %v1693, 0.0
        %v1703 = vmax.f32 %v1694, 0.0
        %v1704 = vmax.f32 %v1695, 0.0
        %v1705 = vmax.f32 %v1696, 0.0
        %v1706 = vmul.u32 %v789, 2
        %vm1707 = vcmp.eq.s32.totalorder %v793, %v1706
        %v1708 = vsel %vm1707, 1.0, 0.0
        %vm1709 = vcmask 146432
        %v1711 = vsel %vm1709, %v1708, 0
        %vm1713 = vcmask 1041408
        %v1715 = vsel %vm1713, %v1703, 0
        %v1718 = vsel %vm1713, %v1704, 0
        %v1721 = vsel %vm1713, %v1705, 0
        %1723 = vmatprep.subr.mxu0 %v1698
        %1724 = vmatpush1.msra.mxu0 %v1697
        %1725 = vmatprep.subr.mxu0 %v1701
        %1726 = vmatpush1.msra.mxu0 %v1700
        %1727 = vmatprep.subr.mxu0 %v1718
        %1728 = vmatpush1.msra.mxu0 %v1715
        %1729 = vmatprep.subr.mxu0 0.0
        %1730 = vmatpush1.msra.mxu0 0.0
        %1731 = vmatprep.subr.mxu0 0.0
        %1732 = vmatpush1.msra.mxu0 0.0
        %1733 = vmatprep.subr.mxu0 0.0
        %1734 = vmatpush1.msra.mxu0 0.0
        %1735 = vmatprep.subr.mxu0 0.0
        %1736 = vmatpush1.msra.mxu0 0.0
        %1737 = vmatprep.subr.mxu0 0.0
        %1738 = vmatpush1.msra.mxu0 0.0
        %1739 = vmatprep.subr.mxu0 0.0
        %1740 = vmatpush1.msra.mxu0 0.0
        %1741 = vmatprep.subr.mxu0 0.0
        %1742 = vmatpush1.msra.mxu0 0.0
        %1743 = vmatprep.subr.mxu0 0.0
        %1744 = vmatpush1.msra.mxu0 0.0
        %1745 = vmatprep.subr.mxu0 0.0
        %1746 = vmatpush1.msra.mxu0 0.0
        %1747 = vmatprep.subr.mxu0 0.0
        %1748 = vmatpush1.msra.mxu0 0.0
        %1749 = vmatprep.subr.mxu0 0.0
        %1750 = vmatpush1.msra.mxu0 0.0
        %1751 = vmatprep.subr.mxu0 0.0
        %1752 = vmatpush1.msra.mxu0 0.0
        %1753 = vmatprep.subr.mxu0 0.0
        %1754 = vmatpush1.msra.mxu0 0.0
        %1755 = vmatprep.subr.mxu0 0.0
        %1756 = vmatpush1.msra.mxu0 0.0
        %1757 = vmatprep.subr.mxu0 0.0
        %1758 = vmatpush1.msra.mxu0 0.0
        %1759 = vmatprep.subr.mxu0 0.0
        %1760 = vmatpush1.msra.mxu0 0.0
        %1761 = vmatprep.subr.mxu0 0.0
        %1762 = vmatpush1.msra.mxu0 0.0
        %1763 = vmatprep.subr.mxu0 0.0
        %1764 = vmatpush1.msra.mxu0 0.0
        %1765 = vmatprep.subr.mxu0 0.0
        %1766 = vmatpush1.msra.mxu0 0.0
        %1767 = vmatprep.subr.mxu0 0.0
        %1768 = vmatpush1.msra.mxu0 0.0
        %1769 = vmatprep.subr.mxu0 0.0
        %1770 = vmatpush1.msra.mxu0 0.0
        %1771 = vmatprep.subr.mxu0 0.0
        %1772 = vmatpush1.msra.mxu0 0.0
        %1773 = vmatprep.subr.mxu0 0.0
        %1774 = vmatpush1.msra.mxu0 0.0
        %1775 = vmatprep.subr.mxu0 0.0
        %1776 = vmatpush1.msra.mxu0 0.0
        %1777 = vmatprep.subr.mxu0 0.0
        %1778 = vmatpush1.msra.mxu0 0.0
        %1779 = vmatprep.subr.mxu0 0.0
        %1780 = vmatpush1.msra.mxu0 0.0
        %1781 = vmatprep.subr.mxu0 0.0
        %1782 = vmatpush1.msra.mxu0 0.0
        %1783 = vmatprep.subr.mxu0 0.0
        %1784 = vmatpush1.msra.mxu0 0.0
        %1785 = vmatprep.subr.mxu0 0.0
        %1786 = vmatpush1.msra.mxu0 0.0
        %1787 = vmatprep.mubr.f32.mxu0 0.0
        %1788 = vmatmul.mubr.f32.gmra.mrb[0].mxu0 %v1711
        %v1789 = vpop.f32.mrb[0].mxu0
        %v1790 = vadd.f32 0.0, %v1789
        %v1791 = vpop.f32.mrb[0].mxu0
        %v1792 = vadd.f32 0.0, %v1791
        %1793 = vdwg.mxu0
        %1794 = vmatprep.subr.mxu0 0.0
        %1795 = vmatpush1.msra.mxu0 %v1699
        %1796 = vmatprep.subr.mxu0 0.0
        %1797 = vmatpush1.msra.mxu0 %v1702
        %1798 = vmatprep.subr.mxu0 0.0
        %1799 = vmatpush1.msra.mxu0 %v1721
        %1800 = vmatprep.subr.mxu0 0.0
        %1801 = vmatpush1.msra.mxu0 0.0
        %1802 = vmatprep.subr.mxu0 0.0
        %1803 = vmatpush1.msra.mxu0 0.0
        %1804 = vmatprep.subr.mxu0 0.0
        %1805 = vmatpush1.msra.mxu0 0.0
        %1806 = vmatprep.subr.mxu0 0.0
        %1807 = vmatpush1.msra.mxu0 0.0
        %1808 = vmatprep.subr.mxu0 0.0
        %1809 = vmatpush1.msra.mxu0 0.0
        %1810 = vmatprep.subr.mxu0 0.0
        %1811 = vmatpush1.msra.mxu0 0.0
        %1812 = vmatprep.subr.mxu0 0.0
        %1813 = vmatpush1.msra.mxu0 0.0
        %1814 = vmatprep.subr.mxu0 0.0
        %1815 = vmatpush1.msra.mxu0 0.0
        %1816 = vmatprep.subr.mxu0 0.0
        %1817 = vmatpush1.msra.mxu0 0.0
        %1818 = vmatprep.subr.mxu0 0.0
        %1819 = vmatpush1.msra.mxu0 0.0
        %1820 = vmatprep.subr.mxu0 0.0
        %1821 = vmatpush1.msra.mxu0 0.0
        %1822 = vmatprep.subr.mxu0 0.0
        %1823 = vmatpush1.msra.mxu0 0.0
        %1824 = vmatprep.subr.mxu0 0.0
        %1825 = vmatpush1.msra.mxu0 0.0
        %1826 = vmatprep.subr.mxu0 0.0
        %1827 = vmatpush1.msra.mxu0 0.0
        %1828 = vmatprep.subr.mxu0 0.0
        %1829 = vmatpush1.msra.mxu0 0.0
        %1830 = vmatprep.subr.mxu0 0.0
        %1831 = vmatpush1.msra.mxu0 0.0
        %1832 = vmatprep.subr.mxu0 0.0
        %1833 = vmatpush1.msra.mxu0 0.0
        %1834 = vmatprep.subr.mxu0 0.0
        %1835 = vmatpush1.msra.mxu0 0.0
        %1836 = vmatprep.subr.mxu0 0.0
        %1837 = vmatpush1.msra.mxu0 0.0
        %1838 = vmatprep.subr.mxu0 0.0
        %1839 = vmatpush1.msra.mxu0 0.0
        %1840 = vmatprep.subr.mxu0 0.0
        %1841 = vmatpush1.msra.mxu0 0.0
        %1842 = vmatprep.subr.mxu0 0.0
        %1843 = vmatpush1.msra.mxu0 0.0
        %1844 = vmatprep.subr.mxu0 0.0
        %1845 = vmatpush1.msra.mxu0 0.0
        %1846 = vmatprep.subr.mxu0 0.0
        %1847 = vmatpush1.msra.mxu0 0.0
        %1848 = vmatprep.subr.mxu0 0.0
        %1849 = vmatpush1.msra.mxu0 0.0
        %1850 = vmatprep.subr.mxu0 0.0
        %1851 = vmatpush1.msra.mxu0 0.0
        %1852 = vmatprep.subr.mxu0 0.0
        %1853 = vmatpush1.msra.mxu0 0.0
        %1854 = vmatprep.subr.mxu0 0.0
        %1855 = vmatpush1.msra.mxu0 0.0
        %1856 = vmatprep.subr.mxu0 0.0
        %1857 = vmatpush1.msra.mxu0 0.0
        %1858 = vmatprep.mubr.f32.mxu0 0.0
        %1859 = vmatmul.mubr.f32.gmra.mrb[0].mxu0 %v1711
        %v1860 = vpop.f32.mrb[0].mxu0
        %v1861 = vadd.f32 0.0, %v1860
        %v1862 = vpop.f32.mrb[0].mxu0
        %1863 = vdwg.mxu0
        %v1864 = vld [vmem:[%s5] sm:$0xff]
        %v1865 = vld [vmem:[%s5 + $0x8] sm:$0xff]
        %v1866 = vld [vmem:[%s5 + $0x10] sm:$0xff]
        %v1867 = vld [vmem:[%s5 + $0x18] sm:$0xff]
        %v1868 = vld [vmem:[%s5 + $0x20] sm:$0xff]
        %v1869 = vld [vmem:[%s5 + $0x28] sm:$0xff]
        %v1870 = vld [vmem:[%s5 + $0x30] sm:$0xff]
        %v1871 = vld [vmem:[%s5 + $0x38] sm:$0xff]
        %v1872 = vld [vmem:[%s5 + $0x40] sm:$0xff]
        %v1873 = vld [vmem:[%s5 + $0x48] sm:$0xff]
        %v1874 = vld [vmem:[%s5 + $0x50] sm:$0xff]
        %v1875 = vld [vmem:[%s5 + $0x58] sm:$0xff]
        %v1876 = vld [vmem:[%s5 + $0x60] sm:$0xff]
        %v1877 = vld [vmem:[%s5 + $0x68] sm:$0xff]
        %v1878 = vld [vmem:[%s5 + $0x70] sm:$0xff]
        %v1879 = vld [vmem:[%s5 + $0x78] sm:$0xff]
        %v1880 = vld [vmem:[%s5 + $0x80] sm:$0xff]
        %v1881 = vld [vmem:[%s5 + $0x88] sm:$0xff]
        %v1882 = vld [vmem:[%s5 + $0x90] sm:$0xff]
        %v1883 = vld [vmem:[%s5 + $0x98] sm:$0xff]
        %v1884 = vld [vmem:[%s5 + $0xa0] sm:$0xff]
        %v1885 = vld [vmem:[%s5 + $0xa8] sm:$0xff]
        %v1886 = vld [vmem:[%s5 + $0xb0] sm:$0xff]
        %v1887 = vld [vmem:[%s5 + $0xb8] sm:$0xff]
        %v1888 = vld [vmem:[%s5 + $0xc0] sm:$0xff]
        %v1889 = vld [vmem:[%s5 + $0xc8] sm:$0xff]
        %v1890 = vld [vmem:[%s5 + $0xd0] sm:$0xff]
        %v1891 = vld [vmem:[%s5 + $0xd8] sm:$0xff]
        %v1892 = vld [vmem:[%s5 + $0xe0] sm:$0xff]
        %v1893 = vld [vmem:[%s5 + $0xe8] sm:$0xff]
        %v1894 = vld [vmem:[%s5 + $0xf0] sm:$0xff]
        %v1895 = vld [vmem:[%s5 + $0xf8] sm:$0xff]
        %v1896 = vld [vmem:[%s5 + $0x100] sm:$0xff]
        %v1897 = vld [vmem:[%s5 + $0x108] sm:$0xff]
        %v1898 = vld [vmem:[%s5 + $0x110] sm:$0xff]
        %v1899 = vld [vmem:[%s5 + $0x118] sm:$0xff]
        %v1900 = vadd.s32 %v1706, 1
        %vm1901 = vcmp.eq.s32.totalorder %v793, %v1900
        %v1902 = vsel %vm1901, 1.0, 0.0
        %v1904 = vsel %vm1709, %v1902, 0
        %1906 = vmatprep.subr.mxu0 %v1698
        %1907 = vmatpush1.msra.mxu0 %v1697
        %1908 = vmatprep.subr.mxu0 %v1701
        %1909 = vmatpush1.msra.mxu0 %v1700
        %1910 = vmatprep.subr.mxu0 %v1718
        %1911 = vmatpush1.msra.mxu0 %v1715
        %1912 = vmatprep.subr.mxu0 0.0
        %1913 = vmatpush1.msra.mxu0 0.0
        %1914 = vmatprep.subr.mxu0 0.0
        %1915 = vmatpush1.msra.mxu0 0.0
        %1916 = vmatprep.subr.mxu0 0.0
        %1917 = vmatpush1.msra.mxu0 0.0
        %1918 = vmatprep.subr.mxu0 0.0
        %1919 = vmatpush1.msra.mxu0 0.0
        %1920 = vmatprep.subr.mxu0 0.0
        %1921 = vmatpush1.msra.mxu0 0.0
        %1922 = vmatprep.subr.mxu0 0.0
        %1923 = vmatpush1.msra.mxu0 0.0
        %1924 = vmatprep.subr.mxu0 0.0
        %1925 = vmatpush1.msra.mxu0 0.0
        %1926 = vmatprep.subr.mxu0 0.0
        %1927 = vmatpush1.msra.mxu0 0.0
        %1928 = vmatprep.subr.mxu0 0.0
        %1929 = vmatpush1.msra.mxu0 0.0
        %1930 = vmatprep.subr.mxu0 0.0
        %1931 = vmatpush1.msra.mxu0 0.0
        %1932 = vmatprep.subr.mxu0 0.0
        %1933 = vmatpush1.msra.mxu0 0.0
        %1934 = vmatprep.subr.mxu0 0.0
        %1935 = vmatpush1.msra.mxu0 0.0
        %1936 = vmatprep.subr.mxu0 0.0
        %1937 = vmatpush1.msra.mxu0 0.0
        %1938 = vmatprep.subr.mxu0 0.0
        %1939 = vmatpush1.msra.mxu0 0.0
        %1940 = vmatprep.subr.mxu0 0.0
        %1941 = vmatpush1.msra.mxu0 0.0
        %1942 = vmatprep.subr.mxu0 0.0
        %1943 = vmatpush1.msra.mxu0 0.0
        %1944 = vmatprep.subr.mxu0 0.0
        %1945 = vmatpush1.msra.mxu0 0.0
        %1946 = vmatprep.subr.mxu0 0.0
        %1947 = vmatpush1.msra.mxu0 0.0
        %1948 = vmatprep.subr.mxu0 0.0
        %1949 = vmatpush1.msra.mxu0 0.0
        %1950 = vmatprep.subr.mxu0 0.0
        %1951 = vmatpush1.msra.mxu0 0.0
        %1952 = vmatprep.subr.mxu0 0.0
        %1953 = vmatpush1.msra.mxu0 0.0
        %1954 = vmatprep.subr.mxu0 0.0
        %1955 = vmatpush1.msra.mxu0 0.0
        %1956 = vmatprep.subr.mxu0 0.0
        %1957 = vmatpush1.msra.mxu0 0.0
        %1958 = vmatprep.subr.mxu0 0.0
        %1959 = vmatpush1.msra.mxu0 0.0
        %1960 = vmatprep.subr.mxu0 0.0
        %1961 = vmatpush1.msra.mxu0 0.0
        %1962 = vmatprep.subr.mxu0 0.0
        %1963 = vmatpush1.msra.mxu0 0.0
        %1964 = vmatprep.subr.mxu0 0.0
        %1965 = vmatpush1.msra.mxu0 0.0
        %1966 = vmatprep.subr.mxu0 0.0
        %1967 = vmatpush1.msra.mxu0 0.0
        %1968 = vmatprep.subr.mxu0 0.0
        %1969 = vmatpush1.msra.mxu0 0.0
        %1970 = vmatprep.mubr.f32.mxu0 0.0
        %1971 = vmatmul.mubr.f32.gmra.mrb[0].mxu0 %v1904
        %v1972 = vpop.f32.mrb[0].mxu0
        %v1973 = vadd.f32 0.0, %v1972
        %v1974 = vpop.f32.mrb[0].mxu0
        %v1975 = vadd.f32 0.0, %v1974
        %1976 = vdwg.mxu0
        %1977 = vmatprep.subr.mxu0 0.0
        %1978 = vmatpush1.msra.mxu0 %v1699
        %1979 = vmatprep.subr.mxu0 0.0
        %1980 = vmatpush1.msra.mxu0 %v1702
        %1981 = vmatprep.subr.mxu0 0.0
        %1982 = vmatpush1.msra.mxu0 %v1721
        %1983 = vmatprep.subr.mxu0 0.0
        %1984 = vmatpush1.msra.mxu0 0.0
        %1985 = vmatprep.subr.mxu0 0.0
        %1986 = vmatpush1.msra.mxu0 0.0
        %1987 = vmatprep.subr.mxu0 0.0
        %1988 = vmatpush1.msra.mxu0 0.0
        %1989 = vmatprep.subr.mxu0 0.0
        %1990 = vmatpush1.msra.mxu0 0.0
        %1991 = vmatprep.subr.mxu0 0.0
        %1992 = vmatpush1.msra.mxu0 0.0
        %1993 = vmatprep.subr.mxu0 0.0
        %1994 = vmatpush1.msra.mxu0 0.0
        %1995 = vmatprep.subr.mxu0 0.0
        %1996 = vmatpush1.msra.mxu0 0.0
        %1997 = vmatprep.subr.mxu0 0.0
        %1998 = vmatpush1.msra.mxu0 0.0
        %1999 = vmatprep.subr.mxu0 0.0
        %2000 = vmatpush1.msra.mxu0 0.0
        %2001 = vmatprep.subr.mxu0 0.0
        %2002 = vmatpush1.msra.mxu0 0.0
        %2003 = vmatprep.subr.mxu0 0.0
        %2004 = vmatpush1.msra.mxu0 0.0
        %2005 = vmatprep.subr.mxu0 0.0
        %2006 = vmatpush1.msra.mxu0 0.0
        %2007 = vmatprep.subr.mxu0 0.0
        %2008 = vmatpush1.msra.mxu0 0.0
        %2009 = vmatprep.subr.mxu0 0.0
        %2010 = vmatpush1.msra.mxu0 0.0
        %2011 = vmatprep.subr.mxu0 0.0
        %2012 = vmatpush1.msra.mxu0 0.0
        %2013 = vmatprep.subr.mxu0 0.0
        %2014 = vmatpush1.msra.mxu0 0.0
        %2015 = vmatprep.subr.mxu0 0.0
        %2016 = vmatpush1.msra.mxu0 0.0
        %2017 = vmatprep.subr.mxu0 0.0
        %2018 = vmatpush1.msra.mxu0 0.0
        %2019 = vmatprep.subr.mxu0 0.0
        %2020 = vmatpush1.msra.mxu0 0.0
        %2021 = vmatprep.subr.mxu0 0.0
        %2022 = vmatpush1.msra.mxu0 0.0
        %2023 = vmatprep.subr.mxu0 0.0
        %2024 = vmatpush1.msra.mxu0 0.0
        %2025 = vmatprep.subr.mxu0 0.0
        %2026 = vmatpush1.msra.mxu0 0.0
        %2027 = vmatprep.subr.mxu0 0.0
        %2028 = vmatpush1.msra.mxu0 0.0
        %2029 = vmatprep.subr.mxu0 0.0
        %2030 = vmatpush1.msra.mxu0 0.0
        %2031 = vmatprep.subr.mxu0 0.0
        %2032 = vmatpush1.msra.mxu0 0.0
        %2033 = vmatprep.subr.mxu0 0.0
        %2034 = vmatpush1.msra.mxu0 0.0
        %2035 = vmatprep.subr.mxu0 0.0
        %2036 = vmatpush1.msra.mxu0 0.0
        %2037 = vmatprep.subr.mxu0 0.0
        %2038 = vmatpush1.msra.mxu0 0.0
        %2039 = vmatprep.subr.mxu0 0.0
        %2040 = vmatpush1.msra.mxu0 0.0
        %2041 = vmatprep.mubr.f32.mxu0 0.0
        %2042 = vmatmul.mubr.f32.gmra.mrb[0].mxu0 %v1904
        %v2043 = vpop.f32.mrb[0].mxu0
        %v2044 = vadd.f32 0.0, %v2043
        %v2045 = vpop.f32.mrb[0].mxu0
        %2046 = vdwg.mxu0
        %s2047 = scalar_lea.vmem %s5, 288
        %v2048 = vld [vmem:[%s2047] sm:$0xff]
        %v2049 = vld [vmem:[%s2047 + $0x8] sm:$0xff]
        %v2050 = vld [vmem:[%s2047 + $0x10] sm:$0xff]
        %v2051 = vld [vmem:[%s2047 + $0x18] sm:$0xff]
        %v2052 = vld [vmem:[%s2047 + $0x20] sm:$0xff]
        %v2053 = vld [vmem:[%s2047 + $0x28] sm:$0xff]
        %v2054 = vld [vmem:[%s2047 + $0x30] sm:$0xff]
        %v2055 = vld [vmem:[%s2047 + $0x38] sm:$0xff]
        %v2056 = vld [vmem:[%s2047 + $0x40] sm:$0xff]
        %v2057 = vld [vmem:[%s2047 + $0x48] sm:$0xff]
        %v2058 = vld [vmem:[%s2047 + $0x50] sm:$0xff]
        %v2059 = vld [vmem:[%s2047 + $0x58] sm:$0xff]
        %v2060 = vld [vmem:[%s2047 + $0x60] sm:$0xff]
        %v2061 = vld [vmem:[%s2047 + $0x68] sm:$0xff]
        %v2062 = vld [vmem:[%s2047 + $0x70] sm:$0xff]
        %v2063 = vld [vmem:[%s2047 + $0x78] sm:$0xff]
        %v2064 = vld [vmem:[%s2047 + $0x80] sm:$0xff]
        %v2065 = vld [vmem:[%s2047 + $0x88] sm:$0xff]
        %v2066 = vld [vmem:[%s2047 + $0x90] sm:$0xff]
        %v2067 = vld [vmem:[%s2047 + $0x98] sm:$0xff]
        %v2068 = vld [vmem:[%s2047 + $0xa0] sm:$0xff]
        %v2069 = vld [vmem:[%s2047 + $0xa8] sm:$0xff]
        %v2070 = vld [vmem:[%s2047 + $0xb0] sm:$0xff]
        %v2071 = vld [vmem:[%s2047 + $0xb8] sm:$0xff]
        %v2072 = vld [vmem:[%s2047 + $0xc0] sm:$0xff]
        %v2073 = vld [vmem:[%s2047 + $0xc8] sm:$0xff]
        %v2074 = vld [vmem:[%s2047 + $0xd0] sm:$0xff]
        %v2075 = vld [vmem:[%s2047 + $0xd8] sm:$0xff]
        %v2076 = vld [vmem:[%s2047 + $0xe0] sm:$0xff]
        %v2077 = vld [vmem:[%s2047 + $0xe8] sm:$0xff]
        %v2078 = vld [vmem:[%s2047 + $0xf0] sm:$0xff]
        %v2079 = vld [vmem:[%s2047 + $0xf8] sm:$0xff]
        %v2080 = vld [vmem:[%s2047 + $0x100] sm:$0xff]
        %v2081 = vld [vmem:[%s2047 + $0x108] sm:$0xff]
        %v2082 = vld [vmem:[%s2047 + $0x110] sm:$0xff]
        %v2083 = vld [vmem:[%s2047 + $0x118] sm:$0xff]
        %vm2084 = vcmask 261120
        %v2086 = vsel %vm2084, %v2044, 0
        %2088 = vmatprep.subr.mxu0 0.0
        %2089 = vmatpush1.msra.mxu0 %v2048
        %2090 = vmatprep.subr.mxu0 0.0
        %2091 = vmatpush1.msra.mxu0 %v2049
        %2092 = vmatprep.subr.mxu0 0.0
        %2093 = vmatpush1.msra.mxu0 %v2050
        %2094 = vmatprep.subr.mxu0 0.0
        %2095 = vmatpush1.msra.mxu0 %v2051
        %2096 = vmatprep.subr.mxu0 0.0
        %2097 = vmatpush1.msra.mxu0 %v2052
        %2098 = vmatprep.subr.mxu0 0.0
        %2099 = vmatpush1.msra.mxu0 %v2053
        %2100 = vmatprep.subr.mxu0 0.0
        %2101 = vmatpush1.msra.mxu0 %v2054
        %2102 = vmatprep.subr.mxu0 0.0
        %2103 = vmatpush1.msra.mxu0 %v2055
        %2104 = vmatprep.subr.mxu0 0.0
        %2105 = vmatpush1.msra.mxu0 %v2056
        %2106 = vmatprep.subr.mxu0 0.0
        %2107 = vmatpush1.msra.mxu0 %v2057
        %2108 = vmatprep.subr.mxu0 0.0
        %2109 = vmatpush1.msra.mxu0 %v2058
        %2110 = vmatprep.subr.mxu0 0.0
        %2111 = vmatpush1.msra.mxu0 %v2059
        %2112 = vmatprep.subr.mxu0 0.0
        %2113 = vmatpush1.msra.mxu0 %v2060
        %2114 = vmatprep.subr.mxu0 0.0
        %2115 = vmatpush1.msra.mxu0 %v2061
        %2116 = vmatprep.subr.mxu0 0.0
        %2117 = vmatpush1.msra.mxu0 %v2062
        %2118 = vmatprep.subr.mxu0 0.0
        %2119 = vmatpush1.msra.mxu0 %v2063
        %2120 = vmatprep.subr.mxu0 0.0
        %2121 = vmatpush1.msra.mxu0 %v2064
        %2122 = vmatprep.subr.mxu0 0.0
        %2123 = vmatpush1.msra.mxu0 %v2065
        %2124 = vmatprep.subr.mxu0 0.0
        %2125 = vmatpush1.msra.mxu0 %v2066
        %2126 = vmatprep.subr.mxu0 0.0
        %2127 = vmatpush1.msra.mxu0 %v2067
        %2128 = vmatprep.subr.mxu0 0.0
        %2129 = vmatpush1.msra.mxu0 %v2068
        %2130 = vmatprep.subr.mxu0 0.0
        %2131 = vmatpush1.msra.mxu0 %v2069
        %2132 = vmatprep.subr.mxu0 0.0
        %2133 = vmatpush1.msra.mxu0 %v2070
        %2134 = vmatprep.subr.mxu0 0.0
        %2135 = vmatpush1.msra.mxu0 %v2071
        %2136 = vmatprep.subr.mxu0 0.0
        %2137 = vmatpush1.msra.mxu0 %v2072
        %2138 = vmatprep.subr.mxu0 0.0
        %2139 = vmatpush1.msra.mxu0 %v2073
        %2140 = vmatprep.subr.mxu0 0.0
        %2141 = vmatpush1.msra.mxu0 %v2074
        %2142 = vmatprep.subr.mxu0 0.0
        %2143 = vmatpush1.msra.mxu0 %v2075
        %2144 = vmatprep.subr.mxu0 0.0
        %2145 = vmatpush1.msra.mxu0 %v2076
        %2146 = vmatprep.subr.mxu0 0.0
        %2147 = vmatpush1.msra.mxu0 %v2077
        %2148 = vmatprep.subr.mxu0 0.0
        %2149 = vmatpush1.msra.mxu0 %v2078
        %2150 = vmatprep.subr.mxu0 0.0
        %2151 = vmatpush1.msra.mxu0 %v2079
        %2152 = vmatprep.mubr.f32.mxu0 %v1975
        %2153 = vmatmul.mubr.f32.gmra.mrb[0].mxu0 %v1973
        %v2154 = vpop.f32.mrb[0].mxu0
        %v2155 = vadd.f32 0.0, %v2154
        %v2156 = vpop.f32.mrb[0].mxu0
        %2157 = vdwg.mxu0
        %2158 = vmatprep.subr.mxu0 0.0
        %2159 = vmatpush1.msra.mxu0 %v2080
        %2160 = vmatprep.subr.mxu0 0.0
        %2161 = vmatpush1.msra.mxu0 %v2081
        %2162 = vmatprep.subr.mxu0 0.0
        %2163 = vmatpush1.msra.mxu0 %v2082
        %2164 = vmatprep.subr.mxu0 0.0
        %2165 = vmatpush1.msra.mxu0 %v2083
        %2166 = vmatprep.subr.mxu0 0.0
        %2167 = vmatpush1.msra.mxu0 0.0
        %2168 = vmatprep.subr.mxu0 0.0
        %2169 = vmatpush1.msra.mxu0 0.0
        %2170 = vmatprep.subr.mxu0 0.0
        %2171 = vmatpush1.msra.mxu0 0.0
        %2172 = vmatprep.subr.mxu0 0.0
        %2173 = vmatpush1.msra.mxu0 0.0
        %2174 = vmatprep.subr.mxu0 0.0
        %2175 = vmatpush1.msra.mxu0 0.0
        %2176 = vmatprep.subr.mxu0 0.0
        %2177 = vmatpush1.msra.mxu0 0.0
        %2178 = vmatprep.subr.mxu0 0.0
        %2179 = vmatpush1.msra.mxu0 0.0
        %2180 = vmatprep.subr.mxu0 0.0
        %2181 = vmatpush1.msra.mxu0 0.0
        %2182 = vmatprep.subr.mxu0 0.0
        %2183 = vmatpush1.msra.mxu0 0.0
        %2184 = vmatprep.subr.mxu0 0.0
        %2185 = vmatpush1.msra.mxu0 0.0
        %2186 = vmatprep.subr.mxu0 0.0
        %2187 = vmatpush1.msra.mxu0 0.0
        %2188 = vmatprep.subr.mxu0 0.0
        %2189 = vmatpush1.msra.mxu0 0.0
        %2190 = vmatprep.subr.mxu0 0.0
        %2191 = vmatpush1.msra.mxu0 0.0
        %2192 = vmatprep.subr.mxu0 0.0
        %2193 = vmatpush1.msra.mxu0 0.0
        %2194 = vmatprep.subr.mxu0 0.0
        %2195 = vmatpush1.msra.mxu0 0.0
        %2196 = vmatprep.subr.mxu0 0.0
        %2197 = vmatpush1.msra.mxu0 0.0
        %2198 = vmatprep.subr.mxu0 0.0
        %2199 = vmatpush1.msra.mxu0 0.0
        %2200 = vmatprep.subr.mxu0 0.0
        %2201 = vmatpush1.msra.mxu0 0.0
        %2202 = vmatprep.subr.mxu0 0.0
        %2203 = vmatpush1.msra.mxu0 0.0
        %2204 = vmatprep.subr.mxu0 0.0
        %2205 = vmatpush1.msra.mxu0 0.0
        %2206 = vmatprep.subr.mxu0 0.0
        %2207 = vmatpush1.msra.mxu0 0.0
        %2208 = vmatprep.subr.mxu0 0.0
        %2209 = vmatpush1.msra.mxu0 0.0
        %2210 = vmatprep.subr.mxu0 0.0
        %2211 = vmatpush1.msra.mxu0 0.0
        %2212 = vmatprep.subr.mxu0 0.0
        %2213 = vmatpush1.msra.mxu0 0.0
        %2214 = vmatprep.subr.mxu0 0.0
        %2215 = vmatpush1.msra.mxu0 0.0
        %2216 = vmatprep.subr.mxu0 0.0
        %2217 = vmatpush1.msra.mxu0 0.0
        %2218 = vmatprep.subr.mxu0 0.0
        %2219 = vmatpush1.msra.mxu0 0.0
        %2220 = vmatprep.subr.mxu0 0.0
        %2221 = vmatpush1.msra.mxu0 0.0
        %2222 = vmatprep.mubr.f32.mxu0 0.0
        %2223 = vmatmul.mubr.f32.gmra.mrb[0].mxu0 %v2086
        %v2224 = vpop.f32.mrb[0].mxu0
        %v2225 = vadd.f32 %v2155, %v2224
        %v2226 = vpop.f32.mrb[0].mxu0
        %2227 = vdwg.mxu0
        %v2229 = vsel %vm2084, %v1861, 0
        %2231 = vmatprep.subr.mxu0 0.0
        %2232 = vmatpush1.msra.mxu0 %v1864
        %2233 = vmatprep.subr.mxu0 0.0
        %2234 = vmatpush1.msra.mxu0 %v1865
        %2235 = vmatprep.subr.mxu0 0.0
        %2236 = vmatpush1.msra.mxu0 %v1866
        %2237 = vmatprep.subr.mxu0 0.0
        %2238 = vmatpush1.msra.mxu0 %v1867
        %2239 = vmatprep.subr.mxu0 0.0
        %2240 = vmatpush1.msra.mxu0 %v1868
        %2241 = vmatprep.subr.mxu0 0.0
        %2242 = vmatpush1.msra.mxu0 %v1869
        %2243 = vmatprep.subr.mxu0 0.0
        %2244 = vmatpush1.msra.mxu0 %v1870
        %2245 = vmatprep.subr.mxu0 0.0
        %2246 = vmatpush1.msra.mxu0 %v1871
        %2247 = vmatprep.subr.mxu0 0.0
        %2248 = vmatpush1.msra.mxu0 %v1872
        %2249 = vmatprep.subr.mxu0 0.0
        %2250 = vmatpush1.msra.mxu0 %v1873
        %2251 = vmatprep.subr.mxu0 0.0
        %2252 = vmatpush1.msra.mxu0 %v1874
        %2253 = vmatprep.subr.mxu0 0.0
        %2254 = vmatpush1.msra.mxu0 %v1875
        %2255 = vmatprep.subr.mxu0 0.0
        %2256 = vmatpush1.msra.mxu0 %v1876
        %2257 = vmatprep.subr.mxu0 0.0
        %2258 = vmatpush1.msra.mxu0 %v1877
        %2259 = vmatprep.subr.mxu0 0.0
        %2260 = vmatpush1.msra.mxu0 %v1878
        %2261 = vmatprep.subr.mxu0 0.0
        %2262 = vmatpush1.msra.mxu0 %v1879
        %2263 = vmatprep.subr.mxu0 0.0
        %2264 = vmatpush1.msra.mxu0 %v1880
        %2265 = vmatprep.subr.mxu0 0.0
        %2266 = vmatpush1.msra.mxu0 %v1881
        %2267 = vmatprep.subr.mxu0 0.0
        %2268 = vmatpush1.msra.mxu0 %v1882
        %2269 = vmatprep.subr.mxu0 0.0
        %2270 = vmatpush1.msra.mxu0 %v1883
        %2271 = vmatprep.subr.mxu0 0.0
        %2272 = vmatpush1.msra.mxu0 %v1884
        %2273 = vmatprep.subr.mxu0 0.0
        %2274 = vmatpush1.msra.mxu0 %v1885
        %2275 = vmatprep.subr.mxu0 0.0
        %2276 = vmatpush1.msra.mxu0 %v1886
        %2277 = vmatprep.subr.mxu0 0.0
        %2278 = vmatpush1.msra.mxu0 %v1887
        %2279 = vmatprep.subr.mxu0 0.0
        %2280 = vmatpush1.msra.mxu0 %v1888
        %2281 = vmatprep.subr.mxu0 0.0
        %2282 = vmatpush1.msra.mxu0 %v1889
        %2283 = vmatprep.subr.mxu0 0.0
        %2284 = vmatpush1.msra.mxu0 %v1890
        %2285 = vmatprep.subr.mxu0 0.0
        %2286 = vmatpush1.msra.mxu0 %v1891
        %2287 = vmatprep.subr.mxu0 0.0
        %2288 = vmatpush1.msra.mxu0 %v1892
        %2289 = vmatprep.subr.mxu0 0.0
        %2290 = vmatpush1.msra.mxu0 %v1893
        %2291 = vmatprep.subr.mxu0 0.0
        %2292 = vmatpush1.msra.mxu0 %v1894
        %2293 = vmatprep.subr.mxu0 0.0
        %2294 = vmatpush1.msra.mxu0 %v1895
        %2295 = vmatprep.mubr.f32.mxu0 %v1792
        %2296 = vmatmul.mubr.f32.gmra.mrb[0].mxu0 %v1790
        %v2297 = vpop.f32.mrb[0].mxu0
        %v2298 = vadd.f32 %v2225, %v2297
        %v2299 = vpop.f32.mrb[0].mxu0
        %2300 = vdwg.mxu0
        %2301 = vmatprep.subr.mxu0 0.0
        %2302 = vmatpush1.msra.mxu0 %v1896
        %2303 = vmatprep.subr.mxu0 0.0
        %2304 = vmatpush1.msra.mxu0 %v1897
        %2305 = vmatprep.subr.mxu0 0.0
        %2306 = vmatpush1.msra.mxu0 %v1898
        %2307 = vmatprep.subr.mxu0 0.0
        %2308 = vmatpush1.msra.mxu0 %v1899
        %2309 = vmatprep.subr.mxu0 0.0
        %2310 = vmatpush1.msra.mxu0 0.0
        %2311 = vmatprep.subr.mxu0 0.0
        %2312 = vmatpush1.msra.mxu0 0.0
        %2313 = vmatprep.subr.mxu0 0.0
        %2314 = vmatpush1.msra.mxu0 0.0
        %2315 = vmatprep.subr.mxu0 0.0
        %2316 = vmatpush1.msra.mxu0 0.0
        %2317 = vmatprep.subr.mxu0 0.0
        %2318 = vmatpush1.msra.mxu0 0.0
        %2319 = vmatprep.subr.mxu0 0.0
        %2320 = vmatpush1.msra.mxu0 0.0
        %2321 = vmatprep.subr.mxu0 0.0
        %2322 = vmatpush1.msra.mxu0 0.0
        %2323 = vmatprep.subr.mxu0 0.0
        %2324 = vmatpush1.msra.mxu0 0.0
        %2325 = vmatprep.subr.mxu0 0.0
        %2326 = vmatpush1.msra.mxu0 0.0
        %2327 = vmatprep.subr.mxu0 0.0
        %2328 = vmatpush1.msra.mxu0 0.0
        %2329 = vmatprep.subr.mxu0 0.0
        %2330 = vmatpush1.msra.mxu0 0.0
        %2331 = vmatprep.subr.mxu0 0.0
        %2332 = vmatpush1.msra.mxu0 0.0
        %2333 = vmatprep.subr.mxu0 0.0
        %2334 = vmatpush1.msra.mxu0 0.0
        %2335 = vmatprep.subr.mxu0 0.0
        %2336 = vmatpush1.msra.mxu0 0.0
        %2337 = vmatprep.subr.mxu0 0.0
        %2338 = vmatpush1.msra.mxu0 0.0
        %2339 = vmatprep.subr.mxu0 0.0
        %2340 = vmatpush1.msra.mxu0 0.0
        %2341 = vmatprep.subr.mxu0 0.0
        %2342 = vmatpush1.msra.mxu0 0.0
        %2343 = vmatprep.subr.mxu0 0.0
        %2344 = vmatpush1.msra.mxu0 0.0
        %2345 = vmatprep.subr.mxu0 0.0
        %2346 = vmatpush1.msra.mxu0 0.0
        %2347 = vmatprep.subr.mxu0 0.0
        %2348 = vmatpush1.msra.mxu0 0.0
        %2349 = vmatprep.subr.mxu0 0.0
        %2350 = vmatpush1.msra.mxu0 0.0
        %2351 = vmatprep.subr.mxu0 0.0
        %2352 = vmatpush1.msra.mxu0 0.0
        %2353 = vmatprep.subr.mxu0 0.0
        %2354 = vmatpush1.msra.mxu0 0.0
        %2355 = vmatprep.subr.mxu0 0.0
        %2356 = vmatpush1.msra.mxu0 0.0
        %2357 = vmatprep.subr.mxu0 0.0
        %2358 = vmatpush1.msra.mxu0 0.0
        %2359 = vmatprep.subr.mxu0 0.0
        %2360 = vmatpush1.msra.mxu0 0.0
        %2361 = vmatprep.subr.mxu0 0.0
        %2362 = vmatpush1.msra.mxu0 0.0
        %2363 = vmatprep.subr.mxu0 0.0
        %2364 = vmatpush1.msra.mxu0 0.0
        %2365 = vmatprep.mubr.f32.mxu0 0.0
        %2366 = vmatmul.mubr.f32.gmra.mrb[0].mxu0 %v2229
        %v2367 = vpop.f32.mrb[0].mxu0
        %v2368 = vadd.f32 %v2298, %v2367
        %v2369 = vpop.f32.mrb[0].mxu0
        %2370 = vdwg.mxu0
        %v2371 = vadd.s32 %v1706, 2
        %vm2372 = vcmp.eq.s32.totalorder %v793, %v2371
        %v2373 = vsel %vm2372, 1.0, 0.0
        %v2375 = vsel %vm1709, %v2373, 0
        %2377 = vmatprep.subr.mxu0 %v1698
        %2378 = vmatpush1.msra.mxu0 %v1697
        %2379 = vmatprep.subr.mxu0 %v1701
        %2380 = vmatpush1.msra.mxu0 %v1700
        %2381 = vmatprep.subr.mxu0 %v1718
        %2382 = vmatpush1.msra.mxu0 %v1715
        %2383 = vmatprep.subr.mxu0 0.0
        %2384 = vmatpush1.msra.mxu0 0.0
        %2385 = vmatprep.subr.mxu0 0.0
        %2386 = vmatpush1.msra.mxu0 0.0
        %2387 = vmatprep.subr.mxu0 0.0
        %2388 = vmatpush1.msra.mxu0 0.0
        %2389 = vmatprep.subr.mxu0 0.0
        %2390 = vmatpush1.msra.mxu0 0.0
        %2391 = vmatprep.subr.mxu0 0.0
        %2392 = vmatpush1.msra.mxu0 0.0
        %2393 = vmatprep.subr.mxu0 0.0
        %2394 = vmatpush1.msra.mxu0 0.0
        %2395 = vmatprep.subr.mxu0 0.0
        %2396 = vmatpush1.msra.mxu0 0.0
        %2397 = vmatprep.subr.mxu0 0.0
        %2398 = vmatpush1.msra.mxu0 0.0
        %2399 = vmatprep.subr.mxu0 0.0
        %2400 = vmatpush1.msra.mxu0 0.0
        %2401 = vmatprep.subr.mxu0 0.0
        %2402 = vmatpush1.msra.mxu0 0.0
        %2403 = vmatprep.subr.mxu0 0.0
        %2404 = vmatpush1.msra.mxu0 0.0
        %2405 = vmatprep.subr.mxu0 0.0
        %2406 = vmatpush1.msra.mxu0 0.0
        %2407 = vmatprep.subr.mxu0 0.0
        %2408 = vmatpush1.msra.mxu0 0.0
        %2409 = vmatprep.subr.mxu0 0.0
        %2410 = vmatpush1.msra.mxu0 0.0
        %2411 = vmatprep.subr.mxu0 0.0
        %2412 = vmatpush1.msra.mxu0 0.0
        %2413 = vmatprep.subr.mxu0 0.0
        %2414 = vmatpush1.msra.mxu0 0.0
        %2415 = vmatprep.subr.mxu0 0.0
        %2416 = vmatpush1.msra.mxu0 0.0
        %2417 = vmatprep.subr.mxu0 0.0
        %2418 = vmatpush1.msra.mxu0 0.0
        %2419 = vmatprep.subr.mxu0 0.0
        %2420 = vmatpush1.msra.mxu0 0.0
        %2421 = vmatprep.subr.mxu0 0.0
        %2422 = vmatpush1.msra.mxu0 0.0
        %2423 = vmatprep.subr.mxu0 0.0
        %2424 = vmatpush1.msra.mxu0 0.0
        %2425 = vmatprep.subr.mxu0 0.0
        %2426 = vmatpush1.msra.mxu0 0.0
        %2427 = vmatprep.subr.mxu0 0.0
        %2428 = vmatpush1.msra.mxu0 0.0
        %2429 = vmatprep.subr.mxu0 0.0
        %2430 = vmatpush1.msra.mxu0 0.0
        %2431 = vmatprep.subr.mxu0 0.0
        %2432 = vmatpush1.msra.mxu0 0.0
        %2433 = vmatprep.subr.mxu0 0.0
        %2434 = vmatpush1.msra.mxu0 0.0
        %2435 = vmatprep.subr.mxu0 0.0
        %2436 = vmatpush1.msra.mxu0 0.0
        %2437 = vmatprep.subr.mxu0 0.0
        %2438 = vmatpush1.msra.mxu0 0.0
        %2439 = vmatprep.subr.mxu0 0.0
        %2440 = vmatpush1.msra.mxu0 0.0
        %2441 = vmatprep.mubr.f32.mxu0 0.0
        %2442 = vmatmul.mubr.f32.gmra.mrb[0].mxu0 %v2375
        %v2443 = vpop.f32.mrb[0].mxu0
        %v2444 = vadd.f32 0.0, %v2443
        %v2445 = vpop.f32.mrb[0].mxu0
        %v2446 = vadd.f32 0.0, %v2445
        %2447 = vdwg.mxu0
        %2448 = vmatprep.subr.mxu0 0.0
        %2449 = vmatpush1.msra.mxu0 %v1699
        %2450 = vmatprep.subr.mxu0 0.0
        %2451 = vmatpush1.msra.mxu0 %v1702
        %2452 = vmatprep.subr.mxu0 0.0
        %2453 = vmatpush1.msra.mxu0 %v1721
        %2454 = vmatprep.subr.mxu0 0.0
        %2455 = vmatpush1.msra.mxu0 0.0
        %2456 = vmatprep.subr.mxu0 0.0
        %2457 = vmatpush1.msra.mxu0 0.0
        %2458 = vmatprep.subr.mxu0 0.0
        %2459 = vmatpush1.msra.mxu0 0.0
        %2460 = vmatprep.subr.mxu0 0.0
        %2461 = vmatpush1.msra.mxu0 0.0
        %2462 = vmatprep.subr.mxu0 0.0
        %2463 = vmatpush1.msra.mxu0 0.0
        %2464 = vmatprep.subr.mxu0 0.0
        %2465 = vmatpush1.msra.mxu0 0.0
        %2466 = vmatprep.subr.mxu0 0.0
        %2467 = vmatpush1.msra.mxu0 0.0
        %2468 = vmatprep.subr.mxu0 0.0
        %2469 = vmatpush1.msra.mxu0 0.0
        %2470 = vmatprep.subr.mxu0 0.0
        %2471 = vmatpush1.msra.mxu0 0.0
        %2472 = vmatprep.subr.mxu0 0.0
        %2473 = vmatpush1.msra.mxu0 0.0
        %2474 = vmatprep.subr.mxu0 0.0
        %2475 = vmatpush1.msra.mxu0 0.0
        %2476 = vmatprep.subr.mxu0 0.0
        %2477 = vmatpush1.msra.mxu0 0.0
        %2478 = vmatprep.subr.mxu0 0.0
        %2479 = vmatpush1.msra.mxu0 0.0
        %2480 = vmatprep.subr.mxu0 0.0
        %2481 = vmatpush1.msra.mxu0 0.0
        %2482 = vmatprep.subr.mxu0 0.0
        %2483 = vmatpush1.msra.mxu0 0.0
        %2484 = vmatprep.subr.mxu0 0.0
        %2485 = vmatpush1.msra.mxu0 0.0
        %2486 = vmatprep.subr.mxu0 0.0
        %2487 = vmatpush1.msra.mxu0 0.0
        %2488 = vmatprep.subr.mxu0 0.0
        %2489 = vmatpush1.msra.mxu0 0.0
        %2490 = vmatprep.subr.mxu0 0.0
        %2491 = vmatpush1.msra.mxu0 0.0
        %2492 = vmatprep.subr.mxu0 0.0
        %2493 = vmatpush1.msra.mxu0 0.0
        %2494 = vmatprep.subr.mxu0 0.0
        %2495 = vmatpush1.msra.mxu0 0.0
        %2496 = vmatprep.subr.mxu0 0.0
        %2497 = vmatpush1.msra.mxu0 0.0
        %2498 = vmatprep.subr.mxu0 0.0
        %2499 = vmatpush1.msra.mxu0 0.0
        %2500 = vmatprep.subr.mxu0 0.0
        %2501 = vmatpush1.msra.mxu0 0.0
        %2502 = vmatprep.subr.mxu0 0.0
        %2503 = vmatpush1.msra.mxu0 0.0
        %2504 = vmatprep.subr.mxu0 0.0
        %2505 = vmatpush1.msra.mxu0 0.0
        %2506 = vmatprep.subr.mxu0 0.0
        %2507 = vmatpush1.msra.mxu0 0.0
        %2508 = vmatprep.subr.mxu0 0.0
        %2509 = vmatpush1.msra.mxu0 0.0
        %2510 = vmatprep.subr.mxu0 0.0
        %2511 = vmatpush1.msra.mxu0 0.0
        %2512 = vmatprep.mubr.f32.mxu0 0.0
        %2513 = vmatmul.mubr.f32.gmra.mrb[0].mxu0 %v2375
        %v2514 = vpop.f32.mrb[0].mxu0
        %v2515 = vadd.f32 0.0, %v2514
        %v2516 = vpop.f32.mrb[0].mxu0
        %2517 = vdwg.mxu0
        %s2518 = scalar_lea.vmem %s5, 576
        %v2519 = vld [vmem:[%s2518] sm:$0xff]
        %v2520 = vld [vmem:[%s2518 + $0x8] sm:$0xff]
        %v2521 = vld [vmem:[%s2518 + $0x10] sm:$0xff]
        %v2522 = vld [vmem:[%s2518 + $0x18] sm:$0xff]
        %v2523 = vld [vmem:[%s2518 + $0x20] sm:$0xff]
        %v2524 = vld [vmem:[%s2518 + $0x28] sm:$0xff]
        %v2525 = vld [vmem:[%s2518 + $0x30] sm:$0xff]
        %v2526 = vld [vmem:[%s2518 + $0x38] sm:$0xff]
        %v2527 = vld [vmem:[%s2518 + $0x40] sm:$0xff]
        %v2528 = vld [vmem:[%s2518 + $0x48] sm:$0xff]
        %v2529 = vld [vmem:[%s2518 + $0x50] sm:$0xff]
        %v2530 = vld [vmem:[%s2518 + $0x58] sm:$0xff]
        %v2531 = vld [vmem:[%s2518 + $0x60] sm:$0xff]
        %v2532 = vld [vmem:[%s2518 + $0x68] sm:$0xff]
        %v2533 = vld [vmem:[%s2518 + $0x70] sm:$0xff]
        %v2534 = vld [vmem:[%s2518 + $0x78] sm:$0xff]
        %v2535 = vld [vmem:[%s2518 + $0x80] sm:$0xff]
        %v2536 = vld [vmem:[%s2518 + $0x88] sm:$0xff]
        %v2537 = vld [vmem:[%s2518 + $0x90] sm:$0xff]
        %v2538 = vld [vmem:[%s2518 + $0x98] sm:$0xff]
        %v2539 = vld [vmem:[%s2518 + $0xa0] sm:$0xff]
        %v2540 = vld [vmem:[%s2518 + $0xa8] sm:$0xff]
        %v2541 = vld [vmem:[%s2518 + $0xb0] sm:$0xff]
        %v2542 = vld [vmem:[%s2518 + $0xb8] sm:$0xff]
        %v2543 = vld [vmem:[%s2518 + $0xc0] sm:$0xff]
        %v2544 = vld [vmem:[%s2518 + $0xc8] sm:$0xff]
        %v2545 = vld [vmem:[%s2518 + $0xd0] sm:$0xff]
        %v2546 = vld [vmem:[%s2518 + $0xd8] sm:$0xff]
        %v2547 = vld [vmem:[%s2518 + $0xe0] sm:$0xff]
        %v2548 = vld [vmem:[%s2518 + $0xe8] sm:$0xff]
        %v2549 = vld [vmem:[%s2518 + $0xf0] sm:$0xff]
        %v2550 = vld [vmem:[%s2518 + $0xf8] sm:$0xff]
        %v2551 = vld [vmem:[%s2518 + $0x100] sm:$0xff]
        %v2552 = vld [vmem:[%s2518 + $0x108] sm:$0xff]
        %v2553 = vld [vmem:[%s2518 + $0x110] sm:$0xff]
        %v2554 = vld [vmem:[%s2518 + $0x118] sm:$0xff]
        %v2556 = vsel %vm2084, %v2515, 0
        %2558 = vmatprep.subr.mxu0 0.0
        %2559 = vmatpush1.msra.mxu0 %v2519
        %2560 = vmatprep.subr.mxu0 0.0
        %2561 = vmatpush1.msra.mxu0 %v2520
        %2562 = vmatprep.subr.mxu0 0.0
        %2563 = vmatpush1.msra.mxu0 %v2521
        %2564 = vmatprep.subr.mxu0 0.0
        %2565 = vmatpush1.msra.mxu0 %v2522
        %2566 = vmatprep.subr.mxu0 0.0
        %2567 = vmatpush1.msra.mxu0 %v2523
        %2568 = vmatprep.subr.mxu0 0.0
        %2569 = vmatpush1.msra.mxu0 %v2524
        %2570 = vmatprep.subr.mxu0 0.0
        %2571 = vmatpush1.msra.mxu0 %v2525
        %2572 = vmatprep.subr.mxu0 0.0
        %2573 = vmatpush1.msra.mxu0 %v2526
        %2574 = vmatprep.subr.mxu0 0.0
        %2575 = vmatpush1.msra.mxu0 %v2527
        %2576 = vmatprep.subr.mxu0 0.0
        %2577 = vmatpush1.msra.mxu0 %v2528
        %2578 = vmatprep.subr.mxu0 0.0
        %2579 = vmatpush1.msra.mxu0 %v2529
        %2580 = vmatprep.subr.mxu0 0.0
        %2581 = vmatpush1.msra.mxu0 %v2530
        %2582 = vmatprep.subr.mxu0 0.0
        %2583 = vmatpush1.msra.mxu0 %v2531
        %2584 = vmatprep.subr.mxu0 0.0
        %2585 = vmatpush1.msra.mxu0 %v2532
        %2586 = vmatprep.subr.mxu0 0.0
        %2587 = vmatpush1.msra.mxu0 %v2533
        %2588 = vmatprep.subr.mxu0 0.0
        %2589 = vmatpush1.msra.mxu0 %v2534
        %2590 = vmatprep.subr.mxu0 0.0
        %2591 = vmatpush1.msra.mxu0 %v2535
        %2592 = vmatprep.subr.mxu0 0.0
        %2593 = vmatpush1.msra.mxu0 %v2536
        %2594 = vmatprep.subr.mxu0 0.0
        %2595 = vmatpush1.msra.mxu0 %v2537
        %2596 = vmatprep.subr.mxu0 0.0
        %2597 = vmatpush1.msra.mxu0 %v2538
        %2598 = vmatprep.subr.mxu0 0.0
        %2599 = vmatpush1.msra.mxu0 %v2539
        %2600 = vmatprep.subr.mxu0 0.0
        %2601 = vmatpush1.msra.mxu0 %v2540
        %2602 = vmatprep.subr.mxu0 0.0
        %2603 = vmatpush1.msra.mxu0 %v2541
        %2604 = vmatprep.subr.mxu0 0.0
        %2605 = vmatpush1.msra.mxu0 %v2542
        %2606 = vmatprep.subr.mxu0 0.0
        %2607 = vmatpush1.msra.mxu0 %v2543
        %2608 = vmatprep.subr.mxu0 0.0
        %2609 = vmatpush1.msra.mxu0 %v2544
        %2610 = vmatprep.subr.mxu0 0.0
        %2611 = vmatpush1.msra.mxu0 %v2545
        %2612 = vmatprep.subr.mxu0 0.0
        %2613 = vmatpush1.msra.mxu0 %v2546
        %2614 = vmatprep.subr.mxu0 0.0
        %2615 = vmatpush1.msra.mxu0 %v2547
        %2616 = vmatprep.subr.mxu0 0.0
        %2617 = vmatpush1.msra.mxu0 %v2548
        %2618 = vmatprep.subr.mxu0 0.0
        %2619 = vmatpush1.msra.mxu0 %v2549
        %2620 = vmatprep.subr.mxu0 0.0
        %2621 = vmatpush1.msra.mxu0 %v2550
        %2622 = vmatprep.mubr.f32.mxu0 %v2446
        %2623 = vmatmul.mubr.f32.gmra.mrb[0].mxu0 %v2444
        %v2624 = vpop.f32.mrb[0].mxu0
        %v2625 = vadd.f32 0.0, %v2624
        %v2626 = vpop.f32.mrb[0].mxu0
        %2627 = vdwg.mxu0
        %2628 = vmatprep.subr.mxu0 0.0
        %2629 = vmatpush1.msra.mxu0 %v2551
        %2630 = vmatprep.subr.mxu0 0.0
        %2631 = vmatpush1.msra.mxu0 %v2552
        %2632 = vmatprep.subr.mxu0 0.0
        %2633 = vmatpush1.msra.mxu0 %v2553
        %2634 = vmatprep.subr.mxu0 0.0
        %2635 = vmatpush1.msra.mxu0 %v2554
        %2636 = vmatprep.subr.mxu0 0.0
        %2637 = vmatpush1.msra.mxu0 0.0
        %2638 = vmatprep.subr.mxu0 0.0
        %2639 = vmatpush1.msra.mxu0 0.0
        %2640 = vmatprep.subr.mxu0 0.0
        %2641 = vmatpush1.msra.mxu0 0.0
        %2642 = vmatprep.subr.mxu0 0.0
        %2643 = vmatpush1.msra.mxu0 0.0
        %2644 = vmatprep.subr.mxu0 0.0
        %2645 = vmatpush1.msra.mxu0 0.0
        %2646 = vmatprep.subr.mxu0 0.0
        %2647 = vmatpush1.msra.mxu0 0.0
        %2648 = vmatprep.subr.mxu0 0.0
        %2649 = vmatpush1.msra.mxu0 0.0
        %2650 = vmatprep.subr.mxu0 0.0
        %2651 = vmatpush1.msra.mxu0 0.0
        %2652 = vmatprep.subr.mxu0 0.0
        %2653 = vmatpush1.msra.mxu0 0.0
        %2654 = vmatprep.subr.mxu0 0.0
        %2655 = vmatpush1.msra.mxu0 0.0
        %2656 = vmatprep.subr.mxu0 0.0
        %2657 = vmatpush1.msra.mxu0 0.0
        %2658 = vmatprep.subr.mxu0 0.0
        %2659 = vmatpush1.msra.mxu0 0.0
        %2660 = vmatprep.subr.mxu0 0.0
        %2661 = vmatpush1.msra.mxu0 0.0
        %2662 = vmatprep.subr.mxu0 0.0
        %2663 = vmatpush1.msra.mxu0 0.0
        %2664 = vmatprep.subr.mxu0 0.0
        %2665 = vmatpush1.msra.mxu0 0.0
        %2666 = vmatprep.subr.mxu0 0.0
        %2667 = vmatpush1.msra.mxu0 0.0
        %2668 = vmatprep.subr.mxu0 0.0
        %2669 = vmatpush1.msra.mxu0 0.0
        %2670 = vmatprep.subr.mxu0 0.0
        %2671 = vmatpush1.msra.mxu0 0.0
        %2672 = vmatprep.subr.mxu0 0.0
        %2673 = vmatpush1.msra.mxu0 0.0
        %2674 = vmatprep.subr.mxu0 0.0
        %2675 = vmatpush1.msra.mxu0 0.0
        %2676 = vmatprep.subr.mxu0 0.0
        %2677 = vmatpush1.msra.mxu0 0.0
        %2678 = vmatprep.subr.mxu0 0.0
        %2679 = vmatpush1.msra.mxu0 0.0
        %2680 = vmatprep.subr.mxu0 0.0
        %2681 = vmatpush1.msra.mxu0 0.0
        %2682 = vmatprep.subr.mxu0 0.0
        %2683 = vmatpush1.msra.mxu0 0.0
        %2684 = vmatprep.subr.mxu0 0.0
        %2685 = vmatpush1.msra.mxu0 0.0
        %2686 = vmatprep.subr.mxu0 0.0
        %2687 = vmatpush1.msra.mxu0 0.0
        %2688 = vmatprep.subr.mxu0 0.0
        %2689 = vmatpush1.msra.mxu0 0.0
        %2690 = vmatprep.subr.mxu0 0.0
        %2691 = vmatpush1.msra.mxu0 0.0
        %2692 = vmatprep.mubr.f32.mxu0 0.0
        %2693 = vmatmul.mubr.f32.gmra.mrb[0].mxu0 %v2556
        %v2694 = vpop.f32.mrb[0].mxu0
        %v2695 = vadd.f32 %v2625, %v2694
        %v2696 = vpop.f32.mrb[0].mxu0
        %2697 = vdwg.mxu0
        %v2698 = vadd.f32 %v2368, %v2695
        %v2699 = vadd.s32 %v1706, 3
        %vm2700 = vcmp.eq.s32.totalorder %v793, %v2699
        %v2701 = vsel %vm2700, 1.0, 0.0
        %v2703 = vsel %vm1709, %v2701, 0
        %2705 = vmatprep.subr.mxu0 %v1698
        %2706 = vmatpush1.msra.mxu0 %v1697
        %2707 = vmatprep.subr.mxu0 %v1701
        %2708 = vmatpush1.msra.mxu0 %v1700
        %2709 = vmatprep.subr.mxu0 %v1718
        %2710 = vmatpush1.msra.mxu0 %v1715
        %2711 = vmatprep.subr.mxu0 0.0
        %2712 = vmatpush1.msra.mxu0 0.0
        %2713 = vmatprep.subr.mxu0 0.0
        %2714 = vmatpush1.msra.mxu0 0.0
        %2715 = vmatprep.subr.mxu0 0.0
        %2716 = vmatpush1.msra.mxu0 0.0
        %2717 = vmatprep.subr.mxu0 0.0
        %2718 = vmatpush1.msra.mxu0 0.0
        %2719 = vmatprep.subr.mxu0 0.0
        %2720 = vmatpush1.msra.mxu0 0.0
        %2721 = vmatprep.subr.mxu0 0.0
        %2722 = vmatpush1.msra.mxu0 0.0
        %2723 = vmatprep.subr.mxu0 0.0
        %2724 = vmatpush1.msra.mxu0 0.0
        %2725 = vmatprep.subr.mxu0 0.0
        %2726 = vmatpush1.msra.mxu0 0.0
        %2727 = vmatprep.subr.mxu0 0.0
        %2728 = vmatpush1.msra.mxu0 0.0
        %2729 = vmatprep.subr.mxu0 0.0
        %2730 = vmatpush1.msra.mxu0 0.0
        %2731 = vmatprep.subr.mxu0 0.0
        %2732 = vmatpush1.msra.mxu0 0.0
        %2733 = vmatprep.subr.mxu0 0.0
        %2734 = vmatpush1.msra.mxu0 0.0
        %2735 = vmatprep.subr.mxu0 0.0
        %2736 = vmatpush1.msra.mxu0 0.0
        %2737 = vmatprep.subr.mxu0 0.0
        %2738 = vmatpush1.msra.mxu0 0.0
        %2739 = vmatprep.subr.mxu0 0.0
        %2740 = vmatpush1.msra.mxu0 0.0
        %2741 = vmatprep.subr.mxu0 0.0
        %2742 = vmatpush1.msra.mxu0 0.0
        %2743 = vmatprep.subr.mxu0 0.0
        %2744 = vmatpush1.msra.mxu0 0.0
        %2745 = vmatprep.subr.mxu0 0.0
        %2746 = vmatpush1.msra.mxu0 0.0
        %2747 = vmatprep.subr.mxu0 0.0
        %2748 = vmatpush1.msra.mxu0 0.0
        %2749 = vmatprep.subr.mxu0 0.0
        %2750 = vmatpush1.msra.mxu0 0.0
        %2751 = vmatprep.subr.mxu0 0.0
        %2752 = vmatpush1.msra.mxu0 0.0
        %2753 = vmatprep.subr.mxu0 0.0
        %2754 = vmatpush1.msra.mxu0 0.0
        %2755 = vmatprep.subr.mxu0 0.0
        %2756 = vmatpush1.msra.mxu0 0.0
        %2757 = vmatprep.subr.mxu0 0.0
        %2758 = vmatpush1.msra.mxu0 0.0
        %2759 = vmatprep.subr.mxu0 0.0
        %2760 = vmatpush1.msra.mxu0 0.0
        %2761 = vmatprep.subr.mxu0 0.0
        %2762 = vmatpush1.msra.mxu0 0.0
        %2763 = vmatprep.subr.mxu0 0.0
        %2764 = vmatpush1.msra.mxu0 0.0
        %2765 = vmatprep.subr.mxu0 0.0
        %2766 = vmatpush1.msra.mxu0 0.0
        %2767 = vmatprep.subr.mxu0 0.0
        %2768 = vmatpush1.msra.mxu0 0.0
        %2769 = vmatprep.mubr.f32.mxu0 0.0
        %2770 = vmatmul.mubr.f32.gmra.mrb[0].mxu0 %v2703
        %v2771 = vpop.f32.mrb[0].mxu0
        %v2772 = vadd.f32 0.0, %v2771
        %v2773 = vpop.f32.mrb[0].mxu0
        %v2774 = vadd.f32 0.0, %v2773
        %2775 = vdwg.mxu0
        %2776 = vmatprep.subr.mxu0 0.0
        %2777 = vmatpush1.msra.mxu0 %v1699
        %2778 = vmatprep.subr.mxu0 0.0
        %2779 = vmatpush1.msra.mxu0 %v1702
        %2780 = vmatprep.subr.mxu0 0.0
        %2781 = vmatpush1.msra.mxu0 %v1721
        %2782 = vmatprep.subr.mxu0 0.0
        %2783 = vmatpush1.msra.mxu0 0.0
        %2784 = vmatprep.subr.mxu0 0.0
        %2785 = vmatpush1.msra.mxu0 0.0
        %2786 = vmatprep.subr.mxu0 0.0
        %2787 = vmatpush1.msra.mxu0 0.0
        %2788 = vmatprep.subr.mxu0 0.0
        %2789 = vmatpush1.msra.mxu0 0.0
        %2790 = vmatprep.subr.mxu0 0.0
        %2791 = vmatpush1.msra.mxu0 0.0
        %2792 = vmatprep.subr.mxu0 0.0
        %2793 = vmatpush1.msra.mxu0 0.0
        %2794 = vmatprep.subr.mxu0 0.0
        %2795 = vmatpush1.msra.mxu0 0.0
        %2796 = vmatprep.subr.mxu0 0.0
        %2797 = vmatpush1.msra.mxu0 0.0
        %2798 = vmatprep.subr.mxu0 0.0
        %2799 = vmatpush1.msra.mxu0 0.0
        %2800 = vmatprep.subr.mxu0 0.0
        %2801 = vmatpush1.msra.mxu0 0.0
        %2802 = vmatprep.subr.mxu0 0.0
        %2803 = vmatpush1.msra.mxu0 0.0
        %2804 = vmatprep.subr.mxu0 0.0
        %2805 = vmatpush1.msra.mxu0 0.0
        %2806 = vmatprep.subr.mxu0 0.0
        %2807 = vmatpush1.msra.mxu0 0.0
        %2808 = vmatprep.subr.mxu0 0.0
        %2809 = vmatpush1.msra.mxu0 0.0
        %2810 = vmatprep.subr.mxu0 0.0
        %2811 = vmatpush1.msra.mxu0 0.0
        %2812 = vmatprep.subr.mxu0 0.0
        %2813 = vmatpush1.msra.mxu0 0.0
        %2814 = vmatprep.subr.mxu0 0.0
        %2815 = vmatpush1.msra.mxu0 0.0
        %2816 = vmatprep.subr.mxu0 0.0
        %2817 = vmatpush1.msra.mxu0 0.0
        %2818 = vmatprep.subr.mxu0 0.0
        %2819 = vmatpush1.msra.mxu0 0.0
        %2820 = vmatprep.subr.mxu0 0.0
        %2821 = vmatpush1.msra.mxu0 0.0
        %2822 = vmatprep.subr.mxu0 0.0
        %2823 = vmatpush1.msra.mxu0 0.0
        %2824 = vmatprep.subr.mxu0 0.0
        %2825 = vmatpush1.msra.mxu0 0.0
        %2826 = vmatprep.subr.mxu0 0.0
        %2827 = vmatpush1.msra.mxu0 0.0
        %2828 = vmatprep.subr.mxu0 0.0
        %2829 = vmatpush1.msra.mxu0 0.0
        %2830 = vmatprep.subr.mxu0 0.0
        %2831 = vmatpush1.msra.mxu0 0.0
        %2832 = vmatprep.subr.mxu0 0.0
        %2833 = vmatpush1.msra.mxu0 0.0
        %2834 = vmatprep.subr.mxu0 0.0
        %2835 = vmatpush1.msra.mxu0 0.0
        %2836 = vmatprep.subr.mxu0 0.0
        %2837 = vmatpush1.msra.mxu0 0.0
        %2838 = vmatprep.subr.mxu0 0.0
        %2839 = vmatpush1.msra.mxu0 0.0
        %2840 = vmatprep.mubr.f32.mxu0 0.0
        %2841 = vmatmul.mubr.f32.gmra.mrb[0].mxu0 %v2703
        %v2842 = vpop.f32.mrb[0].mxu0
        %v2843 = vadd.f32 0.0, %v2842
        %v2844 = vpop.f32.mrb[0].mxu0
        %2845 = vdwg.mxu0
        %s2846 = scalar_lea.vmem %s5, 864
        %v2847 = vld [vmem:[%s2846] sm:$0xff]
        %v2848 = vld [vmem:[%s2846 + $0x8] sm:$0xff]
        %v2849 = vld [vmem:[%s2846 + $0x10] sm:$0xff]
        %v2850 = vld [vmem:[%s2846 + $0x18] sm:$0xff]
        %v2851 = vld [vmem:[%s2846 + $0x20] sm:$0xff]
        %v2852 = vld [vmem:[%s2846 + $0x28] sm:$0xff]
        %v2853 = vld [vmem:[%s2846 + $0x30] sm:$0xff]
        %v2854 = vld [vmem:[%s2846 + $0x38] sm:$0xff]
        %v2855 = vld [vmem:[%s2846 + $0x40] sm:$0xff]
        %v2856 = vld [vmem:[%s2846 + $0x48] sm:$0xff]
        %v2857 = vld [vmem:[%s2846 + $0x50] sm:$0xff]
        %v2858 = vld [vmem:[%s2846 + $0x58] sm:$0xff]
        %v2859 = vld [vmem:[%s2846 + $0x60] sm:$0xff]
        %v2860 = vld [vmem:[%s2846 + $0x68] sm:$0xff]
        %v2861 = vld [vmem:[%s2846 + $0x70] sm:$0xff]
        %v2862 = vld [vmem:[%s2846 + $0x78] sm:$0xff]
        %v2863 = vld [vmem:[%s2846 + $0x80] sm:$0xff]
        %v2864 = vld [vmem:[%s2846 + $0x88] sm:$0xff]
        %v2865 = vld [vmem:[%s2846 + $0x90] sm:$0xff]
        %v2866 = vld [vmem:[%s2846 + $0x98] sm:$0xff]
        %v2867 = vld [vmem:[%s2846 + $0xa0] sm:$0xff]
        %v2868 = vld [vmem:[%s2846 + $0xa8] sm:$0xff]
        %v2869 = vld [vmem:[%s2846 + $0xb0] sm:$0xff]
        %v2870 = vld [vmem:[%s2846 + $0xb8] sm:$0xff]
        %v2871 = vld [vmem:[%s2846 + $0xc0] sm:$0xff]
        %v2872 = vld [vmem:[%s2846 + $0xc8] sm:$0xff]
        %v2873 = vld [vmem:[%s2846 + $0xd0] sm:$0xff]
        %v2874 = vld [vmem:[%s2846 + $0xd8] sm:$0xff]
        %v2875 = vld [vmem:[%s2846 + $0xe0] sm:$0xff]
        %v2876 = vld [vmem:[%s2846 + $0xe8] sm:$0xff]
        %v2877 = vld [vmem:[%s2846 + $0xf0] sm:$0xff]
        %v2878 = vld [vmem:[%s2846 + $0xf8] sm:$0xff]
        %v2879 = vld [vmem:[%s2846 + $0x100] sm:$0xff]
        %v2880 = vld [vmem:[%s2846 + $0x108] sm:$0xff]
        %v2881 = vld [vmem:[%s2846 + $0x110] sm:$0xff]
        %v2882 = vld [vmem:[%s2846 + $0x118] sm:$0xff]
        %v2884 = vsel %vm2084, %v2843, 0
        %2886 = vmatprep.subr.mxu0 0.0
        %2887 = vmatpush1.msra.mxu0 %v2847
        %2888 = vmatprep.subr.mxu0 0.0
        %2889 = vmatpush1.msra.mxu0 %v2848
        %2890 = vmatprep.subr.mxu0 0.0
        %2891 = vmatpush1.msra.mxu0 %v2849
        %2892 = vmatprep.subr.mxu0 0.0
        %2893 = vmatpush1.msra.mxu0 %v2850
        %2894 = vmatprep.subr.mxu0 0.0
        %2895 = vmatpush1.msra.mxu0 %v2851
        %2896 = vmatprep.subr.mxu0 0.0
        %2897 = vmatpush1.msra.mxu0 %v2852
        %2898 = vmatprep.subr.mxu0 0.0
        %2899 = vmatpush1.msra.mxu0 %v2853
        %2900 = vmatprep.subr.mxu0 0.0
        %2901 = vmatpush1.msra.mxu0 %v2854
        %2902 = vmatprep.subr.mxu0 0.0
        %2903 = vmatpush1.msra.mxu0 %v2855
        %2904 = vmatprep.subr.mxu0 0.0
        %2905 = vmatpush1.msra.mxu0 %v2856
        %2906 = vmatprep.subr.mxu0 0.0
        %2907 = vmatpush1.msra.mxu0 %v2857
        %2908 = vmatprep.subr.mxu0 0.0
        %2909 = vmatpush1.msra.mxu0 %v2858
        %2910 = vmatprep.subr.mxu0 0.0
        %2911 = vmatpush1.msra.mxu0 %v2859
        %2912 = vmatprep.subr.mxu0 0.0
        %2913 = vmatpush1.msra.mxu0 %v2860
        %2914 = vmatprep.subr.mxu0 0.0
        %2915 = vmatpush1.msra.mxu0 %v2861
        %2916 = vmatprep.subr.mxu0 0.0
        %2917 = vmatpush1.msra.mxu0 %v2862
        %2918 = vmatprep.subr.mxu0 0.0
        %2919 = vmatpush1.msra.mxu0 %v2863
        %2920 = vmatprep.subr.mxu0 0.0
        %2921 = vmatpush1.msra.mxu0 %v2864
        %2922 = vmatprep.subr.mxu0 0.0
        %2923 = vmatpush1.msra.mxu0 %v2865
        %2924 = vmatprep.subr.mxu0 0.0
        %2925 = vmatpush1.msra.mxu0 %v2866
        %2926 = vmatprep.subr.mxu0 0.0
        %2927 = vmatpush1.msra.mxu0 %v2867
        %2928 = vmatprep.subr.mxu0 0.0
        %2929 = vmatpush1.msra.mxu0 %v2868
        %2930 = vmatprep.subr.mxu0 0.0
        %2931 = vmatpush1.msra.mxu0 %v2869
        %2932 = vmatprep.subr.mxu0 0.0
        %2933 = vmatpush1.msra.mxu0 %v2870
        %2934 = vmatprep.subr.mxu0 0.0
        %2935 = vmatpush1.msra.mxu0 %v2871
        %2936 = vmatprep.subr.mxu0 0.0
        %2937 = vmatpush1.msra.mxu0 %v2872
        %2938 = vmatprep.subr.mxu0 0.0
        %2939 = vmatpush1.msra.mxu0 %v2873
        %2940 = vmatprep.subr.mxu0 0.0
        %2941 = vmatpush1.msra.mxu0 %v2874
        %2942 = vmatprep.subr.mxu0 0.0
        %2943 = vmatpush1.msra.mxu0 %v2875
        %2944 = vmatprep.subr.mxu0 0.0
        %2945 = vmatpush1.msra.mxu0 %v2876
        %2946 = vmatprep.subr.mxu0 0.0
        %2947 = vmatpush1.msra.mxu0 %v2877
        %2948 = vmatprep.subr.mxu0 0.0
        %2949 = vmatpush1.msra.mxu0 %v2878
        %2950 = vmatprep.mubr.f32.mxu0 %v2774
        %2951 = vmatmul.mubr.f32.gmra.mrb[0].mxu0 %v2772
        %v2952 = vpop.f32.mrb[0].mxu0
        %v2953 = vadd.f32 0.0, %v2952
        %v2954 = vpop.f32.mrb[0].mxu0
        %2955 = vdwg.mxu0
        %2956 = vmatprep.subr.mxu0 0.0
        %2957 = vmatpush1.msra.mxu0 %v2879
        %2958 = vmatprep.subr.mxu0 0.0
        %2959 = vmatpush1.msra.mxu0 %v2880
        %2960 = vmatprep.subr.mxu0 0.0
        %2961 = vmatpush1.msra.mxu0 %v2881
        %2962 = vmatprep.subr.mxu0 0.0
        %2963 = vmatpush1.msra.mxu0 %v2882
        %2964 = vmatprep.subr.mxu0 0.0
        %2965 = vmatpush1.msra.mxu0 0.0
        %2966 = vmatprep.subr.mxu0 0.0
        %2967 = vmatpush1.msra.mxu0 0.0
        %2968 = vmatprep.subr.mxu0 0.0
        %2969 = vmatpush1.msra.mxu0 0.0
        %2970 = vmatprep.subr.mxu0 0.0
        %2971 = vmatpush1.msra.mxu0 0.0
        %2972 = vmatprep.subr.mxu0 0.0
        %2973 = vmatpush1.msra.mxu0 0.0
        %2974 = vmatprep.subr.mxu0 0.0
        %2975 = vmatpush1.msra.mxu0 0.0
        %2976 = vmatprep.subr.mxu0 0.0
        %2977 = vmatpush1.msra.mxu0 0.0
        %2978 = vmatprep.subr.mxu0 0.0
        %2979 = vmatpush1.msra.mxu0 0.0
        %2980 = vmatprep.subr.mxu0 0.0
        %2981 = vmatpush1.msra.mxu0 0.0
        %2982 = vmatprep.subr.mxu0 0.0
        %2983 = vmatpush1.msra.mxu0 0.0
        %2984 = vmatprep.subr.mxu0 0.0
        %2985 = vmatpush1.msra.mxu0 0.0
        %2986 = vmatprep.subr.mxu0 0.0
        %2987 = vmatpush1.msra.mxu0 0.0
        %2988 = vmatprep.subr.mxu0 0.0
        %2989 = vmatpush1.msra.mxu0 0.0
        %2990 = vmatprep.subr.mxu0 0.0
        %2991 = vmatpush1.msra.mxu0 0.0
        %2992 = vmatprep.subr.mxu0 0.0
        %2993 = vmatpush1.msra.mxu0 0.0
        %2994 = vmatprep.subr.mxu0 0.0
        %2995 = vmatpush1.msra.mxu0 0.0
        %2996 = vmatprep.subr.mxu0 0.0
        %2997 = vmatpush1.msra.mxu0 0.0
        %2998 = vmatprep.subr.mxu0 0.0
        %2999 = vmatpush1.msra.mxu0 0.0
        %3000 = vmatprep.subr.mxu0 0.0
        %3001 = vmatpush1.msra.mxu0 0.0
        %3002 = vmatprep.subr.mxu0 0.0
        %3003 = vmatpush1.msra.mxu0 0.0
        %3004 = vmatprep.subr.mxu0 0.0
        %3005 = vmatpush1.msra.mxu0 0.0
        %3006 = vmatprep.subr.mxu0 0.0
        %3007 = vmatpush1.msra.mxu0 0.0
        %3008 = vmatprep.subr.mxu0 0.0
        %3009 = vmatpush1.msra.mxu0 0.0
        %3010 = vmatprep.subr.mxu0 0.0
        %3011 = vmatpush1.msra.mxu0 0.0
        %3012 = vmatprep.subr.mxu0 0.0
        %3013 = vmatpush1.msra.mxu0 0.0
        %3014 = vmatprep.subr.mxu0 0.0
        %3015 = vmatpush1.msra.mxu0 0.0
        %3016 = vmatprep.subr.mxu0 0.0
        %3017 = vmatpush1.msra.mxu0 0.0
        %3018 = vmatprep.subr.mxu0 0.0
        %3019 = vmatpush1.msra.mxu0 0.0
        %3020 = vmatprep.mubr.f32.mxu0 0.0
        %3021 = vmatmul.mubr.f32.gmra.mrb[0].mxu0 %v2884
        %v3022 = vpop.f32.mrb[0].mxu0
        %v3023 = vadd.f32 %v2953, %v3022
        %v3024 = vpop.f32.mrb[0].mxu0
        %3025 = vdwg.mxu0
        %v3026 = vadd.f32 %v2698, %v3023
        %v3027 = vld [vmem:[%s6] sm:$0x1]
        %v3029 = vlaneseq
        %v3030 = vshrl.u32 %v3029, 7
        %v3031 = vsub.s32 0, %v3030
        %v3032 = vrot.slane %v3027, %v3031
        %v3034 = vadd.f32 %v3026, %v3032
        %v3035 = vmax.f32 %v3034, 0.0
        %vm3036 = vcmask 64512
        %v3037 = vsel %vm3036, %v1708, 0
        %3039 = vmatprep.subr.mxu0 0.0
        %3040 = vmatpush1.msra.mxu0 %v3035
        %3041 = vmatprep.subr.mxu0 0.0
        %3042 = vmatpush1.msra.mxu0 0.0
        %3043 = vmatprep.subr.mxu0 0.0
        %3044 = vmatpush1.msra.mxu0 0.0
        %3045 = vmatprep.subr.mxu0 0.0
        %3046 = vmatpush1.msra.mxu0 0.0
        %3047 = vmatprep.subr.mxu0 0.0
        %3048 = vmatpush1.msra.mxu0 0.0
        %3049 = vmatprep.subr.mxu0 0.0
        %3050 = vmatpush1.msra.mxu0 0.0
        %3051 = vmatprep.subr.mxu0 0.0
        %3052 = vmatpush1.msra.mxu0 0.0
        %3053 = vmatprep.subr.mxu0 0.0
        %3054 = vmatpush1.msra.mxu0 0.0
        %3055 = vmatprep.subr.mxu0 0.0
        %3056 = vmatpush1.msra.mxu0 0.0
        %3057 = vmatprep.subr.mxu0 0.0
        %3058 = vmatpush1.msra.mxu0 0.0
        %3059 = vmatprep.subr.mxu0 0.0
        %3060 = vmatpush1.msra.mxu0 0.0
        %3061 = vmatprep.subr.mxu0 0.0
        %3062 = vmatpush1.msra.mxu0 0.0
        %3063 = vmatprep.subr.mxu0 0.0
        %3064 = vmatpush1.msra.mxu0 0.0
        %3065 = vmatprep.subr.mxu0 0.0
        %3066 = vmatpush1.msra.mxu0 0.0
        %3067 = vmatprep.subr.mxu0 0.0
        %3068 = vmatpush1.msra.mxu0 0.0
        %3069 = vmatprep.subr.mxu0 0.0
        %3070 = vmatpush1.msra.mxu0 0.0
        %3071 = vmatprep.subr.mxu0 0.0
        %3072 = vmatpush1.msra.mxu0 0.0
        %3073 = vmatprep.subr.mxu0 0.0
        %3074 = vmatpush1.msra.mxu0 0.0
        %3075 = vmatprep.subr.mxu0 0.0
        %3076 = vmatpush1.msra.mxu0 0.0
        %3077 = vmatprep.subr.mxu0 0.0
        %3078 = vmatpush1.msra.mxu0 0.0
        %3079 = vmatprep.subr.mxu0 0.0
        %3080 = vmatpush1.msra.mxu0 0.0
        %3081 = vmatprep.subr.mxu0 0.0
        %3082 = vmatpush1.msra.mxu0 0.0
        %3083 = vmatprep.subr.mxu0 0.0
        %3084 = vmatpush1.msra.mxu0 0.0
        %3085 = vmatprep.subr.mxu0 0.0
        %3086 = vmatpush1.msra.mxu0 0.0
        %3087 = vmatprep.subr.mxu0 0.0
        %3088 = vmatpush1.msra.mxu0 0.0
        %3089 = vmatprep.subr.mxu0 0.0
        %3090 = vmatpush1.msra.mxu0 0.0
        %3091 = vmatprep.subr.mxu0 0.0
        %3092 = vmatpush1.msra.mxu0 0.0
        %3093 = vmatprep.subr.mxu0 0.0
        %3094 = vmatpush1.msra.mxu0 0.0
        %3095 = vmatprep.subr.mxu0 0.0
        %3096 = vmatpush1.msra.mxu0 0.0
        %3097 = vmatprep.subr.mxu0 0.0
        %3098 = vmatpush1.msra.mxu0 0.0
        %3099 = vmatprep.subr.mxu0 0.0
        %3100 = vmatpush1.msra.mxu0 0.0
        %3101 = vmatprep.subr.mxu0 0.0
        %3102 = vmatpush1.msra.mxu0 0.0
        %3103 = vmatprep.mubr.f32.mxu0 0.0
        %3104 = vmatmul.mubr.f32.gmra.mrb[0].mxu0 %v3037
        %v3105 = vpop.f32.mrb[0].mxu0
        %v3106 = vadd.f32 0.0, %v3105
        %v3107 = vpop.f32.mrb[0].mxu0
        %3108 = vdwg.mxu0
        %v3109 = vld [vmem:[%s7] sm:$0xff]
        %v3110 = vld [vmem:[%s7 + $0x8] sm:$0xff]
        %v3111 = vld [vmem:[%s7 + $0x10] sm:$0xff]
        %v3112 = vld [vmem:[%s7 + $0x18] sm:$0xff]
        %v3113 = vld [vmem:[%s7 + $0x20] sm:$0xff]
        %v3114 = vld [vmem:[%s7 + $0x28] sm:$0xff]
        %v3115 = vld [vmem:[%s7 + $0x30] sm:$0xff]
        %v3116 = vld [vmem:[%s7 + $0x38] sm:$0xff]
        %v3117 = vsel %vm3036, %v1902, 0
        %3119 = vmatprep.subr.mxu0 0.0
        %3120 = vmatpush1.msra.mxu0 %v3035
        %3121 = vmatprep.subr.mxu0 0.0
        %3122 = vmatpush1.msra.mxu0 0.0
        %3123 = vmatprep.subr.mxu0 0.0
        %3124 = vmatpush1.msra.mxu0 0.0
        %3125 = vmatprep.subr.mxu0 0.0
        %3126 = vmatpush1.msra.mxu0 0.0
        %3127 = vmatprep.subr.mxu0 0.0
        %3128 = vmatpush1.msra.mxu0 0.0
        %3129 = vmatprep.subr.mxu0 0.0
        %3130 = vmatpush1.msra.mxu0 0.0
        %3131 = vmatprep.subr.mxu0 0.0
        %3132 = vmatpush1.msra.mxu0 0.0
        %3133 = vmatprep.subr.mxu0 0.0
        %3134 = vmatpush1.msra.mxu0 0.0
        %3135 = vmatprep.subr.mxu0 0.0
        %3136 = vmatpush1.msra.mxu0 0.0
        %3137 = vmatprep.subr.mxu0 0.0
        %3138 = vmatpush1.msra.mxu0 0.0
        %3139 = vmatprep.subr.mxu0 0.0
        %3140 = vmatpush1.msra.mxu0 0.0
        %3141 = vmatprep.subr.mxu0 0.0
        %3142 = vmatpush1.msra.mxu0 0.0
        %3143 = vmatprep.subr.mxu0 0.0
        %3144 = vmatpush1.msra.mxu0 0.0
        %3145 = vmatprep.subr.mxu0 0.0
        %3146 = vmatpush1.msra.mxu0 0.0
        %3147 = vmatprep.subr.mxu0 0.0
        %3148 = vmatpush1.msra.mxu0 0.0
        %3149 = vmatprep.subr.mxu0 0.0
        %3150 = vmatpush1.msra.mxu0 0.0
        %3151 = vmatprep.subr.mxu0 0.0
        %3152 = vmatpush1.msra.mxu0 0.0
        %3153 = vmatprep.subr.mxu0 0.0
        %3154 = vmatpush1.msra.mxu0 0.0
        %3155 = vmatprep.subr.mxu0 0.0
        %3156 = vmatpush1.msra.mxu0 0.0
        %3157 = vmatprep.subr.mxu0 0.0
        %3158 = vmatpush1.msra.mxu0 0.0
        %3159 = vmatprep.subr.mxu0 0.0
        %3160 = vmatpush1.msra.mxu0 0.0
        %3161 = vmatprep.subr.mxu0 0.0
        %3162 = vmatpush1.msra.mxu0 0.0
        %3163 = vmatprep.subr.mxu0 0.0
        %3164 = vmatpush1.msra.mxu0 0.0
        %3165 = vmatprep.subr.mxu0 0.0
        %3166 = vmatpush1.msra.mxu0 0.0
        %3167 = vmatprep.subr.mxu0 0.0
        %3168 = vmatpush1.msra.mxu0 0.0
        %3169 = vmatprep.subr.mxu0 0.0
        %3170 = vmatpush1.msra.mxu0 0.0
        %3171 = vmatprep.subr.mxu0 0.0
        %3172 = vmatpush1.msra.mxu0 0.0
        %3173 = vmatprep.subr.mxu0 0.0
        %3174 = vmatpush1.msra.mxu0 0.0
        %3175 = vmatprep.subr.mxu0 0.0
        %3176 = vmatpush1.msra.mxu0 0.0
        %3177 = vmatprep.subr.mxu0 0.0
        %3178 = vmatpush1.msra.mxu0 0.0
        %3179 = vmatprep.subr.mxu0 0.0
        %3180 = vmatpush1.msra.mxu0 0.0
        %3181 = vmatprep.subr.mxu0 0.0
        %3182 = vmatpush1.msra.mxu0 0.0
        %3183 = vmatprep.mubr.f32.mxu0 0.0
        %3184 = vmatmul.mubr.f32.gmra.mrb[0].mxu0 %v3117
        %v3185 = vpop.f32.mrb[0].mxu0
        %v3186 = vadd.f32 0.0, %v3185
        %v3187 = vpop.f32.mrb[0].mxu0
        %3188 = vdwg.mxu0
        %s3189 = scalar_lea.vmem %s7, 64
        %v3190 = vld [vmem:[%s3189] sm:$0xff]
        %v3191 = vld [vmem:[%s3189 + $0x8] sm:$0xff]
        %v3192 = vld [vmem:[%s3189 + $0x10] sm:$0xff]
        %v3193 = vld [vmem:[%s3189 + $0x18] sm:$0xff]
        %v3194 = vld [vmem:[%s3189 + $0x20] sm:$0xff]
        %v3195 = vld [vmem:[%s3189 + $0x28] sm:$0xff]
        %v3196 = vld [vmem:[%s3189 + $0x30] sm:$0xff]
        %v3197 = vld [vmem:[%s3189 + $0x38] sm:$0xff]
        %vm3198 = vcmask 523264
        %v3200 = vsel %vm3198, %v3186, 0
        %3202 = vmatprep.subr.mxu0 0.0
        %3203 = vmatpush1.msra.mxu0 %v3190
        %3204 = vmatprep.subr.mxu0 0.0
        %3205 = vmatpush1.msra.mxu0 %v3191
        %3206 = vmatprep.subr.mxu0 0.0
        %3207 = vmatpush1.msra.mxu0 %v3192
        %3208 = vmatprep.subr.mxu0 0.0
        %3209 = vmatpush1.msra.mxu0 %v3193
        %3210 = vmatprep.subr.mxu0 0.0
        %3211 = vmatpush1.msra.mxu0 %v3194
        %3212 = vmatprep.subr.mxu0 0.0
        %3213 = vmatpush1.msra.mxu0 %v3195
        %3214 = vmatprep.subr.mxu0 0.0
        %3215 = vmatpush1.msra.mxu0 %v3196
        %3216 = vmatprep.subr.mxu0 0.0
        %3217 = vmatpush1.msra.mxu0 %v3197
        %3218 = vmatprep.subr.mxu0 0.0
        %3219 = vmatpush1.msra.mxu0 0.0
        %3220 = vmatprep.subr.mxu0 0.0
        %3221 = vmatpush1.msra.mxu0 0.0
        %3222 = vmatprep.subr.mxu0 0.0
        %3223 = vmatpush1.msra.mxu0 0.0
        %3224 = vmatprep.subr.mxu0 0.0
        %3225 = vmatpush1.msra.mxu0 0.0
        %3226 = vmatprep.subr.mxu0 0.0
        %3227 = vmatpush1.msra.mxu0 0.0
        %3228 = vmatprep.subr.mxu0 0.0
        %3229 = vmatpush1.msra.mxu0 0.0
        %3230 = vmatprep.subr.mxu0 0.0
        %3231 = vmatpush1.msra.mxu0 0.0
        %3232 = vmatprep.subr.mxu0 0.0
        %3233 = vmatpush1.msra.mxu0 0.0
        %3234 = vmatprep.subr.mxu0 0.0
        %3235 = vmatpush1.msra.mxu0 0.0
        %3236 = vmatprep.subr.mxu0 0.0
        %3237 = vmatpush1.msra.mxu0 0.0
        %3238 = vmatprep.subr.mxu0 0.0
        %3239 = vmatpush1.msra.mxu0 0.0
        %3240 = vmatprep.subr.mxu0 0.0
        %3241 = vmatpush1.msra.mxu0 0.0
        %3242 = vmatprep.subr.mxu0 0.0
        %3243 = vmatpush1.msra.mxu0 0.0
        %3244 = vmatprep.subr.mxu0 0.0
        %3245 = vmatpush1.msra.mxu0 0.0
        %3246 = vmatprep.subr.mxu0 0.0
        %3247 = vmatpush1.msra.mxu0 0.0
        %3248 = vmatprep.subr.mxu0 0.0
        %3249 = vmatpush1.msra.mxu0 0.0
        %3250 = vmatprep.subr.mxu0 0.0
        %3251 = vmatpush1.msra.mxu0 0.0
        %3252 = vmatprep.subr.mxu0 0.0
        %3253 = vmatpush1.msra.mxu0 0.0
        %3254 = vmatprep.subr.mxu0 0.0
        %3255 = vmatpush1.msra.mxu0 0.0
        %3256 = vmatprep.subr.mxu0 0.0
        %3257 = vmatpush1.msra.mxu0 0.0
        %3258 = vmatprep.subr.mxu0 0.0
        %3259 = vmatpush1.msra.mxu0 0.0
        %3260 = vmatprep.subr.mxu0 0.0
        %3261 = vmatpush1.msra.mxu0 0.0
        %3262 = vmatprep.subr.mxu0 0.0
        %3263 = vmatpush1.msra.mxu0 0.0
        %3264 = vmatprep.subr.mxu0 0.0
        %3265 = vmatpush1.msra.mxu0 0.0
        %3266 = vmatprep.mubr.f32.mxu0 0.0
        %3267 = vmatmul.mubr.f32.gmra.mrb[0].mxu0 %v3200
        %v3268 = vpop.f32.mrb[0].mxu0
        %v3269 = vadd.f32 0.0, %v3268
        %v3270 = vpop.f32.mrb[0].mxu0
        %3271 = vdwg.mxu0
        %v3273 = vsel %vm3198, %v3106, 0
        %3275 = vmatprep.subr.mxu0 0.0
        %3276 = vmatpush1.msra.mxu0 %v3109
        %3277 = vmatprep.subr.mxu0 0.0
        %3278 = vmatpush1.msra.mxu0 %v3110
        %3279 = vmatprep.subr.mxu0 0.0
        %3280 = vmatpush1.msra.mxu0 %v3111
        %3281 = vmatprep.subr.mxu0 0.0
        %3282 = vmatpush1.msra.mxu0 %v3112
        %3283 = vmatprep.subr.mxu0 0.0
        %3284 = vmatpush1.msra.mxu0 %v3113
        %3285 = vmatprep.subr.mxu0 0.0
        %3286 = vmatpush1.msra.mxu0 %v3114
        %3287 = vmatprep.subr.mxu0 0.0
        %3288 = vmatpush1.msra.mxu0 %v3115
        %3289 = vmatprep.subr.mxu0 0.0
        %3290 = vmatpush1.msra.mxu0 %v3116
        %3291 = vmatprep.subr.mxu0 0.0
        %3292 = vmatpush1.msra.mxu0 0.0
        %3293 = vmatprep.subr.mxu0 0.0
        %3294 = vmatpush1.msra.mxu0 0.0
        %3295 = vmatprep.subr.mxu0 0.0
        %3296 = vmatpush1.msra.mxu0 0.0
        %3297 = vmatprep.subr.mxu0 0.0
        %3298 = vmatpush1.msra.mxu0 0.0
        %3299 = vmatprep.subr.mxu0 0.0
        %3300 = vmatpush1.msra.mxu0 0.0
        %3301 = vmatprep.subr.mxu0 0.0
        %3302 = vmatpush1.msra.mxu0 0.0
        %3303 = vmatprep.subr.mxu0 0.0
        %3304 = vmatpush1.msra.mxu0 0.0
        %3305 = vmatprep.subr.mxu0 0.0
        %3306 = vmatpush1.msra.mxu0 0.0
        %3307 = vmatprep.subr.mxu0 0.0
        %3308 = vmatpush1.msra.mxu0 0.0
        %3309 = vmatprep.subr.mxu0 0.0
        %3310 = vmatpush1.msra.mxu0 0.0
        %3311 = vmatprep.subr.mxu0 0.0
        %3312 = vmatpush1.msra.mxu0 0.0
        %3313 = vmatprep.subr.mxu0 0.0
        %3314 = vmatpush1.msra.mxu0 0.0
        %3315 = vmatprep.subr.mxu0 0.0
        %3316 = vmatpush1.msra.mxu0 0.0
        %3317 = vmatprep.subr.mxu0 0.0
        %3318 = vmatpush1.msra.mxu0 0.0
        %3319 = vmatprep.subr.mxu0 0.0
        %3320 = vmatpush1.msra.mxu0 0.0
        %3321 = vmatprep.subr.mxu0 0.0
        %3322 = vmatpush1.msra.mxu0 0.0
        %3323 = vmatprep.subr.mxu0 0.0
        %3324 = vmatpush1.msra.mxu0 0.0
        %3325 = vmatprep.subr.mxu0 0.0
        %3326 = vmatpush1.msra.mxu0 0.0
        %3327 = vmatprep.subr.mxu0 0.0
        %3328 = vmatpush1.msra.mxu0 0.0
        %3329 = vmatprep.subr.mxu0 0.0
        %3330 = vmatpush1.msra.mxu0 0.0
        %3331 = vmatprep.subr.mxu0 0.0
        %3332 = vmatpush1.msra.mxu0 0.0
        %3333 = vmatprep.subr.mxu0 0.0
        %3334 = vmatpush1.msra.mxu0 0.0
        %3335 = vmatprep.subr.mxu0 0.0
        %3336 = vmatpush1.msra.mxu0 0.0
        %3337 = vmatprep.subr.mxu0 0.0
        %3338 = vmatpush1.msra.mxu0 0.0
        %3339 = vmatprep.mubr.f32.mxu0 0.0
        %3340 = vmatmul.mubr.f32.gmra.mrb[0].mxu0 %v3273
        %v3341 = vpop.f32.mrb[0].mxu0
        %v3342 = vadd.f32 %v3269, %v3341
        %v3343 = vpop.f32.mrb[0].mxu0
        %3344 = vdwg.mxu0
        %v3345 = vsel %vm3036, %v2373, 0
        %3347 = vmatprep.subr.mxu0 0.0
        %3348 = vmatpush1.msra.mxu0 %v3035
        %3349 = vmatprep.subr.mxu0 0.0
        %3350 = vmatpush1.msra.mxu0 0.0
        %3351 = vmatprep.subr.mxu0 0.0
        %3352 = vmatpush1.msra.mxu0 0.0
        %3353 = vmatprep.subr.mxu0 0.0
        %3354 = vmatpush1.msra.mxu0 0.0
        %3355 = vmatprep.subr.mxu0 0.0
        %3356 = vmatpush1.msra.mxu0 0.0
        %3357 = vmatprep.subr.mxu0 0.0
        %3358 = vmatpush1.msra.mxu0 0.0
        %3359 = vmatprep.subr.mxu0 0.0
        %3360 = vmatpush1.msra.mxu0 0.0
        %3361 = vmatprep.subr.mxu0 0.0
        %3362 = vmatpush1.msra.mxu0 0.0
        %3363 = vmatprep.subr.mxu0 0.0
        %3364 = vmatpush1.msra.mxu0 0.0
        %3365 = vmatprep.subr.mxu0 0.0
        %3366 = vmatpush1.msra.mxu0 0.0
        %3367 = vmatprep.subr.mxu0 0.0
        %3368 = vmatpush1.msra.mxu0 0.0
        %3369 = vmatprep.subr.mxu0 0.0
        %3370 = vmatpush1.msra.mxu0 0.0
        %3371 = vmatprep.subr.mxu0 0.0
        %3372 = vmatpush1.msra.mxu0 0.0
        %3373 = vmatprep.subr.mxu0 0.0
        %3374 = vmatpush1.msra.mxu0 0.0
        %3375 = vmatprep.subr.mxu0 0.0
        %3376 = vmatpush1.msra.mxu0 0.0
        %3377 = vmatprep.subr.mxu0 0.0
        %3378 = vmatpush1.msra.mxu0 0.0
        %3379 = vmatprep.subr.mxu0 0.0
        %3380 = vmatpush1.msra.mxu0 0.0
        %3381 = vmatprep.subr.mxu0 0.0
        %3382 = vmatpush1.msra.mxu0 0.0
        %3383 = vmatprep.subr.mxu0 0.0
        %3384 = vmatpush1.msra.mxu0 0.0
        %3385 = vmatprep.subr.mxu0 0.0
        %3386 = vmatpush1.msra.mxu0 0.0
        %3387 = vmatprep.subr.mxu0 0.0
        %3388 = vmatpush1.msra.mxu0 0.0
        %3389 = vmatprep.subr.mxu0 0.0
        %3390 = vmatpush1.msra.mxu0 0.0
        %3391 = vmatprep.subr.mxu0 0.0
        %3392 = vmatpush1.msra.mxu0 0.0
        %3393 = vmatprep.subr.mxu0 0.0
        %3394 = vmatpush1.msra.mxu0 0.0
        %3395 = vmatprep.subr.mxu0 0.0
        %3396 = vmatpush1.msra.mxu0 0.0
        %3397 = vmatprep.subr.mxu0 0.0
        %3398 = vmatpush1.msra.mxu0 0.0
        %3399 = vmatprep.subr.mxu0 0.0
        %3400 = vmatpush1.msra.mxu0 0.0
        %3401 = vmatprep.subr.mxu0 0.0
        %3402 = vmatpush1.msra.mxu0 0.0
        %3403 = vmatprep.subr.mxu0 0.0
        %3404 = vmatpush1.msra.mxu0 0.0
        %3405 = vmatprep.subr.mxu0 0.0
        %3406 = vmatpush1.msra.mxu0 0.0
        %3407 = vmatprep.subr.mxu0 0.0
        %3408 = vmatpush1.msra.mxu0 0.0
        %3409 = vmatprep.subr.mxu0 0.0
        %3410 = vmatpush1.msra.mxu0 0.0
        %3411 = vmatprep.mubr.f32.mxu0 0.0
        %3412 = vmatmul.mubr.f32.gmra.mrb[0].mxu0 %v3345
        %v3413 = vpop.f32.mrb[0].mxu0
        %v3414 = vadd.f32 0.0, %v3413
        %v3415 = vpop.f32.mrb[0].mxu0
        %3416 = vdwg.mxu0
        %s3417 = scalar_lea.vmem %s7, 128
        %v3418 = vld [vmem:[%s3417] sm:$0xff]
        %v3419 = vld [vmem:[%s3417 + $0x8] sm:$0xff]
        %v3420 = vld [vmem:[%s3417 + $0x10] sm:$0xff]
        %v3421 = vld [vmem:[%s3417 + $0x18] sm:$0xff]
        %v3422 = vld [vmem:[%s3417 + $0x20] sm:$0xff]
        %v3423 = vld [vmem:[%s3417 + $0x28] sm:$0xff]
        %v3424 = vld [vmem:[%s3417 + $0x30] sm:$0xff]
        %v3425 = vld [vmem:[%s3417 + $0x38] sm:$0xff]
        %v3427 = vsel %vm3198, %v3414, 0
        %3429 = vmatprep.subr.mxu0 0.0
        %3430 = vmatpush1.msra.mxu0 %v3418
        %3431 = vmatprep.subr.mxu0 0.0
        %3432 = vmatpush1.msra.mxu0 %v3419
        %3433 = vmatprep.subr.mxu0 0.0
        %3434 = vmatpush1.msra.mxu0 %v3420
        %3435 = vmatprep.subr.mxu0 0.0
        %3436 = vmatpush1.msra.mxu0 %v3421
        %3437 = vmatprep.subr.mxu0 0.0
        %3438 = vmatpush1.msra.mxu0 %v3422
        %3439 = vmatprep.subr.mxu0 0.0
        %3440 = vmatpush1.msra.mxu0 %v3423
        %3441 = vmatprep.subr.mxu0 0.0
        %3442 = vmatpush1.msra.mxu0 %v3424
        %3443 = vmatprep.subr.mxu0 0.0
        %3444 = vmatpush1.msra.mxu0 %v3425
        %3445 = vmatprep.subr.mxu0 0.0
        %3446 = vmatpush1.msra.mxu0 0.0
        %3447 = vmatprep.subr.mxu0 0.0
        %3448 = vmatpush1.msra.mxu0 0.0
        %3449 = vmatprep.subr.mxu0 0.0
        %3450 = vmatpush1.msra.mxu0 0.0
        %3451 = vmatprep.subr.mxu0 0.0
        %3452 = vmatpush1.msra.mxu0 0.0
        %3453 = vmatprep.subr.mxu0 0.0
        %3454 = vmatpush1.msra.mxu0 0.0
        %3455 = vmatprep.subr.mxu0 0.0
        %3456 = vmatpush1.msra.mxu0 0.0
        %3457 = vmatprep.subr.mxu0 0.0
        %3458 = vmatpush1.msra.mxu0 0.0
        %3459 = vmatprep.subr.mxu0 0.0
        %3460 = vmatpush1.msra.mxu0 0.0
        %3461 = vmatprep.subr.mxu0 0.0
        %3462 = vmatpush1.msra.mxu0 0.0
        %3463 = vmatprep.subr.mxu0 0.0
        %3464 = vmatpush1.msra.mxu0 0.0
        %3465 = vmatprep.subr.mxu0 0.0
        %3466 = vmatpush1.msra.mxu0 0.0
        %3467 = vmatprep.subr.mxu0 0.0
        %3468 = vmatpush1.msra.mxu0 0.0
        %3469 = vmatprep.subr.mxu0 0.0
        %3470 = vmatpush1.msra.mxu0 0.0
        %3471 = vmatprep.subr.mxu0 0.0
        %3472 = vmatpush1.msra.mxu0 0.0
        %3473 = vmatprep.subr.mxu0 0.0
        %3474 = vmatpush1.msra.mxu0 0.0
        %3475 = vmatprep.subr.mxu0 0.0
        %3476 = vmatpush1.msra.mxu0 0.0
        %3477 = vmatprep.subr.mxu0 0.0
        %3478 = vmatpush1.msra.mxu0 0.0
        %3479 = vmatprep.subr.mxu0 0.0
        %3480 = vmatpush1.msra.mxu0 0.0
        %3481 = vmatprep.subr.mxu0 0.0
        %3482 = vmatpush1.msra.mxu0 0.0
        %3483 = vmatprep.subr.mxu0 0.0
        %3484 = vmatpush1.msra.mxu0 0.0
        %3485 = vmatprep.subr.mxu0 0.0
        %3486 = vmatpush1.msra.mxu0 0.0
        %3487 = vmatprep.subr.mxu0 0.0
        %3488 = vmatpush1.msra.mxu0 0.0
        %3489 = vmatprep.subr.mxu0 0.0
        %3490 = vmatpush1.msra.mxu0 0.0
        %3491 = vmatprep.subr.mxu0 0.0
        %3492 = vmatpush1.msra.mxu0 0.0
        %3493 = vmatprep.mubr.f32.mxu0 0.0
        %3494 = vmatmul.mubr.f32.gmra.mrb[0].mxu0 %v3427
        %v3495 = vpop.f32.mrb[0].mxu0
        %v3496 = vadd.f32 0.0, %v3495
        %v3497 = vpop.f32.mrb[0].mxu0
        %3498 = vdwg.mxu0
        %v3499 = vadd.f32 %v3342, %v3496
        %v3500 = vsel %vm3036, %v2701, 0
        %3502 = vmatprep.subr.mxu0 0.0
        %3503 = vmatpush1.msra.mxu0 %v3035
        %3504 = vmatprep.subr.mxu0 0.0
        %3505 = vmatpush1.msra.mxu0 0.0
        %3506 = vmatprep.subr.mxu0 0.0
        %3507 = vmatpush1.msra.mxu0 0.0
        %3508 = vmatprep.subr.mxu0 0.0
        %3509 = vmatpush1.msra.mxu0 0.0
        %3510 = vmatprep.subr.mxu0 0.0
        %3511 = vmatpush1.msra.mxu0 0.0
        %3512 = vmatprep.subr.mxu0 0.0
        %3513 = vmatpush1.msra.mxu0 0.0
        %3514 = vmatprep.subr.mxu0 0.0
        %3515 = vmatpush1.msra.mxu0 0.0
        %3516 = vmatprep.subr.mxu0 0.0
        %3517 = vmatpush1.msra.mxu0 0.0
        %3518 = vmatprep.subr.mxu0 0.0
        %3519 = vmatpush1.msra.mxu0 0.0
        %3520 = vmatprep.subr.mxu0 0.0
        %3521 = vmatpush1.msra.mxu0 0.0
        %3522 = vmatprep.subr.mxu0 0.0
        %3523 = vmatpush1.msra.mxu0 0.0
        %3524 = vmatprep.subr.mxu0 0.0
        %3525 = vmatpush1.msra.mxu0 0.0
        %3526 = vmatprep.subr.mxu0 0.0
        %3527 = vmatpush1.msra.mxu0 0.0
        %3528 = vmatprep.subr.mxu0 0.0
        %3529 = vmatpush1.msra.mxu0 0.0
        %3530 = vmatprep.subr.mxu0 0.0
        %3531 = vmatpush1.msra.mxu0 0.0
        %3532 = vmatprep.subr.mxu0 0.0
        %3533 = vmatpush1.msra.mxu0 0.0
        %3534 = vmatprep.subr.mxu0 0.0
        %3535 = vmatpush1.msra.mxu0 0.0
        %3536 = vmatprep.subr.mxu0 0.0
        %3537 = vmatpush1.msra.mxu0 0.0
        %3538 = vmatprep.subr.mxu0 0.0
        %3539 = vmatpush1.msra.mxu0 0.0
        %3540 = vmatprep.subr.mxu0 0.0
        %3541 = vmatpush1.msra.mxu0 0.0
        %3542 = vmatprep.subr.mxu0 0.0
        %3543 = vmatpush1.msra.mxu0 0.0
        %3544 = vmatprep.subr.mxu0 0.0
        %3545 = vmatpush1.msra.mxu0 0.0
        %3546 = vmatprep.subr.mxu0 0.0
        %3547 = vmatpush1.msra.mxu0 0.0
        %3548 = vmatprep.subr.mxu0 0.0
        %3549 = vmatpush1.msra.mxu0 0.0
        %3550 = vmatprep.subr.mxu0 0.0
        %3551 = vmatpush1.msra.mxu0 0.0
        %3552 = vmatprep.subr.mxu0 0.0
        %3553 = vmatpush1.msra.mxu0 0.0
        %3554 = vmatprep.subr.mxu0 0.0
        %3555 = vmatpush1.msra.mxu0 0.0
        %3556 = vmatprep.subr.mxu0 0.0
        %3557 = vmatpush1.msra.mxu0 0.0
        %3558 = vmatprep.subr.mxu0 0.0
        %3559 = vmatpush1.msra.mxu0 0.0
        %3560 = vmatprep.subr.mxu0 0.0
        %3561 = vmatpush1.msra.mxu0 0.0
        %3562 = vmatprep.subr.mxu0 0.0
        %3563 = vmatpush1.msra.mxu0 0.0
        %3564 = vmatprep.subr.mxu0 0.0
        %3565 = vmatpush1.msra.mxu0 0.0
        %3566 = vmatprep.mubr.f32.mxu0 0.0
        %3567 = vmatmul.mubr.f32.gmra.mrb[0].mxu0 %v3500
        %v3568 = vpop.f32.mrb[0].mxu0
        %v3569 = vadd.f32 0.0, %v3568
        %v3570 = vpop.f32.mrb[0].mxu0
        %3571 = vdwg.mxu0
        %s3572 = scalar_lea.vmem %s7, 192
        %v3573 = vld [vmem:[%s3572] sm:$0xff]
        %v3574 = vld [vmem:[%s3572 + $0x8] sm:$0xff]
        %v3575 = vld [vmem:[%s3572 + $0x10] sm:$0xff]
        %v3576 = vld [vmem:[%s3572 + $0x18] sm:$0xff]
        %v3577 = vld [vmem:[%s3572 + $0x20] sm:$0xff]
        %v3578 = vld [vmem:[%s3572 + $0x28] sm:$0xff]
        %v3579 = vld [vmem:[%s3572 + $0x30] sm:$0xff]
        %v3580 = vld [vmem:[%s3572 + $0x38] sm:$0xff]
        %v3582 = vsel %vm3198, %v3569, 0
        %3584 = vmatprep.subr.mxu0 0.0
        %3585 = vmatpush1.msra.mxu0 %v3573
        %3586 = vmatprep.subr.mxu0 0.0
        %3587 = vmatpush1.msra.mxu0 %v3574
        %3588 = vmatprep.subr.mxu0 0.0
        %3589 = vmatpush1.msra.mxu0 %v3575
        %3590 = vmatprep.subr.mxu0 0.0
        %3591 = vmatpush1.msra.mxu0 %v3576
        %3592 = vmatprep.subr.mxu0 0.0
        %3593 = vmatpush1.msra.mxu0 %v3577
        %3594 = vmatprep.subr.mxu0 0.0
        %3595 = vmatpush1.msra.mxu0 %v3578
        %3596 = vmatprep.subr.mxu0 0.0
        %3597 = vmatpush1.msra.mxu0 %v3579
        %3598 = vmatprep.subr.mxu0 0.0
        %3599 = vmatpush1.msra.mxu0 %v3580
        %3600 = vmatprep.subr.mxu0 0.0
        %3601 = vmatpush1.msra.mxu0 0.0
        %3602 = vmatprep.subr.mxu0 0.0
        %3603 = vmatpush1.msra.mxu0 0.0
        %3604 = vmatprep.subr.mxu0 0.0
        %3605 = vmatpush1.msra.mxu0 0.0
        %3606 = vmatprep.subr.mxu0 0.0
        %3607 = vmatpush1.msra.mxu0 0.0
        %3608 = vmatprep.subr.mxu0 0.0
        %3609 = vmatpush1.msra.mxu0 0.0
        %3610 = vmatprep.subr.mxu0 0.0
        %3611 = vmatpush1.msra.mxu0 0.0
        %3612 = vmatprep.subr.mxu0 0.0
        %3613 = vmatpush1.msra.mxu0 0.0
        %3614 = vmatprep.subr.mxu0 0.0
        %3615 = vmatpush1.msra.mxu0 0.0
        %3616 = vmatprep.subr.mxu0 0.0
        %3617 = vmatpush1.msra.mxu0 0.0
        %3618 = vmatprep.subr.mxu0 0.0
        %3619 = vmatpush1.msra.mxu0 0.0
        %3620 = vmatprep.subr.mxu0 0.0
        %3621 = vmatpush1.msra.mxu0 0.0
        %3622 = vmatprep.subr.mxu0 0.0
        %3623 = vmatpush1.msra.mxu0 0.0
        %3624 = vmatprep.subr.mxu0 0.0
        %3625 = vmatpush1.msra.mxu0 0.0
        %3626 = vmatprep.subr.mxu0 0.0
        %3627 = vmatpush1.msra.mxu0 0.0
        %3628 = vmatprep.subr.mxu0 0.0
        %3629 = vmatpush1.msra.mxu0 0.0
        %3630 = vmatprep.subr.mxu0 0.0
        %3631 = vmatpush1.msra.mxu0 0.0
        %3632 = vmatprep.subr.mxu0 0.0
        %3633 = vmatpush1.msra.mxu0 0.0
        %3634 = vmatprep.subr.mxu0 0.0
        %3635 = vmatpush1.msra.mxu0 0.0
        %3636 = vmatprep.subr.mxu0 0.0
        %3637 = vmatpush1.msra.mxu0 0.0
        %3638 = vmatprep.subr.mxu0 0.0
        %3639 = vmatpush1.msra.mxu0 0.0
        %3640 = vmatprep.subr.mxu0 0.0
        %3641 = vmatpush1.msra.mxu0 0.0
        %3642 = vmatprep.subr.mxu0 0.0
        %3643 = vmatpush1.msra.mxu0 0.0
        %3644 = vmatprep.subr.mxu0 0.0
        %3645 = vmatpush1.msra.mxu0 0.0
        %3646 = vmatprep.subr.mxu0 0.0
        %3647 = vmatpush1.msra.mxu0 0.0
        %3648 = vmatprep.mubr.f32.mxu0 0.0
        %3649 = vmatmul.mubr.f32.gmra.mrb[0].mxu0 %v3582
        %v3650 = vpop.f32.mrb[0].mxu0
        %v3651 = vadd.f32 0.0, %v3650
        %v3652 = vpop.f32.mrb[0].mxu0
        %3653 = vdwg.mxu0
        %v3654 = vadd.f32 %v3499, %v3651
        %v3655 = vld [vmem:[%s8] sm:$0x1]
        %v3657 = vlaneseq
        %v3658 = vshrl.u32 %v3657, 7
        %v3659 = vsub.s32 0, %v3658
        %v3660 = vrot.slane %v3655, %v3659
        %v3662 = vadd.f32 %v3654, %v3660
        %v3663 = vmax.f32 %v3662, 0.0
        %v3664 = vld [vmem:[%s10] sm:$0x1]
        %v3665 = vld [vmem:[%s12] sm:$0x1]
        %vm3666 = vcmp.eq.s32.totalorder %v793, 0
        %v3667 = vsel %vm3666, 1.0, 0.0
        %vm3668 = vcmask 23552
        %v3670 = vsel %vm3668, %v3667, 0
        %vm3672 = vcmask 1042432
        %v3674 = vsel %vm3672, %v3663, 0
        %3676 = vmatprep.subr.mxu0 0.0
        %3677 = vmatpush1.msra.mxu0 %v3674
        %3678 = vmatprep.subr.mxu0 0.0
        %3679 = vmatpush1.msra.mxu0 0.0
        %3680 = vmatprep.subr.mxu0 0.0
        %3681 = vmatpush1.msra.mxu0 0.0
        %3682 = vmatprep.subr.mxu0 0.0
        %3683 = vmatpush1.msra.mxu0 0.0
        %3684 = vmatprep.subr.mxu0 0.0
        %3685 = vmatpush1.msra.mxu0 0.0
        %3686 = vmatprep.subr.mxu0 0.0
        %3687 = vmatpush1.msra.mxu0 0.0
        %3688 = vmatprep.subr.mxu0 0.0
        %3689 = vmatpush1.msra.mxu0 0.0
        %3690 = vmatprep.subr.mxu0 0.0
        %3691 = vmatpush1.msra.mxu0 0.0
        %3692 = vmatprep.subr.mxu0 0.0
        %3693 = vmatpush1.msra.mxu0 0.0
        %3694 = vmatprep.subr.mxu0 0.0
        %3695 = vmatpush1.msra.mxu0 0.0
        %3696 = vmatprep.subr.mxu0 0.0
        %3697 = vmatpush1.msra.mxu0 0.0
        %3698 = vmatprep.subr.mxu0 0.0
        %3699 = vmatpush1.msra.mxu0 0.0
        %3700 = vmatprep.subr.mxu0 0.0
        %3701 = vmatpush1.msra.mxu0 0.0
        %3702 = vmatprep.subr.mxu0 0.0
        %3703 = vmatpush1.msra.mxu0 0.0
        %3704 = vmatprep.subr.mxu0 0.0
        %3705 = vmatpush1.msra.mxu0 0.0
        %3706 = vmatprep.subr.mxu0 0.0
        %3707 = vmatpush1.msra.mxu0 0.0
        %3708 = vmatprep.subr.mxu0 0.0
        %3709 = vmatpush1.msra.mxu0 0.0
        %3710 = vmatprep.subr.mxu0 0.0
        %3711 = vmatpush1.msra.mxu0 0.0
        %3712 = vmatprep.subr.mxu0 0.0
        %3713 = vmatpush1.msra.mxu0 0.0
        %3714 = vmatprep.subr.mxu0 0.0
        %3715 = vmatpush1.msra.mxu0 0.0
        %3716 = vmatprep.subr.mxu0 0.0
        %3717 = vmatpush1.msra.mxu0 0.0
        %3718 = vmatprep.subr.mxu0 0.0
        %3719 = vmatpush1.msra.mxu0 0.0
        %3720 = vmatprep.subr.mxu0 0.0
        %3721 = vmatpush1.msra.mxu0 0.0
        %3722 = vmatprep.subr.mxu0 0.0
        %3723 = vmatpush1.msra.mxu0 0.0
        %3724 = vmatprep.subr.mxu0 0.0
        %3725 = vmatpush1.msra.mxu0 0.0
        %3726 = vmatprep.subr.mxu0 0.0
        %3727 = vmatpush1.msra.mxu0 0.0
        %3728 = vmatprep.subr.mxu0 0.0
        %3729 = vmatpush1.msra.mxu0 0.0
        %3730 = vmatprep.subr.mxu0 0.0
        %3731 = vmatpush1.msra.mxu0 0.0
        %3732 = vmatprep.subr.mxu0 0.0
        %3733 = vmatpush1.msra.mxu0 0.0
        %3734 = vmatprep.subr.mxu0 0.0
        %3735 = vmatpush1.msra.mxu0 0.0
        %3736 = vmatprep.subr.mxu0 0.0
        %3737 = vmatpush1.msra.mxu0 0.0
        %3738 = vmatprep.subr.mxu0 0.0
        %3739 = vmatpush1.msra.mxu0 0.0
        %3740 = vmatprep.mubr.f32.mxu0 0.0
        %3741 = vmatmul.mubr.f32.gmra.mrb[0].mxu0 %v3670
        %v3742 = vpop.f32.mrb[0].mxu0
        %v3743 = vadd.f32 0.0, %v3742
        %v3744 = vpop.f32.mrb[0].mxu0
        %3745 = vdwg.mxu0
        %v3746 = vld [vmem:[%s9] sm:$0xff]
        %v3747 = vld [vmem:[%s9 + $0x8] sm:$0xf]
        %vm3748 = vcmask 97280
        %v3750 = vsel %vm3748, %v3743, 0
        %v3753 = vsel %vm810, %v3747, 0
        %3755 = vmatprep.subr.mxu0 0.0
        %3756 = vmatpush1.msra.mxu0 %v3746
        %3757 = vmatprep.subr.mxu0 0.0
        %3758 = vmatpush1.msra.mxu0 %v3753
        %3759 = vmatprep.subr.mxu0 0.0
        %3760 = vmatpush1.msra.mxu0 0.0
        %3761 = vmatprep.subr.mxu0 0.0
        %3762 = vmatpush1.msra.mxu0 0.0
        %3763 = vmatprep.subr.mxu0 0.0
        %3764 = vmatpush1.msra.mxu0 0.0
        %3765 = vmatprep.subr.mxu0 0.0
        %3766 = vmatpush1.msra.mxu0 0.0
        %3767 = vmatprep.subr.mxu0 0.0
        %3768 = vmatpush1.msra.mxu0 0.0
        %3769 = vmatprep.subr.mxu0 0.0
        %3770 = vmatpush1.msra.mxu0 0.0
        %3771 = vmatprep.subr.mxu0 0.0
        %3772 = vmatpush1.msra.mxu0 0.0
        %3773 = vmatprep.subr.mxu0 0.0
        %3774 = vmatpush1.msra.mxu0 0.0
        %3775 = vmatprep.subr.mxu0 0.0
        %3776 = vmatpush1.msra.mxu0 0.0
        %3777 = vmatprep.subr.mxu0 0.0
        %3778 = vmatpush1.msra.mxu0 0.0
        %3779 = vmatprep.subr.mxu0 0.0
        %3780 = vmatpush1.msra.mxu0 0.0
        %3781 = vmatprep.subr.mxu0 0.0
        %3782 = vmatpush1.msra.mxu0 0.0
        %3783 = vmatprep.subr.mxu0 0.0
        %3784 = vmatpush1.msra.mxu0 0.0
        %3785 = vmatprep.subr.mxu0 0.0
        %3786 = vmatpush1.msra.mxu0 0.0
        %3787 = vmatprep.subr.mxu0 0.0
        %3788 = vmatpush1.msra.mxu0 0.0
        %3789 = vmatprep.subr.mxu0 0.0
        %3790 = vmatpush1.msra.mxu0 0.0
        %3791 = vmatprep.subr.mxu0 0.0
        %3792 = vmatpush1.msra.mxu0 0.0
        %3793 = vmatprep.subr.mxu0 0.0
        %3794 = vmatpush1.msra.mxu0 0.0
        %3795 = vmatprep.subr.mxu0 0.0
        %3796 = vmatpush1.msra.mxu0 0.0
        %3797 = vmatprep.subr.mxu0 0.0
        %3798 = vmatpush1.msra.mxu0 0.0
        %3799 = vmatprep.subr.mxu0 0.0
        %3800 = vmatpush1.msra.mxu0 0.0
        %3801 = vmatprep.subr.mxu0 0.0
        %3802 = vmatpush1.msra.mxu0 0.0
        %3803 = vmatprep.subr.mxu0 0.0
        %3804 = vmatpush1.msra.mxu0 0.0
        %3805 = vmatprep.subr.mxu0 0.0
        %3806 = vmatpush1.msra.mxu0 0.0
        %3807 = vmatprep.subr.mxu0 0.0
        %3808 = vmatpush1.msra.mxu0 0.0
        %3809 = vmatprep.subr.mxu0 0.0
        %3810 = vmatpush1.msra.mxu0 0.0
        %3811 = vmatprep.subr.mxu0 0.0
        %3812 = vmatpush1.msra.mxu0 0.0
        %3813 = vmatprep.subr.mxu0 0.0
        %3814 = vmatpush1.msra.mxu0 0.0
        %3815 = vmatprep.subr.mxu0 0.0
        %3816 = vmatpush1.msra.mxu0 0.0
        %3817 = vmatprep.subr.mxu0 0.0
        %3818 = vmatpush1.msra.mxu0 0.0
        %3819 = vmatprep.mubr.f32.mxu0 0.0
        %3820 = vmatmul.mubr.f32.gmra.mrb[0].mxu0 %v3750
        %v3821 = vpop.f32.mrb[0].mxu0
        %v3822 = vadd.f32 0.0, %v3821
        %v3823 = vpop.f32.mrb[0].mxu0
        %3824 = vdwg.mxu0
        %v3825 = vadd.f32 %v3664, %v3822
        %v3826 = vld [vmem:[%s11] sm:$0xff]
        %v3827 = vld [vmem:[%s11 + $0x8] sm:$0xf]
        %v3829 = vsel %vm810, %v3827, 0
        %3831 = vmatprep.subr.mxu0 0.0
        %3832 = vmatpush1.msra.mxu0 %v3826
        %3833 = vmatprep.subr.mxu0 0.0
        %3834 = vmatpush1.msra.mxu0 %v3829
        %3835 = vmatprep.subr.mxu0 0.0
        %3836 = vmatpush1.msra.mxu0 0.0
        %3837 = vmatprep.subr.mxu0 0.0
        %3838 = vmatpush1.msra.mxu0 0.0
        %3839 = vmatprep.subr.mxu0 0.0
        %3840 = vmatpush1.msra.mxu0 0.0
        %3841 = vmatprep.subr.mxu0 0.0
        %3842 = vmatpush1.msra.mxu0 0.0
        %3843 = vmatprep.subr.mxu0 0.0
        %3844 = vmatpush1.msra.mxu0 0.0
        %3845 = vmatprep.subr.mxu0 0.0
        %3846 = vmatpush1.msra.mxu0 0.0
        %3847 = vmatprep.subr.mxu0 0.0
        %3848 = vmatpush1.msra.mxu0 0.0
        %3849 = vmatprep.subr.mxu0 0.0
        %3850 = vmatpush1.msra.mxu0 0.0
        %3851 = vmatprep.subr.mxu0 0.0
        %3852 = vmatpush1.msra.mxu0 0.0
        %3853 = vmatprep.subr.mxu0 0.0
        %3854 = vmatpush1.msra.mxu0 0.0
        %3855 = vmatprep.subr.mxu0 0.0
        %3856 = vmatpush1.msra.mxu0 0.0
        %3857 = vmatprep.subr.mxu0 0.0
        %3858 = vmatpush1.msra.mxu0 0.0
        %3859 = vmatprep.subr.mxu0 0.0
        %3860 = vmatpush1.msra.mxu0 0.0
        %3861 = vmatprep.subr.mxu0 0.0
        %3862 = vmatpush1.msra.mxu0 0.0
        %3863 = vmatprep.subr.mxu0 0.0
        %3864 = vmatpush1.msra.mxu0 0.0
        %3865 = vmatprep.subr.mxu0 0.0
        %3866 = vmatpush1.msra.mxu0 0.0
        %3867 = vmatprep.subr.mxu0 0.0
        %3868 = vmatpush1.msra.mxu0 0.0
        %3869 = vmatprep.subr.mxu0 0.0
        %3870 = vmatpush1.msra.mxu0 0.0
        %3871 = vmatprep.subr.mxu0 0.0
        %3872 = vmatpush1.msra.mxu0 0.0
        %3873 = vmatprep.subr.mxu0 0.0
        %3874 = vmatpush1.msra.mxu0 0.0
        %3875 = vmatprep.subr.mxu0 0.0
        %3876 = vmatpush1.msra.mxu0 0.0
        %3877 = vmatprep.subr.mxu0 0.0
        %3878 = vmatpush1.msra.mxu0 0.0
        %3879 = vmatprep.subr.mxu0 0.0
        %3880 = vmatpush1.msra.mxu0 0.0
        %3881 = vmatprep.subr.mxu0 0.0
        %3882 = vmatpush1.msra.mxu0 0.0
        %3883 = vmatprep.subr.mxu0 0.0
        %3884 = vmatpush1.msra.mxu0 0.0
        %3885 = vmatprep.subr.mxu0 0.0
        %3886 = vmatpush1.msra.mxu0 0.0
        %3887 = vmatprep.subr.mxu0 0.0
        %3888 = vmatpush1.msra.mxu0 0.0
        %3889 = vmatprep.subr.mxu0 0.0
        %3890 = vmatpush1.msra.mxu0 0.0
        %3891 = vmatprep.subr.mxu0 0.0
        %3892 = vmatpush1.msra.mxu0 0.0
        %3893 = vmatprep.subr.mxu0 0.0
        %3894 = vmatpush1.msra.mxu0 0.0
        %3895 = vmatprep.mubr.f32.mxu0 0.0
        %3896 = vmatmul.mubr.f32.gmra.mrb[0].mxu0 %v3750
        %v3897 = vpop.f32.mrb[0].mxu0
        %v3898 = vadd.f32 0.0, %v3897
        %v3899 = vpop.f32.mrb[0].mxu0
        %3900 = vdwg.mxu0
        %v3901 = vadd.f32 %v3665, %v3898
        %vm3902 = vcmp.eq.s32.totalorder %v793, 1
        %v3903 = vsel %vm3902, 1.0, 0.0
        %v3905 = vsel %vm3668, %v3903, 0
        %3907 = vmatprep.subr.mxu0 0.0
        %3908 = vmatpush1.msra.mxu0 %v3674
        %3909 = vmatprep.subr.mxu0 0.0
        %3910 = vmatpush1.msra.mxu0 0.0
        %3911 = vmatprep.subr.mxu0 0.0
        %3912 = vmatpush1.msra.mxu0 0.0
        %3913 = vmatprep.subr.mxu0 0.0
        %3914 = vmatpush1.msra.mxu0 0.0
        %3915 = vmatprep.subr.mxu0 0.0
        %3916 = vmatpush1.msra.mxu0 0.0
        %3917 = vmatprep.subr.mxu0 0.0
        %3918 = vmatpush1.msra.mxu0 0.0
        %3919 = vmatprep.subr.mxu0 0.0
        %3920 = vmatpush1.msra.mxu0 0.0
        %3921 = vmatprep.subr.mxu0 0.0
        %3922 = vmatpush1.msra.mxu0 0.0
        %3923 = vmatprep.subr.mxu0 0.0
        %3924 = vmatpush1.msra.mxu0 0.0
        %3925 = vmatprep.subr.mxu0 0.0
        %3926 = vmatpush1.msra.mxu0 0.0
        %3927 = vmatprep.subr.mxu0 0.0
        %3928 = vmatpush1.msra.mxu0 0.0
        %3929 = vmatprep.subr.mxu0 0.0
        %3930 = vmatpush1.msra.mxu0 0.0
        %3931 = vmatprep.subr.mxu0 0.0
        %3932 = vmatpush1.msra.mxu0 0.0
        %3933 = vmatprep.subr.mxu0 0.0
        %3934 = vmatpush1.msra.mxu0 0.0
        %3935 = vmatprep.subr.mxu0 0.0
        %3936 = vmatpush1.msra.mxu0 0.0
        %3937 = vmatprep.subr.mxu0 0.0
        %3938 = vmatpush1.msra.mxu0 0.0
        %3939 = vmatprep.subr.mxu0 0.0
        %3940 = vmatpush1.msra.mxu0 0.0
        %3941 = vmatprep.subr.mxu0 0.0
        %3942 = vmatpush1.msra.mxu0 0.0
        %3943 = vmatprep.subr.mxu0 0.0
        %3944 = vmatpush1.msra.mxu0 0.0
        %3945 = vmatprep.subr.mxu0 0.0
        %3946 = vmatpush1.msra.mxu0 0.0
        %3947 = vmatprep.subr.mxu0 0.0
        %3948 = vmatpush1.msra.mxu0 0.0
        %3949 = vmatprep.subr.mxu0 0.0
        %3950 = vmatpush1.msra.mxu0 0.0
        %3951 = vmatprep.subr.mxu0 0.0
        %3952 = vmatpush1.msra.mxu0 0.0
        %3953 = vmatprep.subr.mxu0 0.0
        %3954 = vmatpush1.msra.mxu0 0.0
        %3955 = vmatprep.subr.mxu0 0.0
        %3956 = vmatpush1.msra.mxu0 0.0
        %3957 = vmatprep.subr.mxu0 0.0
        %3958 = vmatpush1.msra.mxu0 0.0
        %3959 = vmatprep.subr.mxu0 0.0
        %3960 = vmatpush1.msra.mxu0 0.0
        %3961 = vmatprep.subr.mxu0 0.0
        %3962 = vmatpush1.msra.mxu0 0.0
        %3963 = vmatprep.subr.mxu0 0.0
        %3964 = vmatpush1.msra.mxu0 0.0
        %3965 = vmatprep.subr.mxu0 0.0
        %3966 = vmatpush1.msra.mxu0 0.0
        %3967 = vmatprep.subr.mxu0 0.0
        %3968 = vmatpush1.msra.mxu0 0.0
        %3969 = vmatprep.subr.mxu0 0.0
        %3970 = vmatpush1.msra.mxu0 0.0
        %3971 = vmatprep.mubr.f32.mxu0 0.0
        %3972 = vmatmul.mubr.f32.gmra.mrb[0].mxu0 %v3905
        %v3973 = vpop.f32.mrb[0].mxu0
        %v3974 = vadd.f32 0.0, %v3973
        %v3975 = vpop.f32.mrb[0].mxu0
        %3976 = vdwg.mxu0
        %s3977 = scalar_lea.vmem %s9, 16
        %v3978 = vld [vmem:[%s3977] sm:$0xff]
        %v3979 = vld [vmem:[%s3977 + $0x8] sm:$0xf]
        %v3981 = vsel %vm3748, %v3974, 0
        %v3984 = vsel %vm810, %v3979, 0
        %3986 = vmatprep.subr.mxu0 0.0
        %3987 = vmatpush1.msra.mxu0 %v3978
        %3988 = vmatprep.subr.mxu0 0.0
        %3989 = vmatpush1.msra.mxu0 %v3984
        %3990 = vmatprep.subr.mxu0 0.0
        %3991 = vmatpush1.msra.mxu0 0.0
        %3992 = vmatprep.subr.mxu0 0.0
        %3993 = vmatpush1.msra.mxu0 0.0
        %3994 = vmatprep.subr.mxu0 0.0
        %3995 = vmatpush1.msra.mxu0 0.0
        %3996 = vmatprep.subr.mxu0 0.0
        %3997 = vmatpush1.msra.mxu0 0.0
        %3998 = vmatprep.subr.mxu0 0.0
        %3999 = vmatpush1.msra.mxu0 0.0
        %4000 = vmatprep.subr.mxu0 0.0
        %4001 = vmatpush1.msra.mxu0 0.0
        %4002 = vmatprep.subr.mxu0 0.0
        %4003 = vmatpush1.msra.mxu0 0.0
        %4004 = vmatprep.subr.mxu0 0.0
        %4005 = vmatpush1.msra.mxu0 0.0
        %4006 = vmatprep.subr.mxu0 0.0
        %4007 = vmatpush1.msra.mxu0 0.0
        %4008 = vmatprep.subr.mxu0 0.0
        %4009 = vmatpush1.msra.mxu0 0.0
        %4010 = vmatprep.subr.mxu0 0.0
        %4011 = vmatpush1.msra.mxu0 0.0
        %4012 = vmatprep.subr.mxu0 0.0
        %4013 = vmatpush1.msra.mxu0 0.0
        %4014 = vmatprep.subr.mxu0 0.0
        %4015 = vmatpush1.msra.mxu0 0.0
        %4016 = vmatprep.subr.mxu0 0.0
        %4017 = vmatpush1.msra.mxu0 0.0
        %4018 = vmatprep.subr.mxu0 0.0
        %4019 = vmatpush1.msra.mxu0 0.0
        %4020 = vmatprep.subr.mxu0 0.0
        %4021 = vmatpush1.msra.mxu0 0.0
        %4022 = vmatprep.subr.mxu0 0.0
        %4023 = vmatpush1.msra.mxu0 0.0
        %4024 = vmatprep.subr.mxu0 0.0
        %4025 = vmatpush1.msra.mxu0 0.0
        %4026 = vmatprep.subr.mxu0 0.0
        %4027 = vmatpush1.msra.mxu0 0.0
        %4028 = vmatprep.subr.mxu0 0.0
        %4029 = vmatpush1.msra.mxu0 0.0
        %4030 = vmatprep.subr.mxu0 0.0
        %4031 = vmatpush1.msra.mxu0 0.0
        %4032 = vmatprep.subr.mxu0 0.0
        %4033 = vmatpush1.msra.mxu0 0.0
        %4034 = vmatprep.subr.mxu0 0.0
        %4035 = vmatpush1.msra.mxu0 0.0
        %4036 = vmatprep.subr.mxu0 0.0
        %4037 = vmatpush1.msra.mxu0 0.0
        %4038 = vmatprep.subr.mxu0 0.0
        %4039 = vmatpush1.msra.mxu0 0.0
        %4040 = vmatprep.subr.mxu0 0.0
        %4041 = vmatpush1.msra.mxu0 0.0
        %4042 = vmatprep.subr.mxu0 0.0
        %4043 = vmatpush1.msra.mxu0 0.0
        %4044 = vmatprep.subr.mxu0 0.0
        %4045 = vmatpush1.msra.mxu0 0.0
        %4046 = vmatprep.subr.mxu0 0.0
        %4047 = vmatpush1.msra.mxu0 0.0
        %4048 = vmatprep.subr.mxu0 0.0
        %4049 = vmatpush1.msra.mxu0 0.0
        %4050 = vmatprep.mubr.f32.mxu0 0.0
        %4051 = vmatmul.mubr.f32.gmra.mrb[0].mxu0 %v3981
        %v4052 = vpop.f32.mrb[0].mxu0
        %v4053 = vadd.f32 0.0, %v4052
        %v4054 = vpop.f32.mrb[0].mxu0
        %4055 = vdwg.mxu0
        %v4056 = vadd.f32 %v3825, %v4053
        %s4057 = scalar_lea.vmem %s11, 16
        %v4058 = vld [vmem:[%s4057] sm:$0xff]
        %v4059 = vld [vmem:[%s4057 + $0x8] sm:$0xf]
        %v4061 = vsel %vm810, %v4059, 0
        %4063 = vmatprep.subr.mxu0 0.0
        %4064 = vmatpush1.msra.mxu0 %v4058
        %4065 = vmatprep.subr.mxu0 0.0
        %4066 = vmatpush1.msra.mxu0 %v4061
        %4067 = vmatprep.subr.mxu0 0.0
        %4068 = vmatpush1.msra.mxu0 0.0
        %4069 = vmatprep.subr.mxu0 0.0
        %4070 = vmatpush1.msra.mxu0 0.0
        %4071 = vmatprep.subr.mxu0 0.0
        %4072 = vmatpush1.msra.mxu0 0.0
        %4073 = vmatprep.subr.mxu0 0.0
        %4074 = vmatpush1.msra.mxu0 0.0
        %4075 = vmatprep.subr.mxu0 0.0
        %4076 = vmatpush1.msra.mxu0 0.0
        %4077 = vmatprep.subr.mxu0 0.0
        %4078 = vmatpush1.msra.mxu0 0.0
        %4079 = vmatprep.subr.mxu0 0.0
        %4080 = vmatpush1.msra.mxu0 0.0
        %4081 = vmatprep.subr.mxu0 0.0
        %4082 = vmatpush1.msra.mxu0 0.0
        %4083 = vmatprep.subr.mxu0 0.0
        %4084 = vmatpush1.msra.mxu0 0.0
        %4085 = vmatprep.subr.mxu0 0.0
        %4086 = vmatpush1.msra.mxu0 0.0
        %4087 = vmatprep.subr.mxu0 0.0
        %4088 = vmatpush1.msra.mxu0 0.0
        %4089 = vmatprep.subr.mxu0 0.0
        %4090 = vmatpush1.msra.mxu0 0.0
        %4091 = vmatprep.subr.mxu0 0.0
        %4092 = vmatpush1.msra.mxu0 0.0
        %4093 = vmatprep.subr.mxu0 0.0
        %4094 = vmatpush1.msra.mxu0 0.0
        %4095 = vmatprep.subr.mxu0 0.0
        %4096 = vmatpush1.msra.mxu0 0.0
        %4097 = vmatprep.subr.mxu0 0.0
        %4098 = vmatpush1.msra.mxu0 0.0
        %4099 = vmatprep.subr.mxu0 0.0
        %4100 = vmatpush1.msra.mxu0 0.0
        %4101 = vmatprep.subr.mxu0 0.0
        %4102 = vmatpush1.msra.mxu0 0.0
        %4103 = vmatprep.subr.mxu0 0.0
        %4104 = vmatpush1.msra.mxu0 0.0
        %4105 = vmatprep.subr.mxu0 0.0
        %4106 = vmatpush1.msra.mxu0 0.0
        %4107 = vmatprep.subr.mxu0 0.0
        %4108 = vmatpush1.msra.mxu0 0.0
        %4109 = vmatprep.subr.mxu0 0.0
        %4110 = vmatpush1.msra.mxu0 0.0
        %4111 = vmatprep.subr.mxu0 0.0
        %4112 = vmatpush1.msra.mxu0 0.0
        %4113 = vmatprep.subr.mxu0 0.0
        %4114 = vmatpush1.msra.mxu0 0.0
        %4115 = vmatprep.subr.mxu0 0.0
        %4116 = vmatpush1.msra.mxu0 0.0
        %4117 = vmatprep.subr.mxu0 0.0
        %4118 = vmatpush1.msra.mxu0 0.0
        %4119 = vmatprep.subr.mxu0 0.0
        %4120 = vmatpush1.msra.mxu0 0.0
        %4121 = vmatprep.subr.mxu0 0.0
        %4122 = vmatpush1.msra.mxu0 0.0
        %4123 = vmatprep.subr.mxu0 0.0
        %4124 = vmatpush1.msra.mxu0 0.0
        %4125 = vmatprep.subr.mxu0 0.0
        %4126 = vmatpush1.msra.mxu0 0.0
        %4127 = vmatprep.mubr.f32.mxu0 0.0
        %4128 = vmatmul.mubr.f32.gmra.mrb[0].mxu0 %v3981
        %v4129 = vpop.f32.mrb[0].mxu0
        %v4130 = vadd.f32 0.0, %v4129
        %v4131 = vpop.f32.mrb[0].mxu0
        %4132 = vdwg.mxu0
        %v4133 = vadd.f32 %v3901, %v4130
        %vm4134 = vcmp.eq.s32.totalorder %v793, 2
        %v4135 = vsel %vm4134, 1.0, 0.0
        %v4137 = vsel %vm3668, %v4135, 0
        %4139 = vmatprep.subr.mxu0 0.0
        %4140 = vmatpush1.msra.mxu0 %v3674
        %4141 = vmatprep.subr.mxu0 0.0
        %4142 = vmatpush1.msra.mxu0 0.0
        %4143 = vmatprep.subr.mxu0 0.0
        %4144 = vmatpush1.msra.mxu0 0.0
        %4145 = vmatprep.subr.mxu0 0.0
        %4146 = vmatpush1.msra.mxu0 0.0
        %4147 = vmatprep.subr.mxu0 0.0
        %4148 = vmatpush1.msra.mxu0 0.0
        %4149 = vmatprep.subr.mxu0 0.0
        %4150 = vmatpush1.msra.mxu0 0.0
        %4151 = vmatprep.subr.mxu0 0.0
        %4152 = vmatpush1.msra.mxu0 0.0
        %4153 = vmatprep.subr.mxu0 0.0
        %4154 = vmatpush1.msra.mxu0 0.0
        %4155 = vmatprep.subr.mxu0 0.0
        %4156 = vmatpush1.msra.mxu0 0.0
        %4157 = vmatprep.subr.mxu0 0.0
        %4158 = vmatpush1.msra.mxu0 0.0
        %4159 = vmatprep.subr.mxu0 0.0
        %4160 = vmatpush1.msra.mxu0 0.0
        %4161 = vmatprep.subr.mxu0 0.0
        %4162 = vmatpush1.msra.mxu0 0.0
        %4163 = vmatprep.subr.mxu0 0.0
        %4164 = vmatpush1.msra.mxu0 0.0
        %4165 = vmatprep.subr.mxu0 0.0
        %4166 = vmatpush1.msra.mxu0 0.0
        %4167 = vmatprep.subr.mxu0 0.0
        %4168 = vmatpush1.msra.mxu0 0.0
        %4169 = vmatprep.subr.mxu0 0.0
        %4170 = vmatpush1.msra.mxu0 0.0
        %4171 = vmatprep.subr.mxu0 0.0
        %4172 = vmatpush1.msra.mxu0 0.0
        %4173 = vmatprep.subr.mxu0 0.0
        %4174 = vmatpush1.msra.mxu0 0.0
        %4175 = vmatprep.subr.mxu0 0.0
        %4176 = vmatpush1.msra.mxu0 0.0
        %4177 = vmatprep.subr.mxu0 0.0
        %4178 = vmatpush1.msra.mxu0 0.0
        %4179 = vmatprep.subr.mxu0 0.0
        %4180 = vmatpush1.msra.mxu0 0.0
        %4181 = vmatprep.subr.mxu0 0.0
        %4182 = vmatpush1.msra.mxu0 0.0
        %4183 = vmatprep.subr.mxu0 0.0
        %4184 = vmatpush1.msra.mxu0 0.0
        %4185 = vmatprep.subr.mxu0 0.0
        %4186 = vmatpush1.msra.mxu0 0.0
        %4187 = vmatprep.subr.mxu0 0.0
        %4188 = vmatpush1.msra.mxu0 0.0
        %4189 = vmatprep.subr.mxu0 0.0
        %4190 = vmatpush1.msra.mxu0 0.0
        %4191 = vmatprep.subr.mxu0 0.0
        %4192 = vmatpush1.msra.mxu0 0.0
        %4193 = vmatprep.subr.mxu0 0.0
        %4194 = vmatpush1.msra.mxu0 0.0
        %4195 = vmatprep.subr.mxu0 0.0
        %4196 = vmatpush1.msra.mxu0 0.0
        %4197 = vmatprep.subr.mxu0 0.0
        %4198 = vmatpush1.msra.mxu0 0.0
        %4199 = vmatprep.subr.mxu0 0.0
        %4200 = vmatpush1.msra.mxu0 0.0
        %4201 = vmatprep.subr.mxu0 0.0
        %4202 = vmatpush1.msra.mxu0 0.0
        %4203 = vmatprep.mubr.f32.mxu0 0.0
        %4204 = vmatmul.mubr.f32.gmra.mrb[0].mxu0 %v4137
        %v4205 = vpop.f32.mrb[0].mxu0
        %v4206 = vadd.f32 0.0, %v4205
        %v4207 = vpop.f32.mrb[0].mxu0
        %4208 = vdwg.mxu0
        %s4209 = scalar_lea.vmem %s9, 32
        %v4210 = vld [vmem:[%s4209] sm:$0xff]
        %v4211 = vld [vmem:[%s4209 + $0x8] sm:$0xf]
        %v4213 = vsel %vm3748, %v4206, 0
        %v4216 = vsel %vm810, %v4211, 0
        %4218 = vmatprep.subr.mxu0 0.0
        %4219 = vmatpush1.msra.mxu0 %v4210
        %4220 = vmatprep.subr.mxu0 0.0
        %4221 = vmatpush1.msra.mxu0 %v4216
        %4222 = vmatprep.subr.mxu0 0.0
        %4223 = vmatpush1.msra.mxu0 0.0
        %4224 = vmatprep.subr.mxu0 0.0
        %4225 = vmatpush1.msra.mxu0 0.0
        %4226 = vmatprep.subr.mxu0 0.0
        %4227 = vmatpush1.msra.mxu0 0.0
        %4228 = vmatprep.subr.mxu0 0.0
        %4229 = vmatpush1.msra.mxu0 0.0
        %4230 = vmatprep.subr.mxu0 0.0
        %4231 = vmatpush1.msra.mxu0 0.0
        %4232 = vmatprep.subr.mxu0 0.0
        %4233 = vmatpush1.msra.mxu0 0.0
        %4234 = vmatprep.subr.mxu0 0.0
        %4235 = vmatpush1.msra.mxu0 0.0
        %4236 = vmatprep.subr.mxu0 0.0
        %4237 = vmatpush1.msra.mxu0 0.0
        %4238 = vmatprep.subr.mxu0 0.0
        %4239 = vmatpush1.msra.mxu0 0.0
        %4240 = vmatprep.subr.mxu0 0.0
        %4241 = vmatpush1.msra.mxu0 0.0
        %4242 = vmatprep.subr.mxu0 0.0
        %4243 = vmatpush1.msra.mxu0 0.0
        %4244 = vmatprep.subr.mxu0 0.0
        %4245 = vmatpush1.msra.mxu0 0.0
        %4246 = vmatprep.subr.mxu0 0.0
        %4247 = vmatpush1.msra.mxu0 0.0
        %4248 = vmatprep.subr.mxu0 0.0
        %4249 = vmatpush1.msra.mxu0 0.0
        %4250 = vmatprep.subr.mxu0 0.0
        %4251 = vmatpush1.msra.mxu0 0.0
        %4252 = vmatprep.subr.mxu0 0.0
        %4253 = vmatpush1.msra.mxu0 0.0
        %4254 = vmatprep.subr.mxu0 0.0
        %4255 = vmatpush1.msra.mxu0 0.0
        %4256 = vmatprep.subr.mxu0 0.0
        %4257 = vmatpush1.msra.mxu0 0.0
        %4258 = vmatprep.subr.mxu0 0.0
        %4259 = vmatpush1.msra.mxu0 0.0
        %4260 = vmatprep.subr.mxu0 0.0
        %4261 = vmatpush1.msra.mxu0 0.0
        %4262 = vmatprep.subr.mxu0 0.0
        %4263 = vmatpush1.msra.mxu0 0.0
        %4264 = vmatprep.subr.mxu0 0.0
        %4265 = vmatpush1.msra.mxu0 0.0
        %4266 = vmatprep.subr.mxu0 0.0
        %4267 = vmatpush1.msra.mxu0 0.0
        %4268 = vmatprep.subr.mxu0 0.0
        %4269 = vmatpush1.msra.mxu0 0.0
        %4270 = vmatprep.subr.mxu0 0.0
        %4271 = vmatpush1.msra.mxu0 0.0
        %4272 = vmatprep.subr.mxu0 0.0
        %4273 = vmatpush1.msra.mxu0 0.0
        %4274 = vmatprep.subr.mxu0 0.0
        %4275 = vmatpush1.msra.mxu0 0.0
        %4276 = vmatprep.subr.mxu0 0.0
        %4277 = vmatpush1.msra.mxu0 0.0
        %4278 = vmatprep.subr.mxu0 0.0
        %4279 = vmatpush1.msra.mxu0 0.0
        %4280 = vmatprep.subr.mxu0 0.0
        %4281 = vmatpush1.msra.mxu0 0.0
        %4282 = vmatprep.mubr.f32.mxu0 0.0
        %4283 = vmatmul.mubr.f32.gmra.mrb[0].mxu0 %v4213
        %v4284 = vpop.f32.mrb[0].mxu0
        %v4285 = vadd.f32 0.0, %v4284
        %v4286 = vpop.f32.mrb[0].mxu0
        %4287 = vdwg.mxu0
        %v4288 = vadd.f32 %v4056, %v4285
        %s4289 = scalar_lea.vmem %s11, 32
        %v4290 = vld [vmem:[%s4289] sm:$0xff]
        %v4291 = vld [vmem:[%s4289 + $0x8] sm:$0xf]
        %v4293 = vsel %vm810, %v4291, 0
        %4295 = vmatprep.subr.mxu0 0.0
        %4296 = vmatpush1.msra.mxu0 %v4290
        %4297 = vmatprep.subr.mxu0 0.0
        %4298 = vmatpush1.msra.mxu0 %v4293
        %4299 = vmatprep.subr.mxu0 0.0
        %4300 = vmatpush1.msra.mxu0 0.0
        %4301 = vmatprep.subr.mxu0 0.0
        %4302 = vmatpush1.msra.mxu0 0.0
        %4303 = vmatprep.subr.mxu0 0.0
        %4304 = vmatpush1.msra.mxu0 0.0
        %4305 = vmatprep.subr.mxu0 0.0
        %4306 = vmatpush1.msra.mxu0 0.0
        %4307 = vmatprep.subr.mxu0 0.0
        %4308 = vmatpush1.msra.mxu0 0.0
        %4309 = vmatprep.subr.mxu0 0.0
        %4310 = vmatpush1.msra.mxu0 0.0
        %4311 = vmatprep.subr.mxu0 0.0
        %4312 = vmatpush1.msra.mxu0 0.0
        %4313 = vmatprep.subr.mxu0 0.0
        %4314 = vmatpush1.msra.mxu0 0.0
        %4315 = vmatprep.subr.mxu0 0.0
        %4316 = vmatpush1.msra.mxu0 0.0
        %4317 = vmatprep.subr.mxu0 0.0
        %4318 = vmatpush1.msra.mxu0 0.0
        %4319 = vmatprep.subr.mxu0 0.0
        %4320 = vmatpush1.msra.mxu0 0.0
        %4321 = vmatprep.subr.mxu0 0.0
        %4322 = vmatpush1.msra.mxu0 0.0
        %4323 = vmatprep.subr.mxu0 0.0
        %4324 = vmatpush1.msra.mxu0 0.0
        %4325 = vmatprep.subr.mxu0 0.0
        %4326 = vmatpush1.msra.mxu0 0.0
        %4327 = vmatprep.subr.mxu0 0.0
        %4328 = vmatpush1.msra.mxu0 0.0
        %4329 = vmatprep.subr.mxu0 0.0
        %4330 = vmatpush1.msra.mxu0 0.0
        %4331 = vmatprep.subr.mxu0 0.0
        %4332 = vmatpush1.msra.mxu0 0.0
        %4333 = vmatprep.subr.mxu0 0.0
        %4334 = vmatpush1.msra.mxu0 0.0
        %4335 = vmatprep.subr.mxu0 0.0
        %4336 = vmatpush1.msra.mxu0 0.0
        %4337 = vmatprep.subr.mxu0 0.0
        %4338 = vmatpush1.msra.mxu0 0.0
        %4339 = vmatprep.subr.mxu0 0.0
        %4340 = vmatpush1.msra.mxu0 0.0
        %4341 = vmatprep.subr.mxu0 0.0
        %4342 = vmatpush1.msra.mxu0 0.0
        %4343 = vmatprep.subr.mxu0 0.0
        %4344 = vmatpush1.msra.mxu0 0.0
        %4345 = vmatprep.subr.mxu0 0.0
        %4346 = vmatpush1.msra.mxu0 0.0
        %4347 = vmatprep.subr.mxu0 0.0
        %4348 = vmatpush1.msra.mxu0 0.0
        %4349 = vmatprep.subr.mxu0 0.0
        %4350 = vmatpush1.msra.mxu0 0.0
        %4351 = vmatprep.subr.mxu0 0.0
        %4352 = vmatpush1.msra.mxu0 0.0
        %4353 = vmatprep.subr.mxu0 0.0
        %4354 = vmatpush1.msra.mxu0 0.0
        %4355 = vmatprep.subr.mxu0 0.0
        %4356 = vmatpush1.msra.mxu0 0.0
        %4357 = vmatprep.subr.mxu0 0.0
        %4358 = vmatpush1.msra.mxu0 0.0
        %4359 = vmatprep.mubr.f32.mxu0 0.0
        %4360 = vmatmul.mubr.f32.gmra.mrb[0].mxu0 %v4213
        %v4361 = vpop.f32.mrb[0].mxu0
        %v4362 = vadd.f32 0.0, %v4361
        %v4363 = vpop.f32.mrb[0].mxu0
        %4364 = vdwg.mxu0
        %v4365 = vadd.f32 %v4133, %v4362
        %4366 = vst [vmem:[%s762] sm:$0x1] %v4288
        %4367 = vst [vmem:[%s768] sm:$0x1] %v4365
        %v4368 = vld [vmem:[%s776] sm:$0x1]
        %v4369 = vmul.f32 %v4365, 0.5
        %v4370 = vmul.f32 %v4369, 1.442695
        %v4371 = vpow.pop %v4370
        %v4372 = vmul.f32 %v4368, %v4371
        %v4373 = vadd.f32 %v4372, %v4288
        %v4374 = vld [vmem:[%s779] sm:$0x1]
        %v4375 = vld [vmem:[%s13] sm:$0x3f]
        %v4376 = vld [vmem:[%s14] sm:$0x3f]
        %vm4377 = vcmask 48128
        %v4379 = vsel %vm4377, %v4374, 0
        %vm4381 = vcmask 1045504
        %v4383 = vsel %vm4381, %v4376, 0
        %4385 = vmatprep.subr.mxu0 0.0
        %4386 = vmatpush1.msra.mxu0 %v4383
        %4387 = vmatprep.subr.mxu0 0.0
        %4388 = vmatpush1.msra.mxu0 0.0
        %4389 = vmatprep.subr.mxu0 0.0
        %4390 = vmatpush1.msra.mxu0 0.0
        %4391 = vmatprep.subr.mxu0 0.0
        %4392 = vmatpush1.msra.mxu0 0.0
        %4393 = vmatprep.subr.mxu0 0.0
        %4394 = vmatpush1.msra.mxu0 0.0
        %4395 = vmatprep.subr.mxu0 0.0
        %4396 = vmatpush1.msra.mxu0 0.0
        %4397 = vmatprep.subr.mxu0 0.0
        %4398 = vmatpush1.msra.mxu0 0.0
        %4399 = vmatprep.subr.mxu0 0.0
        %4400 = vmatpush1.msra.mxu0 0.0
        %4401 = vmatprep.subr.mxu0 0.0
        %4402 = vmatpush1.msra.mxu0 0.0
        %4403 = vmatprep.subr.mxu0 0.0
        %4404 = vmatpush1.msra.mxu0 0.0
        %4405 = vmatprep.subr.mxu0 0.0
        %4406 = vmatpush1.msra.mxu0 0.0
        %4407 = vmatprep.subr.mxu0 0.0
        %4408 = vmatpush1.msra.mxu0 0.0
        %4409 = vmatprep.subr.mxu0 0.0
        %4410 = vmatpush1.msra.mxu0 0.0
        %4411 = vmatprep.subr.mxu0 0.0
        %4412 = vmatpush1.msra.mxu0 0.0
        %4413 = vmatprep.subr.mxu0 0.0
        %4414 = vmatpush1.msra.mxu0 0.0
        %4415 = vmatprep.subr.mxu0 0.0
        %4416 = vmatpush1.msra.mxu0 0.0
        %4417 = vmatprep.subr.mxu0 0.0
        %4418 = vmatpush1.msra.mxu0 0.0
        %4419 = vmatprep.subr.mxu0 0.0
        %4420 = vmatpush1.msra.mxu0 0.0
        %4421 = vmatprep.subr.mxu0 0.0
        %4422 = vmatpush1.msra.mxu0 0.0
        %4423 = vmatprep.subr.mxu0 0.0
        %4424 = vmatpush1.msra.mxu0 0.0
        %4425 = vmatprep.subr.mxu0 0.0
        %4426 = vmatpush1.msra.mxu0 0.0
        %4427 = vmatprep.subr.mxu0 0.0
        %4428 = vmatpush1.msra.mxu0 0.0
        %4429 = vmatprep.subr.mxu0 0.0
        %4430 = vmatpush1.msra.mxu0 0.0
        %4431 = vmatprep.subr.mxu0 0.0
        %4432 = vmatpush1.msra.mxu0 0.0
        %4433 = vmatprep.subr.mxu0 0.0
        %4434 = vmatpush1.msra.mxu0 0.0
        %4435 = vmatprep.subr.mxu0 0.0
        %4436 = vmatpush1.msra.mxu0 0.0
        %4437 = vmatprep.subr.mxu0 0.0
        %4438 = vmatpush1.msra.mxu0 0.0
        %4439 = vmatprep.subr.mxu0 0.0
        %4440 = vmatpush1.msra.mxu0 0.0
        %4441 = vmatprep.subr.mxu0 0.0
        %4442 = vmatpush1.msra.mxu0 0.0
        %4443 = vmatprep.subr.mxu0 0.0
        %4444 = vmatpush1.msra.mxu0 0.0
        %4445 = vmatprep.subr.mxu0 0.0
        %4446 = vmatpush1.msra.mxu0 0.0
        %4447 = vmatprep.subr.mxu0 0.0
        %4448 = vmatpush1.msra.mxu0 0.0
        %4449 = vmatprep.mubr.f32.mxu0 0.0
        %4450 = vmatmul.mubr.f32.gmra.mrb[0].mxu0 %v4379
        %v4451 = vpop.f32.mrb[0].mxu0
        %v4452 = vadd.f32 0.0, %v4451
        %v4453 = vpop.f32.mrb[0].mxu0
        %4454 = vdwg.mxu0
        %v4456 = vsel %vm4377, %v4373, 0
        %v4459 = vsel %vm4381, %v4375, 0
        %4461 = vmatprep.subr.mxu0 0.0
        %4462 = vmatpush1.msra.mxu0 %v4459
        %4463 = vmatprep.subr.mxu0 0.0
        %4464 = vmatpush1.msra.mxu0 0.0
        %4465 = vmatprep.subr.mxu0 0.0
        %4466 = vmatpush1.msra.mxu0 0.0
        %4467 = vmatprep.subr.mxu0 0.0
        %4468 = vmatpush1.msra.mxu0 0.0
        %4469 = vmatprep.subr.mxu0 0.0
        %4470 = vmatpush1.msra.mxu0 0.0
        %4471 = vmatprep.subr.mxu0 0.0
        %4472 = vmatpush1.msra.mxu0 0.0
        %4473 = vmatprep.subr.mxu0 0.0
        %4474 = vmatpush1.msra.mxu0 0.0
        %4475 = vmatprep.subr.mxu0 0.0
        %4476 = vmatpush1.msra.mxu0 0.0
        %4477 = vmatprep.subr.mxu0 0.0
        %4478 = vmatpush1.msra.mxu0 0.0
        %4479 = vmatprep.subr.mxu0 0.0
        %4480 = vmatpush1.msra.mxu0 0.0
        %4481 = vmatprep.subr.mxu0 0.0
        %4482 = vmatpush1.msra.mxu0 0.0
        %4483 = vmatprep.subr.mxu0 0.0
        %4484 = vmatpush1.msra.mxu0 0.0
        %4485 = vmatprep.subr.mxu0 0.0
        %4486 = vmatpush1.msra.mxu0 0.0
        %4487 = vmatprep.subr.mxu0 0.0
        %4488 = vmatpush1.msra.mxu0 0.0
        %4489 = vmatprep.subr.mxu0 0.0
        %4490 = vmatpush1.msra.mxu0 0.0
        %4491 = vmatprep.subr.mxu0 0.0
        %4492 = vmatpush1.msra.mxu0 0.0
        %4493 = vmatprep.subr.mxu0 0.0
        %4494 = vmatpush1.msra.mxu0 0.0
        %4495 = vmatprep.subr.mxu0 0.0
        %4496 = vmatpush1.msra.mxu0 0.0
        %4497 = vmatprep.subr.mxu0 0.0
        %4498 = vmatpush1.msra.mxu0 0.0
        %4499 = vmatprep.subr.mxu0 0.0
        %4500 = vmatpush1.msra.mxu0 0.0
        %4501 = vmatprep.subr.mxu0 0.0
        %4502 = vmatpush1.msra.mxu0 0.0
        %4503 = vmatprep.subr.mxu0 0.0
        %4504 = vmatpush1.msra.mxu0 0.0
        %4505 = vmatprep.subr.mxu0 0.0
        %4506 = vmatpush1.msra.mxu0 0.0
        %4507 = vmatprep.subr.mxu0 0.0
        %4508 = vmatpush1.msra.mxu0 0.0
        %4509 = vmatprep.subr.mxu0 0.0
        %4510 = vmatpush1.msra.mxu0 0.0
        %4511 = vmatprep.subr.mxu0 0.0
        %4512 = vmatpush1.msra.mxu0 0.0
        %4513 = vmatprep.subr.mxu0 0.0
        %4514 = vmatpush1.msra.mxu0 0.0
        %4515 = vmatprep.subr.mxu0 0.0
        %4516 = vmatpush1.msra.mxu0 0.0
        %4517 = vmatprep.subr.mxu0 0.0
        %4518 = vmatpush1.msra.mxu0 0.0
        %4519 = vmatprep.subr.mxu0 0.0
        %4520 = vmatpush1.msra.mxu0 0.0
        %4521 = vmatprep.subr.mxu0 0.0
        %4522 = vmatpush1.msra.mxu0 0.0
        %4523 = vmatprep.subr.mxu0 0.0
        %4524 = vmatpush1.msra.mxu0 0.0
        %4525 = vmatprep.mubr.f32.mxu0 0.0
        %4526 = vmatmul.mubr.f32.gmra.mrb[0].mxu0 %v4456
        %v4527 = vpop.f32.mrb[0].mxu0
        %v4528 = vadd.f32 %v4452, %v4527
        %v4529 = vpop.f32.mrb[0].mxu0
        %4530 = vdwg.mxu0
        %v4531 = vld [vmem:[%s15] sm:$0x1]
        %v4532 = vadd.f32 %v4528, %v4531
        %vm4533 = vcmp.eq.s32.totalorder %v789, 0
        %v4534 = vsel %vm4533, 1.0, 0.0
        %v4535 = vlaneseq
        %v4536 = vshrl.u32 %v4535, 7
        %v4537 = vsub.s32 0, %v4536
        %v4538 = vrot.slane %v4532, %v4537
        %v4539 = vmul.f32 %v4534, %v4538
        %s4540 = scalar_lea.vmem %s13, 8
        %v4541 = vld [vmem:[%s4540] sm:$0x3f]
        %s4542 = scalar_lea.vmem %s14, 8
        %v4543 = vld [vmem:[%s4542] sm:$0x3f]
        %v4545 = vsel %vm4381, %v4543, 0
        %4547 = vmatprep.subr.mxu0 0.0
        %4548 = vmatpush1.msra.mxu0 %v4545
        %4549 = vmatprep.subr.mxu0 0.0
        %4550 = vmatpush1.msra.mxu0 0.0
        %4551 = vmatprep.subr.mxu0 0.0
        %4552 = vmatpush1.msra.mxu0 0.0
        %4553 = vmatprep.subr.mxu0 0.0
        %4554 = vmatpush1.msra.mxu0 0.0
        %4555 = vmatprep.subr.mxu0 0.0
        %4556 = vmatpush1.msra.mxu0 0.0
        %4557 = vmatprep.subr.mxu0 0.0
        %4558 = vmatpush1.msra.mxu0 0.0
        %4559 = vmatprep.subr.mxu0 0.0
        %4560 = vmatpush1.msra.mxu0 0.0
        %4561 = vmatprep.subr.mxu0 0.0
        %4562 = vmatpush1.msra.mxu0 0.0
        %4563 = vmatprep.subr.mxu0 0.0
        %4564 = vmatpush1.msra.mxu0 0.0
        %4565 = vmatprep.subr.mxu0 0.0
        %4566 = vmatpush1.msra.mxu0 0.0
        %4567 = vmatprep.subr.mxu0 0.0
        %4568 = vmatpush1.msra.mxu0 0.0
        %4569 = vmatprep.subr.mxu0 0.0
        %4570 = vmatpush1.msra.mxu0 0.0
        %4571 = vmatprep.subr.mxu0 0.0
        %4572 = vmatpush1.msra.mxu0 0.0
        %4573 = vmatprep.subr.mxu0 0.0
        %4574 = vmatpush1.msra.mxu0 0.0
        %4575 = vmatprep.subr.mxu0 0.0
        %4576 = vmatpush1.msra.mxu0 0.0
        %4577 = vmatprep.subr.mxu0 0.0
        %4578 = vmatpush1.msra.mxu0 0.0
        %4579 = vmatprep.subr.mxu0 0.0
        %4580 = vmatpush1.msra.mxu0 0.0
        %4581 = vmatprep.subr.mxu0 0.0
        %4582 = vmatpush1.msra.mxu0 0.0
        %4583 = vmatprep.subr.mxu0 0.0
        %4584 = vmatpush1.msra.mxu0 0.0
        %4585 = vmatprep.subr.mxu0 0.0
        %4586 = vmatpush1.msra.mxu0 0.0
        %4587 = vmatprep.subr.mxu0 0.0
        %4588 = vmatpush1.msra.mxu0 0.0
        %4589 = vmatprep.subr.mxu0 0.0
        %4590 = vmatpush1.msra.mxu0 0.0
        %4591 = vmatprep.subr.mxu0 0.0
        %4592 = vmatpush1.msra.mxu0 0.0
        %4593 = vmatprep.subr.mxu0 0.0
        %4594 = vmatpush1.msra.mxu0 0.0
        %4595 = vmatprep.subr.mxu0 0.0
        %4596 = vmatpush1.msra.mxu0 0.0
        %4597 = vmatprep.subr.mxu0 0.0
        %4598 = vmatpush1.msra.mxu0 0.0
        %4599 = vmatprep.subr.mxu0 0.0
        %4600 = vmatpush1.msra.mxu0 0.0
        %4601 = vmatprep.subr.mxu0 0.0
        %4602 = vmatpush1.msra.mxu0 0.0
        %4603 = vmatprep.subr.mxu0 0.0
        %4604 = vmatpush1.msra.mxu0 0.0
        %4605 = vmatprep.subr.mxu0 0.0
        %4606 = vmatpush1.msra.mxu0 0.0
        %4607 = vmatprep.subr.mxu0 0.0
        %4608 = vmatpush1.msra.mxu0 0.0
        %4609 = vmatprep.subr.mxu0 0.0
        %4610 = vmatpush1.msra.mxu0 0.0
        %4611 = vmatprep.mubr.f32.mxu0 0.0
        %4612 = vmatmul.mubr.f32.gmra.mrb[0].mxu0 %v4379
        %v4613 = vpop.f32.mrb[0].mxu0
        %v4614 = vadd.f32 0.0, %v4613
        %v4615 = vpop.f32.mrb[0].mxu0
        %4616 = vdwg.mxu0
        %v4618 = vsel %vm4381, %v4541, 0
        %4620 = vmatprep.subr.mxu0 0.0
        %4621 = vmatpush1.msra.mxu0 %v4618
        %4622 = vmatprep.subr.mxu0 0.0
        %4623 = vmatpush1.msra.mxu0 0.0
        %4624 = vmatprep.subr.mxu0 0.0
        %4625 = vmatpush1.msra.mxu0 0.0
        %4626 = vmatprep.subr.mxu0 0.0
        %4627 = vmatpush1.msra.mxu0 0.0
        %4628 = vmatprep.subr.mxu0 0.0
        %4629 = vmatpush1.msra.mxu0 0.0
        %4630 = vmatprep.subr.mxu0 0.0
        %4631 = vmatpush1.msra.mxu0 0.0
        %4632 = vmatprep.subr.mxu0 0.0
        %4633 = vmatpush1.msra.mxu0 0.0
        %4634 = vmatprep.subr.mxu0 0.0
        %4635 = vmatpush1.msra.mxu0 0.0
        %4636 = vmatprep.subr.mxu0 0.0
        %4637 = vmatpush1.msra.mxu0 0.0
        %4638 = vmatprep.subr.mxu0 0.0
        %4639 = vmatpush1.msra.mxu0 0.0
        %4640 = vmatprep.subr.mxu0 0.0
        %4641 = vmatpush1.msra.mxu0 0.0
        %4642 = vmatprep.subr.mxu0 0.0
        %4643 = vmatpush1.msra.mxu0 0.0
        %4644 = vmatprep.subr.mxu0 0.0
        %4645 = vmatpush1.msra.mxu0 0.0
        %4646 = vmatprep.subr.mxu0 0.0
        %4647 = vmatpush1.msra.mxu0 0.0
        %4648 = vmatprep.subr.mxu0 0.0
        %4649 = vmatpush1.msra.mxu0 0.0
        %4650 = vmatprep.subr.mxu0 0.0
        %4651 = vmatpush1.msra.mxu0 0.0
        %4652 = vmatprep.subr.mxu0 0.0
        %4653 = vmatpush1.msra.mxu0 0.0
        %4654 = vmatprep.subr.mxu0 0.0
        %4655 = vmatpush1.msra.mxu0 0.0
        %4656 = vmatprep.subr.mxu0 0.0
        %4657 = vmatpush1.msra.mxu0 0.0
        %4658 = vmatprep.subr.mxu0 0.0
        %4659 = vmatpush1.msra.mxu0 0.0
        %4660 = vmatprep.subr.mxu0 0.0
        %4661 = vmatpush1.msra.mxu0 0.0
        %4662 = vmatprep.subr.mxu0 0.0
        %4663 = vmatpush1.msra.mxu0 0.0
        %4664 = vmatprep.subr.mxu0 0.0
        %4665 = vmatpush1.msra.mxu0 0.0
        %4666 = vmatprep.subr.mxu0 0.0
        %4667 = vmatpush1.msra.mxu0 0.0
        %4668 = vmatprep.subr.mxu0 0.0
        %4669 = vmatpush1.msra.mxu0 0.0
        %4670 = vmatprep.subr.mxu0 0.0
        %4671 = vmatpush1.msra.mxu0 0.0
        %4672 = vmatprep.subr.mxu0 0.0
        %4673 = vmatpush1.msra.mxu0 0.0
        %4674 = vmatprep.subr.mxu0 0.0
        %4675 = vmatpush1.msra.mxu0 0.0
        %4676 = vmatprep.subr.mxu0 0.0
        %4677 = vmatpush1.msra.mxu0 0.0
        %4678 = vmatprep.subr.mxu0 0.0
        %4679 = vmatpush1.msra.mxu0 0.0
        %4680 = vmatprep.subr.mxu0 0.0
        %4681 = vmatpush1.msra.mxu0 0.0
        %4682 = vmatprep.subr.mxu0 0.0
        %4683 = vmatpush1.msra.mxu0 0.0
        %4684 = vmatprep.mubr.f32.mxu0 0.0
        %4685 = vmatmul.mubr.f32.gmra.mrb[0].mxu0 %v4456
        %v4686 = vpop.f32.mrb[0].mxu0
        %v4687 = vadd.f32 %v4614, %v4686
        %v4688 = vpop.f32.mrb[0].mxu0
        %4689 = vdwg.mxu0
        %s4690 = scalar_lea.vmem %s15, 1
        %v4691 = vld [vmem:[%s4690] sm:$0x1]
        %v4692 = vadd.f32 %v4687, %v4691
        %vm4693 = vcmp.eq.s32.totalorder %v789, 1
        %v4694 = vsel %vm4693, 1.0, 0.0
        %v4695 = vlaneseq
        %v4696 = vshrl.u32 %v4695, 7
        %v4697 = vsub.s32 0, %v4696
        %v4698 = vrot.slane %v4692, %v4697
        %v4699 = vmul.f32 %v4694, %v4698
        %v4700 = vadd.f32 %v4539, %v4699
        %s4701 = scalar_lea.vmem %s13, 16
        %v4702 = vld [vmem:[%s4701] sm:$0x3f]
        %s4703 = scalar_lea.vmem %s14, 16
        %v4704 = vld [vmem:[%s4703] sm:$0x3f]
        %v4706 = vsel %vm4381, %v4704, 0
        %4708 = vmatprep.subr.mxu0 0.0
        %4709 = vmatpush1.msra.mxu0 %v4706
        %4710 = vmatprep.subr.mxu0 0.0
        %4711 = vmatpush1.msra.mxu0 0.0
        %4712 = vmatprep.subr.mxu0 0.0
        %4713 = vmatpush1.msra.mxu0 0.0
        %4714 = vmatprep.subr.mxu0 0.0
        %4715 = vmatpush1.msra.mxu0 0.0
        %4716 = vmatprep.subr.mxu0 0.0
        %4717 = vmatpush1.msra.mxu0 0.0
        %4718 = vmatprep.subr.mxu0 0.0
        %4719 = vmatpush1.msra.mxu0 0.0
        %4720 = vmatprep.subr.mxu0 0.0
        %4721 = vmatpush1.msra.mxu0 0.0
        %4722 = vmatprep.subr.mxu0 0.0
        %4723 = vmatpush1.msra.mxu0 0.0
        %4724 = vmatprep.subr.mxu0 0.0
        %4725 = vmatpush1.msra.mxu0 0.0
        %4726 = vmatprep.subr.mxu0 0.0
        %4727 = vmatpush1.msra.mxu0 0.0
        %4728 = vmatprep.subr.mxu0 0.0
        %4729 = vmatpush1.msra.mxu0 0.0
        %4730 = vmatprep.subr.mxu0 0.0
        %4731 = vmatpush1.msra.mxu0 0.0
        %4732 = vmatprep.subr.mxu0 0.0
        %4733 = vmatpush1.msra.mxu0 0.0
        %4734 = vmatprep.subr.mxu0 0.0
        %4735 = vmatpush1.msra.mxu0 0.0
        %4736 = vmatprep.subr.mxu0 0.0
        %4737 = vmatpush1.msra.mxu0 0.0
        %4738 = vmatprep.subr.mxu0 0.0
        %4739 = vmatpush1.msra.mxu0 0.0
        %4740 = vmatprep.subr.mxu0 0.0
        %4741 = vmatpush1.msra.mxu0 0.0
        %4742 = vmatprep.subr.mxu0 0.0
        %4743 = vmatpush1.msra.mxu0 0.0
        %4744 = vmatprep.subr.mxu0 0.0
        %4745 = vmatpush1.msra.mxu0 0.0
        %4746 = vmatprep.subr.mxu0 0.0
        %4747 = vmatpush1.msra.mxu0 0.0
        %4748 = vmatprep.subr.mxu0 0.0
        %4749 = vmatpush1.msra.mxu0 0.0
        %4750 = vmatprep.subr.mxu0 0.0
        %4751 = vmatpush1.msra.mxu0 0.0
        %4752 = vmatprep.subr.mxu0 0.0
        %4753 = vmatpush1.msra.mxu0 0.0
        %4754 = vmatprep.subr.mxu0 0.0
        %4755 = vmatpush1.msra.mxu0 0.0
        %4756 = vmatprep.subr.mxu0 0.0
        %4757 = vmatpush1.msra.mxu0 0.0
        %4758 = vmatprep.subr.mxu0 0.0
        %4759 = vmatpush1.msra.mxu0 0.0
        %4760 = vmatprep.subr.mxu0 0.0
        %4761 = vmatpush1.msra.mxu0 0.0
        %4762 = vmatprep.subr.mxu0 0.0
        %4763 = vmatpush1.msra.mxu0 0.0
        %4764 = vmatprep.subr.mxu0 0.0
        %4765 = vmatpush1.msra.mxu0 0.0
        %4766 = vmatprep.subr.mxu0 0.0
        %4767 = vmatpush1.msra.mxu0 0.0
        %4768 = vmatprep.subr.mxu0 0.0
        %4769 = vmatpush1.msra.mxu0 0.0
        %4770 = vmatprep.subr.mxu0 0.0
        %4771 = vmatpush1.msra.mxu0 0.0
        %4772 = vmatprep.mubr.f32.mxu0 0.0
        %4773 = vmatmul.mubr.f32.gmra.mrb[0].mxu0 %v4379
        %v4774 = vpop.f32.mrb[0].mxu0
        %v4775 = vadd.f32 0.0, %v4774
        %v4776 = vpop.f32.mrb[0].mxu0
        %4777 = vdwg.mxu0
        %v4779 = vsel %vm4381, %v4702, 0
        %4781 = vmatprep.subr.mxu0 0.0
        %4782 = vmatpush1.msra.mxu0 %v4779
        %4783 = vmatprep.subr.mxu0 0.0
        %4784 = vmatpush1.msra.mxu0 0.0
        %4785 = vmatprep.subr.mxu0 0.0
        %4786 = vmatpush1.msra.mxu0 0.0
        %4787 = vmatprep.subr.mxu0 0.0
        %4788 = vmatpush1.msra.mxu0 0.0
        %4789 = vmatprep.subr.mxu0 0.0
        %4790 = vmatpush1.msra.mxu0 0.0
        %4791 = vmatprep.subr.mxu0 0.0
        %4792 = vmatpush1.msra.mxu0 0.0
        %4793 = vmatprep.subr.mxu0 0.0
        %4794 = vmatpush1.msra.mxu0 0.0
        %4795 = vmatprep.subr.mxu0 0.0
        %4796 = vmatpush1.msra.mxu0 0.0
        %4797 = vmatprep.subr.mxu0 0.0
        %4798 = vmatpush1.msra.mxu0 0.0
        %4799 = vmatprep.subr.mxu0 0.0
        %4800 = vmatpush1.msra.mxu0 0.0
        %4801 = vmatprep.subr.mxu0 0.0
        %4802 = vmatpush1.msra.mxu0 0.0
        %4803 = vmatprep.subr.mxu0 0.0
        %4804 = vmatpush1.msra.mxu0 0.0
        %4805 = vmatprep.subr.mxu0 0.0
        %4806 = vmatpush1.msra.mxu0 0.0
        %4807 = vmatprep.subr.mxu0 0.0
        %4808 = vmatpush1.msra.mxu0 0.0
        %4809 = vmatprep.subr.mxu0 0.0
        %4810 = vmatpush1.msra.mxu0 0.0
        %4811 = vmatprep.subr.mxu0 0.0
        %4812 = vmatpush1.msra.mxu0 0.0
        %4813 = vmatprep.subr.mxu0 0.0
        %4814 = vmatpush1.msra.mxu0 0.0
        %4815 = vmatprep.subr.mxu0 0.0
        %4816 = vmatpush1.msra.mxu0 0.0
        %4817 = vmatprep.subr.mxu0 0.0
        %4818 = vmatpush1.msra.mxu0 0.0
        %4819 = vmatprep.subr.mxu0 0.0
        %4820 = vmatpush1.msra.mxu0 0.0
        %4821 = vmatprep.subr.mxu0 0.0
        %4822 = vmatpush1.msra.mxu0 0.0
        %4823 = vmatprep.subr.mxu0 0.0
        %4824 = vmatpush1.msra.mxu0 0.0
        %4825 = vmatprep.subr.mxu0 0.0
        %4826 = vmatpush1.msra.mxu0 0.0
        %4827 = vmatprep.subr.mxu0 0.0
        %4828 = vmatpush1.msra.mxu0 0.0
        %4829 = vmatprep.subr.mxu0 0.0
        %4830 = vmatpush1.msra.mxu0 0.0
        %4831 = vmatprep.subr.mxu0 0.0
        %4832 = vmatpush1.msra.mxu0 0.0
        %4833 = vmatprep.subr.mxu0 0.0
        %4834 = vmatpush1.msra.mxu0 0.0
        %4835 = vmatprep.subr.mxu0 0.0
        %4836 = vmatpush1.msra.mxu0 0.0
        %4837 = vmatprep.subr.mxu0 0.0
        %4838 = vmatpush1.msra.mxu0 0.0
        %4839 = vmatprep.subr.mxu0 0.0
        %4840 = vmatpush1.msra.mxu0 0.0
        %4841 = vmatprep.subr.mxu0 0.0
        %4842 = vmatpush1.msra.mxu0 0.0
        %4843 = vmatprep.subr.mxu0 0.0
        %4844 = vmatpush1.msra.mxu0 0.0
        %4845 = vmatprep.mubr.f32.mxu0 0.0
        %4846 = vmatmul.mubr.f32.gmra.mrb[0].mxu0 %v4456
        %v4847 = vpop.f32.mrb[0].mxu0
        %v4848 = vadd.f32 %v4775, %v4847
        %v4849 = vpop.f32.mrb[0].mxu0
        %4850 = vdwg.mxu0
        %s4851 = scalar_lea.vmem %s15, 2
        %v4852 = vld [vmem:[%s4851] sm:$0x1]
        %v4853 = vadd.f32 %v4848, %v4852
        %vm4854 = vcmp.eq.s32.totalorder %v789, 2
        %v4855 = vsel %vm4854, 1.0, 0.0
        %v4856 = vlaneseq
        %v4857 = vshrl.u32 %v4856, 7
        %v4858 = vsub.s32 0, %v4857
        %v4859 = vrot.slane %v4853, %v4858
        %v4860 = vmul.f32 %v4855, %v4859
        %v4861 = vadd.f32 %v4700, %v4860
        %v4862 = vmul.u32 %v793, 2
        %vm4863 = vcmp.eq.s32.totalorder %v789, %v4862
        %v4864 = vsel %vm4863, 1.0, 0.0
        %v4865 = vld [vmem:[%s16] sm:$0xff]
        %v4866 = vld [vmem:[%s16 + $0x8] sm:$0xf]
        %v4868 = vsel %vm3748, %v4861, 0
        %v4871 = vsel %vm810, %v4866, 0
        %4873 = vmatprep.subr.mxu0 0.0
        %4874 = vmatpush1.msra.mxu0 %v4865
        %4875 = vmatprep.subr.mxu0 0.0
        %4876 = vmatpush1.msra.mxu0 %v4871
        %4877 = vmatprep.subr.mxu0 0.0
        %4878 = vmatpush1.msra.mxu0 0.0
        %4879 = vmatprep.subr.mxu0 0.0
        %4880 = vmatpush1.msra.mxu0 0.0
        %4881 = vmatprep.subr.mxu0 0.0
        %4882 = vmatpush1.msra.mxu0 0.0
        %4883 = vmatprep.subr.mxu0 0.0
        %4884 = vmatpush1.msra.mxu0 0.0
        %4885 = vmatprep.subr.mxu0 0.0
        %4886 = vmatpush1.msra.mxu0 0.0
        %4887 = vmatprep.subr.mxu0 0.0
        %4888 = vmatpush1.msra.mxu0 0.0
        %4889 = vmatprep.subr.mxu0 0.0
        %4890 = vmatpush1.msra.mxu0 0.0
        %4891 = vmatprep.subr.mxu0 0.0
        %4892 = vmatpush1.msra.mxu0 0.0
        %4893 = vmatprep.subr.mxu0 0.0
        %4894 = vmatpush1.msra.mxu0 0.0
        %4895 = vmatprep.subr.mxu0 0.0
        %4896 = vmatpush1.msra.mxu0 0.0
        %4897 = vmatprep.subr.mxu0 0.0
        %4898 = vmatpush1.msra.mxu0 0.0
        %4899 = vmatprep.subr.mxu0 0.0
        %4900 = vmatpush1.msra.mxu0 0.0
        %4901 = vmatprep.subr.mxu0 0.0
        %4902 = vmatpush1.msra.mxu0 0.0
        %4903 = vmatprep.subr.mxu0 0.0
        %4904 = vmatpush1.msra.mxu0 0.0
        %4905 = vmatprep.subr.mxu0 0.0
        %4906 = vmatpush1.msra.mxu0 0.0
        %4907 = vmatprep.subr.mxu0 0.0
        %4908 = vmatpush1.msra.mxu0 0.0
        %4909 = vmatprep.subr.mxu0 0.0
        %4910 = vmatpush1.msra.mxu0 0.0
        %4911 = vmatprep.subr.mxu0 0.0
        %4912 = vmatpush1.msra.mxu0 0.0
        %4913 = vmatprep.subr.mxu0 0.0
        %4914 = vmatpush1.msra.mxu0 0.0
        %4915 = vmatprep.subr.mxu0 0.0
        %4916 = vmatpush1.msra.mxu0 0.0
        %4917 = vmatprep.subr.mxu0 0.0
        %4918 = vmatpush1.msra.mxu0 0.0
        %4919 = vmatprep.subr.mxu0 0.0
        %4920 = vmatpush1.msra.mxu0 0.0
        %4921 = vmatprep.subr.mxu0 0.0
        %4922 = vmatpush1.msra.mxu0 0.0
        %4923 = vmatprep.subr.mxu0 0.0
        %4924 = vmatpush1.msra.mxu0 0.0
        %4925 = vmatprep.subr.mxu0 0.0
        %4926 = vmatpush1.msra.mxu0 0.0
        %4927 = vmatprep.subr.mxu0 0.0
        %4928 = vmatpush1.msra.mxu0 0.0
        %4929 = vmatprep.subr.mxu0 0.0
        %4930 = vmatpush1.msra.mxu0 0.0
        %4931 = vmatprep.subr.mxu0 0.0
        %4932 = vmatpush1.msra.mxu0 0.0
        %4933 = vmatprep.subr.mxu0 0.0
        %4934 = vmatpush1.msra.mxu0 0.0
        %4935 = vmatprep.subr.mxu0 0.0
        %4936 = vmatpush1.msra.mxu0 0.0
        %4937 = vmatprep.mubr.f32.mxu0 0.0
        %4938 = vmatmul.mubr.f32.gmra.mrb[0].mxu0 %v4868
        %v4939 = vpop.f32.mrb[0].mxu0
        %v4940 = vadd.f32 0.0, %v4939
        %v4941 = vpop.f32.mrb[0].mxu0
        %4942 = vdwg.mxu0
        %v4943 = vadd.s32 %v4862, 1
        %vm4944 = vcmp.eq.s32.totalorder %v789, %v4943
        %v4945 = vsel %vm4944, 1.0, 0.0
        %s4946 = scalar_lea.vmem %s16, 16
        %v4947 = vld [vmem:[%s4946] sm:$0xff]
        %v4948 = vld [vmem:[%s4946 + $0x8] sm:$0xf]
        %v4950 = vsel %vm810, %v4948, 0
        %4952 = vmatprep.subr.mxu0 0.0
        %4953 = vmatpush1.msra.mxu0 %v4947
        %4954 = vmatprep.subr.mxu0 0.0
        %4955 = vmatpush1.msra.mxu0 %v4950
        %4956 = vmatprep.subr.mxu0 0.0
        %4957 = vmatpush1.msra.mxu0 0.0
        %4958 = vmatprep.subr.mxu0 0.0
        %4959 = vmatpush1.msra.mxu0 0.0
        %4960 = vmatprep.subr.mxu0 0.0
        %4961 = vmatpush1.msra.mxu0 0.0
        %4962 = vmatprep.subr.mxu0 0.0
        %4963 = vmatpush1.msra.mxu0 0.0
        %4964 = vmatprep.subr.mxu0 0.0
        %4965 = vmatpush1.msra.mxu0 0.0
        %4966 = vmatprep.subr.mxu0 0.0
        %4967 = vmatpush1.msra.mxu0 0.0
        %4968 = vmatprep.subr.mxu0 0.0
        %4969 = vmatpush1.msra.mxu0 0.0
        %4970 = vmatprep.subr.mxu0 0.0
        %4971 = vmatpush1.msra.mxu0 0.0
        %4972 = vmatprep.subr.mxu0 0.0
        %4973 = vmatpush1.msra.mxu0 0.0
        %4974 = vmatprep.subr.mxu0 0.0
        %4975 = vmatpush1.msra.mxu0 0.0
        %4976 = vmatprep.subr.mxu0 0.0
        %4977 = vmatpush1.msra.mxu0 0.0
        %4978 = vmatprep.subr.mxu0 0.0
        %4979 = vmatpush1.msra.mxu0 0.0
        %4980 = vmatprep.subr.mxu0 0.0
        %4981 = vmatpush1.msra.mxu0 0.0
        %4982 = vmatprep.subr.mxu0 0.0
        %4983 = vmatpush1.msra.mxu0 0.0
        %4984 = vmatprep.subr.mxu0 0.0
        %4985 = vmatpush1.msra.mxu0 0.0
        %4986 = vmatprep.subr.mxu0 0.0
        %4987 = vmatpush1.msra.mxu0 0.0
        %4988 = vmatprep.subr.mxu0 0.0
        %4989 = vmatpush1.msra.mxu0 0.0
        %4990 = vmatprep.subr.mxu0 0.0
        %4991 = vmatpush1.msra.mxu0 0.0
        %4992 = vmatprep.subr.mxu0 0.0
        %4993 = vmatpush1.msra.mxu0 0.0
        %4994 = vmatprep.subr.mxu0 0.0
        %4995 = vmatpush1.msra.mxu0 0.0
        %4996 = vmatprep.subr.mxu0 0.0
        %4997 = vmatpush1.msra.mxu0 0.0
        %4998 = vmatprep.subr.mxu0 0.0
        %4999 = vmatpush1.msra.mxu0 0.0
        %5000 = vmatprep.subr.mxu0 0.0
        %5001 = vmatpush1.msra.mxu0 0.0
        %5002 = vmatprep.subr.mxu0 0.0
        %5003 = vmatpush1.msra.mxu0 0.0
        %5004 = vmatprep.subr.mxu0 0.0
        %5005 = vmatpush1.msra.mxu0 0.0
        %5006 = vmatprep.subr.mxu0 0.0
        %5007 = vmatpush1.msra.mxu0 0.0
        %5008 = vmatprep.subr.mxu0 0.0
        %5009 = vmatpush1.msra.mxu0 0.0
        %5010 = vmatprep.subr.mxu0 0.0
        %5011 = vmatpush1.msra.mxu0 0.0
        %5012 = vmatprep.subr.mxu0 0.0
        %5013 = vmatpush1.msra.mxu0 0.0
        %5014 = vmatprep.subr.mxu0 0.0
        %5015 = vmatpush1.msra.mxu0 0.0
        %5016 = vmatprep.mubr.f32.mxu0 0.0
        %5017 = vmatmul.mubr.f32.gmra.mrb[0].mxu0 %v4868
        %v5018 = vpop.f32.mrb[0].mxu0
        %v5019 = vadd.f32 0.0, %v5018
        %v5020 = vpop.f32.mrb[0].mxu0
        %5021 = vdwg.mxu0
        %v5023 = vsel %vm3668, %v4945, 0
        %v5026 = vsel %vm3672, %v5019, 0
        %5028 = vmatprep.subr.mxu0 0.0
        %5029 = vmatpush1.msra.mxu0 %v5026
        %5030 = vmatprep.subr.mxu0 0.0
        %5031 = vmatpush1.msra.mxu0 0.0
        %5032 = vmatprep.subr.mxu0 0.0
        %5033 = vmatpush1.msra.mxu0 0.0
        %5034 = vmatprep.subr.mxu0 0.0
        %5035 = vmatpush1.msra.mxu0 0.0
        %5036 = vmatprep.subr.mxu0 0.0
        %5037 = vmatpush1.msra.mxu0 0.0
        %5038 = vmatprep.subr.mxu0 0.0
        %5039 = vmatpush1.msra.mxu0 0.0
        %5040 = vmatprep.subr.mxu0 0.0
        %5041 = vmatpush1.msra.mxu0 0.0
        %5042 = vmatprep.subr.mxu0 0.0
        %5043 = vmatpush1.msra.mxu0 0.0
        %5044 = vmatprep.subr.mxu0 0.0
        %5045 = vmatpush1.msra.mxu0 0.0
        %5046 = vmatprep.subr.mxu0 0.0
        %5047 = vmatpush1.msra.mxu0 0.0
        %5048 = vmatprep.subr.mxu0 0.0
        %5049 = vmatpush1.msra.mxu0 0.0
        %5050 = vmatprep.subr.mxu0 0.0
        %5051 = vmatpush1.msra.mxu0 0.0
        %5052 = vmatprep.subr.mxu0 0.0
        %5053 = vmatpush1.msra.mxu0 0.0
        %5054 = vmatprep.subr.mxu0 0.0
        %5055 = vmatpush1.msra.mxu0 0.0
        %5056 = vmatprep.subr.mxu0 0.0
        %5057 = vmatpush1.msra.mxu0 0.0
        %5058 = vmatprep.subr.mxu0 0.0
        %5059 = vmatpush1.msra.mxu0 0.0
        %5060 = vmatprep.subr.mxu0 0.0
        %5061 = vmatpush1.msra.mxu0 0.0
        %5062 = vmatprep.subr.mxu0 0.0
        %5063 = vmatpush1.msra.mxu0 0.0
        %5064 = vmatprep.subr.mxu0 0.0
        %5065 = vmatpush1.msra.mxu0 0.0
        %5066 = vmatprep.subr.mxu0 0.0
        %5067 = vmatpush1.msra.mxu0 0.0
        %5068 = vmatprep.subr.mxu0 0.0
        %5069 = vmatpush1.msra.mxu0 0.0
        %5070 = vmatprep.subr.mxu0 0.0
        %5071 = vmatpush1.msra.mxu0 0.0
        %5072 = vmatprep.subr.mxu0 0.0
        %5073 = vmatpush1.msra.mxu0 0.0
        %5074 = vmatprep.subr.mxu0 0.0
        %5075 = vmatpush1.msra.mxu0 0.0
        %5076 = vmatprep.subr.mxu0 0.0
        %5077 = vmatpush1.msra.mxu0 0.0
        %5078 = vmatprep.subr.mxu0 0.0
        %5079 = vmatpush1.msra.mxu0 0.0
        %5080 = vmatprep.subr.mxu0 0.0
        %5081 = vmatpush1.msra.mxu0 0.0
        %5082 = vmatprep.subr.mxu0 0.0
        %5083 = vmatpush1.msra.mxu0 0.0
        %5084 = vmatprep.subr.mxu0 0.0
        %5085 = vmatpush1.msra.mxu0 0.0
        %5086 = vmatprep.subr.mxu0 0.0
        %5087 = vmatpush1.msra.mxu0 0.0
        %5088 = vmatprep.subr.mxu0 0.0
        %5089 = vmatpush1.msra.mxu0 0.0
        %5090 = vmatprep.subr.mxu0 0.0
        %5091 = vmatpush1.msra.mxu0 0.0
        %5092 = vmatprep.mubr.f32.mxu0 0.0
        %5093 = vmatmul.mubr.f32.gmra.mrb[0].mxu0 %v5023
        %v5094 = vpop.f32.mrb[0].mxu0
        %v5095 = vadd.f32 0.0, %v5094
        %v5096 = vpop.f32.mrb[0].mxu0
        %5097 = vdwg.mxu0
        %v5099 = vsel %vm3668, %v4864, 0
        %v5102 = vsel %vm3672, %v4940, 0
        %5104 = vmatprep.subr.mxu0 0.0
        %5105 = vmatpush1.msra.mxu0 %v5102
        %5106 = vmatprep.subr.mxu0 0.0
        %5107 = vmatpush1.msra.mxu0 0.0
        %5108 = vmatprep.subr.mxu0 0.0
        %5109 = vmatpush1.msra.mxu0 0.0
        %5110 = vmatprep.subr.mxu0 0.0
        %5111 = vmatpush1.msra.mxu0 0.0
        %5112 = vmatprep.subr.mxu0 0.0
        %5113 = vmatpush1.msra.mxu0 0.0
        %5114 = vmatprep.subr.mxu0 0.0
        %5115 = vmatpush1.msra.mxu0 0.0
        %5116 = vmatprep.subr.mxu0 0.0
        %5117 = vmatpush1.msra.mxu0 0.0
        %5118 = vmatprep.subr.mxu0 0.0
        %5119 = vmatpush1.msra.mxu0 0.0
        %5120 = vmatprep.subr.mxu0 0.0
        %5121 = vmatpush1.msra.mxu0 0.0
        %5122 = vmatprep.subr.mxu0 0.0
        %5123 = vmatpush1.msra.mxu0 0.0
        %5124 = vmatprep.subr.mxu0 0.0
        %5125 = vmatpush1.msra.mxu0 0.0
        %5126 = vmatprep.subr.mxu0 0.0
        %5127 = vmatpush1.msra.mxu0 0.0
        %5128 = vmatprep.subr.mxu0 0.0
        %5129 = vmatpush1.msra.mxu0 0.0
        %5130 = vmatprep.subr.mxu0 0.0
        %5131 = vmatpush1.msra.mxu0 0.0
        %5132 = vmatprep.subr.mxu0 0.0
        %5133 = vmatpush1.msra.mxu0 0.0
        %5134 = vmatprep.subr.mxu0 0.0
        %5135 = vmatpush1.msra.mxu0 0.0
        %5136 = vmatprep.subr.mxu0 0.0
        %5137 = vmatpush1.msra.mxu0 0.0
        %5138 = vmatprep.subr.mxu0 0.0
        %5139 = vmatpush1.msra.mxu0 0.0
        %5140 = vmatprep.subr.mxu0 0.0
        %5141 = vmatpush1.msra.mxu0 0.0
        %5142 = vmatprep.subr.mxu0 0.0
        %5143 = vmatpush1.msra.mxu0 0.0
        %5144 = vmatprep.subr.mxu0 0.0
        %5145 = vmatpush1.msra.mxu0 0.0
        %5146 = vmatprep.subr.mxu0 0.0
        %5147 = vmatpush1.msra.mxu0 0.0
        %5148 = vmatprep.subr.mxu0 0.0
        %5149 = vmatpush1.msra.mxu0 0.0
        %5150 = vmatprep.subr.mxu0 0.0
        %5151 = vmatpush1.msra.mxu0 0.0
        %5152 = vmatprep.subr.mxu0 0.0
        %5153 = vmatpush1.msra.mxu0 0.0
        %5154 = vmatprep.subr.mxu0 0.0
        %5155 = vmatpush1.msra.mxu0 0.0
        %5156 = vmatprep.subr.mxu0 0.0
        %5157 = vmatpush1.msra.mxu0 0.0
        %5158 = vmatprep.subr.mxu0 0.0
        %5159 = vmatpush1.msra.mxu0 0.0
        %5160 = vmatprep.subr.mxu0 0.0
        %5161 = vmatpush1.msra.mxu0 0.0
        %5162 = vmatprep.subr.mxu0 0.0
        %5163 = vmatpush1.msra.mxu0 0.0
        %5164 = vmatprep.subr.mxu0 0.0
        %5165 = vmatpush1.msra.mxu0 0.0
        %5166 = vmatprep.subr.mxu0 0.0
        %5167 = vmatpush1.msra.mxu0 0.0
        %5168 = vmatprep.mubr.f32.mxu0 0.0
        %5169 = vmatmul.mubr.f32.gmra.mrb[0].mxu0 %v5099
        %v5170 = vpop.f32.mrb[0].mxu0
        %v5171 = vadd.f32 %v5095, %v5170
        %v5172 = vpop.f32.mrb[0].mxu0
        %5173 = vdwg.mxu0
        %v5174 = vadd.s32 %v4862, 2
        %vm5175 = vcmp.eq.s32.totalorder %v789, %v5174
        %v5176 = vsel %vm5175, 1.0, 0.0
        %s5177 = scalar_lea.vmem %s16, 32
        %v5178 = vld [vmem:[%s5177] sm:$0xff]
        %v5179 = vld [vmem:[%s5177 + $0x8] sm:$0xf]
        %v5181 = vsel %vm810, %v5179, 0
        %5183 = vmatprep.subr.mxu0 0.0
        %5184 = vmatpush1.msra.mxu0 %v5178
        %5185 = vmatprep.subr.mxu0 0.0
        %5186 = vmatpush1.msra.mxu0 %v5181
        %5187 = vmatprep.subr.mxu0 0.0
        %5188 = vmatpush1.msra.mxu0 0.0
        %5189 = vmatprep.subr.mxu0 0.0
        %5190 = vmatpush1.msra.mxu0 0.0
        %5191 = vmatprep.subr.mxu0 0.0
        %5192 = vmatpush1.msra.mxu0 0.0
        %5193 = vmatprep.subr.mxu0 0.0
        %5194 = vmatpush1.msra.mxu0 0.0
        %5195 = vmatprep.subr.mxu0 0.0
        %5196 = vmatpush1.msra.mxu0 0.0
        %5197 = vmatprep.subr.mxu0 0.0
        %5198 = vmatpush1.msra.mxu0 0.0
        %5199 = vmatprep.subr.mxu0 0.0
        %5200 = vmatpush1.msra.mxu0 0.0
        %5201 = vmatprep.subr.mxu0 0.0
        %5202 = vmatpush1.msra.mxu0 0.0
        %5203 = vmatprep.subr.mxu0 0.0
        %5204 = vmatpush1.msra.mxu0 0.0
        %5205 = vmatprep.subr.mxu0 0.0
        %5206 = vmatpush1.msra.mxu0 0.0
        %5207 = vmatprep.subr.mxu0 0.0
        %5208 = vmatpush1.msra.mxu0 0.0
        %5209 = vmatprep.subr.mxu0 0.0
        %5210 = vmatpush1.msra.mxu0 0.0
        %5211 = vmatprep.subr.mxu0 0.0
        %5212 = vmatpush1.msra.mxu0 0.0
        %5213 = vmatprep.subr.mxu0 0.0
        %5214 = vmatpush1.msra.mxu0 0.0
        %5215 = vmatprep.subr.mxu0 0.0
        %5216 = vmatpush1.msra.mxu0 0.0
        %5217 = vmatprep.subr.mxu0 0.0
        %5218 = vmatpush1.msra.mxu0 0.0
        %5219 = vmatprep.subr.mxu0 0.0
        %5220 = vmatpush1.msra.mxu0 0.0
        %5221 = vmatprep.subr.mxu0 0.0
        %5222 = vmatpush1.msra.mxu0 0.0
        %5223 = vmatprep.subr.mxu0 0.0
        %5224 = vmatpush1.msra.mxu0 0.0
        %5225 = vmatprep.subr.mxu0 0.0
        %5226 = vmatpush1.msra.mxu0 0.0
        %5227 = vmatprep.subr.mxu0 0.0
        %5228 = vmatpush1.msra.mxu0 0.0
        %5229 = vmatprep.subr.mxu0 0.0
        %5230 = vmatpush1.msra.mxu0 0.0
        %5231 = vmatprep.subr.mxu0 0.0
        %5232 = vmatpush1.msra.mxu0 0.0
        %5233 = vmatprep.subr.mxu0 0.0
        %5234 = vmatpush1.msra.mxu0 0.0
        %5235 = vmatprep.subr.mxu0 0.0
        %5236 = vmatpush1.msra.mxu0 0.0
        %5237 = vmatprep.subr.mxu0 0.0
        %5238 = vmatpush1.msra.mxu0 0.0
        %5239 = vmatprep.subr.mxu0 0.0
        %5240 = vmatpush1.msra.mxu0 0.0
        %5241 = vmatprep.subr.mxu0 0.0
        %5242 = vmatpush1.msra.mxu0 0.0
        %5243 = vmatprep.subr.mxu0 0.0
        %5244 = vmatpush1.msra.mxu0 0.0
        %5245 = vmatprep.subr.mxu0 0.0
        %5246 = vmatpush1.msra.mxu0 0.0
        %5247 = vmatprep.mubr.f32.mxu0 0.0
        %5248 = vmatmul.mubr.f32.gmra.mrb[0].mxu0 %v4868
        %v5249 = vpop.f32.mrb[0].mxu0
        %v5250 = vadd.f32 0.0, %v5249
        %v5251 = vpop.f32.mrb[0].mxu0
        %5252 = vdwg.mxu0
        %v5254 = vsel %vm3668, %v5176, 0
        %v5257 = vsel %vm3672, %v5250, 0
        %5259 = vmatprep.subr.mxu0 0.0
        %5260 = vmatpush1.msra.mxu0 %v5257
        %5261 = vmatprep.subr.mxu0 0.0
        %5262 = vmatpush1.msra.mxu0 0.0
        %5263 = vmatprep.subr.mxu0 0.0
        %5264 = vmatpush1.msra.mxu0 0.0
        %5265 = vmatprep.subr.mxu0 0.0
        %5266 = vmatpush1.msra.mxu0 0.0
        %5267 = vmatprep.subr.mxu0 0.0
        %5268 = vmatpush1.msra.mxu0 0.0
        %5269 = vmatprep.subr.mxu0 0.0
        %5270 = vmatpush1.msra.mxu0 0.0
        %5271 = vmatprep.subr.mxu0 0.0
        %5272 = vmatpush1.msra.mxu0 0.0
        %5273 = vmatprep.subr.mxu0 0.0
        %5274 = vmatpush1.msra.mxu0 0.0
        %5275 = vmatprep.subr.mxu0 0.0
        %5276 = vmatpush1.msra.mxu0 0.0
        %5277 = vmatprep.subr.mxu0 0.0
        %5278 = vmatpush1.msra.mxu0 0.0
        %5279 = vmatprep.subr.mxu0 0.0
        %5280 = vmatpush1.msra.mxu0 0.0
        %5281 = vmatprep.subr.mxu0 0.0
        %5282 = vmatpush1.msra.mxu0 0.0
        %5283 = vmatprep.subr.mxu0 0.0
        %5284 = vmatpush1.msra.mxu0 0.0
        %5285 = vmatprep.subr.mxu0 0.0
        %5286 = vmatpush1.msra.mxu0 0.0
        %5287 = vmatprep.subr.mxu0 0.0
        %5288 = vmatpush1.msra.mxu0 0.0
        %5289 = vmatprep.subr.mxu0 0.0
        %5290 = vmatpush1.msra.mxu0 0.0
        %5291 = vmatprep.subr.mxu0 0.0
        %5292 = vmatpush1.msra.mxu0 0.0
        %5293 = vmatprep.subr.mxu0 0.0
        %5294 = vmatpush1.msra.mxu0 0.0
        %5295 = vmatprep.subr.mxu0 0.0
        %5296 = vmatpush1.msra.mxu0 0.0
        %5297 = vmatprep.subr.mxu0 0.0
        %5298 = vmatpush1.msra.mxu0 0.0
        %5299 = vmatprep.subr.mxu0 0.0
        %5300 = vmatpush1.msra.mxu0 0.0
        %5301 = vmatprep.subr.mxu0 0.0
        %5302 = vmatpush1.msra.mxu0 0.0
        %5303 = vmatprep.subr.mxu0 0.0
        %5304 = vmatpush1.msra.mxu0 0.0
        %5305 = vmatprep.subr.mxu0 0.0
        %5306 = vmatpush1.msra.mxu0 0.0
        %5307 = vmatprep.subr.mxu0 0.0
        %5308 = vmatpush1.msra.mxu0 0.0
        %5309 = vmatprep.subr.mxu0 0.0
        %5310 = vmatpush1.msra.mxu0 0.0
        %5311 = vmatprep.subr.mxu0 0.0
        %5312 = vmatpush1.msra.mxu0 0.0
        %5313 = vmatprep.subr.mxu0 0.0
        %5314 = vmatpush1.msra.mxu0 0.0
        %5315 = vmatprep.subr.mxu0 0.0
        %5316 = vmatpush1.msra.mxu0 0.0
        %5317 = vmatprep.subr.mxu0 0.0
        %5318 = vmatpush1.msra.mxu0 0.0
        %5319 = vmatprep.subr.mxu0 0.0
        %5320 = vmatpush1.msra.mxu0 0.0
        %5321 = vmatprep.subr.mxu0 0.0
        %5322 = vmatpush1.msra.mxu0 0.0
        %5323 = vmatprep.mubr.f32.mxu0 0.0
        %5324 = vmatmul.mubr.f32.gmra.mrb[0].mxu0 %v5254
        %v5325 = vpop.f32.mrb[0].mxu0
        %v5326 = vadd.f32 0.0, %v5325
        %v5327 = vpop.f32.mrb[0].mxu0
        %5328 = vdwg.mxu0
        %v5329 = vadd.f32 %v5171, %v5326
        %v5330 = vadd.s32 %v4862, 3
        %vm5331 = vcmp.eq.s32.totalorder %v789, %v5330
        %v5332 = vsel %vm5331, 1.0, 0.0
        %s5333 = scalar_lea.vmem %s16, 48
        %v5334 = vld [vmem:[%s5333] sm:$0xff]
        %v5335 = vld [vmem:[%s5333 + $0x8] sm:$0xf]
        %v5337 = vsel %vm810, %v5335, 0
        %5339 = vmatprep.subr.mxu0 0.0
        %5340 = vmatpush1.msra.mxu0 %v5334
        %5341 = vmatprep.subr.mxu0 0.0
        %5342 = vmatpush1.msra.mxu0 %v5337
        %5343 = vmatprep.subr.mxu0 0.0
        %5344 = vmatpush1.msra.mxu0 0.0
        %5345 = vmatprep.subr.mxu0 0.0
        %5346 = vmatpush1.msra.mxu0 0.0
        %5347 = vmatprep.subr.mxu0 0.0
        %5348 = vmatpush1.msra.mxu0 0.0
        %5349 = vmatprep.subr.mxu0 0.0
        %5350 = vmatpush1.msra.mxu0 0.0
        %5351 = vmatprep.subr.mxu0 0.0
        %5352 = vmatpush1.msra.mxu0 0.0
        %5353 = vmatprep.subr.mxu0 0.0
        %5354 = vmatpush1.msra.mxu0 0.0
        %5355 = vmatprep.subr.mxu0 0.0
        %5356 = vmatpush1.msra.mxu0 0.0
        %5357 = vmatprep.subr.mxu0 0.0
        %5358 = vmatpush1.msra.mxu0 0.0
        %5359 = vmatprep.subr.mxu0 0.0
        %5360 = vmatpush1.msra.mxu0 0.0
        %5361 = vmatprep.subr.mxu0 0.0
        %5362 = vmatpush1.msra.mxu0 0.0
        %5363 = vmatprep.subr.mxu0 0.0
        %5364 = vmatpush1.msra.mxu0 0.0
        %5365 = vmatprep.subr.mxu0 0.0
        %5366 = vmatpush1.msra.mxu0 0.0
        %5367 = vmatprep.subr.mxu0 0.0
        %5368 = vmatpush1.msra.mxu0 0.0
        %5369 = vmatprep.subr.mxu0 0.0
        %5370 = vmatpush1.msra.mxu0 0.0
        %5371 = vmatprep.subr.mxu0 0.0
        %5372 = vmatpush1.msra.mxu0 0.0
        %5373 = vmatprep.subr.mxu0 0.0
        %5374 = vmatpush1.msra.mxu0 0.0
        %5375 = vmatprep.subr.mxu0 0.0
        %5376 = vmatpush1.msra.mxu0 0.0
        %5377 = vmatprep.subr.mxu0 0.0
        %5378 = vmatpush1.msra.mxu0 0.0
        %5379 = vmatprep.subr.mxu0 0.0
        %5380 = vmatpush1.msra.mxu0 0.0
        %5381 = vmatprep.subr.mxu0 0.0
        %5382 = vmatpush1.msra.mxu0 0.0
        %5383 = vmatprep.subr.mxu0 0.0
        %5384 = vmatpush1.msra.mxu0 0.0
        %5385 = vmatprep.subr.mxu0 0.0
        %5386 = vmatpush1.msra.mxu0 0.0
        %5387 = vmatprep.subr.mxu0 0.0
        %5388 = vmatpush1.msra.mxu0 0.0
        %5389 = vmatprep.subr.mxu0 0.0
        %5390 = vmatpush1.msra.mxu0 0.0
        %5391 = vmatprep.subr.mxu0 0.0
        %5392 = vmatpush1.msra.mxu0 0.0
        %5393 = vmatprep.subr.mxu0 0.0
        %5394 = vmatpush1.msra.mxu0 0.0
        %5395 = vmatprep.subr.mxu0 0.0
        %5396 = vmatpush1.msra.mxu0 0.0
        %5397 = vmatprep.subr.mxu0 0.0
        %5398 = vmatpush1.msra.mxu0 0.0
        %5399 = vmatprep.subr.mxu0 0.0
        %5400 = vmatpush1.msra.mxu0 0.0
        %5401 = vmatprep.subr.mxu0 0.0
        %5402 = vmatpush1.msra.mxu0 0.0
        %5403 = vmatprep.mubr.f32.mxu0 0.0
        %5404 = vmatmul.mubr.f32.gmra.mrb[0].mxu0 %v4868
        %v5405 = vpop.f32.mrb[0].mxu0
        %v5406 = vadd.f32 0.0, %v5405
        %v5407 = vpop.f32.mrb[0].mxu0
        %5408 = vdwg.mxu0
        %v5410 = vsel %vm3668, %v5332, 0
        %v5413 = vsel %vm3672, %v5406, 0
        %5415 = vmatprep.subr.mxu0 0.0
        %5416 = vmatpush1.msra.mxu0 %v5413
        %5417 = vmatprep.subr.mxu0 0.0
        %5418 = vmatpush1.msra.mxu0 0.0
        %5419 = vmatprep.subr.mxu0 0.0
        %5420 = vmatpush1.msra.mxu0 0.0
        %5421 = vmatprep.subr.mxu0 0.0
        %5422 = vmatpush1.msra.mxu0 0.0
        %5423 = vmatprep.subr.mxu0 0.0
        %5424 = vmatpush1.msra.mxu0 0.0
        %5425 = vmatprep.subr.mxu0 0.0
        %5426 = vmatpush1.msra.mxu0 0.0
        %5427 = vmatprep.subr.mxu0 0.0
        %5428 = vmatpush1.msra.mxu0 0.0
        %5429 = vmatprep.subr.mxu0 0.0
        %5430 = vmatpush1.msra.mxu0 0.0
        %5431 = vmatprep.subr.mxu0 0.0
        %5432 = vmatpush1.msra.mxu0 0.0
        %5433 = vmatprep.subr.mxu0 0.0
        %5434 = vmatpush1.msra.mxu0 0.0
        %5435 = vmatprep.subr.mxu0 0.0
        %5436 = vmatpush1.msra.mxu0 0.0
        %5437 = vmatprep.subr.mxu0 0.0
        %5438 = vmatpush1.msra.mxu0 0.0
        %5439 = vmatprep.subr.mxu0 0.0
        %5440 = vmatpush1.msra.mxu0 0.0
        %5441 = vmatprep.subr.mxu0 0.0
        %5442 = vmatpush1.msra.mxu0 0.0
        %5443 = vmatprep.subr.mxu0 0.0
        %5444 = vmatpush1.msra.mxu0 0.0
        %5445 = vmatprep.subr.mxu0 0.0
        %5446 = vmatpush1.msra.mxu0 0.0
        %5447 = vmatprep.subr.mxu0 0.0
        %5448 = vmatpush1.msra.mxu0 0.0
        %5449 = vmatprep.subr.mxu0 0.0
        %5450 = vmatpush1.msra.mxu0 0.0
        %5451 = vmatprep.subr.mxu0 0.0
        %5452 = vmatpush1.msra.mxu0 0.0
        %5453 = vmatprep.subr.mxu0 0.0
        %5454 = vmatpush1.msra.mxu0 0.0
        %5455 = vmatprep.subr.mxu0 0.0
        %5456 = vmatpush1.msra.mxu0 0.0
        %5457 = vmatprep.subr.mxu0 0.0
        %5458 = vmatpush1.msra.mxu0 0.0
        %5459 = vmatprep.subr.mxu0 0.0
        %5460 = vmatpush1.msra.mxu0 0.0
        %5461 = vmatprep.subr.mxu0 0.0
        %5462 = vmatpush1.msra.mxu0 0.0
        %5463 = vmatprep.subr.mxu0 0.0
        %5464 = vmatpush1.msra.mxu0 0.0
        %5465 = vmatprep.subr.mxu0 0.0
        %5466 = vmatpush1.msra.mxu0 0.0
        %5467 = vmatprep.subr.mxu0 0.0
        %5468 = vmatpush1.msra.mxu0 0.0
        %5469 = vmatprep.subr.mxu0 0.0
        %5470 = vmatpush1.msra.mxu0 0.0
        %5471 = vmatprep.subr.mxu0 0.0
        %5472 = vmatpush1.msra.mxu0 0.0
        %5473 = vmatprep.subr.mxu0 0.0
        %5474 = vmatpush1.msra.mxu0 0.0
        %5475 = vmatprep.subr.mxu0 0.0
        %5476 = vmatpush1.msra.mxu0 0.0
        %5477 = vmatprep.subr.mxu0 0.0
        %5478 = vmatpush1.msra.mxu0 0.0
        %5479 = vmatprep.mubr.f32.mxu0 0.0
        %5480 = vmatmul.mubr.f32.gmra.mrb[0].mxu0 %v5410
        %v5481 = vpop.f32.mrb[0].mxu0
        %v5482 = vadd.f32 0.0, %v5481
        %v5483 = vpop.f32.mrb[0].mxu0
        %5484 = vdwg.mxu0
        %v5485 = vadd.f32 %v5329, %v5482
        %v5486 = vld [vmem:[%s17] sm:$0x1]
        %v5488 = vlaneseq
        %v5489 = vshrl.u32 %v5488, 7
        %v5490 = vsub.s32 0, %v5489
        %v5491 = vrot.slane %v5486, %v5490
        %v5493 = vadd.f32 %v5485, %v5491
        %v5494 = vmax.f32 %v5493, 0.0
        %vm5495 = vcmp.eq.s32.totalorder %v790, %v4862
        %vm5496 = vcmp.eq.s32.totalorder %v791, %v4862
        %v5497 = vsel %vm5495, 1.0, 0.0
        %v5498 = vsel %vm5496, 1.0, 0.0
        %v5499 = vld [vmem:[%s18] sm:$0xff]
        %v5500 = vld [vmem:[%s18 + $0x8] sm:$0xff]
        %v5501 = vld [vmem:[%s18 + $0x10] sm:$0xff]
        %v5502 = vld [vmem:[%s18 + $0x18] sm:$0xff]
        %v5503 = vld [vmem:[%s18 + $0x20] sm:$0xff]
        %v5504 = vld [vmem:[%s18 + $0x28] sm:$0xff]
        %v5505 = vld [vmem:[%s18 + $0x30] sm:$0xff]
        %v5506 = vld [vmem:[%s18 + $0x38] sm:$0xff]
        %v5507 = vld [vmem:[%s18 + $0x40] sm:$0xff]
        %v5508 = vld [vmem:[%s18 + $0x48] sm:$0xff]
        %v5509 = vld [vmem:[%s18 + $0x50] sm:$0xff]
        %v5510 = vld [vmem:[%s18 + $0x58] sm:$0xff]
        %v5511 = vld [vmem:[%s18 + $0x60] sm:$0xff]
        %v5512 = vld [vmem:[%s18 + $0x68] sm:$0xff]
        %v5513 = vld [vmem:[%s18 + $0x70] sm:$0xff]
        %v5514 = vld [vmem:[%s18 + $0x78] sm:$0xff]
        %v5516 = vsel %vm3198, %v5494, 0
        %5518 = vmatprep.subr.mxu0 %v5500
        %5519 = vmatpush1.msra.mxu0 %v5499
        %5520 = vmatprep.subr.mxu0 %v5502
        %5521 = vmatpush1.msra.mxu0 %v5501
        %5522 = vmatprep.subr.mxu0 %v5504
        %5523 = vmatpush1.msra.mxu0 %v5503
        %5524 = vmatprep.subr.mxu0 %v5506
        %5525 = vmatpush1.msra.mxu0 %v5505
        %5526 = vmatprep.subr.mxu0 %v5508
        %5527 = vmatpush1.msra.mxu0 %v5507
        %5528 = vmatprep.subr.mxu0 %v5510
        %5529 = vmatpush1.msra.mxu0 %v5509
        %5530 = vmatprep.subr.mxu0 %v5512
        %5531 = vmatpush1.msra.mxu0 %v5511
        %5532 = vmatprep.subr.mxu0 %v5514
        %5533 = vmatpush1.msra.mxu0 %v5513
        %5534 = vmatprep.subr.mxu0 0.0
        %5535 = vmatpush1.msra.mxu0 0.0
        %5536 = vmatprep.subr.mxu0 0.0
        %5537 = vmatpush1.msra.mxu0 0.0
        %5538 = vmatprep.subr.mxu0 0.0
        %5539 = vmatpush1.msra.mxu0 0.0
        %5540 = vmatprep.subr.mxu0 0.0
        %5541 = vmatpush1.msra.mxu0 0.0
        %5542 = vmatprep.subr.mxu0 0.0
        %5543 = vmatpush1.msra.mxu0 0.0
        %5544 = vmatprep.subr.mxu0 0.0
        %5545 = vmatpush1.msra.mxu0 0.0
        %5546 = vmatprep.subr.mxu0 0.0
        %5547 = vmatpush1.msra.mxu0 0.0
        %5548 = vmatprep.subr.mxu0 0.0
        %5549 = vmatpush1.msra.mxu0 0.0
        %5550 = vmatprep.subr.mxu0 0.0
        %5551 = vmatpush1.msra.mxu0 0.0
        %5552 = vmatprep.subr.mxu0 0.0
        %5553 = vmatpush1.msra.mxu0 0.0
        %5554 = vmatprep.subr.mxu0 0.0
        %5555 = vmatpush1.msra.mxu0 0.0
        %5556 = vmatprep.subr.mxu0 0.0
        %5557 = vmatpush1.msra.mxu0 0.0
        %5558 = vmatprep.subr.mxu0 0.0
        %5559 = vmatpush1.msra.mxu0 0.0
        %5560 = vmatprep.subr.mxu0 0.0
        %5561 = vmatpush1.msra.mxu0 0.0
        %5562 = vmatprep.subr.mxu0 0.0
        %5563 = vmatpush1.msra.mxu0 0.0
        %5564 = vmatprep.subr.mxu0 0.0
        %5565 = vmatpush1.msra.mxu0 0.0
        %5566 = vmatprep.subr.mxu0 0.0
        %5567 = vmatpush1.msra.mxu0 0.0
        %5568 = vmatprep.subr.mxu0 0.0
        %5569 = vmatpush1.msra.mxu0 0.0
        %5570 = vmatprep.subr.mxu0 0.0
        %5571 = vmatpush1.msra.mxu0 0.0
        %5572 = vmatprep.subr.mxu0 0.0
        %5573 = vmatpush1.msra.mxu0 0.0
        %5574 = vmatprep.subr.mxu0 0.0
        %5575 = vmatpush1.msra.mxu0 0.0
        %5576 = vmatprep.subr.mxu0 0.0
        %5577 = vmatpush1.msra.mxu0 0.0
        %5578 = vmatprep.subr.mxu0 0.0
        %5579 = vmatpush1.msra.mxu0 0.0
        %5580 = vmatprep.subr.mxu0 0.0
        %5581 = vmatpush1.msra.mxu0 0.0
        %5582 = vmatprep.mubr.f32.mxu0 0.0
        %5583 = vmatmul.mubr.f32.gmra.mrb[0].mxu0 %v5516
        %v5584 = vpop.f32.mrb[0].mxu0
        %v5585 = vadd.f32 0.0, %v5584
        %v5586 = vpop.f32.mrb[0].mxu0
        %v5587 = vadd.f32 0.0, %v5586
        %5588 = vdwg.mxu0
        %vm5589 = vcmp.eq.s32.totalorder %v790, %v4943
        %vm5590 = vcmp.eq.s32.totalorder %v791, %v4943
        %v5591 = vsel %vm5589, 1.0, 0.0
        %v5592 = vsel %vm5590, 1.0, 0.0
        %s5593 = scalar_lea.vmem %s18, 128
        %v5594 = vld [vmem:[%s5593] sm:$0xff]
        %v5595 = vld [vmem:[%s5593 + $0x8] sm:$0xff]
        %v5596 = vld [vmem:[%s5593 + $0x10] sm:$0xff]
        %v5597 = vld [vmem:[%s5593 + $0x18] sm:$0xff]
        %v5598 = vld [vmem:[%s5593 + $0x20] sm:$0xff]
        %v5599 = vld [vmem:[%s5593 + $0x28] sm:$0xff]
        %v5600 = vld [vmem:[%s5593 + $0x30] sm:$0xff]
        %v5601 = vld [vmem:[%s5593 + $0x38] sm:$0xff]
        %v5602 = vld [vmem:[%s5593 + $0x40] sm:$0xff]
        %v5603 = vld [vmem:[%s5593 + $0x48] sm:$0xff]
        %v5604 = vld [vmem:[%s5593 + $0x50] sm:$0xff]
        %v5605 = vld [vmem:[%s5593 + $0x58] sm:$0xff]
        %v5606 = vld [vmem:[%s5593 + $0x60] sm:$0xff]
        %v5607 = vld [vmem:[%s5593 + $0x68] sm:$0xff]
        %v5608 = vld [vmem:[%s5593 + $0x70] sm:$0xff]
        %v5609 = vld [vmem:[%s5593 + $0x78] sm:$0xff]
        %5610 = vmatprep.subr.mxu0 %v5595
        %5611 = vmatpush1.msra.mxu0 %v5594
        %5612 = vmatprep.subr.mxu0 %v5597
        %5613 = vmatpush1.msra.mxu0 %v5596
        %5614 = vmatprep.subr.mxu0 %v5599
        %5615 = vmatpush1.msra.mxu0 %v5598
        %5616 = vmatprep.subr.mxu0 %v5601
        %5617 = vmatpush1.msra.mxu0 %v5600
        %5618 = vmatprep.subr.mxu0 %v5603
        %5619 = vmatpush1.msra.mxu0 %v5602
        %5620 = vmatprep.subr.mxu0 %v5605
        %5621 = vmatpush1.msra.mxu0 %v5604
        %5622 = vmatprep.subr.mxu0 %v5607
        %5623 = vmatpush1.msra.mxu0 %v5606
        %5624 = vmatprep.subr.mxu0 %v5609
        %5625 = vmatpush1.msra.mxu0 %v5608
        %5626 = vmatprep.subr.mxu0 0.0
        %5627 = vmatpush1.msra.mxu0 0.0
        %5628 = vmatprep.subr.mxu0 0.0
        %5629 = vmatpush1.msra.mxu0 0.0
        %5630 = vmatprep.subr.mxu0 0.0
        %5631 = vmatpush1.msra.mxu0 0.0
        %5632 = vmatprep.subr.mxu0 0.0
        %5633 = vmatpush1.msra.mxu0 0.0
        %5634 = vmatprep.subr.mxu0 0.0
        %5635 = vmatpush1.msra.mxu0 0.0
        %5636 = vmatprep.subr.mxu0 0.0
        %5637 = vmatpush1.msra.mxu0 0.0
        %5638 = vmatprep.subr.mxu0 0.0
        %5639 = vmatpush1.msra.mxu0 0.0
        %5640 = vmatprep.subr.mxu0 0.0
        %5641 = vmatpush1.msra.mxu0 0.0
        %5642 = vmatprep.subr.mxu0 0.0
        %5643 = vmatpush1.msra.mxu0 0.0
        %5644 = vmatprep.subr.mxu0 0.0
        %5645 = vmatpush1.msra.mxu0 0.0
        %5646 = vmatprep.subr.mxu0 0.0
        %5647 = vmatpush1.msra.mxu0 0.0
        %5648 = vmatprep.subr.mxu0 0.0
        %5649 = vmatpush1.msra.mxu0 0.0
        %5650 = vmatprep.subr.mxu0 0.0
        %5651 = vmatpush1.msra.mxu0 0.0
        %5652 = vmatprep.subr.mxu0 0.0
        %5653 = vmatpush1.msra.mxu0 0.0
        %5654 = vmatprep.subr.mxu0 0.0
        %5655 = vmatpush1.msra.mxu0 0.0
        %5656 = vmatprep.subr.mxu0 0.0
        %5657 = vmatpush1.msra.mxu0 0.0
        %5658 = vmatprep.subr.mxu0 0.0
        %5659 = vmatpush1.msra.mxu0 0.0
        %5660 = vmatprep.subr.mxu0 0.0
        %5661 = vmatpush1.msra.mxu0 0.0
        %5662 = vmatprep.subr.mxu0 0.0
        %5663 = vmatpush1.msra.mxu0 0.0
        %5664 = vmatprep.subr.mxu0 0.0
        %5665 = vmatpush1.msra.mxu0 0.0
        %5666 = vmatprep.subr.mxu0 0.0
        %5667 = vmatpush1.msra.mxu0 0.0
        %5668 = vmatprep.subr.mxu0 0.0
        %5669 = vmatpush1.msra.mxu0 0.0
        %5670 = vmatprep.subr.mxu0 0.0
        %5671 = vmatpush1.msra.mxu0 0.0
        %5672 = vmatprep.subr.mxu0 0.0
        %5673 = vmatpush1.msra.mxu0 0.0
        %5674 = vmatprep.mubr.f32.mxu0 0.0
        %5675 = vmatmul.mubr.f32.gmra.mrb[0].mxu0 %v5516
        %v5676 = vpop.f32.mrb[0].mxu0
        %v5677 = vadd.f32 0.0, %v5676
        %v5678 = vpop.f32.mrb[0].mxu0
        %v5679 = vadd.f32 0.0, %v5678
        %5680 = vdwg.mxu0
        %v5681 = vsel %vm3036, %v4945, 0
        %v5684 = vsel %vm3036, %v5591, 0
        %v5687 = vsel %vm3036, %v5592, 0
        %5689 = vmatprep.subr.mxu0 %v5679
        %5690 = vmatpush1.msra.mxu0 %v5677
        %5691 = vmatprep.subr.mxu0 0.0
        %5692 = vmatpush1.msra.mxu0 0.0
        %5693 = vmatprep.subr.mxu0 0.0
        %5694 = vmatpush1.msra.mxu0 0.0
        %5695 = vmatprep.subr.mxu0 0.0
        %5696 = vmatpush1.msra.mxu0 0.0
        %5697 = vmatprep.subr.mxu0 0.0
        %5698 = vmatpush1.msra.mxu0 0.0
        %5699 = vmatprep.subr.mxu0 0.0
        %5700 = vmatpush1.msra.mxu0 0.0
        %5701 = vmatprep.subr.mxu0 0.0
        %5702 = vmatpush1.msra.mxu0 0.0
        %5703 = vmatprep.subr.mxu0 0.0
        %5704 = vmatpush1.msra.mxu0 0.0
        %5705 = vmatprep.subr.mxu0 0.0
        %5706 = vmatpush1.msra.mxu0 0.0
        %5707 = vmatprep.subr.mxu0 0.0
        %5708 = vmatpush1.msra.mxu0 0.0
        %5709 = vmatprep.subr.mxu0 0.0
        %5710 = vmatpush1.msra.mxu0 0.0
        %5711 = vmatprep.subr.mxu0 0.0
        %5712 = vmatpush1.msra.mxu0 0.0
        %5713 = vmatprep.subr.mxu0 0.0
        %5714 = vmatpush1.msra.mxu0 0.0
        %5715 = vmatprep.subr.mxu0 0.0
        %5716 = vmatpush1.msra.mxu0 0.0
        %5717 = vmatprep.subr.mxu0 0.0
        %5718 = vmatpush1.msra.mxu0 0.0
        %5719 = vmatprep.subr.mxu0 0.0
        %5720 = vmatpush1.msra.mxu0 0.0
        %5721 = vmatprep.subr.mxu0 0.0
        %5722 = vmatpush1.msra.mxu0 0.0
        %5723 = vmatprep.subr.mxu0 0.0
        %5724 = vmatpush1.msra.mxu0 0.0
        %5725 = vmatprep.subr.mxu0 0.0
        %5726 = vmatpush1.msra.mxu0 0.0
        %5727 = vmatprep.subr.mxu0 0.0
        %5728 = vmatpush1.msra.mxu0 0.0
        %5729 = vmatprep.subr.mxu0 0.0
        %5730 = vmatpush1.msra.mxu0 0.0
        %5731 = vmatprep.subr.mxu0 0.0
        %5732 = vmatpush1.msra.mxu0 0.0
        %5733 = vmatprep.subr.mxu0 0.0
        %5734 = vmatpush1.msra.mxu0 0.0
        %5735 = vmatprep.subr.mxu0 0.0
        %5736 = vmatpush1.msra.mxu0 0.0
        %5737 = vmatprep.subr.mxu0 0.0
        %5738 = vmatpush1.msra.mxu0 0.0
        %5739 = vmatprep.subr.mxu0 0.0
        %5740 = vmatpush1.msra.mxu0 0.0
        %5741 = vmatprep.subr.mxu0 0.0
        %5742 = vmatpush1.msra.mxu0 0.0
        %5743 = vmatprep.subr.mxu0 0.0
        %5744 = vmatpush1.msra.mxu0 0.0
        %5745 = vmatprep.subr.mxu0 0.0
        %5746 = vmatpush1.msra.mxu0 0.0
        %5747 = vmatprep.subr.mxu0 0.0
        %5748 = vmatpush1.msra.mxu0 0.0
        %5749 = vmatprep.subr.mxu0 0.0
        %5750 = vmatpush1.msra.mxu0 0.0
        %5751 = vmatprep.subr.mxu0 0.0
        %5752 = vmatpush1.msra.mxu0 0.0
        %5753 = vmatprep.mubr.f32.mxu0 0.0
        %5754 = vmatmul.mubr.f32.gmra.mrb[0].mxu0 %v5681
        %v5755 = vpop.f32.mrb[0].mxu0
        %v5756 = vadd.f32 0.0, %v5755
        %v5757 = vpop.f32.mrb[0].mxu0
        %v5758 = vadd.f32 0.0, %v5757
        %5759 = vmatprep.mubr.f32.mxu0 0.0
        %5760 = vmatmul.mubr.f32.gmra.mrb[0].mxu0 %v5684
        %v5761 = vpop.f32.mrb[0].mxu0
        %v5762 = vadd.f32 0.0, %v5761
        %v5763 = vpop.f32.mrb[0].mxu0
        %v5764 = vadd.f32 0.0, %v5763
        %5765 = vmatprep.mubr.f32.mxu0 0.0
        %5766 = vmatmul.mubr.f32.gmra.mrb[0].mxu0 %v5687
        %v5767 = vpop.f32.mrb[0].mxu0
        %v5768 = vadd.f32 0.0, %v5767
        %v5769 = vpop.f32.mrb[0].mxu0
        %v5770 = vadd.f32 0.0, %v5769
        %5771 = vdwg.mxu0
        %v5772 = vsel %vm3036, %v4864, 0
        %v5775 = vsel %vm3036, %v5497, 0
        %v5778 = vsel %vm3036, %v5498, 0
        %5780 = vmatprep.subr.mxu0 %v5587
        %5781 = vmatpush1.msra.mxu0 %v5585
        %5782 = vmatprep.subr.mxu0 0.0
        %5783 = vmatpush1.msra.mxu0 0.0
        %5784 = vmatprep.subr.mxu0 0.0
        %5785 = vmatpush1.msra.mxu0 0.0
        %5786 = vmatprep.subr.mxu0 0.0
        %5787 = vmatpush1.msra.mxu0 0.0
        %5788 = vmatprep.subr.mxu0 0.0
        %5789 = vmatpush1.msra.mxu0 0.0
        %5790 = vmatprep.subr.mxu0 0.0
        %5791 = vmatpush1.msra.mxu0 0.0
        %5792 = vmatprep.subr.mxu0 0.0
        %5793 = vmatpush1.msra.mxu0 0.0
        %5794 = vmatprep.subr.mxu0 0.0
        %5795 = vmatpush1.msra.mxu0 0.0
        %5796 = vmatprep.subr.mxu0 0.0
        %5797 = vmatpush1.msra.mxu0 0.0
        %5798 = vmatprep.subr.mxu0 0.0
        %5799 = vmatpush1.msra.mxu0 0.0
        %5800 = vmatprep.subr.mxu0 0.0
        %5801 = vmatpush1.msra.mxu0 0.0
        %5802 = vmatprep.subr.mxu0 0.0
        %5803 = vmatpush1.msra.mxu0 0.0
        %5804 = vmatprep.subr.mxu0 0.0
        %5805 = vmatpush1.msra.mxu0 0.0
        %5806 = vmatprep.subr.mxu0 0.0
        %5807 = vmatpush1.msra.mxu0 0.0
        %5808 = vmatprep.subr.mxu0 0.0
        %5809 = vmatpush1.msra.mxu0 0.0
        %5810 = vmatprep.subr.mxu0 0.0
        %5811 = vmatpush1.msra.mxu0 0.0
        %5812 = vmatprep.subr.mxu0 0.0
        %5813 = vmatpush1.msra.mxu0 0.0
        %5814 = vmatprep.subr.mxu0 0.0
        %5815 = vmatpush1.msra.mxu0 0.0
        %5816 = vmatprep.subr.mxu0 0.0
        %5817 = vmatpush1.msra.mxu0 0.0
        %5818 = vmatprep.subr.mxu0 0.0
        %5819 = vmatpush1.msra.mxu0 0.0
        %5820 = vmatprep.subr.mxu0 0.0
        %5821 = vmatpush1.msra.mxu0 0.0
        %5822 = vmatprep.subr.mxu0 0.0
        %5823 = vmatpush1.msra.mxu0 0.0
        %5824 = vmatprep.subr.mxu0 0.0
        %5825 = vmatpush1.msra.mxu0 0.0
        %5826 = vmatprep.subr.mxu0 0.0
        %5827 = vmatpush1.msra.mxu0 0.0
        %5828 = vmatprep.subr.mxu0 0.0
        %5829 = vmatpush1.msra.mxu0 0.0
        %5830 = vmatprep.subr.mxu0 0.0
        %5831 = vmatpush1.msra.mxu0 0.0
        %5832 = vmatprep.subr.mxu0 0.0
        %5833 = vmatpush1.msra.mxu0 0.0
        %5834 = vmatprep.subr.mxu0 0.0
        %5835 = vmatpush1.msra.mxu0 0.0
        %5836 = vmatprep.subr.mxu0 0.0
        %5837 = vmatpush1.msra.mxu0 0.0
        %5838 = vmatprep.subr.mxu0 0.0
        %5839 = vmatpush1.msra.mxu0 0.0
        %5840 = vmatprep.subr.mxu0 0.0
        %5841 = vmatpush1.msra.mxu0 0.0
        %5842 = vmatprep.subr.mxu0 0.0
        %5843 = vmatpush1.msra.mxu0 0.0
        %5844 = vmatprep.mubr.f32.mxu0 0.0
        %5845 = vmatmul.mubr.f32.gmra.mrb[0].mxu0 %v5772
        %v5846 = vpop.f32.mrb[0].mxu0
        %v5847 = vadd.f32 %v5756, %v5846
        %v5848 = vpop.f32.mrb[0].mxu0
        %v5849 = vadd.f32 %v5758, %v5848
        %5850 = vmatprep.mubr.f32.mxu0 0.0
        %5851 = vmatmul.mubr.f32.gmra.mrb[0].mxu0 %v5775
        %v5852 = vpop.f32.mrb[0].mxu0
        %v5853 = vadd.f32 %v5762, %v5852
        %v5854 = vpop.f32.mrb[0].mxu0
        %v5855 = vadd.f32 %v5764, %v5854
        %5856 = vmatprep.mubr.f32.mxu0 0.0
        %5857 = vmatmul.mubr.f32.gmra.mrb[0].mxu0 %v5778
        %v5858 = vpop.f32.mrb[0].mxu0
        %v5859 = vadd.f32 %v5768, %v5858
        %v5860 = vpop.f32.mrb[0].mxu0
        %v5861 = vadd.f32 %v5770, %v5860
        %5862 = vdwg.mxu0
        %vm5863 = vcmp.eq.s32.totalorder %v790, %v5174
        %vm5864 = vcmp.eq.s32.totalorder %v791, %v5174
        %v5865 = vsel %vm5863, 1.0, 0.0
        %v5866 = vsel %vm5864, 1.0, 0.0
        %s5867 = scalar_lea.vmem %s18, 256
        %v5868 = vld [vmem:[%s5867] sm:$0xff]
        %v5869 = vld [vmem:[%s5867 + $0x8] sm:$0xff]
        %v5870 = vld [vmem:[%s5867 + $0x10] sm:$0xff]
        %v5871 = vld [vmem:[%s5867 + $0x18] sm:$0xff]
        %v5872 = vld [vmem:[%s5867 + $0x20] sm:$0xff]
        %v5873 = vld [vmem:[%s5867 + $0x28] sm:$0xff]
        %v5874 = vld [vmem:[%s5867 + $0x30] sm:$0xff]
        %v5875 = vld [vmem:[%s5867 + $0x38] sm:$0xff]
        %v5876 = vld [vmem:[%s5867 + $0x40] sm:$0xff]
        %v5877 = vld [vmem:[%s5867 + $0x48] sm:$0xff]
        %v5878 = vld [vmem:[%s5867 + $0x50] sm:$0xff]
        %v5879 = vld [vmem:[%s5867 + $0x58] sm:$0xff]
        %v5880 = vld [vmem:[%s5867 + $0x60] sm:$0xff]
        %v5881 = vld [vmem:[%s5867 + $0x68] sm:$0xff]
        %v5882 = vld [vmem:[%s5867 + $0x70] sm:$0xff]
        %v5883 = vld [vmem:[%s5867 + $0x78] sm:$0xff]
        %5884 = vmatprep.subr.mxu0 %v5869
        %5885 = vmatpush1.msra.mxu0 %v5868
        %5886 = vmatprep.subr.mxu0 %v5871
        %5887 = vmatpush1.msra.mxu0 %v5870
        %5888 = vmatprep.subr.mxu0 %v5873
        %5889 = vmatpush1.msra.mxu0 %v5872
        %5890 = vmatprep.subr.mxu0 %v5875
        %5891 = vmatpush1.msra.mxu0 %v5874
        %5892 = vmatprep.subr.mxu0 %v5877
        %5893 = vmatpush1.msra.mxu0 %v5876
        %5894 = vmatprep.subr.mxu0 %v5879
        %5895 = vmatpush1.msra.mxu0 %v5878
        %5896 = vmatprep.subr.mxu0 %v5881
        %5897 = vmatpush1.msra.mxu0 %v5880
        %5898 = vmatprep.subr.mxu0 %v5883
        %5899 = vmatpush1.msra.mxu0 %v5882
        %5900 = vmatprep.subr.mxu0 0.0
        %5901 = vmatpush1.msra.mxu0 0.0
        %5902 = vmatprep.subr.mxu0 0.0
        %5903 = vmatpush1.msra.mxu0 0.0
        %5904 = vmatprep.subr.mxu0 0.0
        %5905 = vmatpush1.msra.mxu0 0.0
        %5906 = vmatprep.subr.mxu0 0.0
        %5907 = vmatpush1.msra.mxu0 0.0
        %5908 = vmatprep.subr.mxu0 0.0
        %5909 = vmatpush1.msra.mxu0 0.0
        %5910 = vmatprep.subr.mxu0 0.0
        %5911 = vmatpush1.msra.mxu0 0.0
        %5912 = vmatprep.subr.mxu0 0.0
        %5913 = vmatpush1.msra.mxu0 0.0
        %5914 = vmatprep.subr.mxu0 0.0
        %5915 = vmatpush1.msra.mxu0 0.0
        %5916 = vmatprep.subr.mxu0 0.0
        %5917 = vmatpush1.msra.mxu0 0.0
        %5918 = vmatprep.subr.mxu0 0.0
        %5919 = vmatpush1.msra.mxu0 0.0
        %5920 = vmatprep.subr.mxu0 0.0
        %5921 = vmatpush1.msra.mxu0 0.0
        %5922 = vmatprep.subr.mxu0 0.0
        %5923 = vmatpush1.msra.mxu0 0.0
        %5924 = vmatprep.subr.mxu0 0.0
        %5925 = vmatpush1.msra.mxu0 0.0
        %5926 = vmatprep.subr.mxu0 0.0
        %5927 = vmatpush1.msra.mxu0 0.0
        %5928 = vmatprep.subr.mxu0 0.0
        %5929 = vmatpush1.msra.mxu0 0.0
        %5930 = vmatprep.subr.mxu0 0.0
        %5931 = vmatpush1.msra.mxu0 0.0
        %5932 = vmatprep.subr.mxu0 0.0
        %5933 = vmatpush1.msra.mxu0 0.0
        %5934 = vmatprep.subr.mxu0 0.0
        %5935 = vmatpush1.msra.mxu0 0.0
        %5936 = vmatprep.subr.mxu0 0.0
        %5937 = vmatpush1.msra.mxu0 0.0
        %5938 = vmatprep.subr.mxu0 0.0
        %5939 = vmatpush1.msra.mxu0 0.0
        %5940 = vmatprep.subr.mxu0 0.0
        %5941 = vmatpush1.msra.mxu0 0.0
        %5942 = vmatprep.subr.mxu0 0.0
        %5943 = vmatpush1.msra.mxu0 0.0
        %5944 = vmatprep.subr.mxu0 0.0
        %5945 = vmatpush1.msra.mxu0 0.0
        %5946 = vmatprep.subr.mxu0 0.0
        %5947 = vmatpush1.msra.mxu0 0.0
        %5948 = vmatprep.mubr.f32.mxu0 0.0
        %5949 = vmatmul.mubr.f32.gmra.mrb[0].mxu0 %v5516
        %v5950 = vpop.f32.mrb[0].mxu0
        %v5951 = vadd.f32 0.0, %v5950
        %v5952 = vpop.f32.mrb[0].mxu0
        %v5953 = vadd.f32 0.0, %v5952
        %5954 = vdwg.mxu0
        %v5955 = vsel %vm3036, %v5176, 0
        %v5958 = vsel %vm3036, %v5865, 0
        %v5961 = vsel %vm3036, %v5866, 0
        %5963 = vmatprep.subr.mxu0 %v5953
        %5964 = vmatpush1.msra.mxu0 %v5951
        %5965 = vmatprep.subr.mxu0 0.0
        %5966 = vmatpush1.msra.mxu0 0.0
        %5967 = vmatprep.subr.mxu0 0.0
        %5968 = vmatpush1.msra.mxu0 0.0
        %5969 = vmatprep.subr.mxu0 0.0
        %5970 = vmatpush1.msra.mxu0 0.0
        %5971 = vmatprep.subr.mxu0 0.0
        %5972 = vmatpush1.msra.mxu0 0.0
        %5973 = vmatprep.subr.mxu0 0.0
        %5974 = vmatpush1.msra.mxu0 0.0
        %5975 = vmatprep.subr.mxu0 0.0
        %5976 = vmatpush1.msra.mxu0 0.0
        %5977 = vmatprep.subr.mxu0 0.0
        %5978 = vmatpush1.msra.mxu0 0.0
        %5979 = vmatprep.subr.mxu0 0.0
        %5980 = vmatpush1.msra.mxu0 0.0
        %5981 = vmatprep.subr.mxu0 0.0
        %5982 = vmatpush1.msra.mxu0 0.0
        %5983 = vmatprep.subr.mxu0 0.0
        %5984 = vmatpush1.msra.mxu0 0.0
        %5985 = vmatprep.subr.mxu0 0.0
        %5986 = vmatpush1.msra.mxu0 0.0
        %5987 = vmatprep.subr.mxu0 0.0
        %5988 = vmatpush1.msra.mxu0 0.0
        %5989 = vmatprep.subr.mxu0 0.0
        %5990 = vmatpush1.msra.mxu0 0.0
        %5991 = vmatprep.subr.mxu0 0.0
        %5992 = vmatpush1.msra.mxu0 0.0
        %5993 = vmatprep.subr.mxu0 0.0
        %5994 = vmatpush1.msra.mxu0 0.0
        %5995 = vmatprep.subr.mxu0 0.0
        %5996 = vmatpush1.msra.mxu0 0.0
        %5997 = vmatprep.subr.mxu0 0.0
        %5998 = vmatpush1.msra.mxu0 0.0
        %5999 = vmatprep.subr.mxu0 0.0
        %6000 = vmatpush1.msra.mxu0 0.0
        %6001 = vmatprep.subr.mxu0 0.0
        %6002 = vmatpush1.msra.mxu0 0.0
        %6003 = vmatprep.subr.mxu0 0.0
        %6004 = vmatpush1.msra.mxu0 0.0
        %6005 = vmatprep.subr.mxu0 0.0
        %6006 = vmatpush1.msra.mxu0 0.0
        %6007 = vmatprep.subr.mxu0 0.0
        %6008 = vmatpush1.msra.mxu0 0.0
        %6009 = vmatprep.subr.mxu0 0.0
        %6010 = vmatpush1.msra.mxu0 0.0
        %6011 = vmatprep.subr.mxu0 0.0
        %6012 = vmatpush1.msra.mxu0 0.0
        %6013 = vmatprep.subr.mxu0 0.0
        %6014 = vmatpush1.msra.mxu0 0.0
        %6015 = vmatprep.subr.mxu0 0.0
        %6016 = vmatpush1.msra.mxu0 0.0
        %6017 = vmatprep.subr.mxu0 0.0
        %6018 = vmatpush1.msra.mxu0 0.0
        %6019 = vmatprep.subr.mxu0 0.0
        %6020 = vmatpush1.msra.mxu0 0.0
        %6021 = vmatprep.subr.mxu0 0.0
        %6022 = vmatpush1.msra.mxu0 0.0
        %6023 = vmatprep.subr.mxu0 0.0
        %6024 = vmatpush1.msra.mxu0 0.0
        %6025 = vmatprep.subr.mxu0 0.0
        %6026 = vmatpush1.msra.mxu0 0.0
        %6027 = vmatprep.mubr.f32.mxu0 0.0
        %6028 = vmatmul.mubr.f32.gmra.mrb[0].mxu0 %v5955
        %v6029 = vpop.f32.mrb[0].mxu0
        %v6030 = vadd.f32 0.0, %v6029
        %v6031 = vpop.f32.mrb[0].mxu0
        %v6032 = vadd.f32 0.0, %v6031
        %6033 = vmatprep.mubr.f32.mxu0 0.0
        %6034 = vmatmul.mubr.f32.gmra.mrb[0].mxu0 %v5958
        %v6035 = vpop.f32.mrb[0].mxu0
        %v6036 = vadd.f32 0.0, %v6035
        %v6037 = vpop.f32.mrb[0].mxu0
        %v6038 = vadd.f32 0.0, %v6037
        %6039 = vmatprep.mubr.f32.mxu0 0.0
        %6040 = vmatmul.mubr.f32.gmra.mrb[0].mxu0 %v5961
        %v6041 = vpop.f32.mrb[0].mxu0
        %v6042 = vadd.f32 0.0, %v6041
        %v6043 = vpop.f32.mrb[0].mxu0
        %v6044 = vadd.f32 0.0, %v6043
        %6045 = vdwg.mxu0
        %v6046 = vadd.f32 %v5847, %v6030
        %v6047 = vadd.f32 %v5849, %v6032
        %v6048 = vadd.f32 %v5853, %v6036
        %v6049 = vadd.f32 %v5855, %v6038
        %v6050 = vadd.f32 %v5859, %v6042
        %v6051 = vadd.f32 %v5861, %v6044
        %vm6052 = vcmp.eq.s32.totalorder %v790, %v5330
        %vm6053 = vcmp.eq.s32.totalorder %v791, %v5330
        %v6054 = vsel %vm6052, 1.0, 0.0
        %v6055 = vsel %vm6053, 1.0, 0.0
        %s6056 = scalar_lea.vmem %s18, 384
        %v6057 = vld [vmem:[%s6056] sm:$0xff]
        %v6058 = vld [vmem:[%s6056 + $0x8] sm:$0xff]
        %v6059 = vld [vmem:[%s6056 + $0x10] sm:$0xff]
        %v6060 = vld [vmem:[%s6056 + $0x18] sm:$0xff]
        %v6061 = vld [vmem:[%s6056 + $0x20] sm:$0xff]
        %v6062 = vld [vmem:[%s6056 + $0x28] sm:$0xff]
        %v6063 = vld [vmem:[%s6056 + $0x30] sm:$0xff]
        %v6064 = vld [vmem:[%s6056 + $0x38] sm:$0xff]
        %v6065 = vld [vmem:[%s6056 + $0x40] sm:$0xff]
        %v6066 = vld [vmem:[%s6056 + $0x48] sm:$0xff]
        %v6067 = vld [vmem:[%s6056 + $0x50] sm:$0xff]
        %v6068 = vld [vmem:[%s6056 + $0x58] sm:$0xff]
        %v6069 = vld [vmem:[%s6056 + $0x60] sm:$0xff]
        %v6070 = vld [vmem:[%s6056 + $0x68] sm:$0xff]
        %v6071 = vld [vmem:[%s6056 + $0x70] sm:$0xff]
        %v6072 = vld [vmem:[%s6056 + $0x78] sm:$0xff]
        %6073 = vmatprep.subr.mxu0 %v6058
        %6074 = vmatpush1.msra.mxu0 %v6057
        %6075 = vmatprep.subr.mxu0 %v6060
        %6076 = vmatpush1.msra.mxu0 %v6059
        %6077 = vmatprep.subr.mxu0 %v6062
        %6078 = vmatpush1.msra.mxu0 %v6061
        %6079 = vmatprep.subr.mxu0 %v6064
        %6080 = vmatpush1.msra.mxu0 %v6063
        %6081 = vmatprep.subr.mxu0 %v6066
        %6082 = vmatpush1.msra.mxu0 %v6065
        %6083 = vmatprep.subr.mxu0 %v6068
        %6084 = vmatpush1.msra.mxu0 %v6067
        %6085 = vmatprep.subr.mxu0 %v6070
        %6086 = vmatpush1.msra.mxu0 %v6069
        %6087 = vmatprep.subr.mxu0 %v6072
        %6088 = vmatpush1.msra.mxu0 %v6071
        %6089 = vmatprep.subr.mxu0 0.0
        %6090 = vmatpush1.msra.mxu0 0.0
        %6091 = vmatprep.subr.mxu0 0.0
        %6092 = vmatpush1.msra.mxu0 0.0
        %6093 = vmatprep.subr.mxu0 0.0
        %6094 = vmatpush1.msra.mxu0 0.0
        %6095 = vmatprep.subr.mxu0 0.0
        %6096 = vmatpush1.msra.mxu0 0.0
        %6097 = vmatprep.subr.mxu0 0.0
        %6098 = vmatpush1.msra.mxu0 0.0
        %6099 = vmatprep.subr.mxu0 0.0
        %6100 = vmatpush1.msra.mxu0 0.0
        %6101 = vmatprep.subr.mxu0 0.0
        %6102 = vmatpush1.msra.mxu0 0.0
        %6103 = vmatprep.subr.mxu0 0.0
        %6104 = vmatpush1.msra.mxu0 0.0
        %6105 = vmatprep.subr.mxu0 0.0
        %6106 = vmatpush1.msra.mxu0 0.0
        %6107 = vmatprep.subr.mxu0 0.0
        %6108 = vmatpush1.msra.mxu0 0.0
        %6109 = vmatprep.subr.mxu0 0.0
        %6110 = vmatpush1.msra.mxu0 0.0
        %6111 = vmatprep.subr.mxu0 0.0
        %6112 = vmatpush1.msra.mxu0 0.0
        %6113 = vmatprep.subr.mxu0 0.0
        %6114 = vmatpush1.msra.mxu0 0.0
        %6115 = vmatprep.subr.mxu0 0.0
        %6116 = vmatpush1.msra.mxu0 0.0
        %6117 = vmatprep.subr.mxu0 0.0
        %6118 = vmatpush1.msra.mxu0 0.0
        %6119 = vmatprep.subr.mxu0 0.0
        %6120 = vmatpush1.msra.mxu0 0.0
        %6121 = vmatprep.subr.mxu0 0.0
        %6122 = vmatpush1.msra.mxu0 0.0
        %6123 = vmatprep.subr.mxu0 0.0
        %6124 = vmatpush1.msra.mxu0 0.0
        %6125 = vmatprep.subr.mxu0 0.0
        %6126 = vmatpush1.msra.mxu0 0.0
        %6127 = vmatprep.subr.mxu0 0.0
        %6128 = vmatpush1.msra.mxu0 0.0
        %6129 = vmatprep.subr.mxu0 0.0
        %6130 = vmatpush1.msra.mxu0 0.0
        %6131 = vmatprep.subr.mxu0 0.0
        %6132 = vmatpush1.msra.mxu0 0.0
        %6133 = vmatprep.subr.mxu0 0.0
        %6134 = vmatpush1.msra.mxu0 0.0
        %6135 = vmatprep.subr.mxu0 0.0
        %6136 = vmatpush1.msra.mxu0 0.0
        %6137 = vmatprep.mubr.f32.mxu0 0.0
        %6138 = vmatmul.mubr.f32.gmra.mrb[0].mxu0 %v5516
        %v6139 = vpop.f32.mrb[0].mxu0
        %v6140 = vadd.f32 0.0, %v6139
        %v6141 = vpop.f32.mrb[0].mxu0
        %v6142 = vadd.f32 0.0, %v6141
        %6143 = vdwg.mxu0
        %v6144 = vsel %vm3036, %v5332, 0
        %v6147 = vsel %vm3036, %v6054, 0
        %v6150 = vsel %vm3036, %v6055, 0
        %6152 = vmatprep.subr.mxu0 %v6142
        %6153 = vmatpush1.msra.mxu0 %v6140
        %6154 = vmatprep.subr.mxu0 0.0
        %6155 = vmatpush1.msra.mxu0 0.0
        %6156 = vmatprep.subr.mxu0 0.0
        %6157 = vmatpush1.msra.mxu0 0.0
        %6158 = vmatprep.subr.mxu0 0.0
        %6159 = vmatpush1.msra.mxu0 0.0
        %6160 = vmatprep.subr.mxu0 0.0
        %6161 = vmatpush1.msra.mxu0 0.0
        %6162 = vmatprep.subr.mxu0 0.0
        %6163 = vmatpush1.msra.mxu0 0.0
        %6164 = vmatprep.subr.mxu0 0.0
        %6165 = vmatpush1.msra.mxu0 0.0
        %6166 = vmatprep.subr.mxu0 0.0
        %6167 = vmatpush1.msra.mxu0 0.0
        %6168 = vmatprep.subr.mxu0 0.0
        %6169 = vmatpush1.msra.mxu0 0.0
        %6170 = vmatprep.subr.mxu0 0.0
        %6171 = vmatpush1.msra.mxu0 0.0
        %6172 = vmatprep.subr.mxu0 0.0
        %6173 = vmatpush1.msra.mxu0 0.0
        %6174 = vmatprep.subr.mxu0 0.0
        %6175 = vmatpush1.msra.mxu0 0.0
        %6176 = vmatprep.subr.mxu0 0.0
        %6177 = vmatpush1.msra.mxu0 0.0
        %6178 = vmatprep.subr.mxu0 0.0
        %6179 = vmatpush1.msra.mxu0 0.0
        %6180 = vmatprep.subr.mxu0 0.0
        %6181 = vmatpush1.msra.mxu0 0.0
        %6182 = vmatprep.subr.mxu0 0.0
        %6183 = vmatpush1.msra.mxu0 0.0
        %6184 = vmatprep.subr.mxu0 0.0
        %6185 = vmatpush1.msra.mxu0 0.0
        %6186 = vmatprep.subr.mxu0 0.0
        %6187 = vmatpush1.msra.mxu0 0.0
        %6188 = vmatprep.subr.mxu0 0.0
        %6189 = vmatpush1.msra.mxu0 0.0
        %6190 = vmatprep.subr.mxu0 0.0
        %6191 = vmatpush1.msra.mxu0 0.0
        %6192 = vmatprep.subr.mxu0 0.0
        %6193 = vmatpush1.msra.mxu0 0.0
        %6194 = vmatprep.subr.mxu0 0.0
        %6195 = vmatpush1.msra.mxu0 0.0
        %6196 = vmatprep.subr.mxu0 0.0
        %6197 = vmatpush1.msra.mxu0 0.0
        %6198 = vmatprep.subr.mxu0 0.0
        %6199 = vmatpush1.msra.mxu0 0.0
        %6200 = vmatprep.subr.mxu0 0.0
        %6201 = vmatpush1.msra.mxu0 0.0
        %6202 = vmatprep.subr.mxu0 0.0
        %6203 = vmatpush1.msra.mxu0 0.0
        %6204 = vmatprep.subr.mxu0 0.0
        %6205 = vmatpush1.msra.mxu0 0.0
        %6206 = vmatprep.subr.mxu0 0.0
        %6207 = vmatpush1.msra.mxu0 0.0
        %6208 = vmatprep.subr.mxu0 0.0
        %6209 = vmatpush1.msra.mxu0 0.0
        %6210 = vmatprep.subr.mxu0 0.0
        %6211 = vmatpush1.msra.mxu0 0.0
        %6212 = vmatprep.subr.mxu0 0.0
        %6213 = vmatpush1.msra.mxu0 0.0
        %6214 = vmatprep.subr.mxu0 0.0
        %6215 = vmatpush1.msra.mxu0 0.0
        %6216 = vmatprep.mubr.f32.mxu0 0.0
        %6217 = vmatmul.mubr.f32.gmra.mrb[0].mxu0 %v6144
        %v6218 = vpop.f32.mrb[0].mxu0
        %v6219 = vadd.f32 0.0, %v6218
        %v6220 = vpop.f32.mrb[0].mxu0
        %v6221 = vadd.f32 0.0, %v6220
        %6222 = vmatprep.mubr.f32.mxu0 0.0
        %6223 = vmatmul.mubr.f32.gmra.mrb[0].mxu0 %v6147
        %v6224 = vpop.f32.mrb[0].mxu0
        %v6225 = vadd.f32 0.0, %v6224
        %v6226 = vpop.f32.mrb[0].mxu0
        %v6227 = vadd.f32 0.0, %v6226
        %6228 = vmatprep.mubr.f32.mxu0 0.0
        %6229 = vmatmul.mubr.f32.gmra.mrb[0].mxu0 %v6150
        %v6230 = vpop.f32.mrb[0].mxu0
        %v6231 = vadd.f32 0.0, %v6230
        %v6232 = vpop.f32.mrb[0].mxu0
        %v6233 = vadd.f32 0.0, %v6232
        %6234 = vdwg.mxu0
        %v6235 = vadd.f32 %v6046, %v6219
        %v6236 = vadd.f32 %v6047, %v6221
        %v6237 = vadd.f32 %v6048, %v6225
        %v6238 = vadd.f32 %v6049, %v6227
        %v6239 = vadd.f32 %v6050, %v6231
        %v6240 = vadd.f32 %v6051, %v6233
        %v6241 = vld [vmem:[%s19] sm:$0x3]
        %v6243 = vlaneseq
        %v6244 = vshrl.u32 %v6243, 7
        %v6245 = vsub.s32 0, %v6244
        %v6246 = vrot.slane %v6241, %v6245
        %v6247 = vlaneseq
        %v6248 = vshrl.u32 %v6247, 7
        %v6249 = vsub.s32 1, %v6248
        %v6250 = vrot.slane %v6241, %v6249
        %v6253 = vadd.f32 %v6235, %v6246
        %v6254 = vadd.f32 %v6236, %v6250
        %v6255 = vadd.f32 %v6237, %v6246
        %v6256 = vadd.f32 %v6238, %v6250
        %v6257 = vadd.f32 %v6239, %v6246
        %v6258 = vadd.f32 %v6240, %v6250
        %v6259 = vmax.f32 %v6253, 0.0
        %v6260 = vmax.f32 %v6254, 0.0
        %v6261 = vmax.f32 %v6255, 0.0
        %v6262 = vmax.f32 %v6256, 0.0
        %v6263 = vmax.f32 %v6257, 0.0
        %v6264 = vmax.f32 %v6258, 0.0
        %vm6265 = vcmp.eq.s32.totalorder %v789, %v793
        %vm6266 = vcmp.eq.s32.totalorder %v790, %v793
        %vm6267 = vcmp.eq.s32.totalorder %v791, %v793
        %v6268 = vsel %vm6265, 1.0, 0.0
        %v6269 = vsel %vm6266, 1.0, 0.0
        %v6270 = vsel %vm6267, 1.0, 0.0
        %v6271 = vld [vmem:[%s20] sm:$0xff]
        %v6272 = vld [vmem:[%s20 + $0x8] sm:$0xff]
        %v6273 = vld [vmem:[%s20 + $0x10] sm:$0xff]
        %v6274 = vld [vmem:[%s20 + $0x18] sm:$0xff]
        %v6275 = vld [vmem:[%s20 + $0x20] sm:$0xff]
        %v6276 = vld [vmem:[%s20 + $0x28] sm:$0xff]
        %v6277 = vld [vmem:[%s20 + $0x30] sm:$0xff]
        %v6278 = vld [vmem:[%s20 + $0x38] sm:$0xff]
        %v6279 = vld [vmem:[%s20 + $0x40] sm:$0xff]
        %v6280 = vld [vmem:[%s20 + $0x48] sm:$0xff]
        %v6281 = vld [vmem:[%s20 + $0x50] sm:$0xff]
        %v6282 = vld [vmem:[%s20 + $0x58] sm:$0xff]
        %v6283 = vld [vmem:[%s20 + $0x60] sm:$0xff]
        %v6284 = vld [vmem:[%s20 + $0x68] sm:$0xff]
        %v6285 = vld [vmem:[%s20 + $0x70] sm:$0xff]
        %v6286 = vld [vmem:[%s20 + $0x78] sm:$0xff]
        %v6287 = vld [vmem:[%s20 + $0x80] sm:$0xff]
        %v6288 = vld [vmem:[%s20 + $0x88] sm:$0xff]
        %vm6289 = vcmask 130048
        %v6291 = vsel %vm6289, %v6260, 0
        %v6294 = vsel %vm6289, %v6262, 0
        %v6297 = vsel %vm6289, %v6264, 0
        %6299 = vmatprep.subr.mxu0 0.0
        %6300 = vmatpush1.msra.mxu0 %v6271
        %6301 = vmatprep.subr.mxu0 0.0
        %6302 = vmatpush1.msra.mxu0 %v6272
        %6303 = vmatprep.subr.mxu0 0.0
        %6304 = vmatpush1.msra.mxu0 %v6273
        %6305 = vmatprep.subr.mxu0 0.0
        %6306 = vmatpush1.msra.mxu0 %v6274
        %6307 = vmatprep.subr.mxu0 0.0
        %6308 = vmatpush1.msra.mxu0 %v6275
        %6309 = vmatprep.subr.mxu0 0.0
        %6310 = vmatpush1.msra.mxu0 %v6276
        %6311 = vmatprep.subr.mxu0 0.0
        %6312 = vmatpush1.msra.mxu0 %v6277
        %6313 = vmatprep.subr.mxu0 0.0
        %6314 = vmatpush1.msra.mxu0 %v6278
        %6315 = vmatprep.subr.mxu0 0.0
        %6316 = vmatpush1.msra.mxu0 %v6279
        %6317 = vmatprep.subr.mxu0 0.0
        %6318 = vmatpush1.msra.mxu0 %v6280
        %6319 = vmatprep.subr.mxu0 0.0
        %6320 = vmatpush1.msra.mxu0 %v6281
        %6321 = vmatprep.subr.mxu0 0.0
        %6322 = vmatpush1.msra.mxu0 %v6282
        %6323 = vmatprep.subr.mxu0 0.0
        %6324 = vmatpush1.msra.mxu0 %v6283
        %6325 = vmatprep.subr.mxu0 0.0
        %6326 = vmatpush1.msra.mxu0 %v6284
        %6327 = vmatprep.subr.mxu0 0.0
        %6328 = vmatpush1.msra.mxu0 %v6285
        %6329 = vmatprep.subr.mxu0 0.0
        %6330 = vmatpush1.msra.mxu0 %v6286
        %6331 = vmatprep.subr.mxu0 0.0
        %6332 = vmatpush1.msra.mxu0 %v6287
        %6333 = vmatprep.subr.mxu0 0.0
        %6334 = vmatpush1.msra.mxu0 %v6288
        %6335 = vmatprep.subr.mxu0 0.0
        %6336 = vmatpush1.msra.mxu0 0.0
        %6337 = vmatprep.subr.mxu0 0.0
        %6338 = vmatpush1.msra.mxu0 0.0
        %6339 = vmatprep.subr.mxu0 0.0
        %6340 = vmatpush1.msra.mxu0 0.0
        %6341 = vmatprep.subr.mxu0 0.0
        %6342 = vmatpush1.msra.mxu0 0.0
        %6343 = vmatprep.subr.mxu0 0.0
        %6344 = vmatpush1.msra.mxu0 0.0
        %6345 = vmatprep.subr.mxu0 0.0
        %6346 = vmatpush1.msra.mxu0 0.0
        %6347 = vmatprep.subr.mxu0 0.0
        %6348 = vmatpush1.msra.mxu0 0.0
        %6349 = vmatprep.subr.mxu0 0.0
        %6350 = vmatpush1.msra.mxu0 0.0
        %6351 = vmatprep.subr.mxu0 0.0
        %6352 = vmatpush1.msra.mxu0 0.0
        %6353 = vmatprep.subr.mxu0 0.0
        %6354 = vmatpush1.msra.mxu0 0.0
        %6355 = vmatprep.subr.mxu0 0.0
        %6356 = vmatpush1.msra.mxu0 0.0
        %6357 = vmatprep.subr.mxu0 0.0
        %6358 = vmatpush1.msra.mxu0 0.0
        %6359 = vmatprep.subr.mxu0 0.0
        %6360 = vmatpush1.msra.mxu0 0.0
        %6361 = vmatprep.subr.mxu0 0.0
        %6362 = vmatpush1.msra.mxu0 0.0
        %6363 = vmatprep.mubr.f32.mxu0 %v6291
        %6364 = vmatmul.mubr.f32.gmra.mrb[0].mxu0 %v6259
        %v6365 = vpop.f32.mrb[0].mxu0
        %v6366 = vadd.f32 0.0, %v6365
        %v6367 = vpop.f32.mrb[0].mxu0
        %6368 = vmatprep.mubr.f32.mxu0 %v6294
        %6369 = vmatmul.mubr.f32.gmra.mrb[0].mxu0 %v6261
        %v6370 = vpop.f32.mrb[0].mxu0
        %v6371 = vadd.f32 0.0, %v6370
        %v6372 = vpop.f32.mrb[0].mxu0
        %6373 = vmatprep.mubr.f32.mxu0 %v6297
        %6374 = vmatmul.mubr.f32.gmra.mrb[0].mxu0 %v6263
        %v6375 = vpop.f32.mrb[0].mxu0
        %v6376 = vadd.f32 0.0, %v6375
        %v6377 = vpop.f32.mrb[0].mxu0
        %6378 = vdwg.mxu0
        %v6379 = vadd.s32 %v793, 1
        %vm6380 = vcmp.eq.s32.totalorder %v789, %v6379
        %vm6381 = vcmp.eq.s32.totalorder %v790, %v6379
        %vm6382 = vcmp.eq.s32.totalorder %v791, %v6379
        %v6383 = vsel %vm6380, 1.0, 0.0
        %v6384 = vsel %vm6381, 1.0, 0.0
        %v6385 = vsel %vm6382, 1.0, 0.0
        %s6386 = scalar_lea.vmem %s20, 144
        %v6387 = vld [vmem:[%s6386] sm:$0xff]
        %v6388 = vld [vmem:[%s6386 + $0x8] sm:$0xff]
        %v6389 = vld [vmem:[%s6386 + $0x10] sm:$0xff]
        %v6390 = vld [vmem:[%s6386 + $0x18] sm:$0xff]
        %v6391 = vld [vmem:[%s6386 + $0x20] sm:$0xff]
        %v6392 = vld [vmem:[%s6386 + $0x28] sm:$0xff]
        %v6393 = vld [vmem:[%s6386 + $0x30] sm:$0xff]
        %v6394 = vld [vmem:[%s6386 + $0x38] sm:$0xff]
        %v6395 = vld [vmem:[%s6386 + $0x40] sm:$0xff]
        %v6396 = vld [vmem:[%s6386 + $0x48] sm:$0xff]
        %v6397 = vld [vmem:[%s6386 + $0x50] sm:$0xff]
        %v6398 = vld [vmem:[%s6386 + $0x58] sm:$0xff]
        %v6399 = vld [vmem:[%s6386 + $0x60] sm:$0xff]
        %v6400 = vld [vmem:[%s6386 + $0x68] sm:$0xff]
        %v6401 = vld [vmem:[%s6386 + $0x70] sm:$0xff]
        %v6402 = vld [vmem:[%s6386 + $0x78] sm:$0xff]
        %v6403 = vld [vmem:[%s6386 + $0x80] sm:$0xff]
        %v6404 = vld [vmem:[%s6386 + $0x88] sm:$0xff]
        %6405 = vmatprep.subr.mxu0 0.0
        %6406 = vmatpush1.msra.mxu0 %v6387
        %6407 = vmatprep.subr.mxu0 0.0
        %6408 = vmatpush1.msra.mxu0 %v6388
        %6409 = vmatprep.subr.mxu0 0.0
        %6410 = vmatpush1.msra.mxu0 %v6389
        %6411 = vmatprep.subr.mxu0 0.0
        %6412 = vmatpush1.msra.mxu0 %v6390
        %6413 = vmatprep.subr.mxu0 0.0
        %6414 = vmatpush1.msra.mxu0 %v6391
        %6415 = vmatprep.subr.mxu0 0.0
        %6416 = vmatpush1.msra.mxu0 %v6392
        %6417 = vmatprep.subr.mxu0 0.0
        %6418 = vmatpush1.msra.mxu0 %v6393
        %6419 = vmatprep.subr.mxu0 0.0
        %6420 = vmatpush1.msra.mxu0 %v6394
        %6421 = vmatprep.subr.mxu0 0.0
        %6422 = vmatpush1.msra.mxu0 %v6395
        %6423 = vmatprep.subr.mxu0 0.0
        %6424 = vmatpush1.msra.mxu0 %v6396
        %6425 = vmatprep.subr.mxu0 0.0
        %6426 = vmatpush1.msra.mxu0 %v6397
        %6427 = vmatprep.subr.mxu0 0.0
        %6428 = vmatpush1.msra.mxu0 %v6398
        %6429 = vmatprep.subr.mxu0 0.0
        %6430 = vmatpush1.msra.mxu0 %v6399
        %6431 = vmatprep.subr.mxu0 0.0
        %6432 = vmatpush1.msra.mxu0 %v6400
        %6433 = vmatprep.subr.mxu0 0.0
        %6434 = vmatpush1.msra.mxu0 %v6401
        %6435 = vmatprep.subr.mxu0 0.0
        %6436 = vmatpush1.msra.mxu0 %v6402
        %6437 = vmatprep.subr.mxu0 0.0
        %6438 = vmatpush1.msra.mxu0 %v6403
        %6439 = vmatprep.subr.mxu0 0.0
        %6440 = vmatpush1.msra.mxu0 %v6404
        %6441 = vmatprep.subr.mxu0 0.0
        %6442 = vmatpush1.msra.mxu0 0.0
        %6443 = vmatprep.subr.mxu0 0.0
        %6444 = vmatpush1.msra.mxu0 0.0
        %6445 = vmatprep.subr.mxu0 0.0
        %6446 = vmatpush1.msra.mxu0 0.0
        %6447 = vmatprep.subr.mxu0 0.0
        %6448 = vmatpush1.msra.mxu0 0.0
        %6449 = vmatprep.subr.mxu0 0.0
        %6450 = vmatpush1.msra.mxu0 0.0
        %6451 = vmatprep.subr.mxu0 0.0
        %6452 = vmatpush1.msra.mxu0 0.0
        %6453 = vmatprep.subr.mxu0 0.0
        %6454 = vmatpush1.msra.mxu0 0.0
        %6455 = vmatprep.subr.mxu0 0.0
        %6456 = vmatpush1.msra.mxu0 0.0
        %6457 = vmatprep.subr.mxu0 0.0
        %6458 = vmatpush1.msra.mxu0 0.0
        %6459 = vmatprep.subr.mxu0 0.0
        %6460 = vmatpush1.msra.mxu0 0.0
        %6461 = vmatprep.subr.mxu0 0.0
        %6462 = vmatpush1.msra.mxu0 0.0
        %6463 = vmatprep.subr.mxu0 0.0
        %6464 = vmatpush1.msra.mxu0 0.0
        %6465 = vmatprep.subr.mxu0 0.0
        %6466 = vmatpush1.msra.mxu0 0.0
        %6467 = vmatprep.subr.mxu0 0.0
        %6468 = vmatpush1.msra.mxu0 0.0
        %6469 = vmatprep.mubr.f32.mxu0 %v6291
        %6470 = vmatmul.mubr.f32.gmra.mrb[0].mxu0 %v6259
        %v6471 = vpop.f32.mrb[0].mxu0
        %v6472 = vadd.f32 0.0, %v6471
        %v6473 = vpop.f32.mrb[0].mxu0
        %6474 = vmatprep.mubr.f32.mxu0 %v6294
        %6475 = vmatmul.mubr.f32.gmra.mrb[0].mxu0 %v6261
        %v6476 = vpop.f32.mrb[0].mxu0
        %v6477 = vadd.f32 0.0, %v6476
        %v6478 = vpop.f32.mrb[0].mxu0
        %6479 = vmatprep.mubr.f32.mxu0 %v6297
        %6480 = vmatmul.mubr.f32.gmra.mrb[0].mxu0 %v6263
        %v6481 = vpop.f32.mrb[0].mxu0
        %v6482 = vadd.f32 0.0, %v6481
        %v6483 = vpop.f32.mrb[0].mxu0
        %6484 = vdwg.mxu0
        %v6486 = vsel %vm1709, %v6383, 0
        %v6489 = vsel %vm1709, %v6384, 0
        %v6492 = vsel %vm1709, %v6385, 0
        %v6495 = vsel %vm1713, %v6482, 0
        %6497 = vmatprep.subr.mxu0 0.0
        %6498 = vmatpush1.msra.mxu0 %v6472
        %6499 = vmatprep.subr.mxu0 0.0
        %6500 = vmatpush1.msra.mxu0 %v6477
        %6501 = vmatprep.subr.mxu0 0.0
        %6502 = vmatpush1.msra.mxu0 %v6495
        %6503 = vmatprep.subr.mxu0 0.0
        %6504 = vmatpush1.msra.mxu0 0.0
        %6505 = vmatprep.subr.mxu0 0.0
        %6506 = vmatpush1.msra.mxu0 0.0
        %6507 = vmatprep.subr.mxu0 0.0
        %6508 = vmatpush1.msra.mxu0 0.0
        %6509 = vmatprep.subr.mxu0 0.0
        %6510 = vmatpush1.msra.mxu0 0.0
        %6511 = vmatprep.subr.mxu0 0.0
        %6512 = vmatpush1.msra.mxu0 0.0
        %6513 = vmatprep.subr.mxu0 0.0
        %6514 = vmatpush1.msra.mxu0 0.0
        %6515 = vmatprep.subr.mxu0 0.0
        %6516 = vmatpush1.msra.mxu0 0.0
        %6517 = vmatprep.subr.mxu0 0.0
        %6518 = vmatpush1.msra.mxu0 0.0
        %6519 = vmatprep.subr.mxu0 0.0
        %6520 = vmatpush1.msra.mxu0 0.0
        %6521 = vmatprep.subr.mxu0 0.0
        %6522 = vmatpush1.msra.mxu0 0.0
        %6523 = vmatprep.subr.mxu0 0.0
        %6524 = vmatpush1.msra.mxu0 0.0
        %6525 = vmatprep.subr.mxu0 0.0
        %6526 = vmatpush1.msra.mxu0 0.0
        %6527 = vmatprep.subr.mxu0 0.0
        %6528 = vmatpush1.msra.mxu0 0.0
        %6529 = vmatprep.subr.mxu0 0.0
        %6530 = vmatpush1.msra.mxu0 0.0
        %6531 = vmatprep.subr.mxu0 0.0
        %6532 = vmatpush1.msra.mxu0 0.0
        %6533 = vmatprep.subr.mxu0 0.0
        %6534 = vmatpush1.msra.mxu0 0.0
        %6535 = vmatprep.subr.mxu0 0.0
        %6536 = vmatpush1.msra.mxu0 0.0
        %6537 = vmatprep.subr.mxu0 0.0
        %6538 = vmatpush1.msra.mxu0 0.0
        %6539 = vmatprep.subr.mxu0 0.0
        %6540 = vmatpush1.msra.mxu0 0.0
        %6541 = vmatprep.subr.mxu0 0.0
        %6542 = vmatpush1.msra.mxu0 0.0
        %6543 = vmatprep.subr.mxu0 0.0
        %6544 = vmatpush1.msra.mxu0 0.0
        %6545 = vmatprep.subr.mxu0 0.0
        %6546 = vmatpush1.msra.mxu0 0.0
        %6547 = vmatprep.subr.mxu0 0.0
        %6548 = vmatpush1.msra.mxu0 0.0
        %6549 = vmatprep.subr.mxu0 0.0
        %6550 = vmatpush1.msra.mxu0 0.0
        %6551 = vmatprep.subr.mxu0 0.0
        %6552 = vmatpush1.msra.mxu0 0.0
        %6553 = vmatprep.subr.mxu0 0.0
        %6554 = vmatpush1.msra.mxu0 0.0
        %6555 = vmatprep.subr.mxu0 0.0
        %6556 = vmatpush1.msra.mxu0 0.0
        %6557 = vmatprep.subr.mxu0 0.0
        %6558 = vmatpush1.msra.mxu0 0.0
        %6559 = vmatprep.subr.mxu0 0.0
        %6560 = vmatpush1.msra.mxu0 0.0
        %6561 = vmatprep.mubr.f32.mxu0 0.0
        %6562 = vmatmul.mubr.f32.gmra.mrb[0].mxu0 %v6486
        %v6563 = vpop.f32.mrb[0].mxu0
        %v6564 = vadd.f32 0.0, %v6563
        %v6565 = vpop.f32.mrb[0].mxu0
        %6566 = vmatprep.mubr.f32.mxu0 0.0
        %6567 = vmatmul.mubr.f32.gmra.mrb[0].mxu0 %v6489
        %v6568 = vpop.f32.mrb[0].mxu0
        %v6569 = vadd.f32 0.0, %v6568
        %v6570 = vpop.f32.mrb[0].mxu0
        %6571 = vmatprep.mubr.f32.mxu0 0.0
        %6572 = vmatmul.mubr.f32.gmra.mrb[0].mxu0 %v6492
        %v6573 = vpop.f32.mrb[0].mxu0
        %v6574 = vadd.f32 0.0, %v6573
        %v6575 = vpop.f32.mrb[0].mxu0
        %6576 = vdwg.mxu0
        %v6578 = vsel %vm1709, %v6268, 0
        %v6581 = vsel %vm1709, %v6269, 0
        %v6584 = vsel %vm1709, %v6270, 0
        %v6587 = vsel %vm1713, %v6376, 0
        %6589 = vmatprep.subr.mxu0 0.0
        %6590 = vmatpush1.msra.mxu0 %v6366
        %6591 = vmatprep.subr.mxu0 0.0
        %6592 = vmatpush1.msra.mxu0 %v6371
        %6593 = vmatprep.subr.mxu0 0.0
        %6594 = vmatpush1.msra.mxu0 %v6587
        %6595 = vmatprep.subr.mxu0 0.0
        %6596 = vmatpush1.msra.mxu0 0.0
        %6597 = vmatprep.subr.mxu0 0.0
        %6598 = vmatpush1.msra.mxu0 0.0
        %6599 = vmatprep.subr.mxu0 0.0
        %6600 = vmatpush1.msra.mxu0 0.0
        %6601 = vmatprep.subr.mxu0 0.0
        %6602 = vmatpush1.msra.mxu0 0.0
        %6603 = vmatprep.subr.mxu0 0.0
        %6604 = vmatpush1.msra.mxu0 0.0
        %6605 = vmatprep.subr.mxu0 0.0
        %6606 = vmatpush1.msra.mxu0 0.0
        %6607 = vmatprep.subr.mxu0 0.0
        %6608 = vmatpush1.msra.mxu0 0.0
        %6609 = vmatprep.subr.mxu0 0.0
        %6610 = vmatpush1.msra.mxu0 0.0
        %6611 = vmatprep.subr.mxu0 0.0
        %6612 = vmatpush1.msra.mxu0 0.0
        %6613 = vmatprep.subr.mxu0 0.0
        %6614 = vmatpush1.msra.mxu0 0.0
        %6615 = vmatprep.subr.mxu0 0.0
        %6616 = vmatpush1.msra.mxu0 0.0
        %6617 = vmatprep.subr.mxu0 0.0
        %6618 = vmatpush1.msra.mxu0 0.0
        %6619 = vmatprep.subr.mxu0 0.0
        %6620 = vmatpush1.msra.mxu0 0.0
        %6621 = vmatprep.subr.mxu0 0.0
        %6622 = vmatpush1.msra.mxu0 0.0
        %6623 = vmatprep.subr.mxu0 0.0
        %6624 = vmatpush1.msra.mxu0 0.0
        %6625 = vmatprep.subr.mxu0 0.0
        %6626 = vmatpush1.msra.mxu0 0.0
        %6627 = vmatprep.subr.mxu0 0.0
        %6628 = vmatpush1.msra.mxu0 0.0
        %6629 = vmatprep.subr.mxu0 0.0
        %6630 = vmatpush1.msra.mxu0 0.0
        %6631 = vmatprep.subr.mxu0 0.0
        %6632 = vmatpush1.msra.mxu0 0.0
        %6633 = vmatprep.subr.mxu0 0.0
        %6634 = vmatpush1.msra.mxu0 0.0
        %6635 = vmatprep.subr.mxu0 0.0
        %6636 = vmatpush1.msra.mxu0 0.0
        %6637 = vmatprep.subr.mxu0 0.0
        %6638 = vmatpush1.msra.mxu0 0.0
        %6639 = vmatprep.subr.mxu0 0.0
        %6640 = vmatpush1.msra.mxu0 0.0
        %6641 = vmatprep.subr.mxu0 0.0
        %6642 = vmatpush1.msra.mxu0 0.0
        %6643 = vmatprep.subr.mxu0 0.0
        %6644 = vmatpush1.msra.mxu0 0.0
        %6645 = vmatprep.subr.mxu0 0.0
        %6646 = vmatpush1.msra.mxu0 0.0
        %6647 = vmatprep.subr.mxu0 0.0
        %6648 = vmatpush1.msra.mxu0 0.0
        %6649 = vmatprep.subr.mxu0 0.0
        %6650 = vmatpush1.msra.mxu0 0.0
        %6651 = vmatprep.subr.mxu0 0.0
        %6652 = vmatpush1.msra.mxu0 0.0
        %6653 = vmatprep.mubr.f32.mxu0 0.0
        %6654 = vmatmul.mubr.f32.gmra.mrb[0].mxu0 %v6578
        %v6655 = vpop.f32.mrb[0].mxu0
        %v6656 = vadd.f32 %v6564, %v6655
        %v6657 = vpop.f32.mrb[0].mxu0
        %6658 = vmatprep.mubr.f32.mxu0 0.0
        %6659 = vmatmul.mubr.f32.gmra.mrb[0].mxu0 %v6581
        %v6660 = vpop.f32.mrb[0].mxu0
        %v6661 = vadd.f32 %v6569, %v6660
        %v6662 = vpop.f32.mrb[0].mxu0
        %6663 = vmatprep.mubr.f32.mxu0 0.0
        %6664 = vmatmul.mubr.f32.gmra.mrb[0].mxu0 %v6584
        %v6665 = vpop.f32.mrb[0].mxu0
        %v6666 = vadd.f32 %v6574, %v6665
        %v6667 = vpop.f32.mrb[0].mxu0
        %6668 = vdwg.mxu0
        %v6669 = vadd.s32 %v793, 2
        %vm6670 = vcmp.eq.s32.totalorder %v789, %v6669
        %vm6671 = vcmp.eq.s32.totalorder %v790, %v6669
        %vm6672 = vcmp.eq.s32.totalorder %v791, %v6669
        %v6673 = vsel %vm6670, 1.0, 0.0
        %v6674 = vsel %vm6671, 1.0, 0.0
        %v6675 = vsel %vm6672, 1.0, 0.0
        %s6676 = scalar_lea.vmem %s20, 288
        %v6677 = vld [vmem:[%s6676] sm:$0xff]
        %v6678 = vld [vmem:[%s6676 + $0x8] sm:$0xff]
        %v6679 = vld [vmem:[%s6676 + $0x10] sm:$0xff]
        %v6680 = vld [vmem:[%s6676 + $0x18] sm:$0xff]
        %v6681 = vld [vmem:[%s6676 + $0x20] sm:$0xff]
        %v6682 = vld [vmem:[%s6676 + $0x28] sm:$0xff]
        %v6683 = vld [vmem:[%s6676 + $0x30] sm:$0xff]
        %v6684 = vld [vmem:[%s6676 + $0x38] sm:$0xff]
        %v6685 = vld [vmem:[%s6676 + $0x40] sm:$0xff]
        %v6686 = vld [vmem:[%s6676 + $0x48] sm:$0xff]
        %v6687 = vld [vmem:[%s6676 + $0x50] sm:$0xff]
        %v6688 = vld [vmem:[%s6676 + $0x58] sm:$0xff]
        %v6689 = vld [vmem:[%s6676 + $0x60] sm:$0xff]
        %v6690 = vld [vmem:[%s6676 + $0x68] sm:$0xff]
        %v6691 = vld [vmem:[%s6676 + $0x70] sm:$0xff]
        %v6692 = vld [vmem:[%s6676 + $0x78] sm:$0xff]
        %v6693 = vld [vmem:[%s6676 + $0x80] sm:$0xff]
        %v6694 = vld [vmem:[%s6676 + $0x88] sm:$0xff]
        %6695 = vmatprep.subr.mxu0 0.0
        %6696 = vmatpush1.msra.mxu0 %v6677
        %6697 = vmatprep.subr.mxu0 0.0
        %6698 = vmatpush1.msra.mxu0 %v6678
        %6699 = vmatprep.subr.mxu0 0.0
        %6700 = vmatpush1.msra.mxu0 %v6679
        %6701 = vmatprep.subr.mxu0 0.0
        %6702 = vmatpush1.msra.mxu0 %v6680
        %6703 = vmatprep.subr.mxu0 0.0
        %6704 = vmatpush1.msra.mxu0 %v6681
        %6705 = vmatprep.subr.mxu0 0.0
        %6706 = vmatpush1.msra.mxu0 %v6682
        %6707 = vmatprep.subr.mxu0 0.0
        %6708 = vmatpush1.msra.mxu0 %v6683
        %6709 = vmatprep.subr.mxu0 0.0
        %6710 = vmatpush1.msra.mxu0 %v6684
        %6711 = vmatprep.subr.mxu0 0.0
        %6712 = vmatpush1.msra.mxu0 %v6685
        %6713 = vmatprep.subr.mxu0 0.0
        %6714 = vmatpush1.msra.mxu0 %v6686
        %6715 = vmatprep.subr.mxu0 0.0
        %6716 = vmatpush1.msra.mxu0 %v6687
        %6717 = vmatprep.subr.mxu0 0.0
        %6718 = vmatpush1.msra.mxu0 %v6688
        %6719 = vmatprep.subr.mxu0 0.0
        %6720 = vmatpush1.msra.mxu0 %v6689
        %6721 = vmatprep.subr.mxu0 0.0
        %6722 = vmatpush1.msra.mxu0 %v6690
        %6723 = vmatprep.subr.mxu0 0.0
        %6724 = vmatpush1.msra.mxu0 %v6691
        %6725 = vmatprep.subr.mxu0 0.0
        %6726 = vmatpush1.msra.mxu0 %v6692
        %6727 = vmatprep.subr.mxu0 0.0
        %6728 = vmatpush1.msra.mxu0 %v6693
        %6729 = vmatprep.subr.mxu0 0.0
        %6730 = vmatpush1.msra.mxu0 %v6694
        %6731 = vmatprep.subr.mxu0 0.0
        %6732 = vmatpush1.msra.mxu0 0.0
        %6733 = vmatprep.subr.mxu0 0.0
        %6734 = vmatpush1.msra.mxu0 0.0
        %6735 = vmatprep.subr.mxu0 0.0
        %6736 = vmatpush1.msra.mxu0 0.0
        %6737 = vmatprep.subr.mxu0 0.0
        %6738 = vmatpush1.msra.mxu0 0.0
        %6739 = vmatprep.subr.mxu0 0.0
        %6740 = vmatpush1.msra.mxu0 0.0
        %6741 = vmatprep.subr.mxu0 0.0
        %6742 = vmatpush1.msra.mxu0 0.0
        %6743 = vmatprep.subr.mxu0 0.0
        %6744 = vmatpush1.msra.mxu0 0.0
        %6745 = vmatprep.subr.mxu0 0.0
        %6746 = vmatpush1.msra.mxu0 0.0
        %6747 = vmatprep.subr.mxu0 0.0
        %6748 = vmatpush1.msra.mxu0 0.0
        %6749 = vmatprep.subr.mxu0 0.0
        %6750 = vmatpush1.msra.mxu0 0.0
        %6751 = vmatprep.subr.mxu0 0.0
        %6752 = vmatpush1.msra.mxu0 0.0
        %6753 = vmatprep.subr.mxu0 0.0
        %6754 = vmatpush1.msra.mxu0 0.0
        %6755 = vmatprep.subr.mxu0 0.0
        %6756 = vmatpush1.msra.mxu0 0.0
        %6757 = vmatprep.subr.mxu0 0.0
        %6758 = vmatpush1.msra.mxu0 0.0
        %6759 = vmatprep.mubr.f32.mxu0 %v6291
        %6760 = vmatmul.mubr.f32.gmra.mrb[0].mxu0 %v6259
        %v6761 = vpop.f32.mrb[0].mxu0
        %v6762 = vadd.f32 0.0, %v6761
        %v6763 = vpop.f32.mrb[0].mxu0
        %6764 = vmatprep.mubr.f32.mxu0 %v6294
        %6765 = vmatmul.mubr.f32.gmra.mrb[0].mxu0 %v6261
        %v6766 = vpop.f32.mrb[0].mxu0
        %v6767 = vadd.f32 0.0, %v6766
        %v6768 = vpop.f32.mrb[0].mxu0
        %6769 = vmatprep.mubr.f32.mxu0 %v6297
        %6770 = vmatmul.mubr.f32.gmra.mrb[0].mxu0 %v6263
        %v6771 = vpop.f32.mrb[0].mxu0
        %v6772 = vadd.f32 0.0, %v6771
        %v6773 = vpop.f32.mrb[0].mxu0
        %6774 = vdwg.mxu0
        %v6776 = vsel %vm1709, %v6673, 0
        %v6779 = vsel %vm1709, %v6674, 0
        %v6782 = vsel %vm1709, %v6675, 0
        %v6785 = vsel %vm1713, %v6772, 0
        %6787 = vmatprep.subr.mxu0 0.0
        %6788 = vmatpush1.msra.mxu0 %v6762
        %6789 = vmatprep.subr.mxu0 0.0
        %6790 = vmatpush1.msra.mxu0 %v6767
        %6791 = vmatprep.subr.mxu0 0.0
        %6792 = vmatpush1.msra.mxu0 %v6785
        %6793 = vmatprep.subr.mxu0 0.0
        %6794 = vmatpush1.msra.mxu0 0.0
        %6795 = vmatprep.subr.mxu0 0.0
        %6796 = vmatpush1.msra.mxu0 0.0
        %6797 = vmatprep.subr.mxu0 0.0
        %6798 = vmatpush1.msra.mxu0 0.0
        %6799 = vmatprep.subr.mxu0 0.0
        %6800 = vmatpush1.msra.mxu0 0.0
        %6801 = vmatprep.subr.mxu0 0.0
        %6802 = vmatpush1.msra.mxu0 0.0
        %6803 = vmatprep.subr.mxu0 0.0
        %6804 = vmatpush1.msra.mxu0 0.0
        %6805 = vmatprep.subr.mxu0 0.0
        %6806 = vmatpush1.msra.mxu0 0.0
        %6807 = vmatprep.subr.mxu0 0.0
        %6808 = vmatpush1.msra.mxu0 0.0
        %6809 = vmatprep.subr.mxu0 0.0
        %6810 = vmatpush1.msra.mxu0 0.0
        %6811 = vmatprep.subr.mxu0 0.0
        %6812 = vmatpush1.msra.mxu0 0.0
        %6813 = vmatprep.subr.mxu0 0.0
        %6814 = vmatpush1.msra.mxu0 0.0
        %6815 = vmatprep.subr.mxu0 0.0
        %6816 = vmatpush1.msra.mxu0 0.0
        %6817 = vmatprep.subr.mxu0 0.0
        %6818 = vmatpush1.msra.mxu0 0.0
        %6819 = vmatprep.subr.mxu0 0.0
        %6820 = vmatpush1.msra.mxu0 0.0
        %6821 = vmatprep.subr.mxu0 0.0
        %6822 = vmatpush1.msra.mxu0 0.0
        %6823 = vmatprep.subr.mxu0 0.0
        %6824 = vmatpush1.msra.mxu0 0.0
        %6825 = vmatprep.subr.mxu0 0.0
        %6826 = vmatpush1.msra.mxu0 0.0
        %6827 = vmatprep.subr.mxu0 0.0
        %6828 = vmatpush1.msra.mxu0 0.0
        %6829 = vmatprep.subr.mxu0 0.0
        %6830 = vmatpush1.msra.mxu0 0.0
        %6831 = vmatprep.subr.mxu0 0.0
        %6832 = vmatpush1.msra.mxu0 0.0
        %6833 = vmatprep.subr.mxu0 0.0
        %6834 = vmatpush1.msra.mxu0 0.0
        %6835 = vmatprep.subr.mxu0 0.0
        %6836 = vmatpush1.msra.mxu0 0.0
        %6837 = vmatprep.subr.mxu0 0.0
        %6838 = vmatpush1.msra.mxu0 0.0
        %6839 = vmatprep.subr.mxu0 0.0
        %6840 = vmatpush1.msra.mxu0 0.0
        %6841 = vmatprep.subr.mxu0 0.0
        %6842 = vmatpush1.msra.mxu0 0.0
        %6843 = vmatprep.subr.mxu0 0.0
        %6844 = vmatpush1.msra.mxu0 0.0
        %6845 = vmatprep.subr.mxu0 0.0
        %6846 = vmatpush1.msra.mxu0 0.0
        %6847 = vmatprep.subr.mxu0 0.0
        %6848 = vmatpush1.msra.mxu0 0.0
        %6849 = vmatprep.subr.mxu0 0.0
        %6850 = vmatpush1.msra.mxu0 0.0
        %6851 = vmatprep.mubr.f32.mxu0 0.0
        %6852 = vmatmul.mubr.f32.gmra.mrb[0].mxu0 %v6776
        %v6853 = vpop.f32.mrb[0].mxu0
        %v6854 = vadd.f32 0.0, %v6853
        %v6855 = vpop.f32.mrb[0].mxu0
        %6856 = vmatprep.mubr.f32.mxu0 0.0
        %6857 = vmatmul.mubr.f32.gmra.mrb[0].mxu0 %v6779
        %v6858 = vpop.f32.mrb[0].mxu0
        %v6859 = vadd.f32 0.0, %v6858
        %v6860 = vpop.f32.mrb[0].mxu0
        %6861 = vmatprep.mubr.f32.mxu0 0.0
        %6862 = vmatmul.mubr.f32.gmra.mrb[0].mxu0 %v6782
        %v6863 = vpop.f32.mrb[0].mxu0
        %v6864 = vadd.f32 0.0, %v6863
        %v6865 = vpop.f32.mrb[0].mxu0
        %6866 = vdwg.mxu0
        %v6867 = vadd.f32 %v6656, %v6854
        %v6868 = vadd.f32 %v6661, %v6859
        %v6869 = vadd.f32 %v6666, %v6864
        %v6870 = vld [vmem:[%s21] sm:$0x1]
        %v6872 = vlaneseq
        %v6873 = vshrl.u32 %v6872, 7
        %v6874 = vsub.s32 0, %v6873
        %v6875 = vrot.slane %v6870, %v6874
        %v6877 = vadd.f32 %v6867, %v6875
        %v6878 = vadd.f32 %v6868, %v6875
        %v6879 = vadd.f32 %v6869, %v6875
        %6880 = vst [vmem:[%s784] sm:$0xff] %v6877
        %6881 = vst [vmem:[%s784 + $0x8] sm:$0xff] %v6878
        %6882 = vst [vmem:[%s784 + $0x10] sm:$0xf] %v6879
        %p6883 = scmp.lt.s32.totalorder %s42, 1
        %s6884 = scalar_select %p6883, %s42, 1
        %s6885 = smul.addr %s6884, 3
        %s6886 = smul.addr %s6885, 8
        %s6887 = scalar_lea.vmem %s22, %s6886
        %s6888 = sand.u32 %s553, 1
        %s6889 = scalar_lea.sflag [#allocation3], %s6888
        %s6890 = sand.u32 %s553, 1
        %s6891 = scalar_lea.vmem [#allocation2], %s6890
        %s6892 = sand.u32 %s579, 1
        %s6893 = scalar_lea.sflag [#allocation5], %s6892
        %s6894 = sand.u32 %s579, 1
        %s6895 = scalar_lea.vmem [#allocation4], %s6894
        // Predicated region
        $region109: #{cluster_vae_forward.1} parent=107 // pred_check
          %p6896 = pneg %p537
        $region110: #{cluster_vae_forward.1} parent=107 // pred_check_branch
          %6898 = sbr.rel (%p6896) target = $region112
        $region111: #{cluster_vae_forward.1} parent=107 // pred_region
          _
        $region112: #{cluster_vae_forward.1} parent=107 // pred_fallthru
          _
        // Predicated region
        $region113: #{cluster_vae_forward.1} parent=107 // pred_check
          %p6899 = pneg %p563
        $region114: #{cluster_vae_forward.1} parent=107 // pred_check_branch
          %6901 = sbr.rel (%p6899) target = $region116
        $region115: #{cluster_vae_forward.1} parent=107 // pred_region
          %s6903 = ssub.s32 16, 16
          %6904 = vsyncadd %s6889, %s6903
          %s6905 = smul.addr %s42, 16
          %s6906 = scalar_lea.hbm %s23, %s6905
          %s6908 = sshll.u32 %s6891, 4
          %s6909 = int_to_ptr.vmem [resolvable:$true] %s6908
          %6911 = dma.vmem_to_hbm [thread:$0]  %s6909, 16, %s6906, %s6889
        $region116: #{cluster_vae_forward.1} parent=107 // pred_fallthru
          _
        // Predicated region
        $region117: #{cluster_vae_forward.1} parent=107 // pred_check
          %p6912 = pneg %p589
        $region118: #{cluster_vae_forward.1} parent=107 // pred_check_branch
          %6914 = sbr.rel (%p6912) target = $region120
        $region119: #{cluster_vae_forward.1} parent=107 // pred_region
          %s6916 = ssub.s32 16, 16
          %6917 = vsyncadd %s6893, %s6916
          %s6918 = smul.addr %s42, 16
          %s6919 = scalar_lea.hbm %s24, %s6918
          %s6921 = sshll.u32 %s6895, 4
          %s6922 = int_to_ptr.vmem [resolvable:$true] %s6921
          %6924 = dma.vmem_to_hbm [thread:$0]  %s6922, 16, %s6919, %s6893
        $region120: #{cluster_vae_forward.1} parent=107 // pred_fallthru
          _
      $region108: #{cluster_vae_forward.1} parent=5 // pred_fallthru
        _
      %p6925 = scmp.le.s32.totalorder 2, %s37
      // Predicated region
      $region121: #{cluster_vae_forward.1} parent=5 // pred_check
        %p6926 = pneg %p6925
      $region122: #{cluster_vae_forward.1} parent=5 // pred_check_branch
        %6928 = sbr.rel (%p6926) target = $region124
      $region123: #{cluster_vae_forward.1} parent=5 // pred_region
        %s6929 = ssub.s32 %s37, 2
        // Predicated region
        $region125: #{cluster_vae_forward.1} parent=123 // pred_check
          %p6930 = pneg %p543
        $region126: #{cluster_vae_forward.1} parent=123 // pred_check_branch
          %6932 = sbr.rel (%p6930) target = $region128
        $region127: #{cluster_vae_forward.1} parent=123 // pred_region
          %p6933 = scmp.lt.s32.totalorder %s43, 1
          %s6934 = scalar_select %p6933, %s43, 1
          %s6935 = smul.addr %s6934, 3
          %s6936 = smul.addr %s6935, 8
          %s6937 = scalar_lea.vmem %s22, %s6936
        $region128: #{cluster_vae_forward.1} parent=123 // pred_fallthru
          _
        // Predicated region
        $region129: #{cluster_vae_forward.1} parent=123 // pred_check
          %p6938 = pneg %p569
        $region130: #{cluster_vae_forward.1} parent=123 // pred_check_branch
          %6940 = sbr.rel (%p6938) target = $region132
        $region131: #{cluster_vae_forward.1} parent=123 // pred_region
          %s6941 = sand.u32 %s554, 1
          %s6942 = scalar_lea.sflag [#allocation3], %s6941
          %s6943 = sand.u32 %s554, 1
          %s6944 = scalar_lea.vmem [#allocation2], %s6943
          %6945 = dma.done %s6942, 16
        $region132: #{cluster_vae_forward.1} parent=123 // pred_fallthru
          _
        // Predicated region
        $region133: #{cluster_vae_forward.1} parent=123 // pred_check
          %p6946 = pneg %p595
        $region134: #{cluster_vae_forward.1} parent=123 // pred_check_branch
          %6948 = sbr.rel (%p6946) target = $region136
        $region135: #{cluster_vae_forward.1} parent=123 // pred_region
          %s6949 = sand.u32 %s580, 1
          %s6950 = scalar_lea.sflag [#allocation5], %s6949
          %s6951 = sand.u32 %s580, 1
          %s6952 = scalar_lea.vmem [#allocation4], %s6951
          %6953 = dma.done %s6950, 16
        $region136: #{cluster_vae_forward.1} parent=123 // pred_fallthru
          _
      $region124: #{cluster_vae_forward.1} parent=5 // pred_fallthru
        _
    $region6: #{cluster_vae_forward.1} parent=1 // loop_footer
      %s41 = sadd.s32 1, %s37
    $region7: #{cluster_vae_forward.1} parent=1 // loop_footer_branch
      %36 = sbr.rel target = $region3
    $region8: #{cluster_vae_forward.1} parent=1 // loop_exit
      _
    %6954 = vsyncpa [#allocation3], 1
    %s6955 = scalar_lea.sflag [#allocation3], 1
    %6956 = vsyncpa %s6955, 1
    %6957 = vsyncpa [#allocation5], 1
    %s6958 = scalar_lea.sflag [#allocation5], 1
    %6959 = vsyncpa %s6958, 1

</llo_original>
